<compile_context>
chip_gen: v7x
topology: tpu7x:2x2x1
jax: 0.10.0
libtpu: 0.0.40
codegen_flags: <defaults>
</compile_context>

<pallas_src>
import jax
import jax.numpy as jnp
from jax.experimental import pallas as pl
from jax.experimental.pallas import tpu as pltpu

IN_FEATURES = 512 * 8 * 8   # 32768
OUT_FEATURES = 2


def _classifier_kernel(x_ref, w_ref, o_ref):
    x = x_ref[...]   # (B, K) f32, K on the lane axis
    w = w_ref[...]   # (N, K) f32, native nn.Linear layout (lane-dense)

    cols = []
    for n in range(OUT_FEATURES):
        # VPU: sublane-broadcast multiply (B, K) * (1, K) -> (B, K)
        prod = x * w[n : n + 1, :]
        # XLU: lane reduction over K -> (B, 1)
        cols.append(jnp.sum(prod, axis=-1, keepdims=True))

    o_ref[...] = jnp.concatenate(cols, axis=-1).astype(o_ref.dtype)


def classifier_forward(x, weight, norm_flag=True):
    """x: (B, 32768) f32, weight: (2, 32768) f32 (PyTorch Linear layout).

    norm_flag is accepted for API parity; as in the reference module it does
    not change the computation (the F.normalize result is discarded there).
    """
    del norm_flag
    B, K = x.shape
    N, K2 = weight.shape
    assert K == K2 == IN_FEATURES and N == OUT_FEATURES

    return pl.pallas_call(
        _classifier_kernel,
        out_shape=jax.ShapeDtypeStruct((B, N), x.dtype),
        in_specs=[
            pl.BlockSpec(memory_space=pltpu.MemorySpace.VMEM),  # full x in VMEM
            pl.BlockSpec(memory_space=pltpu.MemorySpace.VMEM),  # full weight in VMEM
        ],
        out_specs=pl.BlockSpec(memory_space=pltpu.MemorySpace.VMEM),
    )(x, weight)


if __name__ == "__main__":
    key = jax.random.PRNGKey(0)
    kx, kw = jax.random.split(key)

    B = 2
    # Deterministic parameter init matching nn.Linear(...).weight.data.normal_(0, 0.01)
    weight = 0.01 * jax.random.normal(kw, (OUT_FEATURES, IN_FEATURES), dtype=jnp.float32)
    x = jax.random.normal(kx, (B, IN_FEATURES), dtype=jnp.float32)

    out = classifier_forward(x, weight, norm_flag=True)
    out = jax.block_until_ready(out)

    # Reference check against plain JAX.
    ref = x @ weight.T
    assert out.shape == (B, OUT_FEATURES)
    assert jnp.allclose(out, ref, atol=1e-4, rtol=1e-4)

    print("KERNEL_OK")
</pallas_src>

<mosaic_0001>
module attributes {stable_mosaic.version = 11 : i64} {
  func.func @_classifier_kernel(%arg0: memref<2x32768xf32, #tpu.memory_space<vmem>>, %arg1: memref<2x32768xf32, #tpu.memory_space<vmem>>, %arg2: memref<2x2xf32, #tpu.memory_space<vmem>>) attributes {dimension_semantics = [], scalar_prefetch = 0 : i64, scratch_operands = 0 : i64, tpu.core_type = #tpu.core_type<tc>} {
    %c0 = arith.constant 0 : index
    %c0_0 = arith.constant 0 : index
    %0 = vector.load %arg0[%c0, %c0_0] : memref<2x32768xf32, #tpu.memory_space<vmem>>, vector<2x32768xf32>
    %c0_1 = arith.constant 0 : index
    %c0_2 = arith.constant 0 : index
    %1 = vector.load %arg1[%c0_1, %c0_2] : memref<2x32768xf32, #tpu.memory_space<vmem>>, vector<2x32768xf32>
    %2 = vector.extract_strided_slice %1 {offsets = [0, 0], sizes = [1, 32768], strides = [1, 1]} : vector<2x32768xf32> to vector<1x32768xf32>
    %3 = vector.broadcast %2 : vector<1x32768xf32> to vector<2x32768xf32>
    %4 = arith.mulf %0, %3 : vector<2x32768xf32>
    %cst = arith.constant dense<0.000000e+00> : vector<2xf32>
    %5 = vector.multi_reduction <add>, %4, %cst [1] : vector<2x32768xf32> to vector<2xf32>
    %6 = vector.shape_cast %5 : vector<2xf32> to vector<2x1xf32>
    %7 = vector.extract_strided_slice %1 {offsets = [1, 0], sizes = [1, 32768], strides = [1, 1]} : vector<2x32768xf32> to vector<1x32768xf32>
    %8 = vector.broadcast %7 : vector<1x32768xf32> to vector<2x32768xf32>
    %9 = arith.mulf %0, %8 : vector<2x32768xf32>
    %cst_3 = arith.constant dense<0.000000e+00> : vector<2xf32>
    %10 = vector.multi_reduction <add>, %9, %cst_3 [1] : vector<2x32768xf32> to vector<2xf32>
    %11 = vector.shape_cast %10 : vector<2xf32> to vector<2x1xf32>
    %12 = tpu.concatenate %6, %11 in 1 : vector<2x1xf32>, vector<2x1xf32> -> vector<2x2xf32>
    %c0_4 = arith.constant 0 : index
    %c0_5 = arith.constant 0 : index
    %13 = vector.load %arg2[%c0_4, %c0_5] : memref<2x2xf32, #tpu.memory_space<vmem>>, vector<2x2xf32>
    tpu.vector_store %arg2[%c0_4, %c0_5], %12 {strides = array<i32>} : memref<2x2xf32, #tpu.memory_space<vmem>>, vector<2x2xf32>,
    return
  }
}

</mosaic_0001>

<llo_original>
// kernel: tpu_custom_call.1
$region0: #{tpu_custom_call.1}
  #allocation0 [shape = 'u32[]', space=smem, size = 0x4, offset = 0x4, fixed_abs, tag = 'smem constant byte address 0x4 - core index']
  #allocation1 [shape = 'u32[144,128]{1,0:T(1,128)}', space=vmem, size = 0x12000, scoped, tag = 'internal scratch']
  %s0 = inlined_call_operand.hbm [shape: f32[2,32768], index: 0, kind: input, shape index: {}]
  %s1 = inlined_call_operand.hbm [shape: f32[2,32768], index: 1, kind: input, shape index: {}]
  %s2 = inlined_call_operand.hbm [shape: f32[2,2], index: 2, kind: output, shape index: {}]
  %s3 = sld [smem:[#allocation0]]
  $region26: #{tpu_custom_call.1} parent=0
    _
  %s5 = ssub.s32 1, %s3
  %s6 = scalar_select 0, %s5, %s3
  $region1: #{tpu_custom_call.1} parent=0
    #allocation2 [shape = 'u8[262144]{0}', space=vmem, size = 0x40000, scoped, tag = 'input window, operand 0, single buffered']
    #allocation3 [shape = 's32[1]{0}', space=sflag, size = 0x4, scoped, tag = 'scoped memory for tpu_custom_call.1']
    #allocation4 [shape = 's32[1]{0}', space=sflag, size = 0x4, scoped, tag = 'scoped memory for tpu_custom_call.1']
    #allocation5 [shape = 'u8[262144]{0}', space=vmem, size = 0x40000, scoped, tag = 'input window, operand 1, single buffered']
    #allocation6 [shape = 's32[1]{0}', space=sflag, size = 0x4, scoped, tag = 'scoped memory for tpu_custom_call.1']
    #allocation7 [shape = 'u8[1024]{0}', space=vmem, size = 0x400, scoped, tag = 'output window, operand 0, single buffered']
    %7 = vsyncpa [#allocation3], 0
    %8 = vsyncpa [#allocation6], 0
    %9 = vsyncpa [#allocation4], 0
    // Predicated region
    $region2: #{tpu_custom_call.1} parent=1 // pred_check
      _
    $region3: #{tpu_custom_call.1} parent=1 // pred_check_branch
      %11 = sbr.rel (0) target = $region5
    $region4: #{tpu_custom_call.1} parent=1 // pred_region
      %s13 = ssub.s32 8192, 8192
      %14 = vsyncadd [#allocation3], %s13
      %s16 = sshll.u32 [#allocation2], 4
      %s17 = int_to_ptr.vmem [resolvable:$true] %s16
      %19 = dma.hbm_to_vmem [thread:$0]  %s0, 8192, %s17, [#allocation3]
    $region5: #{tpu_custom_call.1} parent=1 // pred_fallthru
      _
    // Predicated region
    $region6: #{tpu_custom_call.1} parent=1 // pred_check
      _
    $region7: #{tpu_custom_call.1} parent=1 // pred_check_branch
      %21 = sbr.rel (0) target = $region9
    $region8: #{tpu_custom_call.1} parent=1 // pred_region
      %s23 = ssub.s32 8192, 8192
      %24 = vsyncadd [#allocation6], %s23
      %s26 = sshll.u32 [#allocation5], 4
      %s27 = int_to_ptr.vmem [resolvable:$true] %s26
      %29 = dma.hbm_to_vmem [thread:$0]  %s1, 8192, %s27, [#allocation6]
    $region9: #{tpu_custom_call.1} parent=1 // pred_fallthru
      _
    // Predicated region
    $region10: #{tpu_custom_call.1} parent=1 // pred_check
      _
    $region11: #{tpu_custom_call.1} parent=1 // pred_check_branch
      %31 = sbr.rel (0) target = $region13
    $region12: #{tpu_custom_call.1} parent=1 // pred_region
      %32 = dma.done [#allocation3], 8192
    $region13: #{tpu_custom_call.1} parent=1 // pred_fallthru
      _
    // Predicated region
    $region14: #{tpu_custom_call.1} parent=1 // pred_check
      _
    $region15: #{tpu_custom_call.1} parent=1 // pred_check_branch
      %34 = sbr.rel (0) target = $region17
    $region16: #{tpu_custom_call.1} parent=1 // pred_region
      %35 = dma.done [#allocation6], 8192
    $region17: #{tpu_custom_call.1} parent=1 // pred_fallthru
      _
    %v36 = vld [vmem:[#allocation2] sm:$0xff]
    %v37 = vld [vmem:[#allocation2 + $0x8] sm:$0xff]
    %v38 = vld [vmem:[#allocation2 + $0x10] sm:$0xff]
    %v39 = vld [vmem:[#allocation2 + $0x18] sm:$0xff]
    %v40 = vld [vmem:[#allocation2 + $0x20] sm:$0xff]
    %v41 = vld [vmem:[#allocation2 + $0x28] sm:$0xff]
    %v42 = vld [vmem:[#allocation2 + $0x30] sm:$0xff]
    %v43 = vld [vmem:[#allocation2 + $0x38] sm:$0xff]
    %v44 = vld [vmem:[#allocation2 + $0x40] sm:$0xff]
    %v45 = vld [vmem:[#allocation2 + $0x48] sm:$0xff]
    %v46 = vld [vmem:[#allocation2 + $0x50] sm:$0xff]
    %v47 = vld [vmem:[#allocation2 + $0x58] sm:$0xff]
    %v48 = vld [vmem:[#allocation2 + $0x60] sm:$0xff]
    %v49 = vld [vmem:[#allocation2 + $0x68] sm:$0xff]
    %v50 = vld [vmem:[#allocation2 + $0x70] sm:$0xff]
    %v51 = vld [vmem:[#allocation2 + $0x78] sm:$0xff]
    %v52 = vld [vmem:[#allocation2 + $0x80] sm:$0xff]
    %v53 = vld [vmem:[#allocation2 + $0x88] sm:$0xff]
    %v54 = vld [vmem:[#allocation2 + $0x90] sm:$0xff]
    %v55 = vld [vmem:[#allocation2 + $0x98] sm:$0xff]
    %v56 = vld [vmem:[#allocation2 + $0xa0] sm:$0xff]
    %v57 = vld [vmem:[#allocation2 + $0xa8] sm:$0xff]
    %v58 = vld [vmem:[#allocation2 + $0xb0] sm:$0xff]
    %v59 = vld [vmem:[#allocation2 + $0xb8] sm:$0xff]
    %v60 = vld [vmem:[#allocation2 + $0xc0] sm:$0xff]
    %v61 = vld [vmem:[#allocation2 + $0xc8] sm:$0xff]
    %v62 = vld [vmem:[#allocation2 + $0xd0] sm:$0xff]
    %v63 = vld [vmem:[#allocation2 + $0xd8] sm:$0xff]
    %v64 = vld [vmem:[#allocation2 + $0xe0] sm:$0xff]
    %v65 = vld [vmem:[#allocation2 + $0xe8] sm:$0xff]
    %v66 = vld [vmem:[#allocation2 + $0xf0] sm:$0xff]
    %v67 = vld [vmem:[#allocation2 + $0xf8] sm:$0xff]
    %v68 = vld [vmem:[#allocation2 + $0x100] sm:$0xff]
    %v69 = vld [vmem:[#allocation2 + $0x108] sm:$0xff]
    %v70 = vld [vmem:[#allocation2 + $0x110] sm:$0xff]
    %v71 = vld [vmem:[#allocation2 + $0x118] sm:$0xff]
    %v72 = vld [vmem:[#allocation2 + $0x120] sm:$0xff]
    %v73 = vld [vmem:[#allocation2 + $0x128] sm:$0xff]
    %v74 = vld [vmem:[#allocation2 + $0x130] sm:$0xff]
    %v75 = vld [vmem:[#allocation2 + $0x138] sm:$0xff]
    %v76 = vld [vmem:[#allocation2 + $0x140] sm:$0xff]
    %v77 = vld [vmem:[#allocation2 + $0x148] sm:$0xff]
    %v78 = vld [vmem:[#allocation2 + $0x150] sm:$0xff]
    %v79 = vld [vmem:[#allocation2 + $0x158] sm:$0xff]
    %v80 = vld [vmem:[#allocation2 + $0x160] sm:$0xff]
    %v81 = vld [vmem:[#allocation2 + $0x168] sm:$0xff]
    %v82 = vld [vmem:[#allocation2 + $0x170] sm:$0xff]
    %v83 = vld [vmem:[#allocation2 + $0x178] sm:$0xff]
    %v84 = vld [vmem:[#allocation2 + $0x180] sm:$0xff]
    %v85 = vld [vmem:[#allocation2 + $0x188] sm:$0xff]
    %v86 = vld [vmem:[#allocation2 + $0x190] sm:$0xff]
    %v87 = vld [vmem:[#allocation2 + $0x198] sm:$0xff]
    %v88 = vld [vmem:[#allocation2 + $0x1a0] sm:$0xff]
    %v89 = vld [vmem:[#allocation2 + $0x1a8] sm:$0xff]
    %v90 = vld [vmem:[#allocation2 + $0x1b0] sm:$0xff]
    %v91 = vld [vmem:[#allocation2 + $0x1b8] sm:$0xff]
    %v92 = vld [vmem:[#allocation2 + $0x1c0] sm:$0xff]
    %v93 = vld [vmem:[#allocation2 + $0x1c8] sm:$0xff]
    %v94 = vld [vmem:[#allocation2 + $0x1d0] sm:$0xff]
    %v95 = vld [vmem:[#allocation2 + $0x1d8] sm:$0xff]
    %v96 = vld [vmem:[#allocation2 + $0x1e0] sm:$0xff]
    %v97 = vld [vmem:[#allocation2 + $0x1e8] sm:$0xff]
    %v98 = vld [vmem:[#allocation2 + $0x1f0] sm:$0xff]
    %v99 = vld [vmem:[#allocation2 + $0x1f8] sm:$0xff]
    %v100 = vld [vmem:[#allocation5] sm:$0xff]
    %v101 = vld [vmem:[#allocation5 + $0x8] sm:$0xff]
    %v102 = vld [vmem:[#allocation5 + $0x10] sm:$0xff]
    %v103 = vld [vmem:[#allocation5 + $0x18] sm:$0xff]
    %v104 = vld [vmem:[#allocation5 + $0x20] sm:$0xff]
    %v105 = vld [vmem:[#allocation5 + $0x28] sm:$0xff]
    %v106 = vld [vmem:[#allocation5 + $0x30] sm:$0xff]
    %v107 = vld [vmem:[#allocation5 + $0x38] sm:$0xff]
    %v108 = vld [vmem:[#allocation5 + $0x40] sm:$0xff]
    %v109 = vld [vmem:[#allocation5 + $0x48] sm:$0xff]
    %v110 = vld [vmem:[#allocation5 + $0x50] sm:$0xff]
    %v111 = vld [vmem:[#allocation5 + $0x58] sm:$0xff]
    %v112 = vld [vmem:[#allocation5 + $0x60] sm:$0xff]
    %v113 = vld [vmem:[#allocation5 + $0x68] sm:$0xff]
    %v114 = vld [vmem:[#allocation5 + $0x70] sm:$0xff]
    %v115 = vld [vmem:[#allocation5 + $0x78] sm:$0xff]
    %v116 = vld [vmem:[#allocation5 + $0x80] sm:$0xff]
    %v117 = vld [vmem:[#allocation5 + $0x88] sm:$0xff]
    %v118 = vld [vmem:[#allocation5 + $0x90] sm:$0xff]
    %v119 = vld [vmem:[#allocation5 + $0x98] sm:$0xff]
    %v120 = vld [vmem:[#allocation5 + $0xa0] sm:$0xff]
    %v121 = vld [vmem:[#allocation5 + $0xa8] sm:$0xff]
    %v122 = vld [vmem:[#allocation5 + $0xb0] sm:$0xff]
    %v123 = vld [vmem:[#allocation5 + $0xb8] sm:$0xff]
    %v124 = vld [vmem:[#allocation5 + $0xc0] sm:$0xff]
    %v125 = vld [vmem:[#allocation5 + $0xc8] sm:$0xff]
    %v126 = vld [vmem:[#allocation5 + $0xd0] sm:$0xff]
    %v127 = vld [vmem:[#allocation5 + $0xd8] sm:$0xff]
    %v128 = vld [vmem:[#allocation5 + $0xe0] sm:$0xff]
    %v129 = vld [vmem:[#allocation5 + $0xe8] sm:$0xff]
    %v130 = vld [vmem:[#allocation5 + $0xf0] sm:$0xff]
    %v131 = vld [vmem:[#allocation5 + $0xf8] sm:$0xff]
    %v132 = vld [vmem:[#allocation5 + $0x100] sm:$0xff]
    %v133 = vld [vmem:[#allocation5 + $0x108] sm:$0xff]
    %v134 = vld [vmem:[#allocation5 + $0x110] sm:$0xff]
    %v135 = vld [vmem:[#allocation5 + $0x118] sm:$0xff]
    %v136 = vld [vmem:[#allocation5 + $0x120] sm:$0xff]
    %v137 = vld [vmem:[#allocation5 + $0x128] sm:$0xff]
    %v138 = vld [vmem:[#allocation5 + $0x130] sm:$0xff]
    %v139 = vld [vmem:[#allocation5 + $0x138] sm:$0xff]
    %v140 = vld [vmem:[#allocation5 + $0x140] sm:$0xff]
    %v141 = vld [vmem:[#allocation5 + $0x148] sm:$0xff]
    %v142 = vld [vmem:[#allocation5 + $0x150] sm:$0xff]
    %v143 = vld [vmem:[#allocation5 + $0x158] sm:$0xff]
    %v144 = vld [vmem:[#allocation5 + $0x160] sm:$0xff]
    %v145 = vld [vmem:[#allocation5 + $0x168] sm:$0xff]
    %v146 = vld [vmem:[#allocation5 + $0x170] sm:$0xff]
    %v147 = vld [vmem:[#allocation5 + $0x178] sm:$0xff]
    %v148 = vld [vmem:[#allocation5 + $0x180] sm:$0xff]
    %v149 = vld [vmem:[#allocation5 + $0x188] sm:$0xff]
    %v150 = vld [vmem:[#allocation5 + $0x190] sm:$0xff]
    %v151 = vld [vmem:[#allocation5 + $0x198] sm:$0xff]
    %v152 = vld [vmem:[#allocation5 + $0x1a0] sm:$0xff]
    %v153 = vld [vmem:[#allocation5 + $0x1a8] sm:$0xff]
    %v154 = vld [vmem:[#allocation5 + $0x1b0] sm:$0xff]
    %v155 = vld [vmem:[#allocation5 + $0x1b8] sm:$0xff]
    %v156 = vld [vmem:[#allocation5 + $0x1c0] sm:$0xff]
    %v157 = vld [vmem:[#allocation5 + $0x1c8] sm:$0xff]
    %v158 = vld [vmem:[#allocation5 + $0x1d0] sm:$0xff]
    %v159 = vld [vmem:[#allocation5 + $0x1d8] sm:$0xff]
    %v160 = vld [vmem:[#allocation5 + $0x1e0] sm:$0xff]
    %v161 = vld [vmem:[#allocation5 + $0x1e8] sm:$0xff]
    %v162 = vld [vmem:[#allocation5 + $0x1f0] sm:$0xff]
    %v163 = vld [vmem:[#allocation5 + $0x1f8] sm:$0xff]
    %v228 = vlaneseq
    %v229 = vshrl.u32 %v228, 7
    %v230 = vsub.s32 0, %v229
    %v231 = vrot.slane %v100, %v230
    %v232 = vlaneseq
    %v233 = vshrl.u32 %v232, 7
    %v234 = vsub.s32 2, %v233
    %v235 = vrot.slane %v100, %v234
    %v236 = vlaneseq
    %v237 = vshrl.u32 %v236, 7
    %v238 = vsub.s32 4, %v237
    %v239 = vrot.slane %v100, %v238
    %v240 = vlaneseq
    %v241 = vshrl.u32 %v240, 7
    %v242 = vsub.s32 6, %v241
    %v243 = vrot.slane %v100, %v242
    %v244 = vlaneseq
    %v245 = vshrl.u32 %v244, 7
    %v246 = vsub.s32 0, %v245
    %v247 = vrot.slane %v101, %v246
    %v248 = vlaneseq
    %v249 = vshrl.u32 %v248, 7
    %v250 = vsub.s32 2, %v249
    %v251 = vrot.slane %v101, %v250
    %v252 = vlaneseq
    %v253 = vshrl.u32 %v252, 7
    %v254 = vsub.s32 4, %v253
    %v255 = vrot.slane %v101, %v254
    %v256 = vlaneseq
    %v257 = vshrl.u32 %v256, 7
    %v258 = vsub.s32 6, %v257
    %v259 = vrot.slane %v101, %v258
    %v260 = vlaneseq
    %v261 = vshrl.u32 %v260, 7
    %v262 = vsub.s32 0, %v261
    %v263 = vrot.slane %v102, %v262
    %v264 = vlaneseq
    %v265 = vshrl.u32 %v264, 7
    %v266 = vsub.s32 2, %v265
    %v267 = vrot.slane %v102, %v266
    %v268 = vlaneseq
    %v269 = vshrl.u32 %v268, 7
    %v270 = vsub.s32 4, %v269
    %v271 = vrot.slane %v102, %v270
    %v272 = vlaneseq
    %v273 = vshrl.u32 %v272, 7
    %v274 = vsub.s32 6, %v273
    %v275 = vrot.slane %v102, %v274
    %v276 = vlaneseq
    %v277 = vshrl.u32 %v276, 7
    %v278 = vsub.s32 0, %v277
    %v279 = vrot.slane %v103, %v278
    %v280 = vlaneseq
    %v281 = vshrl.u32 %v280, 7
    %v282 = vsub.s32 2, %v281
    %v283 = vrot.slane %v103, %v282
    %v284 = vlaneseq
    %v285 = vshrl.u32 %v284, 7
    %v286 = vsub.s32 4, %v285
    %v287 = vrot.slane %v103, %v286
    %v288 = vlaneseq
    %v289 = vshrl.u32 %v288, 7
    %v290 = vsub.s32 6, %v289
    %v291 = vrot.slane %v103, %v290
    %v292 = vlaneseq
    %v293 = vshrl.u32 %v292, 7
    %v294 = vsub.s32 0, %v293
    %v295 = vrot.slane %v104, %v294
    %v296 = vlaneseq
    %v297 = vshrl.u32 %v296, 7
    %v298 = vsub.s32 2, %v297
    %v299 = vrot.slane %v104, %v298
    %v300 = vlaneseq
    %v301 = vshrl.u32 %v300, 7
    %v302 = vsub.s32 4, %v301
    %v303 = vrot.slane %v104, %v302
    %v304 = vlaneseq
    %v305 = vshrl.u32 %v304, 7
    %v306 = vsub.s32 6, %v305
    %v307 = vrot.slane %v104, %v306
    %v308 = vlaneseq
    %v309 = vshrl.u32 %v308, 7
    %v310 = vsub.s32 0, %v309
    %v311 = vrot.slane %v105, %v310
    %v312 = vlaneseq
    %v313 = vshrl.u32 %v312, 7
    %v314 = vsub.s32 2, %v313
    %v315 = vrot.slane %v105, %v314
    %v316 = vlaneseq
    %v317 = vshrl.u32 %v316, 7
    %v318 = vsub.s32 4, %v317
    %v319 = vrot.slane %v105, %v318
    %v320 = vlaneseq
    %v321 = vshrl.u32 %v320, 7
    %v322 = vsub.s32 6, %v321
    %v323 = vrot.slane %v105, %v322
    %v324 = vlaneseq
    %v325 = vshrl.u32 %v324, 7
    %v326 = vsub.s32 0, %v325
    %v327 = vrot.slane %v106, %v326
    %v328 = vlaneseq
    %v329 = vshrl.u32 %v328, 7
    %v330 = vsub.s32 2, %v329
    %v331 = vrot.slane %v106, %v330
    %v332 = vlaneseq
    %v333 = vshrl.u32 %v332, 7
    %v334 = vsub.s32 4, %v333
    %v335 = vrot.slane %v106, %v334
    %v336 = vlaneseq
    %v337 = vshrl.u32 %v336, 7
    %v338 = vsub.s32 6, %v337
    %v339 = vrot.slane %v106, %v338
    %v340 = vlaneseq
    %v341 = vshrl.u32 %v340, 7
    %v342 = vsub.s32 0, %v341
    %v343 = vrot.slane %v107, %v342
    %v344 = vlaneseq
    %v345 = vshrl.u32 %v344, 7
    %v346 = vsub.s32 2, %v345
    %v347 = vrot.slane %v107, %v346
    %v348 = vlaneseq
    %v349 = vshrl.u32 %v348, 7
    %v350 = vsub.s32 4, %v349
    %v351 = vrot.slane %v107, %v350
    %v352 = vlaneseq
    %v353 = vshrl.u32 %v352, 7
    %v354 = vsub.s32 6, %v353
    %v355 = vrot.slane %v107, %v354
    %v356 = vlaneseq
    %v357 = vshrl.u32 %v356, 7
    %v358 = vsub.s32 0, %v357
    %v359 = vrot.slane %v108, %v358
    %v360 = vlaneseq
    %v361 = vshrl.u32 %v360, 7
    %v362 = vsub.s32 2, %v361
    %v363 = vrot.slane %v108, %v362
    %v364 = vlaneseq
    %v365 = vshrl.u32 %v364, 7
    %v366 = vsub.s32 4, %v365
    %v367 = vrot.slane %v108, %v366
    %v368 = vlaneseq
    %v369 = vshrl.u32 %v368, 7
    %v370 = vsub.s32 6, %v369
    %v371 = vrot.slane %v108, %v370
    %v372 = vlaneseq
    %v373 = vshrl.u32 %v372, 7
    %v374 = vsub.s32 0, %v373
    %v375 = vrot.slane %v109, %v374
    %v376 = vlaneseq
    %v377 = vshrl.u32 %v376, 7
    %v378 = vsub.s32 2, %v377
    %v379 = vrot.slane %v109, %v378
    %v380 = vlaneseq
    %v381 = vshrl.u32 %v380, 7
    %v382 = vsub.s32 4, %v381
    %v383 = vrot.slane %v109, %v382
    %v384 = vlaneseq
    %v385 = vshrl.u32 %v384, 7
    %v386 = vsub.s32 6, %v385
    %v387 = vrot.slane %v109, %v386
    %v388 = vlaneseq
    %v389 = vshrl.u32 %v388, 7
    %v390 = vsub.s32 0, %v389
    %v391 = vrot.slane %v110, %v390
    %v392 = vlaneseq
    %v393 = vshrl.u32 %v392, 7
    %v394 = vsub.s32 2, %v393
    %v395 = vrot.slane %v110, %v394
    %v396 = vlaneseq
    %v397 = vshrl.u32 %v396, 7
    %v398 = vsub.s32 4, %v397
    %v399 = vrot.slane %v110, %v398
    %v400 = vlaneseq
    %v401 = vshrl.u32 %v400, 7
    %v402 = vsub.s32 6, %v401
    %v403 = vrot.slane %v110, %v402
    %v404 = vlaneseq
    %v405 = vshrl.u32 %v404, 7
    %v406 = vsub.s32 0, %v405
    %v407 = vrot.slane %v111, %v406
    %v408 = vlaneseq
    %v409 = vshrl.u32 %v408, 7
    %v410 = vsub.s32 2, %v409
    %v411 = vrot.slane %v111, %v410
    %v412 = vlaneseq
    %v413 = vshrl.u32 %v412, 7
    %v414 = vsub.s32 4, %v413
    %v415 = vrot.slane %v111, %v414
    %v416 = vlaneseq
    %v417 = vshrl.u32 %v416, 7
    %v418 = vsub.s32 6, %v417
    %v419 = vrot.slane %v111, %v418
    %v420 = vlaneseq
    %v421 = vshrl.u32 %v420, 7
    %v422 = vsub.s32 0, %v421
    %v423 = vrot.slane %v112, %v422
    %v424 = vlaneseq
    %v425 = vshrl.u32 %v424, 7
    %v426 = vsub.s32 2, %v425
    %v427 = vrot.slane %v112, %v426
    %v428 = vlaneseq
    %v429 = vshrl.u32 %v428, 7
    %v430 = vsub.s32 4, %v429
    %v431 = vrot.slane %v112, %v430
    %v432 = vlaneseq
    %v433 = vshrl.u32 %v432, 7
    %v434 = vsub.s32 6, %v433
    %v435 = vrot.slane %v112, %v434
    %v436 = vlaneseq
    %v437 = vshrl.u32 %v436, 7
    %v438 = vsub.s32 0, %v437
    %v439 = vrot.slane %v113, %v438
    %v440 = vlaneseq
    %v441 = vshrl.u32 %v440, 7
    %v442 = vsub.s32 2, %v441
    %v443 = vrot.slane %v113, %v442
    %v444 = vlaneseq
    %v445 = vshrl.u32 %v444, 7
    %v446 = vsub.s32 4, %v445
    %v447 = vrot.slane %v113, %v446
    %v448 = vlaneseq
    %v449 = vshrl.u32 %v448, 7
    %v450 = vsub.s32 6, %v449
    %v451 = vrot.slane %v113, %v450
    %v452 = vlaneseq
    %v453 = vshrl.u32 %v452, 7
    %v454 = vsub.s32 0, %v453
    %v455 = vrot.slane %v114, %v454
    %v456 = vlaneseq
    %v457 = vshrl.u32 %v456, 7
    %v458 = vsub.s32 2, %v457
    %v459 = vrot.slane %v114, %v458
    %v460 = vlaneseq
    %v461 = vshrl.u32 %v460, 7
    %v462 = vsub.s32 4, %v461
    %v463 = vrot.slane %v114, %v462
    %v464 = vlaneseq
    %v465 = vshrl.u32 %v464, 7
    %v466 = vsub.s32 6, %v465
    %v467 = vrot.slane %v114, %v466
    %v468 = vlaneseq
    %v469 = vshrl.u32 %v468, 7
    %v470 = vsub.s32 0, %v469
    %v471 = vrot.slane %v115, %v470
    %v472 = vlaneseq
    %v473 = vshrl.u32 %v472, 7
    %v474 = vsub.s32 2, %v473
    %v475 = vrot.slane %v115, %v474
    %v476 = vlaneseq
    %v477 = vshrl.u32 %v476, 7
    %v478 = vsub.s32 4, %v477
    %v479 = vrot.slane %v115, %v478
    %v480 = vlaneseq
    %v481 = vshrl.u32 %v480, 7
    %v482 = vsub.s32 6, %v481
    %v483 = vrot.slane %v115, %v482
    %v484 = vlaneseq
    %v485 = vshrl.u32 %v484, 7
    %v486 = vsub.s32 0, %v485
    %v487 = vrot.slane %v116, %v486
    %v488 = vlaneseq
    %v489 = vshrl.u32 %v488, 7
    %v490 = vsub.s32 2, %v489
    %v491 = vrot.slane %v116, %v490
    %v492 = vlaneseq
    %v493 = vshrl.u32 %v492, 7
    %v494 = vsub.s32 4, %v493
    %v495 = vrot.slane %v116, %v494
    %v496 = vlaneseq
    %v497 = vshrl.u32 %v496, 7
    %v498 = vsub.s32 6, %v497
    %v499 = vrot.slane %v116, %v498
    %v500 = vlaneseq
    %v501 = vshrl.u32 %v500, 7
    %v502 = vsub.s32 0, %v501
    %v503 = vrot.slane %v117, %v502
    %v504 = vlaneseq
    %v505 = vshrl.u32 %v504, 7
    %v506 = vsub.s32 2, %v505
    %v507 = vrot.slane %v117, %v506
    %v508 = vlaneseq
    %v509 = vshrl.u32 %v508, 7
    %v510 = vsub.s32 4, %v509
    %v511 = vrot.slane %v117, %v510
    %v512 = vlaneseq
    %v513 = vshrl.u32 %v512, 7
    %v514 = vsub.s32 6, %v513
    %v515 = vrot.slane %v117, %v514
    %v516 = vlaneseq
    %v517 = vshrl.u32 %v516, 7
    %v518 = vsub.s32 0, %v517
    %v519 = vrot.slane %v118, %v518
    %v520 = vlaneseq
    %v521 = vshrl.u32 %v520, 7
    %v522 = vsub.s32 2, %v521
    %v523 = vrot.slane %v118, %v522
    %v524 = vlaneseq
    %v525 = vshrl.u32 %v524, 7
    %v526 = vsub.s32 4, %v525
    %v527 = vrot.slane %v118, %v526
    %v528 = vlaneseq
    %v529 = vshrl.u32 %v528, 7
    %v530 = vsub.s32 6, %v529
    %v531 = vrot.slane %v118, %v530
    %v532 = vlaneseq
    %v533 = vshrl.u32 %v532, 7
    %v534 = vsub.s32 0, %v533
    %v535 = vrot.slane %v119, %v534
    %v536 = vlaneseq
    %v537 = vshrl.u32 %v536, 7
    %v538 = vsub.s32 2, %v537
    %v539 = vrot.slane %v119, %v538
    %v540 = vlaneseq
    %v541 = vshrl.u32 %v540, 7
    %v542 = vsub.s32 4, %v541
    %v543 = vrot.slane %v119, %v542
    %v544 = vlaneseq
    %v545 = vshrl.u32 %v544, 7
    %v546 = vsub.s32 6, %v545
    %v547 = vrot.slane %v119, %v546
    %v548 = vlaneseq
    %v549 = vshrl.u32 %v548, 7
    %v550 = vsub.s32 0, %v549
    %v551 = vrot.slane %v120, %v550
    %v552 = vlaneseq
    %v553 = vshrl.u32 %v552, 7
    %v554 = vsub.s32 2, %v553
    %v555 = vrot.slane %v120, %v554
    %v556 = vlaneseq
    %v557 = vshrl.u32 %v556, 7
    %v558 = vsub.s32 4, %v557
    %v559 = vrot.slane %v120, %v558
    %v560 = vlaneseq
    %v561 = vshrl.u32 %v560, 7
    %v562 = vsub.s32 6, %v561
    %v563 = vrot.slane %v120, %v562
    %v564 = vlaneseq
    %v565 = vshrl.u32 %v564, 7
    %v566 = vsub.s32 0, %v565
    %v567 = vrot.slane %v121, %v566
    %v568 = vlaneseq
    %v569 = vshrl.u32 %v568, 7
    %v570 = vsub.s32 2, %v569
    %v571 = vrot.slane %v121, %v570
    %v572 = vlaneseq
    %v573 = vshrl.u32 %v572, 7
    %v574 = vsub.s32 4, %v573
    %v575 = vrot.slane %v121, %v574
    %v576 = vlaneseq
    %v577 = vshrl.u32 %v576, 7
    %v578 = vsub.s32 6, %v577
    %v579 = vrot.slane %v121, %v578
    %v580 = vlaneseq
    %v581 = vshrl.u32 %v580, 7
    %v582 = vsub.s32 0, %v581
    %v583 = vrot.slane %v122, %v582
    %v584 = vlaneseq
    %v585 = vshrl.u32 %v584, 7
    %v586 = vsub.s32 2, %v585
    %v587 = vrot.slane %v122, %v586
    %v588 = vlaneseq
    %v589 = vshrl.u32 %v588, 7
    %v590 = vsub.s32 4, %v589
    %v591 = vrot.slane %v122, %v590
    %v592 = vlaneseq
    %v593 = vshrl.u32 %v592, 7
    %v594 = vsub.s32 6, %v593
    %v595 = vrot.slane %v122, %v594
    %v596 = vlaneseq
    %v597 = vshrl.u32 %v596, 7
    %v598 = vsub.s32 0, %v597
    %v599 = vrot.slane %v123, %v598
    %v600 = vlaneseq
    %v601 = vshrl.u32 %v600, 7
    %v602 = vsub.s32 2, %v601
    %v603 = vrot.slane %v123, %v602
    %v604 = vlaneseq
    %v605 = vshrl.u32 %v604, 7
    %v606 = vsub.s32 4, %v605
    %v607 = vrot.slane %v123, %v606
    %v608 = vlaneseq
    %v609 = vshrl.u32 %v608, 7
    %v610 = vsub.s32 6, %v609
    %v611 = vrot.slane %v123, %v610
    %v612 = vlaneseq
    %v613 = vshrl.u32 %v612, 7
    %v614 = vsub.s32 0, %v613
    %v615 = vrot.slane %v124, %v614
    %v616 = vlaneseq
    %v617 = vshrl.u32 %v616, 7
    %v618 = vsub.s32 2, %v617
    %v619 = vrot.slane %v124, %v618
    %v620 = vlaneseq
    %v621 = vshrl.u32 %v620, 7
    %v622 = vsub.s32 4, %v621
    %v623 = vrot.slane %v124, %v622
    %v624 = vlaneseq
    %v625 = vshrl.u32 %v624, 7
    %v626 = vsub.s32 6, %v625
    %v627 = vrot.slane %v124, %v626
    %v628 = vlaneseq
    %v629 = vshrl.u32 %v628, 7
    %v630 = vsub.s32 0, %v629
    %v631 = vrot.slane %v125, %v630
    %v632 = vlaneseq
    %v633 = vshrl.u32 %v632, 7
    %v634 = vsub.s32 2, %v633
    %v635 = vrot.slane %v125, %v634
    %v636 = vlaneseq
    %v637 = vshrl.u32 %v636, 7
    %v638 = vsub.s32 4, %v637
    %v639 = vrot.slane %v125, %v638
    %v640 = vlaneseq
    %v641 = vshrl.u32 %v640, 7
    %v642 = vsub.s32 6, %v641
    %v643 = vrot.slane %v125, %v642
    %v644 = vlaneseq
    %v645 = vshrl.u32 %v644, 7
    %v646 = vsub.s32 0, %v645
    %v647 = vrot.slane %v126, %v646
    %v648 = vlaneseq
    %v649 = vshrl.u32 %v648, 7
    %v650 = vsub.s32 2, %v649
    %v651 = vrot.slane %v126, %v650
    %v652 = vlaneseq
    %v653 = vshrl.u32 %v652, 7
    %v654 = vsub.s32 4, %v653
    %v655 = vrot.slane %v126, %v654
    %v656 = vlaneseq
    %v657 = vshrl.u32 %v656, 7
    %v658 = vsub.s32 6, %v657
    %v659 = vrot.slane %v126, %v658
    %v660 = vlaneseq
    %v661 = vshrl.u32 %v660, 7
    %v662 = vsub.s32 0, %v661
    %v663 = vrot.slane %v127, %v662
    %v664 = vlaneseq
    %v665 = vshrl.u32 %v664, 7
    %v666 = vsub.s32 2, %v665
    %v667 = vrot.slane %v127, %v666
    %v668 = vlaneseq
    %v669 = vshrl.u32 %v668, 7
    %v670 = vsub.s32 4, %v669
    %v671 = vrot.slane %v127, %v670
    %v672 = vlaneseq
    %v673 = vshrl.u32 %v672, 7
    %v674 = vsub.s32 6, %v673
    %v675 = vrot.slane %v127, %v674
    %v676 = vlaneseq
    %v677 = vshrl.u32 %v676, 7
    %v678 = vsub.s32 0, %v677
    %v679 = vrot.slane %v128, %v678
    %v680 = vlaneseq
    %v681 = vshrl.u32 %v680, 7
    %v682 = vsub.s32 2, %v681
    %v683 = vrot.slane %v128, %v682
    %v684 = vlaneseq
    %v685 = vshrl.u32 %v684, 7
    %v686 = vsub.s32 4, %v685
    %v687 = vrot.slane %v128, %v686
    %v688 = vlaneseq
    %v689 = vshrl.u32 %v688, 7
    %v690 = vsub.s32 6, %v689
    %v691 = vrot.slane %v128, %v690
    %v692 = vlaneseq
    %v693 = vshrl.u32 %v692, 7
    %v694 = vsub.s32 0, %v693
    %v695 = vrot.slane %v129, %v694
    %v696 = vlaneseq
    %v697 = vshrl.u32 %v696, 7
    %v698 = vsub.s32 2, %v697
    %v699 = vrot.slane %v129, %v698
    %v700 = vlaneseq
    %v701 = vshrl.u32 %v700, 7
    %v702 = vsub.s32 4, %v701
    %v703 = vrot.slane %v129, %v702
    %v704 = vlaneseq
    %v705 = vshrl.u32 %v704, 7
    %v706 = vsub.s32 6, %v705
    %v707 = vrot.slane %v129, %v706
    %v708 = vlaneseq
    %v709 = vshrl.u32 %v708, 7
    %v710 = vsub.s32 0, %v709
    %v711 = vrot.slane %v130, %v710
    %v712 = vlaneseq
    %v713 = vshrl.u32 %v712, 7
    %v714 = vsub.s32 2, %v713
    %v715 = vrot.slane %v130, %v714
    %v716 = vlaneseq
    %v717 = vshrl.u32 %v716, 7
    %v718 = vsub.s32 4, %v717
    %v719 = vrot.slane %v130, %v718
    %v720 = vlaneseq
    %v721 = vshrl.u32 %v720, 7
    %v722 = vsub.s32 6, %v721
    %v723 = vrot.slane %v130, %v722
    %v724 = vlaneseq
    %v725 = vshrl.u32 %v724, 7
    %v726 = vsub.s32 0, %v725
    %v727 = vrot.slane %v131, %v726
    %v728 = vlaneseq
    %v729 = vshrl.u32 %v728, 7
    %v730 = vsub.s32 2, %v729
    %v731 = vrot.slane %v131, %v730
    %v732 = vlaneseq
    %v733 = vshrl.u32 %v732, 7
    %v734 = vsub.s32 4, %v733
    %v735 = vrot.slane %v131, %v734
    %v736 = vlaneseq
    %v737 = vshrl.u32 %v736, 7
    %v738 = vsub.s32 6, %v737
    %v739 = vrot.slane %v131, %v738
    %v740 = vlaneseq
    %v741 = vshrl.u32 %v740, 7
    %v742 = vsub.s32 0, %v741
    %v743 = vrot.slane %v132, %v742
    %v744 = vlaneseq
    %v745 = vshrl.u32 %v744, 7
    %v746 = vsub.s32 2, %v745
    %v747 = vrot.slane %v132, %v746
    %v748 = vlaneseq
    %v749 = vshrl.u32 %v748, 7
    %v750 = vsub.s32 4, %v749
    %v751 = vrot.slane %v132, %v750
    %v752 = vlaneseq
    %v753 = vshrl.u32 %v752, 7
    %v754 = vsub.s32 6, %v753
    %v755 = vrot.slane %v132, %v754
    %v756 = vlaneseq
    %v757 = vshrl.u32 %v756, 7
    %v758 = vsub.s32 0, %v757
    %v759 = vrot.slane %v133, %v758
    %v760 = vlaneseq
    %v761 = vshrl.u32 %v760, 7
    %v762 = vsub.s32 2, %v761
    %v763 = vrot.slane %v133, %v762
    %v764 = vlaneseq
    %v765 = vshrl.u32 %v764, 7
    %v766 = vsub.s32 4, %v765
    %v767 = vrot.slane %v133, %v766
    %v768 = vlaneseq
    %v769 = vshrl.u32 %v768, 7
    %v770 = vsub.s32 6, %v769
    %v771 = vrot.slane %v133, %v770
    %v772 = vlaneseq
    %v773 = vshrl.u32 %v772, 7
    %v774 = vsub.s32 0, %v773
    %v775 = vrot.slane %v134, %v774
    %v776 = vlaneseq
    %v777 = vshrl.u32 %v776, 7
    %v778 = vsub.s32 2, %v777
    %v779 = vrot.slane %v134, %v778
    %v780 = vlaneseq
    %v781 = vshrl.u32 %v780, 7
    %v782 = vsub.s32 4, %v781
    %v783 = vrot.slane %v134, %v782
    %v784 = vlaneseq
    %v785 = vshrl.u32 %v784, 7
    %v786 = vsub.s32 6, %v785
    %v787 = vrot.slane %v134, %v786
    %v788 = vlaneseq
    %v789 = vshrl.u32 %v788, 7
    %v790 = vsub.s32 0, %v789
    %v791 = vrot.slane %v135, %v790
    %v792 = vlaneseq
    %v793 = vshrl.u32 %v792, 7
    %v794 = vsub.s32 2, %v793
    %v795 = vrot.slane %v135, %v794
    %v796 = vlaneseq
    %v797 = vshrl.u32 %v796, 7
    %v798 = vsub.s32 4, %v797
    %v799 = vrot.slane %v135, %v798
    %v800 = vlaneseq
    %v801 = vshrl.u32 %v800, 7
    %v802 = vsub.s32 6, %v801
    %v803 = vrot.slane %v135, %v802
    %v804 = vlaneseq
    %v805 = vshrl.u32 %v804, 7
    %v806 = vsub.s32 0, %v805
    %v807 = vrot.slane %v136, %v806
    %v808 = vlaneseq
    %v809 = vshrl.u32 %v808, 7
    %v810 = vsub.s32 2, %v809
    %v811 = vrot.slane %v136, %v810
    %v812 = vlaneseq
    %v813 = vshrl.u32 %v812, 7
    %v814 = vsub.s32 4, %v813
    %v815 = vrot.slane %v136, %v814
    %v816 = vlaneseq
    %v817 = vshrl.u32 %v816, 7
    %v818 = vsub.s32 6, %v817
    %v819 = vrot.slane %v136, %v818
    %v820 = vlaneseq
    %v821 = vshrl.u32 %v820, 7
    %v822 = vsub.s32 0, %v821
    %v823 = vrot.slane %v137, %v822
    %v824 = vlaneseq
    %v825 = vshrl.u32 %v824, 7
    %v826 = vsub.s32 2, %v825
    %v827 = vrot.slane %v137, %v826
    %v828 = vlaneseq
    %v829 = vshrl.u32 %v828, 7
    %v830 = vsub.s32 4, %v829
    %v831 = vrot.slane %v137, %v830
    %v832 = vlaneseq
    %v833 = vshrl.u32 %v832, 7
    %v834 = vsub.s32 6, %v833
    %v835 = vrot.slane %v137, %v834
    %v836 = vlaneseq
    %v837 = vshrl.u32 %v836, 7
    %v838 = vsub.s32 0, %v837
    %v839 = vrot.slane %v138, %v838
    %v840 = vlaneseq
    %v841 = vshrl.u32 %v840, 7
    %v842 = vsub.s32 2, %v841
    %v843 = vrot.slane %v138, %v842
    %v844 = vlaneseq
    %v845 = vshrl.u32 %v844, 7
    %v846 = vsub.s32 4, %v845
    %v847 = vrot.slane %v138, %v846
    %v848 = vlaneseq
    %v849 = vshrl.u32 %v848, 7
    %v850 = vsub.s32 6, %v849
    %v851 = vrot.slane %v138, %v850
    %v852 = vlaneseq
    %v853 = vshrl.u32 %v852, 7
    %v854 = vsub.s32 0, %v853
    %v855 = vrot.slane %v139, %v854
    %v856 = vlaneseq
    %v857 = vshrl.u32 %v856, 7
    %v858 = vsub.s32 2, %v857
    %v859 = vrot.slane %v139, %v858
    %v860 = vlaneseq
    %v861 = vshrl.u32 %v860, 7
    %v862 = vsub.s32 4, %v861
    %v863 = vrot.slane %v139, %v862
    %v864 = vlaneseq
    %v865 = vshrl.u32 %v864, 7
    %v866 = vsub.s32 6, %v865
    %v867 = vrot.slane %v139, %v866
    %v868 = vlaneseq
    %v869 = vshrl.u32 %v868, 7
    %v870 = vsub.s32 0, %v869
    %v871 = vrot.slane %v140, %v870
    %v872 = vlaneseq
    %v873 = vshrl.u32 %v872, 7
    %v874 = vsub.s32 2, %v873
    %v875 = vrot.slane %v140, %v874
    %v876 = vlaneseq
    %v877 = vshrl.u32 %v876, 7
    %v878 = vsub.s32 4, %v877
    %v879 = vrot.slane %v140, %v878
    %v880 = vlaneseq
    %v881 = vshrl.u32 %v880, 7
    %v882 = vsub.s32 6, %v881
    %v883 = vrot.slane %v140, %v882
    %v884 = vlaneseq
    %v885 = vshrl.u32 %v884, 7
    %v886 = vsub.s32 0, %v885
    %v887 = vrot.slane %v141, %v886
    %v888 = vlaneseq
    %v889 = vshrl.u32 %v888, 7
    %v890 = vsub.s32 2, %v889
    %v891 = vrot.slane %v141, %v890
    %v892 = vlaneseq
    %v893 = vshrl.u32 %v892, 7
    %v894 = vsub.s32 4, %v893
    %v895 = vrot.slane %v141, %v894
    %v896 = vlaneseq
    %v897 = vshrl.u32 %v896, 7
    %v898 = vsub.s32 6, %v897
    %v899 = vrot.slane %v141, %v898
    %v900 = vlaneseq
    %v901 = vshrl.u32 %v900, 7
    %v902 = vsub.s32 0, %v901
    %v903 = vrot.slane %v142, %v902
    %v904 = vlaneseq
    %v905 = vshrl.u32 %v904, 7
    %v906 = vsub.s32 2, %v905
    %v907 = vrot.slane %v142, %v906
    %v908 = vlaneseq
    %v909 = vshrl.u32 %v908, 7
    %v910 = vsub.s32 4, %v909
    %v911 = vrot.slane %v142, %v910
    %v912 = vlaneseq
    %v913 = vshrl.u32 %v912, 7
    %v914 = vsub.s32 6, %v913
    %v915 = vrot.slane %v142, %v914
    %v916 = vlaneseq
    %v917 = vshrl.u32 %v916, 7
    %v918 = vsub.s32 0, %v917
    %v919 = vrot.slane %v143, %v918
    %v920 = vlaneseq
    %v921 = vshrl.u32 %v920, 7
    %v922 = vsub.s32 2, %v921
    %v923 = vrot.slane %v143, %v922
    %v924 = vlaneseq
    %v925 = vshrl.u32 %v924, 7
    %v926 = vsub.s32 4, %v925
    %v927 = vrot.slane %v143, %v926
    %v928 = vlaneseq
    %v929 = vshrl.u32 %v928, 7
    %v930 = vsub.s32 6, %v929
    %v931 = vrot.slane %v143, %v930
    %v932 = vlaneseq
    %v933 = vshrl.u32 %v932, 7
    %v934 = vsub.s32 0, %v933
    %v935 = vrot.slane %v144, %v934
    %v936 = vlaneseq
    %v937 = vshrl.u32 %v936, 7
    %v938 = vsub.s32 2, %v937
    %v939 = vrot.slane %v144, %v938
    %v940 = vlaneseq
    %v941 = vshrl.u32 %v940, 7
    %v942 = vsub.s32 4, %v941
    %v943 = vrot.slane %v144, %v942
    %v944 = vlaneseq
    %v945 = vshrl.u32 %v944, 7
    %v946 = vsub.s32 6, %v945
    %v947 = vrot.slane %v144, %v946
    %v948 = vlaneseq
    %v949 = vshrl.u32 %v948, 7
    %v950 = vsub.s32 0, %v949
    %v951 = vrot.slane %v145, %v950
    %v952 = vlaneseq
    %v953 = vshrl.u32 %v952, 7
    %v954 = vsub.s32 2, %v953
    %v955 = vrot.slane %v145, %v954
    %v956 = vlaneseq
    %v957 = vshrl.u32 %v956, 7
    %v958 = vsub.s32 4, %v957
    %v959 = vrot.slane %v145, %v958
    %v960 = vlaneseq
    %v961 = vshrl.u32 %v960, 7
    %v962 = vsub.s32 6, %v961
    %v963 = vrot.slane %v145, %v962
    %v964 = vlaneseq
    %v965 = vshrl.u32 %v964, 7
    %v966 = vsub.s32 0, %v965
    %v967 = vrot.slane %v146, %v966
    %v968 = vlaneseq
    %v969 = vshrl.u32 %v968, 7
    %v970 = vsub.s32 2, %v969
    %v971 = vrot.slane %v146, %v970
    %v972 = vlaneseq
    %v973 = vshrl.u32 %v972, 7
    %v974 = vsub.s32 4, %v973
    %v975 = vrot.slane %v146, %v974
    %v976 = vlaneseq
    %v977 = vshrl.u32 %v976, 7
    %v978 = vsub.s32 6, %v977
    %v979 = vrot.slane %v146, %v978
    %v980 = vlaneseq
    %v981 = vshrl.u32 %v980, 7
    %v982 = vsub.s32 0, %v981
    %v983 = vrot.slane %v147, %v982
    %v984 = vlaneseq
    %v985 = vshrl.u32 %v984, 7
    %v986 = vsub.s32 2, %v985
    %v987 = vrot.slane %v147, %v986
    %v988 = vlaneseq
    %v989 = vshrl.u32 %v988, 7
    %v990 = vsub.s32 4, %v989
    %v991 = vrot.slane %v147, %v990
    %v992 = vlaneseq
    %v993 = vshrl.u32 %v992, 7
    %v994 = vsub.s32 6, %v993
    %v995 = vrot.slane %v147, %v994
    %v996 = vlaneseq
    %v997 = vshrl.u32 %v996, 7
    %v998 = vsub.s32 0, %v997
    %v999 = vrot.slane %v148, %v998
    %v1000 = vlaneseq
    %v1001 = vshrl.u32 %v1000, 7
    %v1002 = vsub.s32 2, %v1001
    %v1003 = vrot.slane %v148, %v1002
    %v1004 = vlaneseq
    %v1005 = vshrl.u32 %v1004, 7
    %v1006 = vsub.s32 4, %v1005
    %v1007 = vrot.slane %v148, %v1006
    %v1008 = vlaneseq
    %v1009 = vshrl.u32 %v1008, 7
    %v1010 = vsub.s32 6, %v1009
    %v1011 = vrot.slane %v148, %v1010
    %v1012 = vlaneseq
    %v1013 = vshrl.u32 %v1012, 7
    %v1014 = vsub.s32 0, %v1013
    %v1015 = vrot.slane %v149, %v1014
    %v1016 = vlaneseq
    %v1017 = vshrl.u32 %v1016, 7
    %v1018 = vsub.s32 2, %v1017
    %v1019 = vrot.slane %v149, %v1018
    %v1020 = vlaneseq
    %v1021 = vshrl.u32 %v1020, 7
    %v1022 = vsub.s32 4, %v1021
    %v1023 = vrot.slane %v149, %v1022
    %v1024 = vlaneseq
    %v1025 = vshrl.u32 %v1024, 7
    %v1026 = vsub.s32 6, %v1025
    %v1027 = vrot.slane %v149, %v1026
    %v1028 = vlaneseq
    %v1029 = vshrl.u32 %v1028, 7
    %v1030 = vsub.s32 0, %v1029
    %v1031 = vrot.slane %v150, %v1030
    %v1032 = vlaneseq
    %v1033 = vshrl.u32 %v1032, 7
    %v1034 = vsub.s32 2, %v1033
    %v1035 = vrot.slane %v150, %v1034
    %v1036 = vlaneseq
    %v1037 = vshrl.u32 %v1036, 7
    %v1038 = vsub.s32 4, %v1037
    %v1039 = vrot.slane %v150, %v1038
    %v1040 = vlaneseq
    %v1041 = vshrl.u32 %v1040, 7
    %v1042 = vsub.s32 6, %v1041
    %v1043 = vrot.slane %v150, %v1042
    %v1044 = vlaneseq
    %v1045 = vshrl.u32 %v1044, 7
    %v1046 = vsub.s32 0, %v1045
    %v1047 = vrot.slane %v151, %v1046
    %v1048 = vlaneseq
    %v1049 = vshrl.u32 %v1048, 7
    %v1050 = vsub.s32 2, %v1049
    %v1051 = vrot.slane %v151, %v1050
    %v1052 = vlaneseq
    %v1053 = vshrl.u32 %v1052, 7
    %v1054 = vsub.s32 4, %v1053
    %v1055 = vrot.slane %v151, %v1054
    %v1056 = vlaneseq
    %v1057 = vshrl.u32 %v1056, 7
    %v1058 = vsub.s32 6, %v1057
    %v1059 = vrot.slane %v151, %v1058
    %v1060 = vlaneseq
    %v1061 = vshrl.u32 %v1060, 7
    %v1062 = vsub.s32 0, %v1061
    %v1063 = vrot.slane %v152, %v1062
    %v1064 = vlaneseq
    %v1065 = vshrl.u32 %v1064, 7
    %v1066 = vsub.s32 2, %v1065
    %v1067 = vrot.slane %v152, %v1066
    %v1068 = vlaneseq
    %v1069 = vshrl.u32 %v1068, 7
    %v1070 = vsub.s32 4, %v1069
    %v1071 = vrot.slane %v152, %v1070
    %v1072 = vlaneseq
    %v1073 = vshrl.u32 %v1072, 7
    %v1074 = vsub.s32 6, %v1073
    %v1075 = vrot.slane %v152, %v1074
    %v1076 = vlaneseq
    %v1077 = vshrl.u32 %v1076, 7
    %v1078 = vsub.s32 0, %v1077
    %v1079 = vrot.slane %v153, %v1078
    %v1080 = vlaneseq
    %v1081 = vshrl.u32 %v1080, 7
    %v1082 = vsub.s32 2, %v1081
    %v1083 = vrot.slane %v153, %v1082
    %v1084 = vlaneseq
    %v1085 = vshrl.u32 %v1084, 7
    %v1086 = vsub.s32 4, %v1085
    %v1087 = vrot.slane %v153, %v1086
    %v1088 = vlaneseq
    %v1089 = vshrl.u32 %v1088, 7
    %v1090 = vsub.s32 6, %v1089
    %v1091 = vrot.slane %v153, %v1090
    %v1092 = vlaneseq
    %v1093 = vshrl.u32 %v1092, 7
    %v1094 = vsub.s32 0, %v1093
    %v1095 = vrot.slane %v154, %v1094
    %v1096 = vlaneseq
    %v1097 = vshrl.u32 %v1096, 7
    %v1098 = vsub.s32 2, %v1097
    %v1099 = vrot.slane %v154, %v1098
    %v1100 = vlaneseq
    %v1101 = vshrl.u32 %v1100, 7
    %v1102 = vsub.s32 4, %v1101
    %v1103 = vrot.slane %v154, %v1102
    %v1104 = vlaneseq
    %v1105 = vshrl.u32 %v1104, 7
    %v1106 = vsub.s32 6, %v1105
    %v1107 = vrot.slane %v154, %v1106
    %v1108 = vlaneseq
    %v1109 = vshrl.u32 %v1108, 7
    %v1110 = vsub.s32 0, %v1109
    %v1111 = vrot.slane %v155, %v1110
    %v1112 = vlaneseq
    %v1113 = vshrl.u32 %v1112, 7
    %v1114 = vsub.s32 2, %v1113
    %v1115 = vrot.slane %v155, %v1114
    %v1116 = vlaneseq
    %v1117 = vshrl.u32 %v1116, 7
    %v1118 = vsub.s32 4, %v1117
    %v1119 = vrot.slane %v155, %v1118
    %v1120 = vlaneseq
    %v1121 = vshrl.u32 %v1120, 7
    %v1122 = vsub.s32 6, %v1121
    %v1123 = vrot.slane %v155, %v1122
    %v1124 = vlaneseq
    %v1125 = vshrl.u32 %v1124, 7
    %v1126 = vsub.s32 0, %v1125
    %v1127 = vrot.slane %v156, %v1126
    %v1128 = vlaneseq
    %v1129 = vshrl.u32 %v1128, 7
    %v1130 = vsub.s32 2, %v1129
    %v1131 = vrot.slane %v156, %v1130
    %v1132 = vlaneseq
    %v1133 = vshrl.u32 %v1132, 7
    %v1134 = vsub.s32 4, %v1133
    %v1135 = vrot.slane %v156, %v1134
    %v1136 = vlaneseq
    %v1137 = vshrl.u32 %v1136, 7
    %v1138 = vsub.s32 6, %v1137
    %v1139 = vrot.slane %v156, %v1138
    %v1140 = vlaneseq
    %v1141 = vshrl.u32 %v1140, 7
    %v1142 = vsub.s32 0, %v1141
    %v1143 = vrot.slane %v157, %v1142
    %v1144 = vlaneseq
    %v1145 = vshrl.u32 %v1144, 7
    %v1146 = vsub.s32 2, %v1145
    %v1147 = vrot.slane %v157, %v1146
    %v1148 = vlaneseq
    %v1149 = vshrl.u32 %v1148, 7
    %v1150 = vsub.s32 4, %v1149
    %v1151 = vrot.slane %v157, %v1150
    %v1152 = vlaneseq
    %v1153 = vshrl.u32 %v1152, 7
    %v1154 = vsub.s32 6, %v1153
    %v1155 = vrot.slane %v157, %v1154
    %v1156 = vlaneseq
    %v1157 = vshrl.u32 %v1156, 7
    %v1158 = vsub.s32 0, %v1157
    %v1159 = vrot.slane %v158, %v1158
    %v1160 = vlaneseq
    %v1161 = vshrl.u32 %v1160, 7
    %v1162 = vsub.s32 2, %v1161
    %v1163 = vrot.slane %v158, %v1162
    %v1164 = vlaneseq
    %v1165 = vshrl.u32 %v1164, 7
    %v1166 = vsub.s32 4, %v1165
    %v1167 = vrot.slane %v158, %v1166
    %v1168 = vlaneseq
    %v1169 = vshrl.u32 %v1168, 7
    %v1170 = vsub.s32 6, %v1169
    %v1171 = vrot.slane %v158, %v1170
    %v1172 = vlaneseq
    %v1173 = vshrl.u32 %v1172, 7
    %v1174 = vsub.s32 0, %v1173
    %v1175 = vrot.slane %v159, %v1174
    %v1176 = vlaneseq
    %v1177 = vshrl.u32 %v1176, 7
    %v1178 = vsub.s32 2, %v1177
    %v1179 = vrot.slane %v159, %v1178
    %v1180 = vlaneseq
    %v1181 = vshrl.u32 %v1180, 7
    %v1182 = vsub.s32 4, %v1181
    %v1183 = vrot.slane %v159, %v1182
    %v1184 = vlaneseq
    %v1185 = vshrl.u32 %v1184, 7
    %v1186 = vsub.s32 6, %v1185
    %v1187 = vrot.slane %v159, %v1186
    %v1188 = vlaneseq
    %v1189 = vshrl.u32 %v1188, 7
    %v1190 = vsub.s32 0, %v1189
    %v1191 = vrot.slane %v160, %v1190
    %v1192 = vlaneseq
    %v1193 = vshrl.u32 %v1192, 7
    %v1194 = vsub.s32 2, %v1193
    %v1195 = vrot.slane %v160, %v1194
    %v1196 = vlaneseq
    %v1197 = vshrl.u32 %v1196, 7
    %v1198 = vsub.s32 4, %v1197
    %v1199 = vrot.slane %v160, %v1198
    %v1200 = vlaneseq
    %v1201 = vshrl.u32 %v1200, 7
    %v1202 = vsub.s32 6, %v1201
    %v1203 = vrot.slane %v160, %v1202
    %v1204 = vlaneseq
    %v1205 = vshrl.u32 %v1204, 7
    %v1206 = vsub.s32 0, %v1205
    %v1207 = vrot.slane %v161, %v1206
    %v1208 = vlaneseq
    %v1209 = vshrl.u32 %v1208, 7
    %v1210 = vsub.s32 2, %v1209
    %v1211 = vrot.slane %v161, %v1210
    %v1212 = vlaneseq
    %v1213 = vshrl.u32 %v1212, 7
    %v1214 = vsub.s32 4, %v1213
    %v1215 = vrot.slane %v161, %v1214
    %v1216 = vlaneseq
    %v1217 = vshrl.u32 %v1216, 7
    %v1218 = vsub.s32 6, %v1217
    %v1219 = vrot.slane %v161, %v1218
    %v1220 = vlaneseq
    %v1221 = vshrl.u32 %v1220, 7
    %v1222 = vsub.s32 0, %v1221
    %v1223 = vrot.slane %v162, %v1222
    %v1224 = vlaneseq
    %v1225 = vshrl.u32 %v1224, 7
    %v1226 = vsub.s32 2, %v1225
    %v1227 = vrot.slane %v162, %v1226
    %v1228 = vlaneseq
    %v1229 = vshrl.u32 %v1228, 7
    %v1230 = vsub.s32 4, %v1229
    %v1231 = vrot.slane %v162, %v1230
    %v1232 = vlaneseq
    %v1233 = vshrl.u32 %v1232, 7
    %v1234 = vsub.s32 6, %v1233
    %v1235 = vrot.slane %v162, %v1234
    %v1236 = vlaneseq
    %v1237 = vshrl.u32 %v1236, 7
    %v1238 = vsub.s32 0, %v1237
    %v1239 = vrot.slane %v163, %v1238
    %v1240 = vlaneseq
    %v1241 = vshrl.u32 %v1240, 7
    %v1242 = vsub.s32 2, %v1241
    %v1243 = vrot.slane %v163, %v1242
    %v1244 = vlaneseq
    %v1245 = vshrl.u32 %v1244, 7
    %v1246 = vsub.s32 4, %v1245
    %v1247 = vrot.slane %v163, %v1246
    %v1248 = vlaneseq
    %v1249 = vshrl.u32 %v1248, 7
    %v1250 = vsub.s32 6, %v1249
    %v1251 = vrot.slane %v163, %v1250
    %v1508 = vlaneseq
    %v1509 = vshrl.u32 %v1508, 7
    %v1510 = vsub.s32 0, %v1509
    %v1511 = vrot.slane %v231, %v1510
    %v1512 = vlaneseq
    %v1513 = vshrl.u32 %v1512, 7
    %v1514 = vsub.s32 0, %v1513
    %v1515 = vrot.slane %v235, %v1514
    %v1516 = vlaneseq
    %v1517 = vshrl.u32 %v1516, 7
    %v1518 = vsub.s32 0, %v1517
    %v1519 = vrot.slane %v239, %v1518
    %v1520 = vlaneseq
    %v1521 = vshrl.u32 %v1520, 7
    %v1522 = vsub.s32 0, %v1521
    %v1523 = vrot.slane %v243, %v1522
    %v1524 = vlaneseq
    %v1525 = vshrl.u32 %v1524, 7
    %v1526 = vsub.s32 0, %v1525
    %v1527 = vrot.slane %v247, %v1526
    %v1528 = vlaneseq
    %v1529 = vshrl.u32 %v1528, 7
    %v1530 = vsub.s32 0, %v1529
    %v1531 = vrot.slane %v251, %v1530
    %v1532 = vlaneseq
    %v1533 = vshrl.u32 %v1532, 7
    %v1534 = vsub.s32 0, %v1533
    %v1535 = vrot.slane %v255, %v1534
    %v1536 = vlaneseq
    %v1537 = vshrl.u32 %v1536, 7
    %v1538 = vsub.s32 0, %v1537
    %v1539 = vrot.slane %v259, %v1538
    %v1540 = vlaneseq
    %v1541 = vshrl.u32 %v1540, 7
    %v1542 = vsub.s32 0, %v1541
    %v1543 = vrot.slane %v263, %v1542
    %v1544 = vlaneseq
    %v1545 = vshrl.u32 %v1544, 7
    %v1546 = vsub.s32 0, %v1545
    %v1547 = vrot.slane %v267, %v1546
    %v1548 = vlaneseq
    %v1549 = vshrl.u32 %v1548, 7
    %v1550 = vsub.s32 0, %v1549
    %v1551 = vrot.slane %v271, %v1550
    %v1552 = vlaneseq
    %v1553 = vshrl.u32 %v1552, 7
    %v1554 = vsub.s32 0, %v1553
    %v1555 = vrot.slane %v275, %v1554
    %v1556 = vlaneseq
    %v1557 = vshrl.u32 %v1556, 7
    %v1558 = vsub.s32 0, %v1557
    %v1559 = vrot.slane %v279, %v1558
    %v1560 = vlaneseq
    %v1561 = vshrl.u32 %v1560, 7
    %v1562 = vsub.s32 0, %v1561
    %v1563 = vrot.slane %v283, %v1562
    %v1564 = vlaneseq
    %v1565 = vshrl.u32 %v1564, 7
    %v1566 = vsub.s32 0, %v1565
    %v1567 = vrot.slane %v287, %v1566
    %v1568 = vlaneseq
    %v1569 = vshrl.u32 %v1568, 7
    %v1570 = vsub.s32 0, %v1569
    %v1571 = vrot.slane %v291, %v1570
    %v1572 = vlaneseq
    %v1573 = vshrl.u32 %v1572, 7
    %v1574 = vsub.s32 0, %v1573
    %v1575 = vrot.slane %v295, %v1574
    %v1576 = vlaneseq
    %v1577 = vshrl.u32 %v1576, 7
    %v1578 = vsub.s32 0, %v1577
    %v1579 = vrot.slane %v299, %v1578
    %v1580 = vlaneseq
    %v1581 = vshrl.u32 %v1580, 7
    %v1582 = vsub.s32 0, %v1581
    %v1583 = vrot.slane %v303, %v1582
    %v1584 = vlaneseq
    %v1585 = vshrl.u32 %v1584, 7
    %v1586 = vsub.s32 0, %v1585
    %v1587 = vrot.slane %v307, %v1586
    %v1588 = vlaneseq
    %v1589 = vshrl.u32 %v1588, 7
    %v1590 = vsub.s32 0, %v1589
    %v1591 = vrot.slane %v311, %v1590
    %v1592 = vlaneseq
    %v1593 = vshrl.u32 %v1592, 7
    %v1594 = vsub.s32 0, %v1593
    %v1595 = vrot.slane %v315, %v1594
    %v1596 = vlaneseq
    %v1597 = vshrl.u32 %v1596, 7
    %v1598 = vsub.s32 0, %v1597
    %v1599 = vrot.slane %v319, %v1598
    %v1600 = vlaneseq
    %v1601 = vshrl.u32 %v1600, 7
    %v1602 = vsub.s32 0, %v1601
    %v1603 = vrot.slane %v323, %v1602
    %v1604 = vlaneseq
    %v1605 = vshrl.u32 %v1604, 7
    %v1606 = vsub.s32 0, %v1605
    %v1607 = vrot.slane %v327, %v1606
    %v1608 = vlaneseq
    %v1609 = vshrl.u32 %v1608, 7
    %v1610 = vsub.s32 0, %v1609
    %v1611 = vrot.slane %v331, %v1610
    %v1612 = vlaneseq
    %v1613 = vshrl.u32 %v1612, 7
    %v1614 = vsub.s32 0, %v1613
    %v1615 = vrot.slane %v335, %v1614
    %v1616 = vlaneseq
    %v1617 = vshrl.u32 %v1616, 7
    %v1618 = vsub.s32 0, %v1617
    %v1619 = vrot.slane %v339, %v1618
    %v1620 = vlaneseq
    %v1621 = vshrl.u32 %v1620, 7
    %v1622 = vsub.s32 0, %v1621
    %v1623 = vrot.slane %v343, %v1622
    %v1624 = vlaneseq
    %v1625 = vshrl.u32 %v1624, 7
    %v1626 = vsub.s32 0, %v1625
    %v1627 = vrot.slane %v347, %v1626
    %v1628 = vlaneseq
    %v1629 = vshrl.u32 %v1628, 7
    %v1630 = vsub.s32 0, %v1629
    %v1631 = vrot.slane %v351, %v1630
    %v1632 = vlaneseq
    %v1633 = vshrl.u32 %v1632, 7
    %v1634 = vsub.s32 0, %v1633
    %v1635 = vrot.slane %v355, %v1634
    %v1636 = vlaneseq
    %v1637 = vshrl.u32 %v1636, 7
    %v1638 = vsub.s32 0, %v1637
    %v1639 = vrot.slane %v359, %v1638
    %v1640 = vlaneseq
    %v1641 = vshrl.u32 %v1640, 7
    %v1642 = vsub.s32 0, %v1641
    %v1643 = vrot.slane %v363, %v1642
    %v1644 = vlaneseq
    %v1645 = vshrl.u32 %v1644, 7
    %v1646 = vsub.s32 0, %v1645
    %v1647 = vrot.slane %v367, %v1646
    %v1648 = vlaneseq
    %v1649 = vshrl.u32 %v1648, 7
    %v1650 = vsub.s32 0, %v1649
    %v1651 = vrot.slane %v371, %v1650
    %v1652 = vlaneseq
    %v1653 = vshrl.u32 %v1652, 7
    %v1654 = vsub.s32 0, %v1653
    %v1655 = vrot.slane %v375, %v1654
    %v1656 = vlaneseq
    %v1657 = vshrl.u32 %v1656, 7
    %v1658 = vsub.s32 0, %v1657
    %v1659 = vrot.slane %v379, %v1658
    %v1660 = vlaneseq
    %v1661 = vshrl.u32 %v1660, 7
    %v1662 = vsub.s32 0, %v1661
    %v1663 = vrot.slane %v383, %v1662
    %v1664 = vlaneseq
    %v1665 = vshrl.u32 %v1664, 7
    %v1666 = vsub.s32 0, %v1665
    %v1667 = vrot.slane %v387, %v1666
    %v1668 = vlaneseq
    %v1669 = vshrl.u32 %v1668, 7
    %v1670 = vsub.s32 0, %v1669
    %v1671 = vrot.slane %v391, %v1670
    %v1672 = vlaneseq
    %v1673 = vshrl.u32 %v1672, 7
    %v1674 = vsub.s32 0, %v1673
    %v1675 = vrot.slane %v395, %v1674
    %v1676 = vlaneseq
    %v1677 = vshrl.u32 %v1676, 7
    %v1678 = vsub.s32 0, %v1677
    %v1679 = vrot.slane %v399, %v1678
    %v1680 = vlaneseq
    %v1681 = vshrl.u32 %v1680, 7
    %v1682 = vsub.s32 0, %v1681
    %v1683 = vrot.slane %v403, %v1682
    %v1684 = vlaneseq
    %v1685 = vshrl.u32 %v1684, 7
    %v1686 = vsub.s32 0, %v1685
    %v1687 = vrot.slane %v407, %v1686
    %v1688 = vlaneseq
    %v1689 = vshrl.u32 %v1688, 7
    %v1690 = vsub.s32 0, %v1689
    %v1691 = vrot.slane %v411, %v1690
    %v1692 = vlaneseq
    %v1693 = vshrl.u32 %v1692, 7
    %v1694 = vsub.s32 0, %v1693
    %v1695 = vrot.slane %v415, %v1694
    %v1696 = vlaneseq
    %v1697 = vshrl.u32 %v1696, 7
    %v1698 = vsub.s32 0, %v1697
    %v1699 = vrot.slane %v419, %v1698
    %v1700 = vlaneseq
    %v1701 = vshrl.u32 %v1700, 7
    %v1702 = vsub.s32 0, %v1701
    %v1703 = vrot.slane %v423, %v1702
    %v1704 = vlaneseq
    %v1705 = vshrl.u32 %v1704, 7
    %v1706 = vsub.s32 0, %v1705
    %v1707 = vrot.slane %v427, %v1706
    %v1708 = vlaneseq
    %v1709 = vshrl.u32 %v1708, 7
    %v1710 = vsub.s32 0, %v1709
    %v1711 = vrot.slane %v431, %v1710
    %v1712 = vlaneseq
    %v1713 = vshrl.u32 %v1712, 7
    %v1714 = vsub.s32 0, %v1713
    %v1715 = vrot.slane %v435, %v1714
    %v1716 = vlaneseq
    %v1717 = vshrl.u32 %v1716, 7
    %v1718 = vsub.s32 0, %v1717
    %v1719 = vrot.slane %v439, %v1718
    %v1720 = vlaneseq
    %v1721 = vshrl.u32 %v1720, 7
    %v1722 = vsub.s32 0, %v1721
    %v1723 = vrot.slane %v443, %v1722
    %v1724 = vlaneseq
    %v1725 = vshrl.u32 %v1724, 7
    %v1726 = vsub.s32 0, %v1725
    %v1727 = vrot.slane %v447, %v1726
    %v1728 = vlaneseq
    %v1729 = vshrl.u32 %v1728, 7
    %v1730 = vsub.s32 0, %v1729
    %v1731 = vrot.slane %v451, %v1730
    %v1732 = vlaneseq
    %v1733 = vshrl.u32 %v1732, 7
    %v1734 = vsub.s32 0, %v1733
    %v1735 = vrot.slane %v455, %v1734
    %v1736 = vlaneseq
    %v1737 = vshrl.u32 %v1736, 7
    %v1738 = vsub.s32 0, %v1737
    %v1739 = vrot.slane %v459, %v1738
    %v1740 = vlaneseq
    %v1741 = vshrl.u32 %v1740, 7
    %v1742 = vsub.s32 0, %v1741
    %v1743 = vrot.slane %v463, %v1742
    %v1744 = vlaneseq
    %v1745 = vshrl.u32 %v1744, 7
    %v1746 = vsub.s32 0, %v1745
    %v1747 = vrot.slane %v467, %v1746
    %v1748 = vlaneseq
    %v1749 = vshrl.u32 %v1748, 7
    %v1750 = vsub.s32 0, %v1749
    %v1751 = vrot.slane %v471, %v1750
    %v1752 = vlaneseq
    %v1753 = vshrl.u32 %v1752, 7
    %v1754 = vsub.s32 0, %v1753
    %v1755 = vrot.slane %v475, %v1754
    %v1756 = vlaneseq
    %v1757 = vshrl.u32 %v1756, 7
    %v1758 = vsub.s32 0, %v1757
    %v1759 = vrot.slane %v479, %v1758
    %v1760 = vlaneseq
    %v1761 = vshrl.u32 %v1760, 7
    %v1762 = vsub.s32 0, %v1761
    %v1763 = vrot.slane %v483, %v1762
    %v1764 = vlaneseq
    %v1765 = vshrl.u32 %v1764, 7
    %v1766 = vsub.s32 0, %v1765
    %v1767 = vrot.slane %v487, %v1766
    %v1768 = vlaneseq
    %v1769 = vshrl.u32 %v1768, 7
    %v1770 = vsub.s32 0, %v1769
    %v1771 = vrot.slane %v491, %v1770
    %v1772 = vlaneseq
    %v1773 = vshrl.u32 %v1772, 7
    %v1774 = vsub.s32 0, %v1773
    %v1775 = vrot.slane %v495, %v1774
    %v1776 = vlaneseq
    %v1777 = vshrl.u32 %v1776, 7
    %v1778 = vsub.s32 0, %v1777
    %v1779 = vrot.slane %v499, %v1778
    %v1780 = vlaneseq
    %v1781 = vshrl.u32 %v1780, 7
    %v1782 = vsub.s32 0, %v1781
    %v1783 = vrot.slane %v503, %v1782
    %v1784 = vlaneseq
    %v1785 = vshrl.u32 %v1784, 7
    %v1786 = vsub.s32 0, %v1785
    %v1787 = vrot.slane %v507, %v1786
    %v1788 = vlaneseq
    %v1789 = vshrl.u32 %v1788, 7
    %v1790 = vsub.s32 0, %v1789
    %v1791 = vrot.slane %v511, %v1790
    %v1792 = vlaneseq
    %v1793 = vshrl.u32 %v1792, 7
    %v1794 = vsub.s32 0, %v1793
    %v1795 = vrot.slane %v515, %v1794
    %v1796 = vlaneseq
    %v1797 = vshrl.u32 %v1796, 7
    %v1798 = vsub.s32 0, %v1797
    %v1799 = vrot.slane %v519, %v1798
    %v1800 = vlaneseq
    %v1801 = vshrl.u32 %v1800, 7
    %v1802 = vsub.s32 0, %v1801
    %v1803 = vrot.slane %v523, %v1802
    %v1804 = vlaneseq
    %v1805 = vshrl.u32 %v1804, 7
    %v1806 = vsub.s32 0, %v1805
    %v1807 = vrot.slane %v527, %v1806
    %v1808 = vlaneseq
    %v1809 = vshrl.u32 %v1808, 7
    %v1810 = vsub.s32 0, %v1809
    %v1811 = vrot.slane %v531, %v1810
    %v1812 = vlaneseq
    %v1813 = vshrl.u32 %v1812, 7
    %v1814 = vsub.s32 0, %v1813
    %v1815 = vrot.slane %v535, %v1814
    %v1816 = vlaneseq
    %v1817 = vshrl.u32 %v1816, 7
    %v1818 = vsub.s32 0, %v1817
    %v1819 = vrot.slane %v539, %v1818
    %v1820 = vlaneseq
    %v1821 = vshrl.u32 %v1820, 7
    %v1822 = vsub.s32 0, %v1821
    %v1823 = vrot.slane %v543, %v1822
    %v1824 = vlaneseq
    %v1825 = vshrl.u32 %v1824, 7
    %v1826 = vsub.s32 0, %v1825
    %v1827 = vrot.slane %v547, %v1826
    %v1828 = vlaneseq
    %v1829 = vshrl.u32 %v1828, 7
    %v1830 = vsub.s32 0, %v1829
    %v1831 = vrot.slane %v551, %v1830
    %v1832 = vlaneseq
    %v1833 = vshrl.u32 %v1832, 7
    %v1834 = vsub.s32 0, %v1833
    %v1835 = vrot.slane %v555, %v1834
    %v1836 = vlaneseq
    %v1837 = vshrl.u32 %v1836, 7
    %v1838 = vsub.s32 0, %v1837
    %v1839 = vrot.slane %v559, %v1838
    %v1840 = vlaneseq
    %v1841 = vshrl.u32 %v1840, 7
    %v1842 = vsub.s32 0, %v1841
    %v1843 = vrot.slane %v563, %v1842
    %v1844 = vlaneseq
    %v1845 = vshrl.u32 %v1844, 7
    %v1846 = vsub.s32 0, %v1845
    %v1847 = vrot.slane %v567, %v1846
    %v1848 = vlaneseq
    %v1849 = vshrl.u32 %v1848, 7
    %v1850 = vsub.s32 0, %v1849
    %v1851 = vrot.slane %v571, %v1850
    %v1852 = vlaneseq
    %v1853 = vshrl.u32 %v1852, 7
    %v1854 = vsub.s32 0, %v1853
    %v1855 = vrot.slane %v575, %v1854
    %v1856 = vlaneseq
    %v1857 = vshrl.u32 %v1856, 7
    %v1858 = vsub.s32 0, %v1857
    %v1859 = vrot.slane %v579, %v1858
    %v1860 = vlaneseq
    %v1861 = vshrl.u32 %v1860, 7
    %v1862 = vsub.s32 0, %v1861
    %v1863 = vrot.slane %v583, %v1862
    %v1864 = vlaneseq
    %v1865 = vshrl.u32 %v1864, 7
    %v1866 = vsub.s32 0, %v1865
    %v1867 = vrot.slane %v587, %v1866
    %v1868 = vlaneseq
    %v1869 = vshrl.u32 %v1868, 7
    %v1870 = vsub.s32 0, %v1869
    %v1871 = vrot.slane %v591, %v1870
    %v1872 = vlaneseq
    %v1873 = vshrl.u32 %v1872, 7
    %v1874 = vsub.s32 0, %v1873
    %v1875 = vrot.slane %v595, %v1874
    %v1876 = vlaneseq
    %v1877 = vshrl.u32 %v1876, 7
    %v1878 = vsub.s32 0, %v1877
    %v1879 = vrot.slane %v599, %v1878
    %v1880 = vlaneseq
    %v1881 = vshrl.u32 %v1880, 7
    %v1882 = vsub.s32 0, %v1881
    %v1883 = vrot.slane %v603, %v1882
    %v1884 = vlaneseq
    %v1885 = vshrl.u32 %v1884, 7
    %v1886 = vsub.s32 0, %v1885
    %v1887 = vrot.slane %v607, %v1886
    %v1888 = vlaneseq
    %v1889 = vshrl.u32 %v1888, 7
    %v1890 = vsub.s32 0, %v1889
    %v1891 = vrot.slane %v611, %v1890
    %v1892 = vlaneseq
    %v1893 = vshrl.u32 %v1892, 7
    %v1894 = vsub.s32 0, %v1893
    %v1895 = vrot.slane %v615, %v1894
    %v1896 = vlaneseq
    %v1897 = vshrl.u32 %v1896, 7
    %v1898 = vsub.s32 0, %v1897
    %v1899 = vrot.slane %v619, %v1898
    %v1900 = vlaneseq
    %v1901 = vshrl.u32 %v1900, 7
    %v1902 = vsub.s32 0, %v1901
    %v1903 = vrot.slane %v623, %v1902
    %v1904 = vlaneseq
    %v1905 = vshrl.u32 %v1904, 7
    %v1906 = vsub.s32 0, %v1905
    %v1907 = vrot.slane %v627, %v1906
    %v1908 = vlaneseq
    %v1909 = vshrl.u32 %v1908, 7
    %v1910 = vsub.s32 0, %v1909
    %v1911 = vrot.slane %v631, %v1910
    %v1912 = vlaneseq
    %v1913 = vshrl.u32 %v1912, 7
    %v1914 = vsub.s32 0, %v1913
    %v1915 = vrot.slane %v635, %v1914
    %v1916 = vlaneseq
    %v1917 = vshrl.u32 %v1916, 7
    %v1918 = vsub.s32 0, %v1917
    %v1919 = vrot.slane %v639, %v1918
    %v1920 = vlaneseq
    %v1921 = vshrl.u32 %v1920, 7
    %v1922 = vsub.s32 0, %v1921
    %v1923 = vrot.slane %v643, %v1922
    %v1924 = vlaneseq
    %v1925 = vshrl.u32 %v1924, 7
    %v1926 = vsub.s32 0, %v1925
    %v1927 = vrot.slane %v647, %v1926
    %v1928 = vlaneseq
    %v1929 = vshrl.u32 %v1928, 7
    %v1930 = vsub.s32 0, %v1929
    %v1931 = vrot.slane %v651, %v1930
    %v1932 = vlaneseq
    %v1933 = vshrl.u32 %v1932, 7
    %v1934 = vsub.s32 0, %v1933
    %v1935 = vrot.slane %v655, %v1934
    %v1936 = vlaneseq
    %v1937 = vshrl.u32 %v1936, 7
    %v1938 = vsub.s32 0, %v1937
    %v1939 = vrot.slane %v659, %v1938
    %v1940 = vlaneseq
    %v1941 = vshrl.u32 %v1940, 7
    %v1942 = vsub.s32 0, %v1941
    %v1943 = vrot.slane %v663, %v1942
    %v1944 = vlaneseq
    %v1945 = vshrl.u32 %v1944, 7
    %v1946 = vsub.s32 0, %v1945
    %v1947 = vrot.slane %v667, %v1946
    %v1948 = vlaneseq
    %v1949 = vshrl.u32 %v1948, 7
    %v1950 = vsub.s32 0, %v1949
    %v1951 = vrot.slane %v671, %v1950
    %v1952 = vlaneseq
    %v1953 = vshrl.u32 %v1952, 7
    %v1954 = vsub.s32 0, %v1953
    %v1955 = vrot.slane %v675, %v1954
    %v1956 = vlaneseq
    %v1957 = vshrl.u32 %v1956, 7
    %v1958 = vsub.s32 0, %v1957
    %v1959 = vrot.slane %v679, %v1958
    %v1960 = vlaneseq
    %v1961 = vshrl.u32 %v1960, 7
    %v1962 = vsub.s32 0, %v1961
    %v1963 = vrot.slane %v683, %v1962
    %v1964 = vlaneseq
    %v1965 = vshrl.u32 %v1964, 7
    %v1966 = vsub.s32 0, %v1965
    %v1967 = vrot.slane %v687, %v1966
    %v1968 = vlaneseq
    %v1969 = vshrl.u32 %v1968, 7
    %v1970 = vsub.s32 0, %v1969
    %v1971 = vrot.slane %v691, %v1970
    %v1972 = vlaneseq
    %v1973 = vshrl.u32 %v1972, 7
    %v1974 = vsub.s32 0, %v1973
    %v1975 = vrot.slane %v695, %v1974
    %v1976 = vlaneseq
    %v1977 = vshrl.u32 %v1976, 7
    %v1978 = vsub.s32 0, %v1977
    %v1979 = vrot.slane %v699, %v1978
    %v1980 = vlaneseq
    %v1981 = vshrl.u32 %v1980, 7
    %v1982 = vsub.s32 0, %v1981
    %v1983 = vrot.slane %v703, %v1982
    %v1984 = vlaneseq
    %v1985 = vshrl.u32 %v1984, 7
    %v1986 = vsub.s32 0, %v1985
    %v1987 = vrot.slane %v707, %v1986
    %v1988 = vlaneseq
    %v1989 = vshrl.u32 %v1988, 7
    %v1990 = vsub.s32 0, %v1989
    %v1991 = vrot.slane %v711, %v1990
    %v1992 = vlaneseq
    %v1993 = vshrl.u32 %v1992, 7
    %v1994 = vsub.s32 0, %v1993
    %v1995 = vrot.slane %v715, %v1994
    %v1996 = vlaneseq
    %v1997 = vshrl.u32 %v1996, 7
    %v1998 = vsub.s32 0, %v1997
    %v1999 = vrot.slane %v719, %v1998
    %v2000 = vlaneseq
    %v2001 = vshrl.u32 %v2000, 7
    %v2002 = vsub.s32 0, %v2001
    %v2003 = vrot.slane %v723, %v2002
    %v2004 = vlaneseq
    %v2005 = vshrl.u32 %v2004, 7
    %v2006 = vsub.s32 0, %v2005
    %v2007 = vrot.slane %v727, %v2006
    %v2008 = vlaneseq
    %v2009 = vshrl.u32 %v2008, 7
    %v2010 = vsub.s32 0, %v2009
    %v2011 = vrot.slane %v731, %v2010
    %v2012 = vlaneseq
    %v2013 = vshrl.u32 %v2012, 7
    %v2014 = vsub.s32 0, %v2013
    %v2015 = vrot.slane %v735, %v2014
    %v2016 = vlaneseq
    %v2017 = vshrl.u32 %v2016, 7
    %v2018 = vsub.s32 0, %v2017
    %v2019 = vrot.slane %v739, %v2018
    %v2020 = vlaneseq
    %v2021 = vshrl.u32 %v2020, 7
    %v2022 = vsub.s32 0, %v2021
    %v2023 = vrot.slane %v743, %v2022
    %v2024 = vlaneseq
    %v2025 = vshrl.u32 %v2024, 7
    %v2026 = vsub.s32 0, %v2025
    %v2027 = vrot.slane %v747, %v2026
    %v2028 = vlaneseq
    %v2029 = vshrl.u32 %v2028, 7
    %v2030 = vsub.s32 0, %v2029
    %v2031 = vrot.slane %v751, %v2030
    %v2032 = vlaneseq
    %v2033 = vshrl.u32 %v2032, 7
    %v2034 = vsub.s32 0, %v2033
    %v2035 = vrot.slane %v755, %v2034
    %v2036 = vlaneseq
    %v2037 = vshrl.u32 %v2036, 7
    %v2038 = vsub.s32 0, %v2037
    %v2039 = vrot.slane %v759, %v2038
    %v2040 = vlaneseq
    %v2041 = vshrl.u32 %v2040, 7
    %v2042 = vsub.s32 0, %v2041
    %v2043 = vrot.slane %v763, %v2042
    %v2044 = vlaneseq
    %v2045 = vshrl.u32 %v2044, 7
    %v2046 = vsub.s32 0, %v2045
    %v2047 = vrot.slane %v767, %v2046
    %v2048 = vlaneseq
    %v2049 = vshrl.u32 %v2048, 7
    %v2050 = vsub.s32 0, %v2049
    %v2051 = vrot.slane %v771, %v2050
    %v2052 = vlaneseq
    %v2053 = vshrl.u32 %v2052, 7
    %v2054 = vsub.s32 0, %v2053
    %v2055 = vrot.slane %v775, %v2054
    %v2056 = vlaneseq
    %v2057 = vshrl.u32 %v2056, 7
    %v2058 = vsub.s32 0, %v2057
    %v2059 = vrot.slane %v779, %v2058
    %v2060 = vlaneseq
    %v2061 = vshrl.u32 %v2060, 7
    %v2062 = vsub.s32 0, %v2061
    %v2063 = vrot.slane %v783, %v2062
    %v2064 = vlaneseq
    %v2065 = vshrl.u32 %v2064, 7
    %v2066 = vsub.s32 0, %v2065
    %v2067 = vrot.slane %v787, %v2066
    %v2068 = vlaneseq
    %v2069 = vshrl.u32 %v2068, 7
    %v2070 = vsub.s32 0, %v2069
    %v2071 = vrot.slane %v791, %v2070
    %v2072 = vlaneseq
    %v2073 = vshrl.u32 %v2072, 7
    %v2074 = vsub.s32 0, %v2073
    %v2075 = vrot.slane %v795, %v2074
    %v2076 = vlaneseq
    %v2077 = vshrl.u32 %v2076, 7
    %v2078 = vsub.s32 0, %v2077
    %v2079 = vrot.slane %v799, %v2078
    %v2080 = vlaneseq
    %v2081 = vshrl.u32 %v2080, 7
    %v2082 = vsub.s32 0, %v2081
    %v2083 = vrot.slane %v803, %v2082
    %v2084 = vlaneseq
    %v2085 = vshrl.u32 %v2084, 7
    %v2086 = vsub.s32 0, %v2085
    %v2087 = vrot.slane %v807, %v2086
    %v2088 = vlaneseq
    %v2089 = vshrl.u32 %v2088, 7
    %v2090 = vsub.s32 0, %v2089
    %v2091 = vrot.slane %v811, %v2090
    %v2092 = vlaneseq
    %v2093 = vshrl.u32 %v2092, 7
    %v2094 = vsub.s32 0, %v2093
    %v2095 = vrot.slane %v815, %v2094
    %v2096 = vlaneseq
    %v2097 = vshrl.u32 %v2096, 7
    %v2098 = vsub.s32 0, %v2097
    %v2099 = vrot.slane %v819, %v2098
    %v2100 = vlaneseq
    %v2101 = vshrl.u32 %v2100, 7
    %v2102 = vsub.s32 0, %v2101
    %v2103 = vrot.slane %v823, %v2102
    %v2104 = vlaneseq
    %v2105 = vshrl.u32 %v2104, 7
    %v2106 = vsub.s32 0, %v2105
    %v2107 = vrot.slane %v827, %v2106
    %v2108 = vlaneseq
    %v2109 = vshrl.u32 %v2108, 7
    %v2110 = vsub.s32 0, %v2109
    %v2111 = vrot.slane %v831, %v2110
    %v2112 = vlaneseq
    %v2113 = vshrl.u32 %v2112, 7
    %v2114 = vsub.s32 0, %v2113
    %v2115 = vrot.slane %v835, %v2114
    %v2116 = vlaneseq
    %v2117 = vshrl.u32 %v2116, 7
    %v2118 = vsub.s32 0, %v2117
    %v2119 = vrot.slane %v839, %v2118
    %v2120 = vlaneseq
    %v2121 = vshrl.u32 %v2120, 7
    %v2122 = vsub.s32 0, %v2121
    %v2123 = vrot.slane %v843, %v2122
    %v2124 = vlaneseq
    %v2125 = vshrl.u32 %v2124, 7
    %v2126 = vsub.s32 0, %v2125
    %v2127 = vrot.slane %v847, %v2126
    %v2128 = vlaneseq
    %v2129 = vshrl.u32 %v2128, 7
    %v2130 = vsub.s32 0, %v2129
    %v2131 = vrot.slane %v851, %v2130
    %v2132 = vlaneseq
    %v2133 = vshrl.u32 %v2132, 7
    %v2134 = vsub.s32 0, %v2133
    %v2135 = vrot.slane %v855, %v2134
    %v2136 = vlaneseq
    %v2137 = vshrl.u32 %v2136, 7
    %v2138 = vsub.s32 0, %v2137
    %v2139 = vrot.slane %v859, %v2138
    %v2140 = vlaneseq
    %v2141 = vshrl.u32 %v2140, 7
    %v2142 = vsub.s32 0, %v2141
    %v2143 = vrot.slane %v863, %v2142
    %v2144 = vlaneseq
    %v2145 = vshrl.u32 %v2144, 7
    %v2146 = vsub.s32 0, %v2145
    %v2147 = vrot.slane %v867, %v2146
    %v2148 = vlaneseq
    %v2149 = vshrl.u32 %v2148, 7
    %v2150 = vsub.s32 0, %v2149
    %v2151 = vrot.slane %v871, %v2150
    %v2152 = vlaneseq
    %v2153 = vshrl.u32 %v2152, 7
    %v2154 = vsub.s32 0, %v2153
    %v2155 = vrot.slane %v875, %v2154
    %v2156 = vlaneseq
    %v2157 = vshrl.u32 %v2156, 7
    %v2158 = vsub.s32 0, %v2157
    %v2159 = vrot.slane %v879, %v2158
    %v2160 = vlaneseq
    %v2161 = vshrl.u32 %v2160, 7
    %v2162 = vsub.s32 0, %v2161
    %v2163 = vrot.slane %v883, %v2162
    %v2164 = vlaneseq
    %v2165 = vshrl.u32 %v2164, 7
    %v2166 = vsub.s32 0, %v2165
    %v2167 = vrot.slane %v887, %v2166
    %v2168 = vlaneseq
    %v2169 = vshrl.u32 %v2168, 7
    %v2170 = vsub.s32 0, %v2169
    %v2171 = vrot.slane %v891, %v2170
    %v2172 = vlaneseq
    %v2173 = vshrl.u32 %v2172, 7
    %v2174 = vsub.s32 0, %v2173
    %v2175 = vrot.slane %v895, %v2174
    %v2176 = vlaneseq
    %v2177 = vshrl.u32 %v2176, 7
    %v2178 = vsub.s32 0, %v2177
    %v2179 = vrot.slane %v899, %v2178
    %v2180 = vlaneseq
    %v2181 = vshrl.u32 %v2180, 7
    %v2182 = vsub.s32 0, %v2181
    %v2183 = vrot.slane %v903, %v2182
    %v2184 = vlaneseq
    %v2185 = vshrl.u32 %v2184, 7
    %v2186 = vsub.s32 0, %v2185
    %v2187 = vrot.slane %v907, %v2186
    %v2188 = vlaneseq
    %v2189 = vshrl.u32 %v2188, 7
    %v2190 = vsub.s32 0, %v2189
    %v2191 = vrot.slane %v911, %v2190
    %v2192 = vlaneseq
    %v2193 = vshrl.u32 %v2192, 7
    %v2194 = vsub.s32 0, %v2193
    %v2195 = vrot.slane %v915, %v2194
    %v2196 = vlaneseq
    %v2197 = vshrl.u32 %v2196, 7
    %v2198 = vsub.s32 0, %v2197
    %v2199 = vrot.slane %v919, %v2198
    %v2200 = vlaneseq
    %v2201 = vshrl.u32 %v2200, 7
    %v2202 = vsub.s32 0, %v2201
    %v2203 = vrot.slane %v923, %v2202
    %v2204 = vlaneseq
    %v2205 = vshrl.u32 %v2204, 7
    %v2206 = vsub.s32 0, %v2205
    %v2207 = vrot.slane %v927, %v2206
    %v2208 = vlaneseq
    %v2209 = vshrl.u32 %v2208, 7
    %v2210 = vsub.s32 0, %v2209
    %v2211 = vrot.slane %v931, %v2210
    %v2212 = vlaneseq
    %v2213 = vshrl.u32 %v2212, 7
    %v2214 = vsub.s32 0, %v2213
    %v2215 = vrot.slane %v935, %v2214
    %v2216 = vlaneseq
    %v2217 = vshrl.u32 %v2216, 7
    %v2218 = vsub.s32 0, %v2217
    %v2219 = vrot.slane %v939, %v2218
    %v2220 = vlaneseq
    %v2221 = vshrl.u32 %v2220, 7
    %v2222 = vsub.s32 0, %v2221
    %v2223 = vrot.slane %v943, %v2222
    %v2224 = vlaneseq
    %v2225 = vshrl.u32 %v2224, 7
    %v2226 = vsub.s32 0, %v2225
    %v2227 = vrot.slane %v947, %v2226
    %v2228 = vlaneseq
    %v2229 = vshrl.u32 %v2228, 7
    %v2230 = vsub.s32 0, %v2229
    %v2231 = vrot.slane %v951, %v2230
    %v2232 = vlaneseq
    %v2233 = vshrl.u32 %v2232, 7
    %v2234 = vsub.s32 0, %v2233
    %v2235 = vrot.slane %v955, %v2234
    %v2236 = vlaneseq
    %v2237 = vshrl.u32 %v2236, 7
    %v2238 = vsub.s32 0, %v2237
    %v2239 = vrot.slane %v959, %v2238
    %v2240 = vlaneseq
    %v2241 = vshrl.u32 %v2240, 7
    %v2242 = vsub.s32 0, %v2241
    %v2243 = vrot.slane %v963, %v2242
    %v2244 = vlaneseq
    %v2245 = vshrl.u32 %v2244, 7
    %v2246 = vsub.s32 0, %v2245
    %v2247 = vrot.slane %v967, %v2246
    %v2248 = vlaneseq
    %v2249 = vshrl.u32 %v2248, 7
    %v2250 = vsub.s32 0, %v2249
    %v2251 = vrot.slane %v971, %v2250
    %v2252 = vlaneseq
    %v2253 = vshrl.u32 %v2252, 7
    %v2254 = vsub.s32 0, %v2253
    %v2255 = vrot.slane %v975, %v2254
    %v2256 = vlaneseq
    %v2257 = vshrl.u32 %v2256, 7
    %v2258 = vsub.s32 0, %v2257
    %v2259 = vrot.slane %v979, %v2258
    %v2260 = vlaneseq
    %v2261 = vshrl.u32 %v2260, 7
    %v2262 = vsub.s32 0, %v2261
    %v2263 = vrot.slane %v983, %v2262
    %v2264 = vlaneseq
    %v2265 = vshrl.u32 %v2264, 7
    %v2266 = vsub.s32 0, %v2265
    %v2267 = vrot.slane %v987, %v2266
    %v2268 = vlaneseq
    %v2269 = vshrl.u32 %v2268, 7
    %v2270 = vsub.s32 0, %v2269
    %v2271 = vrot.slane %v991, %v2270
    %v2272 = vlaneseq
    %v2273 = vshrl.u32 %v2272, 7
    %v2274 = vsub.s32 0, %v2273
    %v2275 = vrot.slane %v995, %v2274
    %v2276 = vlaneseq
    %v2277 = vshrl.u32 %v2276, 7
    %v2278 = vsub.s32 0, %v2277
    %v2279 = vrot.slane %v999, %v2278
    %v2280 = vlaneseq
    %v2281 = vshrl.u32 %v2280, 7
    %v2282 = vsub.s32 0, %v2281
    %v2283 = vrot.slane %v1003, %v2282
    %v2284 = vlaneseq
    %v2285 = vshrl.u32 %v2284, 7
    %v2286 = vsub.s32 0, %v2285
    %v2287 = vrot.slane %v1007, %v2286
    %v2288 = vlaneseq
    %v2289 = vshrl.u32 %v2288, 7
    %v2290 = vsub.s32 0, %v2289
    %v2291 = vrot.slane %v1011, %v2290
    %v2292 = vlaneseq
    %v2293 = vshrl.u32 %v2292, 7
    %v2294 = vsub.s32 0, %v2293
    %v2295 = vrot.slane %v1015, %v2294
    %v2296 = vlaneseq
    %v2297 = vshrl.u32 %v2296, 7
    %v2298 = vsub.s32 0, %v2297
    %v2299 = vrot.slane %v1019, %v2298
    %v2300 = vlaneseq
    %v2301 = vshrl.u32 %v2300, 7
    %v2302 = vsub.s32 0, %v2301
    %v2303 = vrot.slane %v1023, %v2302
    %v2304 = vlaneseq
    %v2305 = vshrl.u32 %v2304, 7
    %v2306 = vsub.s32 0, %v2305
    %v2307 = vrot.slane %v1027, %v2306
    %v2308 = vlaneseq
    %v2309 = vshrl.u32 %v2308, 7
    %v2310 = vsub.s32 0, %v2309
    %v2311 = vrot.slane %v1031, %v2310
    %v2312 = vlaneseq
    %v2313 = vshrl.u32 %v2312, 7
    %v2314 = vsub.s32 0, %v2313
    %v2315 = vrot.slane %v1035, %v2314
    %v2316 = vlaneseq
    %v2317 = vshrl.u32 %v2316, 7
    %v2318 = vsub.s32 0, %v2317
    %v2319 = vrot.slane %v1039, %v2318
    %v2320 = vlaneseq
    %v2321 = vshrl.u32 %v2320, 7
    %v2322 = vsub.s32 0, %v2321
    %v2323 = vrot.slane %v1043, %v2322
    %v2324 = vlaneseq
    %v2325 = vshrl.u32 %v2324, 7
    %v2326 = vsub.s32 0, %v2325
    %v2327 = vrot.slane %v1047, %v2326
    %v2328 = vlaneseq
    %v2329 = vshrl.u32 %v2328, 7
    %v2330 = vsub.s32 0, %v2329
    %v2331 = vrot.slane %v1051, %v2330
    %v2332 = vlaneseq
    %v2333 = vshrl.u32 %v2332, 7
    %v2334 = vsub.s32 0, %v2333
    %v2335 = vrot.slane %v1055, %v2334
    %v2336 = vlaneseq
    %v2337 = vshrl.u32 %v2336, 7
    %v2338 = vsub.s32 0, %v2337
    %v2339 = vrot.slane %v1059, %v2338
    %v2340 = vlaneseq
    %v2341 = vshrl.u32 %v2340, 7
    %v2342 = vsub.s32 0, %v2341
    %v2343 = vrot.slane %v1063, %v2342
    %v2344 = vlaneseq
    %v2345 = vshrl.u32 %v2344, 7
    %v2346 = vsub.s32 0, %v2345
    %v2347 = vrot.slane %v1067, %v2346
    %v2348 = vlaneseq
    %v2349 = vshrl.u32 %v2348, 7
    %v2350 = vsub.s32 0, %v2349
    %v2351 = vrot.slane %v1071, %v2350
    %v2352 = vlaneseq
    %v2353 = vshrl.u32 %v2352, 7
    %v2354 = vsub.s32 0, %v2353
    %v2355 = vrot.slane %v1075, %v2354
    %v2356 = vlaneseq
    %v2357 = vshrl.u32 %v2356, 7
    %v2358 = vsub.s32 0, %v2357
    %v2359 = vrot.slane %v1079, %v2358
    %v2360 = vlaneseq
    %v2361 = vshrl.u32 %v2360, 7
    %v2362 = vsub.s32 0, %v2361
    %v2363 = vrot.slane %v1083, %v2362
    %v2364 = vlaneseq
    %v2365 = vshrl.u32 %v2364, 7
    %v2366 = vsub.s32 0, %v2365
    %v2367 = vrot.slane %v1087, %v2366
    %v2368 = vlaneseq
    %v2369 = vshrl.u32 %v2368, 7
    %v2370 = vsub.s32 0, %v2369
    %v2371 = vrot.slane %v1091, %v2370
    %v2372 = vlaneseq
    %v2373 = vshrl.u32 %v2372, 7
    %v2374 = vsub.s32 0, %v2373
    %v2375 = vrot.slane %v1095, %v2374
    %v2376 = vlaneseq
    %v2377 = vshrl.u32 %v2376, 7
    %v2378 = vsub.s32 0, %v2377
    %v2379 = vrot.slane %v1099, %v2378
    %v2380 = vlaneseq
    %v2381 = vshrl.u32 %v2380, 7
    %v2382 = vsub.s32 0, %v2381
    %v2383 = vrot.slane %v1103, %v2382
    %v2384 = vlaneseq
    %v2385 = vshrl.u32 %v2384, 7
    %v2386 = vsub.s32 0, %v2385
    %v2387 = vrot.slane %v1107, %v2386
    %v2388 = vlaneseq
    %v2389 = vshrl.u32 %v2388, 7
    %v2390 = vsub.s32 0, %v2389
    %v2391 = vrot.slane %v1111, %v2390
    %v2392 = vlaneseq
    %v2393 = vshrl.u32 %v2392, 7
    %v2394 = vsub.s32 0, %v2393
    %v2395 = vrot.slane %v1115, %v2394
    %v2396 = vlaneseq
    %v2397 = vshrl.u32 %v2396, 7
    %v2398 = vsub.s32 0, %v2397
    %v2399 = vrot.slane %v1119, %v2398
    %v2400 = vlaneseq
    %v2401 = vshrl.u32 %v2400, 7
    %v2402 = vsub.s32 0, %v2401
    %v2403 = vrot.slane %v1123, %v2402
    %v2404 = vlaneseq
    %v2405 = vshrl.u32 %v2404, 7
    %v2406 = vsub.s32 0, %v2405
    %v2407 = vrot.slane %v1127, %v2406
    %v2408 = vlaneseq
    %v2409 = vshrl.u32 %v2408, 7
    %v2410 = vsub.s32 0, %v2409
    %v2411 = vrot.slane %v1131, %v2410
    %v2412 = vlaneseq
    %v2413 = vshrl.u32 %v2412, 7
    %v2414 = vsub.s32 0, %v2413
    %v2415 = vrot.slane %v1135, %v2414
    %v2416 = vlaneseq
    %v2417 = vshrl.u32 %v2416, 7
    %v2418 = vsub.s32 0, %v2417
    %v2419 = vrot.slane %v1139, %v2418
    %v2420 = vlaneseq
    %v2421 = vshrl.u32 %v2420, 7
    %v2422 = vsub.s32 0, %v2421
    %v2423 = vrot.slane %v1143, %v2422
    %v2424 = vlaneseq
    %v2425 = vshrl.u32 %v2424, 7
    %v2426 = vsub.s32 0, %v2425
    %v2427 = vrot.slane %v1147, %v2426
    %v2428 = vlaneseq
    %v2429 = vshrl.u32 %v2428, 7
    %v2430 = vsub.s32 0, %v2429
    %v2431 = vrot.slane %v1151, %v2430
    %v2432 = vlaneseq
    %v2433 = vshrl.u32 %v2432, 7
    %v2434 = vsub.s32 0, %v2433
    %v2435 = vrot.slane %v1155, %v2434
    %v2436 = vlaneseq
    %v2437 = vshrl.u32 %v2436, 7
    %v2438 = vsub.s32 0, %v2437
    %v2439 = vrot.slane %v1159, %v2438
    %v2440 = vlaneseq
    %v2441 = vshrl.u32 %v2440, 7
    %v2442 = vsub.s32 0, %v2441
    %v2443 = vrot.slane %v1163, %v2442
    %v2444 = vlaneseq
    %v2445 = vshrl.u32 %v2444, 7
    %v2446 = vsub.s32 0, %v2445
    %v2447 = vrot.slane %v1167, %v2446
    %v2448 = vlaneseq
    %v2449 = vshrl.u32 %v2448, 7
    %v2450 = vsub.s32 0, %v2449
    %v2451 = vrot.slane %v1171, %v2450
    %v2452 = vlaneseq
    %v2453 = vshrl.u32 %v2452, 7
    %v2454 = vsub.s32 0, %v2453
    %v2455 = vrot.slane %v1175, %v2454
    %v2456 = vlaneseq
    %v2457 = vshrl.u32 %v2456, 7
    %v2458 = vsub.s32 0, %v2457
    %v2459 = vrot.slane %v1179, %v2458
    %v2460 = vlaneseq
    %v2461 = vshrl.u32 %v2460, 7
    %v2462 = vsub.s32 0, %v2461
    %v2463 = vrot.slane %v1183, %v2462
    %v2464 = vlaneseq
    %v2465 = vshrl.u32 %v2464, 7
    %v2466 = vsub.s32 0, %v2465
    %v2467 = vrot.slane %v1187, %v2466
    %v2468 = vlaneseq
    %v2469 = vshrl.u32 %v2468, 7
    %v2470 = vsub.s32 0, %v2469
    %v2471 = vrot.slane %v1191, %v2470
    %v2472 = vlaneseq
    %v2473 = vshrl.u32 %v2472, 7
    %v2474 = vsub.s32 0, %v2473
    %v2475 = vrot.slane %v1195, %v2474
    %v2476 = vlaneseq
    %v2477 = vshrl.u32 %v2476, 7
    %v2478 = vsub.s32 0, %v2477
    %v2479 = vrot.slane %v1199, %v2478
    %v2480 = vlaneseq
    %v2481 = vshrl.u32 %v2480, 7
    %v2482 = vsub.s32 0, %v2481
    %v2483 = vrot.slane %v1203, %v2482
    %v2484 = vlaneseq
    %v2485 = vshrl.u32 %v2484, 7
    %v2486 = vsub.s32 0, %v2485
    %v2487 = vrot.slane %v1207, %v2486
    %v2488 = vlaneseq
    %v2489 = vshrl.u32 %v2488, 7
    %v2490 = vsub.s32 0, %v2489
    %v2491 = vrot.slane %v1211, %v2490
    %v2492 = vlaneseq
    %v2493 = vshrl.u32 %v2492, 7
    %v2494 = vsub.s32 0, %v2493
    %v2495 = vrot.slane %v1215, %v2494
    %v2496 = vlaneseq
    %v2497 = vshrl.u32 %v2496, 7
    %v2498 = vsub.s32 0, %v2497
    %v2499 = vrot.slane %v1219, %v2498
    %v2500 = vlaneseq
    %v2501 = vshrl.u32 %v2500, 7
    %v2502 = vsub.s32 0, %v2501
    %v2503 = vrot.slane %v1223, %v2502
    %v2504 = vlaneseq
    %v2505 = vshrl.u32 %v2504, 7
    %v2506 = vsub.s32 0, %v2505
    %v2507 = vrot.slane %v1227, %v2506
    %v2508 = vlaneseq
    %v2509 = vshrl.u32 %v2508, 7
    %v2510 = vsub.s32 0, %v2509
    %v2511 = vrot.slane %v1231, %v2510
    %v2512 = vlaneseq
    %v2513 = vshrl.u32 %v2512, 7
    %v2514 = vsub.s32 0, %v2513
    %v2515 = vrot.slane %v1235, %v2514
    %v2516 = vlaneseq
    %v2517 = vshrl.u32 %v2516, 7
    %v2518 = vsub.s32 0, %v2517
    %v2519 = vrot.slane %v1239, %v2518
    %v2520 = vlaneseq
    %v2521 = vshrl.u32 %v2520, 7
    %v2522 = vsub.s32 0, %v2521
    %v2523 = vrot.slane %v1243, %v2522
    %v2524 = vlaneseq
    %v2525 = vshrl.u32 %v2524, 7
    %v2526 = vsub.s32 0, %v2525
    %v2527 = vrot.slane %v1247, %v2526
    %v2528 = vlaneseq
    %v2529 = vshrl.u32 %v2528, 7
    %v2530 = vsub.s32 0, %v2529
    %v2531 = vrot.slane %v1251, %v2530
    %v2788 = vcombine.low %v1511, %v1515
    %v2789 = vcombine.low %v1519, %v1523
    %v2791 = vunpack.c.l.s4 1983009808
    %v2792 = vunpack.c.0.s8 %v2791
    %v2793 = vlaneseq
    %v2794 = vshrl.u32 %v2793, 7
    %v2795 = vsub.s32 %v2792, %v2794
    %v2796 = vrot.slane %v2788, %v2795
    %v2798 = vunpack.c.l.s4 1983009808
    %v2799 = vunpack.c.0.s8 %v2798
    %v2800 = vlaneseq
    %v2801 = vshrl.u32 %v2800, 7
    %v2802 = vsub.s32 %v2799, %v2801
    %v2803 = vrot.slane %v2789, %v2802
    %v2804 = vcombine.low %v2796, %v2803
    %v2805 = vcombine.low %v1527, %v1531
    %v2806 = vcombine.low %v1535, %v1539
    %v2808 = vunpack.c.l.s4 1983009808
    %v2809 = vunpack.c.0.s8 %v2808
    %v2810 = vlaneseq
    %v2811 = vshrl.u32 %v2810, 7
    %v2812 = vsub.s32 %v2809, %v2811
    %v2813 = vrot.slane %v2805, %v2812
    %v2815 = vunpack.c.l.s4 1983009808
    %v2816 = vunpack.c.0.s8 %v2815
    %v2817 = vlaneseq
    %v2818 = vshrl.u32 %v2817, 7
    %v2819 = vsub.s32 %v2816, %v2818
    %v2820 = vrot.slane %v2806, %v2819
    %v2821 = vcombine.low %v2813, %v2820
    %v2822 = vcombine.low %v1543, %v1547
    %v2823 = vcombine.low %v1551, %v1555
    %v2825 = vunpack.c.l.s4 1983009808
    %v2826 = vunpack.c.0.s8 %v2825
    %v2827 = vlaneseq
    %v2828 = vshrl.u32 %v2827, 7
    %v2829 = vsub.s32 %v2826, %v2828
    %v2830 = vrot.slane %v2822, %v2829
    %v2832 = vunpack.c.l.s4 1983009808
    %v2833 = vunpack.c.0.s8 %v2832
    %v2834 = vlaneseq
    %v2835 = vshrl.u32 %v2834, 7
    %v2836 = vsub.s32 %v2833, %v2835
    %v2837 = vrot.slane %v2823, %v2836
    %v2838 = vcombine.low %v2830, %v2837
    %v2839 = vcombine.low %v1559, %v1563
    %v2840 = vcombine.low %v1567, %v1571
    %v2842 = vunpack.c.l.s4 1983009808
    %v2843 = vunpack.c.0.s8 %v2842
    %v2844 = vlaneseq
    %v2845 = vshrl.u32 %v2844, 7
    %v2846 = vsub.s32 %v2843, %v2845
    %v2847 = vrot.slane %v2839, %v2846
    %v2849 = vunpack.c.l.s4 1983009808
    %v2850 = vunpack.c.0.s8 %v2849
    %v2851 = vlaneseq
    %v2852 = vshrl.u32 %v2851, 7
    %v2853 = vsub.s32 %v2850, %v2852
    %v2854 = vrot.slane %v2840, %v2853
    %v2855 = vcombine.low %v2847, %v2854
    %v2856 = vcombine.low %v1575, %v1579
    %v2857 = vcombine.low %v1583, %v1587
    %v2859 = vunpack.c.l.s4 1983009808
    %v2860 = vunpack.c.0.s8 %v2859
    %v2861 = vlaneseq
    %v2862 = vshrl.u32 %v2861, 7
    %v2863 = vsub.s32 %v2860, %v2862
    %v2864 = vrot.slane %v2856, %v2863
    %v2866 = vunpack.c.l.s4 1983009808
    %v2867 = vunpack.c.0.s8 %v2866
    %v2868 = vlaneseq
    %v2869 = vshrl.u32 %v2868, 7
    %v2870 = vsub.s32 %v2867, %v2869
    %v2871 = vrot.slane %v2857, %v2870
    %v2872 = vcombine.low %v2864, %v2871
    %v2873 = vcombine.low %v1591, %v1595
    %v2874 = vcombine.low %v1599, %v1603
    %v2876 = vunpack.c.l.s4 1983009808
    %v2877 = vunpack.c.0.s8 %v2876
    %v2878 = vlaneseq
    %v2879 = vshrl.u32 %v2878, 7
    %v2880 = vsub.s32 %v2877, %v2879
    %v2881 = vrot.slane %v2873, %v2880
    %v2883 = vunpack.c.l.s4 1983009808
    %v2884 = vunpack.c.0.s8 %v2883
    %v2885 = vlaneseq
    %v2886 = vshrl.u32 %v2885, 7
    %v2887 = vsub.s32 %v2884, %v2886
    %v2888 = vrot.slane %v2874, %v2887
    %v2889 = vcombine.low %v2881, %v2888
    %v2890 = vcombine.low %v1607, %v1611
    %v2891 = vcombine.low %v1615, %v1619
    %v2893 = vunpack.c.l.s4 1983009808
    %v2894 = vunpack.c.0.s8 %v2893
    %v2895 = vlaneseq
    %v2896 = vshrl.u32 %v2895, 7
    %v2897 = vsub.s32 %v2894, %v2896
    %v2898 = vrot.slane %v2890, %v2897
    %v2900 = vunpack.c.l.s4 1983009808
    %v2901 = vunpack.c.0.s8 %v2900
    %v2902 = vlaneseq
    %v2903 = vshrl.u32 %v2902, 7
    %v2904 = vsub.s32 %v2901, %v2903
    %v2905 = vrot.slane %v2891, %v2904
    %v2906 = vcombine.low %v2898, %v2905
    %v2907 = vcombine.low %v1623, %v1627
    %v2908 = vcombine.low %v1631, %v1635
    %v2910 = vunpack.c.l.s4 1983009808
    %v2911 = vunpack.c.0.s8 %v2910
    %v2912 = vlaneseq
    %v2913 = vshrl.u32 %v2912, 7
    %v2914 = vsub.s32 %v2911, %v2913
    %v2915 = vrot.slane %v2907, %v2914
    %v2917 = vunpack.c.l.s4 1983009808
    %v2918 = vunpack.c.0.s8 %v2917
    %v2919 = vlaneseq
    %v2920 = vshrl.u32 %v2919, 7
    %v2921 = vsub.s32 %v2918, %v2920
    %v2922 = vrot.slane %v2908, %v2921
    %v2923 = vcombine.low %v2915, %v2922
    %v2924 = vcombine.low %v1639, %v1643
    %v2925 = vcombine.low %v1647, %v1651
    %v2927 = vunpack.c.l.s4 1983009808
    %v2928 = vunpack.c.0.s8 %v2927
    %v2929 = vlaneseq
    %v2930 = vshrl.u32 %v2929, 7
    %v2931 = vsub.s32 %v2928, %v2930
    %v2932 = vrot.slane %v2924, %v2931
    %v2934 = vunpack.c.l.s4 1983009808
    %v2935 = vunpack.c.0.s8 %v2934
    %v2936 = vlaneseq
    %v2937 = vshrl.u32 %v2936, 7
    %v2938 = vsub.s32 %v2935, %v2937
    %v2939 = vrot.slane %v2925, %v2938
    %v2940 = vcombine.low %v2932, %v2939
    %v2941 = vcombine.low %v1655, %v1659
    %v2942 = vcombine.low %v1663, %v1667
    %v2944 = vunpack.c.l.s4 1983009808
    %v2945 = vunpack.c.0.s8 %v2944
    %v2946 = vlaneseq
    %v2947 = vshrl.u32 %v2946, 7
    %v2948 = vsub.s32 %v2945, %v2947
    %v2949 = vrot.slane %v2941, %v2948
    %v2951 = vunpack.c.l.s4 1983009808
    %v2952 = vunpack.c.0.s8 %v2951
    %v2953 = vlaneseq
    %v2954 = vshrl.u32 %v2953, 7
    %v2955 = vsub.s32 %v2952, %v2954
    %v2956 = vrot.slane %v2942, %v2955
    %v2957 = vcombine.low %v2949, %v2956
    %v2958 = vcombine.low %v1671, %v1675
    %v2959 = vcombine.low %v1679, %v1683
    %v2961 = vunpack.c.l.s4 1983009808
    %v2962 = vunpack.c.0.s8 %v2961
    %v2963 = vlaneseq
    %v2964 = vshrl.u32 %v2963, 7
    %v2965 = vsub.s32 %v2962, %v2964
    %v2966 = vrot.slane %v2958, %v2965
    %v2968 = vunpack.c.l.s4 1983009808
    %v2969 = vunpack.c.0.s8 %v2968
    %v2970 = vlaneseq
    %v2971 = vshrl.u32 %v2970, 7
    %v2972 = vsub.s32 %v2969, %v2971
    %v2973 = vrot.slane %v2959, %v2972
    %v2974 = vcombine.low %v2966, %v2973
    %v2975 = vcombine.low %v1687, %v1691
    %v2976 = vcombine.low %v1695, %v1699
    %v2978 = vunpack.c.l.s4 1983009808
    %v2979 = vunpack.c.0.s8 %v2978
    %v2980 = vlaneseq
    %v2981 = vshrl.u32 %v2980, 7
    %v2982 = vsub.s32 %v2979, %v2981
    %v2983 = vrot.slane %v2975, %v2982
    %v2985 = vunpack.c.l.s4 1983009808
    %v2986 = vunpack.c.0.s8 %v2985
    %v2987 = vlaneseq
    %v2988 = vshrl.u32 %v2987, 7
    %v2989 = vsub.s32 %v2986, %v2988
    %v2990 = vrot.slane %v2976, %v2989
    %v2991 = vcombine.low %v2983, %v2990
    %v2992 = vcombine.low %v1703, %v1707
    %v2993 = vcombine.low %v1711, %v1715
    %v2995 = vunpack.c.l.s4 1983009808
    %v2996 = vunpack.c.0.s8 %v2995
    %v2997 = vlaneseq
    %v2998 = vshrl.u32 %v2997, 7
    %v2999 = vsub.s32 %v2996, %v2998
    %v3000 = vrot.slane %v2992, %v2999
    %v3002 = vunpack.c.l.s4 1983009808
    %v3003 = vunpack.c.0.s8 %v3002
    %v3004 = vlaneseq
    %v3005 = vshrl.u32 %v3004, 7
    %v3006 = vsub.s32 %v3003, %v3005
    %v3007 = vrot.slane %v2993, %v3006
    %v3008 = vcombine.low %v3000, %v3007
    %v3009 = vcombine.low %v1719, %v1723
    %v3010 = vcombine.low %v1727, %v1731
    %v3012 = vunpack.c.l.s4 1983009808
    %v3013 = vunpack.c.0.s8 %v3012
    %v3014 = vlaneseq
    %v3015 = vshrl.u32 %v3014, 7
    %v3016 = vsub.s32 %v3013, %v3015
    %v3017 = vrot.slane %v3009, %v3016
    %v3019 = vunpack.c.l.s4 1983009808
    %v3020 = vunpack.c.0.s8 %v3019
    %v3021 = vlaneseq
    %v3022 = vshrl.u32 %v3021, 7
    %v3023 = vsub.s32 %v3020, %v3022
    %v3024 = vrot.slane %v3010, %v3023
    %v3025 = vcombine.low %v3017, %v3024
    %v3026 = vcombine.low %v1735, %v1739
    %v3027 = vcombine.low %v1743, %v1747
    %v3029 = vunpack.c.l.s4 1983009808
    %v3030 = vunpack.c.0.s8 %v3029
    %v3031 = vlaneseq
    %v3032 = vshrl.u32 %v3031, 7
    %v3033 = vsub.s32 %v3030, %v3032
    %v3034 = vrot.slane %v3026, %v3033
    %v3036 = vunpack.c.l.s4 1983009808
    %v3037 = vunpack.c.0.s8 %v3036
    %v3038 = vlaneseq
    %v3039 = vshrl.u32 %v3038, 7
    %v3040 = vsub.s32 %v3037, %v3039
    %v3041 = vrot.slane %v3027, %v3040
    %v3042 = vcombine.low %v3034, %v3041
    %v3043 = vcombine.low %v1751, %v1755
    %v3044 = vcombine.low %v1759, %v1763
    %v3046 = vunpack.c.l.s4 1983009808
    %v3047 = vunpack.c.0.s8 %v3046
    %v3048 = vlaneseq
    %v3049 = vshrl.u32 %v3048, 7
    %v3050 = vsub.s32 %v3047, %v3049
    %v3051 = vrot.slane %v3043, %v3050
    %v3053 = vunpack.c.l.s4 1983009808
    %v3054 = vunpack.c.0.s8 %v3053
    %v3055 = vlaneseq
    %v3056 = vshrl.u32 %v3055, 7
    %v3057 = vsub.s32 %v3054, %v3056
    %v3058 = vrot.slane %v3044, %v3057
    %v3059 = vcombine.low %v3051, %v3058
    %v3060 = vcombine.low %v1767, %v1771
    %v3061 = vcombine.low %v1775, %v1779
    %v3063 = vunpack.c.l.s4 1983009808
    %v3064 = vunpack.c.0.s8 %v3063
    %v3065 = vlaneseq
    %v3066 = vshrl.u32 %v3065, 7
    %v3067 = vsub.s32 %v3064, %v3066
    %v3068 = vrot.slane %v3060, %v3067
    %v3070 = vunpack.c.l.s4 1983009808
    %v3071 = vunpack.c.0.s8 %v3070
    %v3072 = vlaneseq
    %v3073 = vshrl.u32 %v3072, 7
    %v3074 = vsub.s32 %v3071, %v3073
    %v3075 = vrot.slane %v3061, %v3074
    %v3076 = vcombine.low %v3068, %v3075
    %v3077 = vcombine.low %v1783, %v1787
    %v3078 = vcombine.low %v1791, %v1795
    %v3080 = vunpack.c.l.s4 1983009808
    %v3081 = vunpack.c.0.s8 %v3080
    %v3082 = vlaneseq
    %v3083 = vshrl.u32 %v3082, 7
    %v3084 = vsub.s32 %v3081, %v3083
    %v3085 = vrot.slane %v3077, %v3084
    %v3087 = vunpack.c.l.s4 1983009808
    %v3088 = vunpack.c.0.s8 %v3087
    %v3089 = vlaneseq
    %v3090 = vshrl.u32 %v3089, 7
    %v3091 = vsub.s32 %v3088, %v3090
    %v3092 = vrot.slane %v3078, %v3091
    %v3093 = vcombine.low %v3085, %v3092
    %v3094 = vcombine.low %v1799, %v1803
    %v3095 = vcombine.low %v1807, %v1811
    %v3097 = vunpack.c.l.s4 1983009808
    %v3098 = vunpack.c.0.s8 %v3097
    %v3099 = vlaneseq
    %v3100 = vshrl.u32 %v3099, 7
    %v3101 = vsub.s32 %v3098, %v3100
    %v3102 = vrot.slane %v3094, %v3101
    %v3104 = vunpack.c.l.s4 1983009808
    %v3105 = vunpack.c.0.s8 %v3104
    %v3106 = vlaneseq
    %v3107 = vshrl.u32 %v3106, 7
    %v3108 = vsub.s32 %v3105, %v3107
    %v3109 = vrot.slane %v3095, %v3108
    %v3110 = vcombine.low %v3102, %v3109
    %v3111 = vcombine.low %v1815, %v1819
    %v3112 = vcombine.low %v1823, %v1827
    %v3114 = vunpack.c.l.s4 1983009808
    %v3115 = vunpack.c.0.s8 %v3114
    %v3116 = vlaneseq
    %v3117 = vshrl.u32 %v3116, 7
    %v3118 = vsub.s32 %v3115, %v3117
    %v3119 = vrot.slane %v3111, %v3118
    %v3121 = vunpack.c.l.s4 1983009808
    %v3122 = vunpack.c.0.s8 %v3121
    %v3123 = vlaneseq
    %v3124 = vshrl.u32 %v3123, 7
    %v3125 = vsub.s32 %v3122, %v3124
    %v3126 = vrot.slane %v3112, %v3125
    %v3127 = vcombine.low %v3119, %v3126
    %v3128 = vcombine.low %v1831, %v1835
    %v3129 = vcombine.low %v1839, %v1843
    %v3131 = vunpack.c.l.s4 1983009808
    %v3132 = vunpack.c.0.s8 %v3131
    %v3133 = vlaneseq
    %v3134 = vshrl.u32 %v3133, 7
    %v3135 = vsub.s32 %v3132, %v3134
    %v3136 = vrot.slane %v3128, %v3135
    %v3138 = vunpack.c.l.s4 1983009808
    %v3139 = vunpack.c.0.s8 %v3138
    %v3140 = vlaneseq
    %v3141 = vshrl.u32 %v3140, 7
    %v3142 = vsub.s32 %v3139, %v3141
    %v3143 = vrot.slane %v3129, %v3142
    %v3144 = vcombine.low %v3136, %v3143
    %v3145 = vcombine.low %v1847, %v1851
    %v3146 = vcombine.low %v1855, %v1859
    %v3148 = vunpack.c.l.s4 1983009808
    %v3149 = vunpack.c.0.s8 %v3148
    %v3150 = vlaneseq
    %v3151 = vshrl.u32 %v3150, 7
    %v3152 = vsub.s32 %v3149, %v3151
    %v3153 = vrot.slane %v3145, %v3152
    %v3155 = vunpack.c.l.s4 1983009808
    %v3156 = vunpack.c.0.s8 %v3155
    %v3157 = vlaneseq
    %v3158 = vshrl.u32 %v3157, 7
    %v3159 = vsub.s32 %v3156, %v3158
    %v3160 = vrot.slane %v3146, %v3159
    %v3161 = vcombine.low %v3153, %v3160
    %v3162 = vcombine.low %v1863, %v1867
    %v3163 = vcombine.low %v1871, %v1875
    %v3165 = vunpack.c.l.s4 1983009808
    %v3166 = vunpack.c.0.s8 %v3165
    %v3167 = vlaneseq
    %v3168 = vshrl.u32 %v3167, 7
    %v3169 = vsub.s32 %v3166, %v3168
    %v3170 = vrot.slane %v3162, %v3169
    %v3172 = vunpack.c.l.s4 1983009808
    %v3173 = vunpack.c.0.s8 %v3172
    %v3174 = vlaneseq
    %v3175 = vshrl.u32 %v3174, 7
    %v3176 = vsub.s32 %v3173, %v3175
    %v3177 = vrot.slane %v3163, %v3176
    %v3178 = vcombine.low %v3170, %v3177
    %v3179 = vcombine.low %v1879, %v1883
    %v3180 = vcombine.low %v1887, %v1891
    %v3182 = vunpack.c.l.s4 1983009808
    %v3183 = vunpack.c.0.s8 %v3182
    %v3184 = vlaneseq
    %v3185 = vshrl.u32 %v3184, 7
    %v3186 = vsub.s32 %v3183, %v3185
    %v3187 = vrot.slane %v3179, %v3186
    %v3189 = vunpack.c.l.s4 1983009808
    %v3190 = vunpack.c.0.s8 %v3189
    %v3191 = vlaneseq
    %v3192 = vshrl.u32 %v3191, 7
    %v3193 = vsub.s32 %v3190, %v3192
    %v3194 = vrot.slane %v3180, %v3193
    %v3195 = vcombine.low %v3187, %v3194
    %v3196 = vcombine.low %v1895, %v1899
    %v3197 = vcombine.low %v1903, %v1907
    %v3199 = vunpack.c.l.s4 1983009808
    %v3200 = vunpack.c.0.s8 %v3199
    %v3201 = vlaneseq
    %v3202 = vshrl.u32 %v3201, 7
    %v3203 = vsub.s32 %v3200, %v3202
    %v3204 = vrot.slane %v3196, %v3203
    %v3206 = vunpack.c.l.s4 1983009808
    %v3207 = vunpack.c.0.s8 %v3206
    %v3208 = vlaneseq
    %v3209 = vshrl.u32 %v3208, 7
    %v3210 = vsub.s32 %v3207, %v3209
    %v3211 = vrot.slane %v3197, %v3210
    %v3212 = vcombine.low %v3204, %v3211
    %v3213 = vcombine.low %v1911, %v1915
    %v3214 = vcombine.low %v1919, %v1923
    %v3216 = vunpack.c.l.s4 1983009808
    %v3217 = vunpack.c.0.s8 %v3216
    %v3218 = vlaneseq
    %v3219 = vshrl.u32 %v3218, 7
    %v3220 = vsub.s32 %v3217, %v3219
    %v3221 = vrot.slane %v3213, %v3220
    %v3223 = vunpack.c.l.s4 1983009808
    %v3224 = vunpack.c.0.s8 %v3223
    %v3225 = vlaneseq
    %v3226 = vshrl.u32 %v3225, 7
    %v3227 = vsub.s32 %v3224, %v3226
    %v3228 = vrot.slane %v3214, %v3227
    %v3229 = vcombine.low %v3221, %v3228
    %v3230 = vcombine.low %v1927, %v1931
    %v3231 = vcombine.low %v1935, %v1939
    %v3233 = vunpack.c.l.s4 1983009808
    %v3234 = vunpack.c.0.s8 %v3233
    %v3235 = vlaneseq
    %v3236 = vshrl.u32 %v3235, 7
    %v3237 = vsub.s32 %v3234, %v3236
    %v3238 = vrot.slane %v3230, %v3237
    %v3240 = vunpack.c.l.s4 1983009808
    %v3241 = vunpack.c.0.s8 %v3240
    %v3242 = vlaneseq
    %v3243 = vshrl.u32 %v3242, 7
    %v3244 = vsub.s32 %v3241, %v3243
    %v3245 = vrot.slane %v3231, %v3244
    %v3246 = vcombine.low %v3238, %v3245
    %v3247 = vcombine.low %v1943, %v1947
    %v3248 = vcombine.low %v1951, %v1955
    %v3250 = vunpack.c.l.s4 1983009808
    %v3251 = vunpack.c.0.s8 %v3250
    %v3252 = vlaneseq
    %v3253 = vshrl.u32 %v3252, 7
    %v3254 = vsub.s32 %v3251, %v3253
    %v3255 = vrot.slane %v3247, %v3254
    %v3257 = vunpack.c.l.s4 1983009808
    %v3258 = vunpack.c.0.s8 %v3257
    %v3259 = vlaneseq
    %v3260 = vshrl.u32 %v3259, 7
    %v3261 = vsub.s32 %v3258, %v3260
    %v3262 = vrot.slane %v3248, %v3261
    %v3263 = vcombine.low %v3255, %v3262
    %v3264 = vcombine.low %v1959, %v1963
    %v3265 = vcombine.low %v1967, %v1971
    %v3267 = vunpack.c.l.s4 1983009808
    %v3268 = vunpack.c.0.s8 %v3267
    %v3269 = vlaneseq
    %v3270 = vshrl.u32 %v3269, 7
    %v3271 = vsub.s32 %v3268, %v3270
    %v3272 = vrot.slane %v3264, %v3271
    %v3274 = vunpack.c.l.s4 1983009808
    %v3275 = vunpack.c.0.s8 %v3274
    %v3276 = vlaneseq
    %v3277 = vshrl.u32 %v3276, 7
    %v3278 = vsub.s32 %v3275, %v3277
    %v3279 = vrot.slane %v3265, %v3278
    %v3280 = vcombine.low %v3272, %v3279
    %v3281 = vcombine.low %v1975, %v1979
    %v3282 = vcombine.low %v1983, %v1987
    %v3284 = vunpack.c.l.s4 1983009808
    %v3285 = vunpack.c.0.s8 %v3284
    %v3286 = vlaneseq
    %v3287 = vshrl.u32 %v3286, 7
    %v3288 = vsub.s32 %v3285, %v3287
    %v3289 = vrot.slane %v3281, %v3288
    %v3291 = vunpack.c.l.s4 1983009808
    %v3292 = vunpack.c.0.s8 %v3291
    %v3293 = vlaneseq
    %v3294 = vshrl.u32 %v3293, 7
    %v3295 = vsub.s32 %v3292, %v3294
    %v3296 = vrot.slane %v3282, %v3295
    %v3297 = vcombine.low %v3289, %v3296
    %v3298 = vcombine.low %v1991, %v1995
    %v3299 = vcombine.low %v1999, %v2003
    %v3301 = vunpack.c.l.s4 1983009808
    %v3302 = vunpack.c.0.s8 %v3301
    %v3303 = vlaneseq
    %v3304 = vshrl.u32 %v3303, 7
    %v3305 = vsub.s32 %v3302, %v3304
    %v3306 = vrot.slane %v3298, %v3305
    %v3308 = vunpack.c.l.s4 1983009808
    %v3309 = vunpack.c.0.s8 %v3308
    %v3310 = vlaneseq
    %v3311 = vshrl.u32 %v3310, 7
    %v3312 = vsub.s32 %v3309, %v3311
    %v3313 = vrot.slane %v3299, %v3312
    %v3314 = vcombine.low %v3306, %v3313
    %v3315 = vcombine.low %v2007, %v2011
    %v3316 = vcombine.low %v2015, %v2019
    %v3318 = vunpack.c.l.s4 1983009808
    %v3319 = vunpack.c.0.s8 %v3318
    %v3320 = vlaneseq
    %v3321 = vshrl.u32 %v3320, 7
    %v3322 = vsub.s32 %v3319, %v3321
    %v3323 = vrot.slane %v3315, %v3322
    %v3325 = vunpack.c.l.s4 1983009808
    %v3326 = vunpack.c.0.s8 %v3325
    %v3327 = vlaneseq
    %v3328 = vshrl.u32 %v3327, 7
    %v3329 = vsub.s32 %v3326, %v3328
    %v3330 = vrot.slane %v3316, %v3329
    %v3331 = vcombine.low %v3323, %v3330
    %v3332 = vcombine.low %v2023, %v2027
    %v3333 = vcombine.low %v2031, %v2035
    %v3335 = vunpack.c.l.s4 1983009808
    %v3336 = vunpack.c.0.s8 %v3335
    %v3337 = vlaneseq
    %v3338 = vshrl.u32 %v3337, 7
    %v3339 = vsub.s32 %v3336, %v3338
    %v3340 = vrot.slane %v3332, %v3339
    %v3342 = vunpack.c.l.s4 1983009808
    %v3343 = vunpack.c.0.s8 %v3342
    %v3344 = vlaneseq
    %v3345 = vshrl.u32 %v3344, 7
    %v3346 = vsub.s32 %v3343, %v3345
    %v3347 = vrot.slane %v3333, %v3346
    %v3348 = vcombine.low %v3340, %v3347
    %v3349 = vcombine.low %v2039, %v2043
    %v3350 = vcombine.low %v2047, %v2051
    %v3352 = vunpack.c.l.s4 1983009808
    %v3353 = vunpack.c.0.s8 %v3352
    %v3354 = vlaneseq
    %v3355 = vshrl.u32 %v3354, 7
    %v3356 = vsub.s32 %v3353, %v3355
    %v3357 = vrot.slane %v3349, %v3356
    %v3359 = vunpack.c.l.s4 1983009808
    %v3360 = vunpack.c.0.s8 %v3359
    %v3361 = vlaneseq
    %v3362 = vshrl.u32 %v3361, 7
    %v3363 = vsub.s32 %v3360, %v3362
    %v3364 = vrot.slane %v3350, %v3363
    %v3365 = vcombine.low %v3357, %v3364
    %v3366 = vcombine.low %v2055, %v2059
    %v3367 = vcombine.low %v2063, %v2067
    %v3369 = vunpack.c.l.s4 1983009808
    %v3370 = vunpack.c.0.s8 %v3369
    %v3371 = vlaneseq
    %v3372 = vshrl.u32 %v3371, 7
    %v3373 = vsub.s32 %v3370, %v3372
    %v3374 = vrot.slane %v3366, %v3373
    %v3376 = vunpack.c.l.s4 1983009808
    %v3377 = vunpack.c.0.s8 %v3376
    %v3378 = vlaneseq
    %v3379 = vshrl.u32 %v3378, 7
    %v3380 = vsub.s32 %v3377, %v3379
    %v3381 = vrot.slane %v3367, %v3380
    %v3382 = vcombine.low %v3374, %v3381
    %v3383 = vcombine.low %v2071, %v2075
    %v3384 = vcombine.low %v2079, %v2083
    %v3386 = vunpack.c.l.s4 1983009808
    %v3387 = vunpack.c.0.s8 %v3386
    %v3388 = vlaneseq
    %v3389 = vshrl.u32 %v3388, 7
    %v3390 = vsub.s32 %v3387, %v3389
    %v3391 = vrot.slane %v3383, %v3390
    %v3393 = vunpack.c.l.s4 1983009808
    %v3394 = vunpack.c.0.s8 %v3393
    %v3395 = vlaneseq
    %v3396 = vshrl.u32 %v3395, 7
    %v3397 = vsub.s32 %v3394, %v3396
    %v3398 = vrot.slane %v3384, %v3397
    %v3399 = vcombine.low %v3391, %v3398
    %v3400 = vcombine.low %v2087, %v2091
    %v3401 = vcombine.low %v2095, %v2099
    %v3403 = vunpack.c.l.s4 1983009808
    %v3404 = vunpack.c.0.s8 %v3403
    %v3405 = vlaneseq
    %v3406 = vshrl.u32 %v3405, 7
    %v3407 = vsub.s32 %v3404, %v3406
    %v3408 = vrot.slane %v3400, %v3407
    %v3410 = vunpack.c.l.s4 1983009808
    %v3411 = vunpack.c.0.s8 %v3410
    %v3412 = vlaneseq
    %v3413 = vshrl.u32 %v3412, 7
    %v3414 = vsub.s32 %v3411, %v3413
    %v3415 = vrot.slane %v3401, %v3414
    %v3416 = vcombine.low %v3408, %v3415
    %v3417 = vcombine.low %v2103, %v2107
    %v3418 = vcombine.low %v2111, %v2115
    %v3420 = vunpack.c.l.s4 1983009808
    %v3421 = vunpack.c.0.s8 %v3420
    %v3422 = vlaneseq
    %v3423 = vshrl.u32 %v3422, 7
    %v3424 = vsub.s32 %v3421, %v3423
    %v3425 = vrot.slane %v3417, %v3424
    %v3427 = vunpack.c.l.s4 1983009808
    %v3428 = vunpack.c.0.s8 %v3427
    %v3429 = vlaneseq
    %v3430 = vshrl.u32 %v3429, 7
    %v3431 = vsub.s32 %v3428, %v3430
    %v3432 = vrot.slane %v3418, %v3431
    %v3433 = vcombine.low %v3425, %v3432
    %v3434 = vcombine.low %v2119, %v2123
    %v3435 = vcombine.low %v2127, %v2131
    %v3437 = vunpack.c.l.s4 1983009808
    %v3438 = vunpack.c.0.s8 %v3437
    %v3439 = vlaneseq
    %v3440 = vshrl.u32 %v3439, 7
    %v3441 = vsub.s32 %v3438, %v3440
    %v3442 = vrot.slane %v3434, %v3441
    %v3444 = vunpack.c.l.s4 1983009808
    %v3445 = vunpack.c.0.s8 %v3444
    %v3446 = vlaneseq
    %v3447 = vshrl.u32 %v3446, 7
    %v3448 = vsub.s32 %v3445, %v3447
    %v3449 = vrot.slane %v3435, %v3448
    %v3450 = vcombine.low %v3442, %v3449
    %v3451 = vcombine.low %v2135, %v2139
    %v3452 = vcombine.low %v2143, %v2147
    %v3454 = vunpack.c.l.s4 1983009808
    %v3455 = vunpack.c.0.s8 %v3454
    %v3456 = vlaneseq
    %v3457 = vshrl.u32 %v3456, 7
    %v3458 = vsub.s32 %v3455, %v3457
    %v3459 = vrot.slane %v3451, %v3458
    %v3461 = vunpack.c.l.s4 1983009808
    %v3462 = vunpack.c.0.s8 %v3461
    %v3463 = vlaneseq
    %v3464 = vshrl.u32 %v3463, 7
    %v3465 = vsub.s32 %v3462, %v3464
    %v3466 = vrot.slane %v3452, %v3465
    %v3467 = vcombine.low %v3459, %v3466
    %v3468 = vcombine.low %v2151, %v2155
    %v3469 = vcombine.low %v2159, %v2163
    %v3471 = vunpack.c.l.s4 1983009808
    %v3472 = vunpack.c.0.s8 %v3471
    %v3473 = vlaneseq
    %v3474 = vshrl.u32 %v3473, 7
    %v3475 = vsub.s32 %v3472, %v3474
    %v3476 = vrot.slane %v3468, %v3475
    %v3478 = vunpack.c.l.s4 1983009808
    %v3479 = vunpack.c.0.s8 %v3478
    %v3480 = vlaneseq
    %v3481 = vshrl.u32 %v3480, 7
    %v3482 = vsub.s32 %v3479, %v3481
    %v3483 = vrot.slane %v3469, %v3482
    %v3484 = vcombine.low %v3476, %v3483
    %v3485 = vcombine.low %v2167, %v2171
    %v3486 = vcombine.low %v2175, %v2179
    %v3488 = vunpack.c.l.s4 1983009808
    %v3489 = vunpack.c.0.s8 %v3488
    %v3490 = vlaneseq
    %v3491 = vshrl.u32 %v3490, 7
    %v3492 = vsub.s32 %v3489, %v3491
    %v3493 = vrot.slane %v3485, %v3492
    %v3495 = vunpack.c.l.s4 1983009808
    %v3496 = vunpack.c.0.s8 %v3495
    %v3497 = vlaneseq
    %v3498 = vshrl.u32 %v3497, 7
    %v3499 = vsub.s32 %v3496, %v3498
    %v3500 = vrot.slane %v3486, %v3499
    %v3501 = vcombine.low %v3493, %v3500
    %v3502 = vcombine.low %v2183, %v2187
    %v3503 = vcombine.low %v2191, %v2195
    %v3505 = vunpack.c.l.s4 1983009808
    %v3506 = vunpack.c.0.s8 %v3505
    %v3507 = vlaneseq
    %v3508 = vshrl.u32 %v3507, 7
    %v3509 = vsub.s32 %v3506, %v3508
    %v3510 = vrot.slane %v3502, %v3509
    %v3512 = vunpack.c.l.s4 1983009808
    %v3513 = vunpack.c.0.s8 %v3512
    %v3514 = vlaneseq
    %v3515 = vshrl.u32 %v3514, 7
    %v3516 = vsub.s32 %v3513, %v3515
    %v3517 = vrot.slane %v3503, %v3516
    %v3518 = vcombine.low %v3510, %v3517
    %v3519 = vcombine.low %v2199, %v2203
    %v3520 = vcombine.low %v2207, %v2211
    %v3522 = vunpack.c.l.s4 1983009808
    %v3523 = vunpack.c.0.s8 %v3522
    %v3524 = vlaneseq
    %v3525 = vshrl.u32 %v3524, 7
    %v3526 = vsub.s32 %v3523, %v3525
    %v3527 = vrot.slane %v3519, %v3526
    %v3529 = vunpack.c.l.s4 1983009808
    %v3530 = vunpack.c.0.s8 %v3529
    %v3531 = vlaneseq
    %v3532 = vshrl.u32 %v3531, 7
    %v3533 = vsub.s32 %v3530, %v3532
    %v3534 = vrot.slane %v3520, %v3533
    %v3535 = vcombine.low %v3527, %v3534
    %v3536 = vcombine.low %v2215, %v2219
    %v3537 = vcombine.low %v2223, %v2227
    %v3539 = vunpack.c.l.s4 1983009808
    %v3540 = vunpack.c.0.s8 %v3539
    %v3541 = vlaneseq
    %v3542 = vshrl.u32 %v3541, 7
    %v3543 = vsub.s32 %v3540, %v3542
    %v3544 = vrot.slane %v3536, %v3543
    %v3546 = vunpack.c.l.s4 1983009808
    %v3547 = vunpack.c.0.s8 %v3546
    %v3548 = vlaneseq
    %v3549 = vshrl.u32 %v3548, 7
    %v3550 = vsub.s32 %v3547, %v3549
    %v3551 = vrot.slane %v3537, %v3550
    %v3552 = vcombine.low %v3544, %v3551
    %v3553 = vcombine.low %v2231, %v2235
    %v3554 = vcombine.low %v2239, %v2243
    %v3556 = vunpack.c.l.s4 1983009808
    %v3557 = vunpack.c.0.s8 %v3556
    %v3558 = vlaneseq
    %v3559 = vshrl.u32 %v3558, 7
    %v3560 = vsub.s32 %v3557, %v3559
    %v3561 = vrot.slane %v3553, %v3560
    %v3563 = vunpack.c.l.s4 1983009808
    %v3564 = vunpack.c.0.s8 %v3563
    %v3565 = vlaneseq
    %v3566 = vshrl.u32 %v3565, 7
    %v3567 = vsub.s32 %v3564, %v3566
    %v3568 = vrot.slane %v3554, %v3567
    %v3569 = vcombine.low %v3561, %v3568
    %v3570 = vcombine.low %v2247, %v2251
    %v3571 = vcombine.low %v2255, %v2259
    %v3573 = vunpack.c.l.s4 1983009808
    %v3574 = vunpack.c.0.s8 %v3573
    %v3575 = vlaneseq
    %v3576 = vshrl.u32 %v3575, 7
    %v3577 = vsub.s32 %v3574, %v3576
    %v3578 = vrot.slane %v3570, %v3577
    %v3580 = vunpack.c.l.s4 1983009808
    %v3581 = vunpack.c.0.s8 %v3580
    %v3582 = vlaneseq
    %v3583 = vshrl.u32 %v3582, 7
    %v3584 = vsub.s32 %v3581, %v3583
    %v3585 = vrot.slane %v3571, %v3584
    %v3586 = vcombine.low %v3578, %v3585
    %v3587 = vcombine.low %v2263, %v2267
    %v3588 = vcombine.low %v2271, %v2275
    %v3590 = vunpack.c.l.s4 1983009808
    %v3591 = vunpack.c.0.s8 %v3590
    %v3592 = vlaneseq
    %v3593 = vshrl.u32 %v3592, 7
    %v3594 = vsub.s32 %v3591, %v3593
    %v3595 = vrot.slane %v3587, %v3594
    %v3597 = vunpack.c.l.s4 1983009808
    %v3598 = vunpack.c.0.s8 %v3597
    %v3599 = vlaneseq
    %v3600 = vshrl.u32 %v3599, 7
    %v3601 = vsub.s32 %v3598, %v3600
    %v3602 = vrot.slane %v3588, %v3601
    %v3603 = vcombine.low %v3595, %v3602
    %v3604 = vcombine.low %v2279, %v2283
    %v3605 = vcombine.low %v2287, %v2291
    %v3607 = vunpack.c.l.s4 1983009808
    %v3608 = vunpack.c.0.s8 %v3607
    %v3609 = vlaneseq
    %v3610 = vshrl.u32 %v3609, 7
    %v3611 = vsub.s32 %v3608, %v3610
    %v3612 = vrot.slane %v3604, %v3611
    %v3614 = vunpack.c.l.s4 1983009808
    %v3615 = vunpack.c.0.s8 %v3614
    %v3616 = vlaneseq
    %v3617 = vshrl.u32 %v3616, 7
    %v3618 = vsub.s32 %v3615, %v3617
    %v3619 = vrot.slane %v3605, %v3618
    %v3620 = vcombine.low %v3612, %v3619
    %v3621 = vcombine.low %v2295, %v2299
    %v3622 = vcombine.low %v2303, %v2307
    %v3624 = vunpack.c.l.s4 1983009808
    %v3625 = vunpack.c.0.s8 %v3624
    %v3626 = vlaneseq
    %v3627 = vshrl.u32 %v3626, 7
    %v3628 = vsub.s32 %v3625, %v3627
    %v3629 = vrot.slane %v3621, %v3628
    %v3631 = vunpack.c.l.s4 1983009808
    %v3632 = vunpack.c.0.s8 %v3631
    %v3633 = vlaneseq
    %v3634 = vshrl.u32 %v3633, 7
    %v3635 = vsub.s32 %v3632, %v3634
    %v3636 = vrot.slane %v3622, %v3635
    %v3637 = vcombine.low %v3629, %v3636
    %v3638 = vcombine.low %v2311, %v2315
    %v3639 = vcombine.low %v2319, %v2323
    %v3641 = vunpack.c.l.s4 1983009808
    %v3642 = vunpack.c.0.s8 %v3641
    %v3643 = vlaneseq
    %v3644 = vshrl.u32 %v3643, 7
    %v3645 = vsub.s32 %v3642, %v3644
    %v3646 = vrot.slane %v3638, %v3645
    %v3648 = vunpack.c.l.s4 1983009808
    %v3649 = vunpack.c.0.s8 %v3648
    %v3650 = vlaneseq
    %v3651 = vshrl.u32 %v3650, 7
    %v3652 = vsub.s32 %v3649, %v3651
    %v3653 = vrot.slane %v3639, %v3652
    %v3654 = vcombine.low %v3646, %v3653
    %v3655 = vcombine.low %v2327, %v2331
    %v3656 = vcombine.low %v2335, %v2339
    %v3658 = vunpack.c.l.s4 1983009808
    %v3659 = vunpack.c.0.s8 %v3658
    %v3660 = vlaneseq
    %v3661 = vshrl.u32 %v3660, 7
    %v3662 = vsub.s32 %v3659, %v3661
    %v3663 = vrot.slane %v3655, %v3662
    %v3665 = vunpack.c.l.s4 1983009808
    %v3666 = vunpack.c.0.s8 %v3665
    %v3667 = vlaneseq
    %v3668 = vshrl.u32 %v3667, 7
    %v3669 = vsub.s32 %v3666, %v3668
    %v3670 = vrot.slane %v3656, %v3669
    %v3671 = vcombine.low %v3663, %v3670
    %v3672 = vcombine.low %v2343, %v2347
    %v3673 = vcombine.low %v2351, %v2355
    %v3675 = vunpack.c.l.s4 1983009808
    %v3676 = vunpack.c.0.s8 %v3675
    %v3677 = vlaneseq
    %v3678 = vshrl.u32 %v3677, 7
    %v3679 = vsub.s32 %v3676, %v3678
    %v3680 = vrot.slane %v3672, %v3679
    %v3682 = vunpack.c.l.s4 1983009808
    %v3683 = vunpack.c.0.s8 %v3682
    %v3684 = vlaneseq
    %v3685 = vshrl.u32 %v3684, 7
    %v3686 = vsub.s32 %v3683, %v3685
    %v3687 = vrot.slane %v3673, %v3686
    %v3688 = vcombine.low %v3680, %v3687
    %v3689 = vcombine.low %v2359, %v2363
    %v3690 = vcombine.low %v2367, %v2371
    %v3692 = vunpack.c.l.s4 1983009808
    %v3693 = vunpack.c.0.s8 %v3692
    %v3694 = vlaneseq
    %v3695 = vshrl.u32 %v3694, 7
    %v3696 = vsub.s32 %v3693, %v3695
    %v3697 = vrot.slane %v3689, %v3696
    %v3699 = vunpack.c.l.s4 1983009808
    %v3700 = vunpack.c.0.s8 %v3699
    %v3701 = vlaneseq
    %v3702 = vshrl.u32 %v3701, 7
    %v3703 = vsub.s32 %v3700, %v3702
    %v3704 = vrot.slane %v3690, %v3703
    %v3705 = vcombine.low %v3697, %v3704
    %v3706 = vcombine.low %v2375, %v2379
    %v3707 = vcombine.low %v2383, %v2387
    %v3709 = vunpack.c.l.s4 1983009808
    %v3710 = vunpack.c.0.s8 %v3709
    %v3711 = vlaneseq
    %v3712 = vshrl.u32 %v3711, 7
    %v3713 = vsub.s32 %v3710, %v3712
    %v3714 = vrot.slane %v3706, %v3713
    %v3716 = vunpack.c.l.s4 1983009808
    %v3717 = vunpack.c.0.s8 %v3716
    %v3718 = vlaneseq
    %v3719 = vshrl.u32 %v3718, 7
    %v3720 = vsub.s32 %v3717, %v3719
    %v3721 = vrot.slane %v3707, %v3720
    %v3722 = vcombine.low %v3714, %v3721
    %v3723 = vcombine.low %v2391, %v2395
    %v3724 = vcombine.low %v2399, %v2403
    %v3726 = vunpack.c.l.s4 1983009808
    %v3727 = vunpack.c.0.s8 %v3726
    %v3728 = vlaneseq
    %v3729 = vshrl.u32 %v3728, 7
    %v3730 = vsub.s32 %v3727, %v3729
    %v3731 = vrot.slane %v3723, %v3730
    %v3733 = vunpack.c.l.s4 1983009808
    %v3734 = vunpack.c.0.s8 %v3733
    %v3735 = vlaneseq
    %v3736 = vshrl.u32 %v3735, 7
    %v3737 = vsub.s32 %v3734, %v3736
    %v3738 = vrot.slane %v3724, %v3737
    %v3739 = vcombine.low %v3731, %v3738
    %v3740 = vcombine.low %v2407, %v2411
    %v3741 = vcombine.low %v2415, %v2419
    %v3743 = vunpack.c.l.s4 1983009808
    %v3744 = vunpack.c.0.s8 %v3743
    %v3745 = vlaneseq
    %v3746 = vshrl.u32 %v3745, 7
    %v3747 = vsub.s32 %v3744, %v3746
    %v3748 = vrot.slane %v3740, %v3747
    %v3750 = vunpack.c.l.s4 1983009808
    %v3751 = vunpack.c.0.s8 %v3750
    %v3752 = vlaneseq
    %v3753 = vshrl.u32 %v3752, 7
    %v3754 = vsub.s32 %v3751, %v3753
    %v3755 = vrot.slane %v3741, %v3754
    %v3756 = vcombine.low %v3748, %v3755
    %v3757 = vcombine.low %v2423, %v2427
    %v3758 = vcombine.low %v2431, %v2435
    %v3760 = vunpack.c.l.s4 1983009808
    %v3761 = vunpack.c.0.s8 %v3760
    %v3762 = vlaneseq
    %v3763 = vshrl.u32 %v3762, 7
    %v3764 = vsub.s32 %v3761, %v3763
    %v3765 = vrot.slane %v3757, %v3764
    %v3767 = vunpack.c.l.s4 1983009808
    %v3768 = vunpack.c.0.s8 %v3767
    %v3769 = vlaneseq
    %v3770 = vshrl.u32 %v3769, 7
    %v3771 = vsub.s32 %v3768, %v3770
    %v3772 = vrot.slane %v3758, %v3771
    %v3773 = vcombine.low %v3765, %v3772
    %v3774 = vcombine.low %v2439, %v2443
    %v3775 = vcombine.low %v2447, %v2451
    %v3777 = vunpack.c.l.s4 1983009808
    %v3778 = vunpack.c.0.s8 %v3777
    %v3779 = vlaneseq
    %v3780 = vshrl.u32 %v3779, 7
    %v3781 = vsub.s32 %v3778, %v3780
    %v3782 = vrot.slane %v3774, %v3781
    %v3784 = vunpack.c.l.s4 1983009808
    %v3785 = vunpack.c.0.s8 %v3784
    %v3786 = vlaneseq
    %v3787 = vshrl.u32 %v3786, 7
    %v3788 = vsub.s32 %v3785, %v3787
    %v3789 = vrot.slane %v3775, %v3788
    %v3790 = vcombine.low %v3782, %v3789
    %v3791 = vcombine.low %v2455, %v2459
    %v3792 = vcombine.low %v2463, %v2467
    %v3794 = vunpack.c.l.s4 1983009808
    %v3795 = vunpack.c.0.s8 %v3794
    %v3796 = vlaneseq
    %v3797 = vshrl.u32 %v3796, 7
    %v3798 = vsub.s32 %v3795, %v3797
    %v3799 = vrot.slane %v3791, %v3798
    %v3801 = vunpack.c.l.s4 1983009808
    %v3802 = vunpack.c.0.s8 %v3801
    %v3803 = vlaneseq
    %v3804 = vshrl.u32 %v3803, 7
    %v3805 = vsub.s32 %v3802, %v3804
    %v3806 = vrot.slane %v3792, %v3805
    %v3807 = vcombine.low %v3799, %v3806
    %v3808 = vcombine.low %v2471, %v2475
    %v3809 = vcombine.low %v2479, %v2483
    %v3811 = vunpack.c.l.s4 1983009808
    %v3812 = vunpack.c.0.s8 %v3811
    %v3813 = vlaneseq
    %v3814 = vshrl.u32 %v3813, 7
    %v3815 = vsub.s32 %v3812, %v3814
    %v3816 = vrot.slane %v3808, %v3815
    %v3818 = vunpack.c.l.s4 1983009808
    %v3819 = vunpack.c.0.s8 %v3818
    %v3820 = vlaneseq
    %v3821 = vshrl.u32 %v3820, 7
    %v3822 = vsub.s32 %v3819, %v3821
    %v3823 = vrot.slane %v3809, %v3822
    %v3824 = vcombine.low %v3816, %v3823
    %v3825 = vcombine.low %v2487, %v2491
    %v3826 = vcombine.low %v2495, %v2499
    %v3828 = vunpack.c.l.s4 1983009808
    %v3829 = vunpack.c.0.s8 %v3828
    %v3830 = vlaneseq
    %v3831 = vshrl.u32 %v3830, 7
    %v3832 = vsub.s32 %v3829, %v3831
    %v3833 = vrot.slane %v3825, %v3832
    %v3835 = vunpack.c.l.s4 1983009808
    %v3836 = vunpack.c.0.s8 %v3835
    %v3837 = vlaneseq
    %v3838 = vshrl.u32 %v3837, 7
    %v3839 = vsub.s32 %v3836, %v3838
    %v3840 = vrot.slane %v3826, %v3839
    %v3841 = vcombine.low %v3833, %v3840
    %v3842 = vcombine.low %v2503, %v2507
    %v3843 = vcombine.low %v2511, %v2515
    %v3845 = vunpack.c.l.s4 1983009808
    %v3846 = vunpack.c.0.s8 %v3845
    %v3847 = vlaneseq
    %v3848 = vshrl.u32 %v3847, 7
    %v3849 = vsub.s32 %v3846, %v3848
    %v3850 = vrot.slane %v3842, %v3849
    %v3852 = vunpack.c.l.s4 1983009808
    %v3853 = vunpack.c.0.s8 %v3852
    %v3854 = vlaneseq
    %v3855 = vshrl.u32 %v3854, 7
    %v3856 = vsub.s32 %v3853, %v3855
    %v3857 = vrot.slane %v3843, %v3856
    %v3858 = vcombine.low %v3850, %v3857
    %v3859 = vcombine.low %v2519, %v2523
    %v3860 = vcombine.low %v2527, %v2531
    %v3862 = vunpack.c.l.s4 1983009808
    %v3863 = vunpack.c.0.s8 %v3862
    %v3864 = vlaneseq
    %v3865 = vshrl.u32 %v3864, 7
    %v3866 = vsub.s32 %v3863, %v3865
    %v3867 = vrot.slane %v3859, %v3866
    %v3869 = vunpack.c.l.s4 1983009808
    %v3870 = vunpack.c.0.s8 %v3869
    %v3871 = vlaneseq
    %v3872 = vshrl.u32 %v3871, 7
    %v3873 = vsub.s32 %v3870, %v3872
    %v3874 = vrot.slane %v3860, %v3873
    %v3875 = vcombine.low %v3867, %v3874
    %v3940 = vmul.f32 %v36, %v2804
    %v3941 = vmul.f32 %v37, %v2821
    %v3942 = vmul.f32 %v38, %v2838
    %v3943 = vmul.f32 %v39, %v2855
    %v3944 = vmul.f32 %v40, %v2872
    %v3945 = vmul.f32 %v41, %v2889
    %v3946 = vmul.f32 %v42, %v2906
    %v3947 = vmul.f32 %v43, %v2923
    %v3948 = vmul.f32 %v44, %v2940
    %v3949 = vmul.f32 %v45, %v2957
    %v3950 = vmul.f32 %v46, %v2974
    %v3951 = vmul.f32 %v47, %v2991
    %v3952 = vmul.f32 %v48, %v3008
    %v3953 = vmul.f32 %v49, %v3025
    %v3954 = vmul.f32 %v50, %v3042
    %v3955 = vmul.f32 %v51, %v3059
    %v3956 = vmul.f32 %v52, %v3076
    %v3957 = vmul.f32 %v53, %v3093
    %v3958 = vmul.f32 %v54, %v3110
    %v3959 = vmul.f32 %v55, %v3127
    %v3960 = vmul.f32 %v56, %v3144
    %v3961 = vmul.f32 %v57, %v3161
    %v3962 = vmul.f32 %v58, %v3178
    %v3963 = vmul.f32 %v59, %v3195
    %v3964 = vmul.f32 %v60, %v3212
    %v3965 = vmul.f32 %v61, %v3229
    %v3966 = vmul.f32 %v62, %v3246
    %v3967 = vmul.f32 %v63, %v3263
    %v3968 = vmul.f32 %v64, %v3280
    %v3969 = vmul.f32 %v65, %v3297
    %v3970 = vmul.f32 %v66, %v3314
    %v3971 = vmul.f32 %v67, %v3331
    %v3972 = vmul.f32 %v68, %v3348
    %v3973 = vmul.f32 %v69, %v3365
    %v3974 = vmul.f32 %v70, %v3382
    %v3975 = vmul.f32 %v71, %v3399
    %v3976 = vmul.f32 %v72, %v3416
    %v3977 = vmul.f32 %v73, %v3433
    %v3978 = vmul.f32 %v74, %v3450
    %v3979 = vmul.f32 %v75, %v3467
    %v3980 = vmul.f32 %v76, %v3484
    %v3981 = vmul.f32 %v77, %v3501
    %v3982 = vmul.f32 %v78, %v3518
    %v3983 = vmul.f32 %v79, %v3535
    %v3984 = vmul.f32 %v80, %v3552
    %v3985 = vmul.f32 %v81, %v3569
    %v3986 = vmul.f32 %v82, %v3586
    %v3987 = vmul.f32 %v83, %v3603
    %v3988 = vmul.f32 %v84, %v3620
    %v3989 = vmul.f32 %v85, %v3637
    %v3990 = vmul.f32 %v86, %v3654
    %v3991 = vmul.f32 %v87, %v3671
    %v3992 = vmul.f32 %v88, %v3688
    %v3993 = vmul.f32 %v89, %v3705
    %v3994 = vmul.f32 %v90, %v3722
    %v3995 = vmul.f32 %v91, %v3739
    %v3996 = vmul.f32 %v92, %v3756
    %v3997 = vmul.f32 %v93, %v3773
    %v3998 = vmul.f32 %v94, %v3790
    %v3999 = vmul.f32 %v95, %v3807
    %v4000 = vmul.f32 %v96, %v3824
    %v4001 = vmul.f32 %v97, %v3841
    %v4002 = vmul.f32 %v98, %v3858
    %v4003 = vmul.f32 %v99, %v3875
    %v4068 = vcombine.high %v3940, %v3940
    %v4070 = vunpack.c.l.s4 1983009808
    %v4071 = vunpack.c.0.s8 %v4070
    %v4072 = vlaneseq
    %v4073 = vshrl.u32 %v4072, 7
    %v4074 = vsub.s32 %v4071, %v4073
    %v4075 = vrot.slane %v3940, %v4074
    %v4077 = vunpack.c.l.s4 1983009808
    %v4078 = vunpack.c.0.s8 %v4077
    %v4079 = vlaneseq
    %v4080 = vshrl.u32 %v4079, 7
    %v4081 = vsub.s32 %v4078, %v4080
    %v4082 = vrot.slane %v4068, %v4081
    %v4083 = vcombine.high %v4075, %v4075
    %v4084 = vcombine.high %v4082, %v4082
    %v4085 = vcombine.high %v3941, %v3941
    %v4087 = vunpack.c.l.s4 1983009808
    %v4088 = vunpack.c.0.s8 %v4087
    %v4089 = vlaneseq
    %v4090 = vshrl.u32 %v4089, 7
    %v4091 = vsub.s32 %v4088, %v4090
    %v4092 = vrot.slane %v3941, %v4091
    %v4094 = vunpack.c.l.s4 1983009808
    %v4095 = vunpack.c.0.s8 %v4094
    %v4096 = vlaneseq
    %v4097 = vshrl.u32 %v4096, 7
    %v4098 = vsub.s32 %v4095, %v4097
    %v4099 = vrot.slane %v4085, %v4098
    %v4100 = vcombine.high %v4092, %v4092
    %v4101 = vcombine.high %v4099, %v4099
    %v4102 = vcombine.high %v3942, %v3942
    %v4104 = vunpack.c.l.s4 1983009808
    %v4105 = vunpack.c.0.s8 %v4104
    %v4106 = vlaneseq
    %v4107 = vshrl.u32 %v4106, 7
    %v4108 = vsub.s32 %v4105, %v4107
    %v4109 = vrot.slane %v3942, %v4108
    %v4111 = vunpack.c.l.s4 1983009808
    %v4112 = vunpack.c.0.s8 %v4111
    %v4113 = vlaneseq
    %v4114 = vshrl.u32 %v4113, 7
    %v4115 = vsub.s32 %v4112, %v4114
    %v4116 = vrot.slane %v4102, %v4115
    %v4117 = vcombine.high %v4109, %v4109
    %v4118 = vcombine.high %v4116, %v4116
    %v4119 = vcombine.high %v3943, %v3943
    %v4121 = vunpack.c.l.s4 1983009808
    %v4122 = vunpack.c.0.s8 %v4121
    %v4123 = vlaneseq
    %v4124 = vshrl.u32 %v4123, 7
    %v4125 = vsub.s32 %v4122, %v4124
    %v4126 = vrot.slane %v3943, %v4125
    %v4128 = vunpack.c.l.s4 1983009808
    %v4129 = vunpack.c.0.s8 %v4128
    %v4130 = vlaneseq
    %v4131 = vshrl.u32 %v4130, 7
    %v4132 = vsub.s32 %v4129, %v4131
    %v4133 = vrot.slane %v4119, %v4132
    %v4134 = vcombine.high %v4126, %v4126
    %v4135 = vcombine.high %v4133, %v4133
    %v4136 = vcombine.high %v3944, %v3944
    %v4138 = vunpack.c.l.s4 1983009808
    %v4139 = vunpack.c.0.s8 %v4138
    %v4140 = vlaneseq
    %v4141 = vshrl.u32 %v4140, 7
    %v4142 = vsub.s32 %v4139, %v4141
    %v4143 = vrot.slane %v3944, %v4142
    %v4145 = vunpack.c.l.s4 1983009808
    %v4146 = vunpack.c.0.s8 %v4145
    %v4147 = vlaneseq
    %v4148 = vshrl.u32 %v4147, 7
    %v4149 = vsub.s32 %v4146, %v4148
    %v4150 = vrot.slane %v4136, %v4149
    %v4151 = vcombine.high %v4143, %v4143
    %v4152 = vcombine.high %v4150, %v4150
    %v4153 = vcombine.high %v3945, %v3945
    %v4155 = vunpack.c.l.s4 1983009808
    %v4156 = vunpack.c.0.s8 %v4155
    %v4157 = vlaneseq
    %v4158 = vshrl.u32 %v4157, 7
    %v4159 = vsub.s32 %v4156, %v4158
    %v4160 = vrot.slane %v3945, %v4159
    %v4162 = vunpack.c.l.s4 1983009808
    %v4163 = vunpack.c.0.s8 %v4162
    %v4164 = vlaneseq
    %v4165 = vshrl.u32 %v4164, 7
    %v4166 = vsub.s32 %v4163, %v4165
    %v4167 = vrot.slane %v4153, %v4166
    %v4168 = vcombine.high %v4160, %v4160
    %v4169 = vcombine.high %v4167, %v4167
    %v4170 = vcombine.high %v3946, %v3946
    %v4172 = vunpack.c.l.s4 1983009808
    %v4173 = vunpack.c.0.s8 %v4172
    %v4174 = vlaneseq
    %v4175 = vshrl.u32 %v4174, 7
    %v4176 = vsub.s32 %v4173, %v4175
    %v4177 = vrot.slane %v3946, %v4176
    %v4179 = vunpack.c.l.s4 1983009808
    %v4180 = vunpack.c.0.s8 %v4179
    %v4181 = vlaneseq
    %v4182 = vshrl.u32 %v4181, 7
    %v4183 = vsub.s32 %v4180, %v4182
    %v4184 = vrot.slane %v4170, %v4183
    %v4185 = vcombine.high %v4177, %v4177
    %v4186 = vcombine.high %v4184, %v4184
    %v4187 = vcombine.high %v3947, %v3947
    %v4189 = vunpack.c.l.s4 1983009808
    %v4190 = vunpack.c.0.s8 %v4189
    %v4191 = vlaneseq
    %v4192 = vshrl.u32 %v4191, 7
    %v4193 = vsub.s32 %v4190, %v4192
    %v4194 = vrot.slane %v3947, %v4193
    %v4196 = vunpack.c.l.s4 1983009808
    %v4197 = vunpack.c.0.s8 %v4196
    %v4198 = vlaneseq
    %v4199 = vshrl.u32 %v4198, 7
    %v4200 = vsub.s32 %v4197, %v4199
    %v4201 = vrot.slane %v4187, %v4200
    %v4202 = vcombine.high %v4194, %v4194
    %v4203 = vcombine.high %v4201, %v4201
    %v4204 = vcombine.high %v3948, %v3948
    %v4206 = vunpack.c.l.s4 1983009808
    %v4207 = vunpack.c.0.s8 %v4206
    %v4208 = vlaneseq
    %v4209 = vshrl.u32 %v4208, 7
    %v4210 = vsub.s32 %v4207, %v4209
    %v4211 = vrot.slane %v3948, %v4210
    %v4213 = vunpack.c.l.s4 1983009808
    %v4214 = vunpack.c.0.s8 %v4213
    %v4215 = vlaneseq
    %v4216 = vshrl.u32 %v4215, 7
    %v4217 = vsub.s32 %v4214, %v4216
    %v4218 = vrot.slane %v4204, %v4217
    %v4219 = vcombine.high %v4211, %v4211
    %v4220 = vcombine.high %v4218, %v4218
    %v4221 = vcombine.high %v3949, %v3949
    %v4223 = vunpack.c.l.s4 1983009808
    %v4224 = vunpack.c.0.s8 %v4223
    %v4225 = vlaneseq
    %v4226 = vshrl.u32 %v4225, 7
    %v4227 = vsub.s32 %v4224, %v4226
    %v4228 = vrot.slane %v3949, %v4227
    %v4230 = vunpack.c.l.s4 1983009808
    %v4231 = vunpack.c.0.s8 %v4230
    %v4232 = vlaneseq
    %v4233 = vshrl.u32 %v4232, 7
    %v4234 = vsub.s32 %v4231, %v4233
    %v4235 = vrot.slane %v4221, %v4234
    %v4236 = vcombine.high %v4228, %v4228
    %v4237 = vcombine.high %v4235, %v4235
    %v4238 = vcombine.high %v3950, %v3950
    %v4240 = vunpack.c.l.s4 1983009808
    %v4241 = vunpack.c.0.s8 %v4240
    %v4242 = vlaneseq
    %v4243 = vshrl.u32 %v4242, 7
    %v4244 = vsub.s32 %v4241, %v4243
    %v4245 = vrot.slane %v3950, %v4244
    %v4247 = vunpack.c.l.s4 1983009808
    %v4248 = vunpack.c.0.s8 %v4247
    %v4249 = vlaneseq
    %v4250 = vshrl.u32 %v4249, 7
    %v4251 = vsub.s32 %v4248, %v4250
    %v4252 = vrot.slane %v4238, %v4251
    %v4253 = vcombine.high %v4245, %v4245
    %v4254 = vcombine.high %v4252, %v4252
    %v4255 = vcombine.high %v3951, %v3951
    %v4257 = vunpack.c.l.s4 1983009808
    %v4258 = vunpack.c.0.s8 %v4257
    %v4259 = vlaneseq
    %v4260 = vshrl.u32 %v4259, 7
    %v4261 = vsub.s32 %v4258, %v4260
    %v4262 = vrot.slane %v3951, %v4261
    %v4264 = vunpack.c.l.s4 1983009808
    %v4265 = vunpack.c.0.s8 %v4264
    %v4266 = vlaneseq
    %v4267 = vshrl.u32 %v4266, 7
    %v4268 = vsub.s32 %v4265, %v4267
    %v4269 = vrot.slane %v4255, %v4268
    %v4270 = vcombine.high %v4262, %v4262
    %v4271 = vcombine.high %v4269, %v4269
    %v4272 = vcombine.high %v3952, %v3952
    %v4274 = vunpack.c.l.s4 1983009808
    %v4275 = vunpack.c.0.s8 %v4274
    %v4276 = vlaneseq
    %v4277 = vshrl.u32 %v4276, 7
    %v4278 = vsub.s32 %v4275, %v4277
    %v4279 = vrot.slane %v3952, %v4278
    %v4281 = vunpack.c.l.s4 1983009808
    %v4282 = vunpack.c.0.s8 %v4281
    %v4283 = vlaneseq
    %v4284 = vshrl.u32 %v4283, 7
    %v4285 = vsub.s32 %v4282, %v4284
    %v4286 = vrot.slane %v4272, %v4285
    %v4287 = vcombine.high %v4279, %v4279
    %v4288 = vcombine.high %v4286, %v4286
    %v4289 = vcombine.high %v3953, %v3953
    %v4291 = vunpack.c.l.s4 1983009808
    %v4292 = vunpack.c.0.s8 %v4291
    %v4293 = vlaneseq
    %v4294 = vshrl.u32 %v4293, 7
    %v4295 = vsub.s32 %v4292, %v4294
    %v4296 = vrot.slane %v3953, %v4295
    %v4298 = vunpack.c.l.s4 1983009808
    %v4299 = vunpack.c.0.s8 %v4298
    %v4300 = vlaneseq
    %v4301 = vshrl.u32 %v4300, 7
    %v4302 = vsub.s32 %v4299, %v4301
    %v4303 = vrot.slane %v4289, %v4302
    %v4304 = vcombine.high %v4296, %v4296
    %v4305 = vcombine.high %v4303, %v4303
    %v4306 = vcombine.high %v3954, %v3954
    %v4308 = vunpack.c.l.s4 1983009808
    %v4309 = vunpack.c.0.s8 %v4308
    %v4310 = vlaneseq
    %v4311 = vshrl.u32 %v4310, 7
    %v4312 = vsub.s32 %v4309, %v4311
    %v4313 = vrot.slane %v3954, %v4312
    %v4315 = vunpack.c.l.s4 1983009808
    %v4316 = vunpack.c.0.s8 %v4315
    %v4317 = vlaneseq
    %v4318 = vshrl.u32 %v4317, 7
    %v4319 = vsub.s32 %v4316, %v4318
    %v4320 = vrot.slane %v4306, %v4319
    %v4321 = vcombine.high %v4313, %v4313
    %v4322 = vcombine.high %v4320, %v4320
    %v4323 = vcombine.high %v3955, %v3955
    %v4325 = vunpack.c.l.s4 1983009808
    %v4326 = vunpack.c.0.s8 %v4325
    %v4327 = vlaneseq
    %v4328 = vshrl.u32 %v4327, 7
    %v4329 = vsub.s32 %v4326, %v4328
    %v4330 = vrot.slane %v3955, %v4329
    %v4332 = vunpack.c.l.s4 1983009808
    %v4333 = vunpack.c.0.s8 %v4332
    %v4334 = vlaneseq
    %v4335 = vshrl.u32 %v4334, 7
    %v4336 = vsub.s32 %v4333, %v4335
    %v4337 = vrot.slane %v4323, %v4336
    %v4338 = vcombine.high %v4330, %v4330
    %v4339 = vcombine.high %v4337, %v4337
    %v4340 = vcombine.high %v3956, %v3956
    %v4342 = vunpack.c.l.s4 1983009808
    %v4343 = vunpack.c.0.s8 %v4342
    %v4344 = vlaneseq
    %v4345 = vshrl.u32 %v4344, 7
    %v4346 = vsub.s32 %v4343, %v4345
    %v4347 = vrot.slane %v3956, %v4346
    %v4349 = vunpack.c.l.s4 1983009808
    %v4350 = vunpack.c.0.s8 %v4349
    %v4351 = vlaneseq
    %v4352 = vshrl.u32 %v4351, 7
    %v4353 = vsub.s32 %v4350, %v4352
    %v4354 = vrot.slane %v4340, %v4353
    %v4355 = vcombine.high %v4347, %v4347
    %v4356 = vcombine.high %v4354, %v4354
    %v4357 = vcombine.high %v3957, %v3957
    %v4359 = vunpack.c.l.s4 1983009808
    %v4360 = vunpack.c.0.s8 %v4359
    %v4361 = vlaneseq
    %v4362 = vshrl.u32 %v4361, 7
    %v4363 = vsub.s32 %v4360, %v4362
    %v4364 = vrot.slane %v3957, %v4363
    %v4366 = vunpack.c.l.s4 1983009808
    %v4367 = vunpack.c.0.s8 %v4366
    %v4368 = vlaneseq
    %v4369 = vshrl.u32 %v4368, 7
    %v4370 = vsub.s32 %v4367, %v4369
    %v4371 = vrot.slane %v4357, %v4370
    %v4372 = vcombine.high %v4364, %v4364
    %v4373 = vcombine.high %v4371, %v4371
    %v4374 = vcombine.high %v3958, %v3958
    %v4376 = vunpack.c.l.s4 1983009808
    %v4377 = vunpack.c.0.s8 %v4376
    %v4378 = vlaneseq
    %v4379 = vshrl.u32 %v4378, 7
    %v4380 = vsub.s32 %v4377, %v4379
    %v4381 = vrot.slane %v3958, %v4380
    %v4383 = vunpack.c.l.s4 1983009808
    %v4384 = vunpack.c.0.s8 %v4383
    %v4385 = vlaneseq
    %v4386 = vshrl.u32 %v4385, 7
    %v4387 = vsub.s32 %v4384, %v4386
    %v4388 = vrot.slane %v4374, %v4387
    %v4389 = vcombine.high %v4381, %v4381
    %v4390 = vcombine.high %v4388, %v4388
    %v4391 = vcombine.high %v3959, %v3959
    %v4393 = vunpack.c.l.s4 1983009808
    %v4394 = vunpack.c.0.s8 %v4393
    %v4395 = vlaneseq
    %v4396 = vshrl.u32 %v4395, 7
    %v4397 = vsub.s32 %v4394, %v4396
    %v4398 = vrot.slane %v3959, %v4397
    %v4400 = vunpack.c.l.s4 1983009808
    %v4401 = vunpack.c.0.s8 %v4400
    %v4402 = vlaneseq
    %v4403 = vshrl.u32 %v4402, 7
    %v4404 = vsub.s32 %v4401, %v4403
    %v4405 = vrot.slane %v4391, %v4404
    %v4406 = vcombine.high %v4398, %v4398
    %v4407 = vcombine.high %v4405, %v4405
    %v4408 = vcombine.high %v3960, %v3960
    %v4410 = vunpack.c.l.s4 1983009808
    %v4411 = vunpack.c.0.s8 %v4410
    %v4412 = vlaneseq
    %v4413 = vshrl.u32 %v4412, 7
    %v4414 = vsub.s32 %v4411, %v4413
    %v4415 = vrot.slane %v3960, %v4414
    %v4417 = vunpack.c.l.s4 1983009808
    %v4418 = vunpack.c.0.s8 %v4417
    %v4419 = vlaneseq
    %v4420 = vshrl.u32 %v4419, 7
    %v4421 = vsub.s32 %v4418, %v4420
    %v4422 = vrot.slane %v4408, %v4421
    %v4423 = vcombine.high %v4415, %v4415
    %v4424 = vcombine.high %v4422, %v4422
    %v4425 = vcombine.high %v3961, %v3961
    %v4427 = vunpack.c.l.s4 1983009808
    %v4428 = vunpack.c.0.s8 %v4427
    %v4429 = vlaneseq
    %v4430 = vshrl.u32 %v4429, 7
    %v4431 = vsub.s32 %v4428, %v4430
    %v4432 = vrot.slane %v3961, %v4431
    %v4434 = vunpack.c.l.s4 1983009808
    %v4435 = vunpack.c.0.s8 %v4434
    %v4436 = vlaneseq
    %v4437 = vshrl.u32 %v4436, 7
    %v4438 = vsub.s32 %v4435, %v4437
    %v4439 = vrot.slane %v4425, %v4438
    %v4440 = vcombine.high %v4432, %v4432
    %v4441 = vcombine.high %v4439, %v4439
    %v4442 = vcombine.high %v3962, %v3962
    %v4444 = vunpack.c.l.s4 1983009808
    %v4445 = vunpack.c.0.s8 %v4444
    %v4446 = vlaneseq
    %v4447 = vshrl.u32 %v4446, 7
    %v4448 = vsub.s32 %v4445, %v4447
    %v4449 = vrot.slane %v3962, %v4448
    %v4451 = vunpack.c.l.s4 1983009808
    %v4452 = vunpack.c.0.s8 %v4451
    %v4453 = vlaneseq
    %v4454 = vshrl.u32 %v4453, 7
    %v4455 = vsub.s32 %v4452, %v4454
    %v4456 = vrot.slane %v4442, %v4455
    %v4457 = vcombine.high %v4449, %v4449
    %v4458 = vcombine.high %v4456, %v4456
    %v4459 = vcombine.high %v3963, %v3963
    %v4461 = vunpack.c.l.s4 1983009808
    %v4462 = vunpack.c.0.s8 %v4461
    %v4463 = vlaneseq
    %v4464 = vshrl.u32 %v4463, 7
    %v4465 = vsub.s32 %v4462, %v4464
    %v4466 = vrot.slane %v3963, %v4465
    %v4468 = vunpack.c.l.s4 1983009808
    %v4469 = vunpack.c.0.s8 %v4468
    %v4470 = vlaneseq
    %v4471 = vshrl.u32 %v4470, 7
    %v4472 = vsub.s32 %v4469, %v4471
    %v4473 = vrot.slane %v4459, %v4472
    %v4474 = vcombine.high %v4466, %v4466
    %v4475 = vcombine.high %v4473, %v4473
    %v4476 = vcombine.high %v3964, %v3964
    %v4478 = vunpack.c.l.s4 1983009808
    %v4479 = vunpack.c.0.s8 %v4478
    %v4480 = vlaneseq
    %v4481 = vshrl.u32 %v4480, 7
    %v4482 = vsub.s32 %v4479, %v4481
    %v4483 = vrot.slane %v3964, %v4482
    %v4485 = vunpack.c.l.s4 1983009808
    %v4486 = vunpack.c.0.s8 %v4485
    %v4487 = vlaneseq
    %v4488 = vshrl.u32 %v4487, 7
    %v4489 = vsub.s32 %v4486, %v4488
    %v4490 = vrot.slane %v4476, %v4489
    %v4491 = vcombine.high %v4483, %v4483
    %v4492 = vcombine.high %v4490, %v4490
    %v4493 = vcombine.high %v3965, %v3965
    %v4495 = vunpack.c.l.s4 1983009808
    %v4496 = vunpack.c.0.s8 %v4495
    %v4497 = vlaneseq
    %v4498 = vshrl.u32 %v4497, 7
    %v4499 = vsub.s32 %v4496, %v4498
    %v4500 = vrot.slane %v3965, %v4499
    %v4502 = vunpack.c.l.s4 1983009808
    %v4503 = vunpack.c.0.s8 %v4502
    %v4504 = vlaneseq
    %v4505 = vshrl.u32 %v4504, 7
    %v4506 = vsub.s32 %v4503, %v4505
    %v4507 = vrot.slane %v4493, %v4506
    %v4508 = vcombine.high %v4500, %v4500
    %v4509 = vcombine.high %v4507, %v4507
    %v4510 = vcombine.high %v3966, %v3966
    %v4512 = vunpack.c.l.s4 1983009808
    %v4513 = vunpack.c.0.s8 %v4512
    %v4514 = vlaneseq
    %v4515 = vshrl.u32 %v4514, 7
    %v4516 = vsub.s32 %v4513, %v4515
    %v4517 = vrot.slane %v3966, %v4516
    %v4519 = vunpack.c.l.s4 1983009808
    %v4520 = vunpack.c.0.s8 %v4519
    %v4521 = vlaneseq
    %v4522 = vshrl.u32 %v4521, 7
    %v4523 = vsub.s32 %v4520, %v4522
    %v4524 = vrot.slane %v4510, %v4523
    %v4525 = vcombine.high %v4517, %v4517
    %v4526 = vcombine.high %v4524, %v4524
    %v4527 = vcombine.high %v3967, %v3967
    %v4529 = vunpack.c.l.s4 1983009808
    %v4530 = vunpack.c.0.s8 %v4529
    %v4531 = vlaneseq
    %v4532 = vshrl.u32 %v4531, 7
    %v4533 = vsub.s32 %v4530, %v4532
    %v4534 = vrot.slane %v3967, %v4533
    %v4536 = vunpack.c.l.s4 1983009808
    %v4537 = vunpack.c.0.s8 %v4536
    %v4538 = vlaneseq
    %v4539 = vshrl.u32 %v4538, 7
    %v4540 = vsub.s32 %v4537, %v4539
    %v4541 = vrot.slane %v4527, %v4540
    %v4542 = vcombine.high %v4534, %v4534
    %v4543 = vcombine.high %v4541, %v4541
    %v4544 = vcombine.high %v3968, %v3968
    %v4546 = vunpack.c.l.s4 1983009808
    %v4547 = vunpack.c.0.s8 %v4546
    %v4548 = vlaneseq
    %v4549 = vshrl.u32 %v4548, 7
    %v4550 = vsub.s32 %v4547, %v4549
    %v4551 = vrot.slane %v3968, %v4550
    %v4553 = vunpack.c.l.s4 1983009808
    %v4554 = vunpack.c.0.s8 %v4553
    %v4555 = vlaneseq
    %v4556 = vshrl.u32 %v4555, 7
    %v4557 = vsub.s32 %v4554, %v4556
    %v4558 = vrot.slane %v4544, %v4557
    %v4559 = vcombine.high %v4551, %v4551
    %v4560 = vcombine.high %v4558, %v4558
    %v4561 = vcombine.high %v3969, %v3969
    %v4563 = vunpack.c.l.s4 1983009808
    %v4564 = vunpack.c.0.s8 %v4563
    %v4565 = vlaneseq
    %v4566 = vshrl.u32 %v4565, 7
    %v4567 = vsub.s32 %v4564, %v4566
    %v4568 = vrot.slane %v3969, %v4567
    %v4570 = vunpack.c.l.s4 1983009808
    %v4571 = vunpack.c.0.s8 %v4570
    %v4572 = vlaneseq
    %v4573 = vshrl.u32 %v4572, 7
    %v4574 = vsub.s32 %v4571, %v4573
    %v4575 = vrot.slane %v4561, %v4574
    %v4576 = vcombine.high %v4568, %v4568
    %v4577 = vcombine.high %v4575, %v4575
    %v4578 = vcombine.high %v3970, %v3970
    %v4580 = vunpack.c.l.s4 1983009808
    %v4581 = vunpack.c.0.s8 %v4580
    %v4582 = vlaneseq
    %v4583 = vshrl.u32 %v4582, 7
    %v4584 = vsub.s32 %v4581, %v4583
    %v4585 = vrot.slane %v3970, %v4584
    %v4587 = vunpack.c.l.s4 1983009808
    %v4588 = vunpack.c.0.s8 %v4587
    %v4589 = vlaneseq
    %v4590 = vshrl.u32 %v4589, 7
    %v4591 = vsub.s32 %v4588, %v4590
    %v4592 = vrot.slane %v4578, %v4591
    %v4593 = vcombine.high %v4585, %v4585
    %v4594 = vcombine.high %v4592, %v4592
    %v4595 = vcombine.high %v3971, %v3971
    %v4597 = vunpack.c.l.s4 1983009808
    %v4598 = vunpack.c.0.s8 %v4597
    %v4599 = vlaneseq
    %v4600 = vshrl.u32 %v4599, 7
    %v4601 = vsub.s32 %v4598, %v4600
    %v4602 = vrot.slane %v3971, %v4601
    %v4604 = vunpack.c.l.s4 1983009808
    %v4605 = vunpack.c.0.s8 %v4604
    %v4606 = vlaneseq
    %v4607 = vshrl.u32 %v4606, 7
    %v4608 = vsub.s32 %v4605, %v4607
    %v4609 = vrot.slane %v4595, %v4608
    %v4610 = vcombine.high %v4602, %v4602
    %v4611 = vcombine.high %v4609, %v4609
    %v4612 = vcombine.high %v3972, %v3972
    %v4614 = vunpack.c.l.s4 1983009808
    %v4615 = vunpack.c.0.s8 %v4614
    %v4616 = vlaneseq
    %v4617 = vshrl.u32 %v4616, 7
    %v4618 = vsub.s32 %v4615, %v4617
    %v4619 = vrot.slane %v3972, %v4618
    %v4621 = vunpack.c.l.s4 1983009808
    %v4622 = vunpack.c.0.s8 %v4621
    %v4623 = vlaneseq
    %v4624 = vshrl.u32 %v4623, 7
    %v4625 = vsub.s32 %v4622, %v4624
    %v4626 = vrot.slane %v4612, %v4625
    %v4627 = vcombine.high %v4619, %v4619
    %v4628 = vcombine.high %v4626, %v4626
    %v4629 = vcombine.high %v3973, %v3973
    %v4631 = vunpack.c.l.s4 1983009808
    %v4632 = vunpack.c.0.s8 %v4631
    %v4633 = vlaneseq
    %v4634 = vshrl.u32 %v4633, 7
    %v4635 = vsub.s32 %v4632, %v4634
    %v4636 = vrot.slane %v3973, %v4635
    %v4638 = vunpack.c.l.s4 1983009808
    %v4639 = vunpack.c.0.s8 %v4638
    %v4640 = vlaneseq
    %v4641 = vshrl.u32 %v4640, 7
    %v4642 = vsub.s32 %v4639, %v4641
    %v4643 = vrot.slane %v4629, %v4642
    %v4644 = vcombine.high %v4636, %v4636
    %v4645 = vcombine.high %v4643, %v4643
    %v4646 = vcombine.high %v3974, %v3974
    %v4648 = vunpack.c.l.s4 1983009808
    %v4649 = vunpack.c.0.s8 %v4648
    %v4650 = vlaneseq
    %v4651 = vshrl.u32 %v4650, 7
    %v4652 = vsub.s32 %v4649, %v4651
    %v4653 = vrot.slane %v3974, %v4652
    %v4655 = vunpack.c.l.s4 1983009808
    %v4656 = vunpack.c.0.s8 %v4655
    %v4657 = vlaneseq
    %v4658 = vshrl.u32 %v4657, 7
    %v4659 = vsub.s32 %v4656, %v4658
    %v4660 = vrot.slane %v4646, %v4659
    %v4661 = vcombine.high %v4653, %v4653
    %v4662 = vcombine.high %v4660, %v4660
    %v4663 = vcombine.high %v3975, %v3975
    %v4665 = vunpack.c.l.s4 1983009808
    %v4666 = vunpack.c.0.s8 %v4665
    %v4667 = vlaneseq
    %v4668 = vshrl.u32 %v4667, 7
    %v4669 = vsub.s32 %v4666, %v4668
    %v4670 = vrot.slane %v3975, %v4669
    %v4672 = vunpack.c.l.s4 1983009808
    %v4673 = vunpack.c.0.s8 %v4672
    %v4674 = vlaneseq
    %v4675 = vshrl.u32 %v4674, 7
    %v4676 = vsub.s32 %v4673, %v4675
    %v4677 = vrot.slane %v4663, %v4676
    %v4678 = vcombine.high %v4670, %v4670
    %v4679 = vcombine.high %v4677, %v4677
    %v4680 = vcombine.high %v3976, %v3976
    %v4682 = vunpack.c.l.s4 1983009808
    %v4683 = vunpack.c.0.s8 %v4682
    %v4684 = vlaneseq
    %v4685 = vshrl.u32 %v4684, 7
    %v4686 = vsub.s32 %v4683, %v4685
    %v4687 = vrot.slane %v3976, %v4686
    %v4689 = vunpack.c.l.s4 1983009808
    %v4690 = vunpack.c.0.s8 %v4689
    %v4691 = vlaneseq
    %v4692 = vshrl.u32 %v4691, 7
    %v4693 = vsub.s32 %v4690, %v4692
    %v4694 = vrot.slane %v4680, %v4693
    %v4695 = vcombine.high %v4687, %v4687
    %v4696 = vcombine.high %v4694, %v4694
    %v4697 = vcombine.high %v3977, %v3977
    %v4699 = vunpack.c.l.s4 1983009808
    %v4700 = vunpack.c.0.s8 %v4699
    %v4701 = vlaneseq
    %v4702 = vshrl.u32 %v4701, 7
    %v4703 = vsub.s32 %v4700, %v4702
    %v4704 = vrot.slane %v3977, %v4703
    %v4706 = vunpack.c.l.s4 1983009808
    %v4707 = vunpack.c.0.s8 %v4706
    %v4708 = vlaneseq
    %v4709 = vshrl.u32 %v4708, 7
    %v4710 = vsub.s32 %v4707, %v4709
    %v4711 = vrot.slane %v4697, %v4710
    %v4712 = vcombine.high %v4704, %v4704
    %v4713 = vcombine.high %v4711, %v4711
    %v4714 = vcombine.high %v3978, %v3978
    %v4716 = vunpack.c.l.s4 1983009808
    %v4717 = vunpack.c.0.s8 %v4716
    %v4718 = vlaneseq
    %v4719 = vshrl.u32 %v4718, 7
    %v4720 = vsub.s32 %v4717, %v4719
    %v4721 = vrot.slane %v3978, %v4720
    %v4723 = vunpack.c.l.s4 1983009808
    %v4724 = vunpack.c.0.s8 %v4723
    %v4725 = vlaneseq
    %v4726 = vshrl.u32 %v4725, 7
    %v4727 = vsub.s32 %v4724, %v4726
    %v4728 = vrot.slane %v4714, %v4727
    %v4729 = vcombine.high %v4721, %v4721
    %v4730 = vcombine.high %v4728, %v4728
    %v4731 = vcombine.high %v3979, %v3979
    %v4733 = vunpack.c.l.s4 1983009808
    %v4734 = vunpack.c.0.s8 %v4733
    %v4735 = vlaneseq
    %v4736 = vshrl.u32 %v4735, 7
    %v4737 = vsub.s32 %v4734, %v4736
    %v4738 = vrot.slane %v3979, %v4737
    %v4740 = vunpack.c.l.s4 1983009808
    %v4741 = vunpack.c.0.s8 %v4740
    %v4742 = vlaneseq
    %v4743 = vshrl.u32 %v4742, 7
    %v4744 = vsub.s32 %v4741, %v4743
    %v4745 = vrot.slane %v4731, %v4744
    %v4746 = vcombine.high %v4738, %v4738
    %v4747 = vcombine.high %v4745, %v4745
    %v4748 = vcombine.high %v3980, %v3980
    %v4750 = vunpack.c.l.s4 1983009808
    %v4751 = vunpack.c.0.s8 %v4750
    %v4752 = vlaneseq
    %v4753 = vshrl.u32 %v4752, 7
    %v4754 = vsub.s32 %v4751, %v4753
    %v4755 = vrot.slane %v3980, %v4754
    %v4757 = vunpack.c.l.s4 1983009808
    %v4758 = vunpack.c.0.s8 %v4757
    %v4759 = vlaneseq
    %v4760 = vshrl.u32 %v4759, 7
    %v4761 = vsub.s32 %v4758, %v4760
    %v4762 = vrot.slane %v4748, %v4761
    %v4763 = vcombine.high %v4755, %v4755
    %v4764 = vcombine.high %v4762, %v4762
    %v4765 = vcombine.high %v3981, %v3981
    %v4767 = vunpack.c.l.s4 1983009808
    %v4768 = vunpack.c.0.s8 %v4767
    %v4769 = vlaneseq
    %v4770 = vshrl.u32 %v4769, 7
    %v4771 = vsub.s32 %v4768, %v4770
    %v4772 = vrot.slane %v3981, %v4771
    %v4774 = vunpack.c.l.s4 1983009808
    %v4775 = vunpack.c.0.s8 %v4774
    %v4776 = vlaneseq
    %v4777 = vshrl.u32 %v4776, 7
    %v4778 = vsub.s32 %v4775, %v4777
    %v4779 = vrot.slane %v4765, %v4778
    %v4780 = vcombine.high %v4772, %v4772
    %v4781 = vcombine.high %v4779, %v4779
    %v4782 = vcombine.high %v3982, %v3982
    %v4784 = vunpack.c.l.s4 1983009808
    %v4785 = vunpack.c.0.s8 %v4784
    %v4786 = vlaneseq
    %v4787 = vshrl.u32 %v4786, 7
    %v4788 = vsub.s32 %v4785, %v4787
    %v4789 = vrot.slane %v3982, %v4788
    %v4791 = vunpack.c.l.s4 1983009808
    %v4792 = vunpack.c.0.s8 %v4791
    %v4793 = vlaneseq
    %v4794 = vshrl.u32 %v4793, 7
    %v4795 = vsub.s32 %v4792, %v4794
    %v4796 = vrot.slane %v4782, %v4795
    %v4797 = vcombine.high %v4789, %v4789
    %v4798 = vcombine.high %v4796, %v4796
    %v4799 = vcombine.high %v3983, %v3983
    %v4801 = vunpack.c.l.s4 1983009808
    %v4802 = vunpack.c.0.s8 %v4801
    %v4803 = vlaneseq
    %v4804 = vshrl.u32 %v4803, 7
    %v4805 = vsub.s32 %v4802, %v4804
    %v4806 = vrot.slane %v3983, %v4805
    %v4808 = vunpack.c.l.s4 1983009808
    %v4809 = vunpack.c.0.s8 %v4808
    %v4810 = vlaneseq
    %v4811 = vshrl.u32 %v4810, 7
    %v4812 = vsub.s32 %v4809, %v4811
    %v4813 = vrot.slane %v4799, %v4812
    %v4814 = vcombine.high %v4806, %v4806
    %v4815 = vcombine.high %v4813, %v4813
    %v4816 = vcombine.high %v3984, %v3984
    %v4818 = vunpack.c.l.s4 1983009808
    %v4819 = vunpack.c.0.s8 %v4818
    %v4820 = vlaneseq
    %v4821 = vshrl.u32 %v4820, 7
    %v4822 = vsub.s32 %v4819, %v4821
    %v4823 = vrot.slane %v3984, %v4822
    %v4825 = vunpack.c.l.s4 1983009808
    %v4826 = vunpack.c.0.s8 %v4825
    %v4827 = vlaneseq
    %v4828 = vshrl.u32 %v4827, 7
    %v4829 = vsub.s32 %v4826, %v4828
    %v4830 = vrot.slane %v4816, %v4829
    %v4831 = vcombine.high %v4823, %v4823
    %v4832 = vcombine.high %v4830, %v4830
    %v4833 = vcombine.high %v3985, %v3985
    %v4835 = vunpack.c.l.s4 1983009808
    %v4836 = vunpack.c.0.s8 %v4835
    %v4837 = vlaneseq
    %v4838 = vshrl.u32 %v4837, 7
    %v4839 = vsub.s32 %v4836, %v4838
    %v4840 = vrot.slane %v3985, %v4839
    %v4842 = vunpack.c.l.s4 1983009808
    %v4843 = vunpack.c.0.s8 %v4842
    %v4844 = vlaneseq
    %v4845 = vshrl.u32 %v4844, 7
    %v4846 = vsub.s32 %v4843, %v4845
    %v4847 = vrot.slane %v4833, %v4846
    %v4848 = vcombine.high %v4840, %v4840
    %v4849 = vcombine.high %v4847, %v4847
    %v4850 = vcombine.high %v3986, %v3986
    %v4852 = vunpack.c.l.s4 1983009808
    %v4853 = vunpack.c.0.s8 %v4852
    %v4854 = vlaneseq
    %v4855 = vshrl.u32 %v4854, 7
    %v4856 = vsub.s32 %v4853, %v4855
    %v4857 = vrot.slane %v3986, %v4856
    %v4859 = vunpack.c.l.s4 1983009808
    %v4860 = vunpack.c.0.s8 %v4859
    %v4861 = vlaneseq
    %v4862 = vshrl.u32 %v4861, 7
    %v4863 = vsub.s32 %v4860, %v4862
    %v4864 = vrot.slane %v4850, %v4863
    %v4865 = vcombine.high %v4857, %v4857
    %v4866 = vcombine.high %v4864, %v4864
    %v4867 = vcombine.high %v3987, %v3987
    %v4869 = vunpack.c.l.s4 1983009808
    %v4870 = vunpack.c.0.s8 %v4869
    %v4871 = vlaneseq
    %v4872 = vshrl.u32 %v4871, 7
    %v4873 = vsub.s32 %v4870, %v4872
    %v4874 = vrot.slane %v3987, %v4873
    %v4876 = vunpack.c.l.s4 1983009808
    %v4877 = vunpack.c.0.s8 %v4876
    %v4878 = vlaneseq
    %v4879 = vshrl.u32 %v4878, 7
    %v4880 = vsub.s32 %v4877, %v4879
    %v4881 = vrot.slane %v4867, %v4880
    %v4882 = vcombine.high %v4874, %v4874
    %v4883 = vcombine.high %v4881, %v4881
    %v4884 = vcombine.high %v3988, %v3988
    %v4886 = vunpack.c.l.s4 1983009808
    %v4887 = vunpack.c.0.s8 %v4886
    %v4888 = vlaneseq
    %v4889 = vshrl.u32 %v4888, 7
    %v4890 = vsub.s32 %v4887, %v4889
    %v4891 = vrot.slane %v3988, %v4890
    %v4893 = vunpack.c.l.s4 1983009808
    %v4894 = vunpack.c.0.s8 %v4893
    %v4895 = vlaneseq
    %v4896 = vshrl.u32 %v4895, 7
    %v4897 = vsub.s32 %v4894, %v4896
    %v4898 = vrot.slane %v4884, %v4897
    %v4899 = vcombine.high %v4891, %v4891
    %v4900 = vcombine.high %v4898, %v4898
    %v4901 = vcombine.high %v3989, %v3989
    %v4903 = vunpack.c.l.s4 1983009808
    %v4904 = vunpack.c.0.s8 %v4903
    %v4905 = vlaneseq
    %v4906 = vshrl.u32 %v4905, 7
    %v4907 = vsub.s32 %v4904, %v4906
    %v4908 = vrot.slane %v3989, %v4907
    %v4910 = vunpack.c.l.s4 1983009808
    %v4911 = vunpack.c.0.s8 %v4910
    %v4912 = vlaneseq
    %v4913 = vshrl.u32 %v4912, 7
    %v4914 = vsub.s32 %v4911, %v4913
    %v4915 = vrot.slane %v4901, %v4914
    %v4916 = vcombine.high %v4908, %v4908
    %v4917 = vcombine.high %v4915, %v4915
    %v4918 = vcombine.high %v3990, %v3990
    %v4920 = vunpack.c.l.s4 1983009808
    %v4921 = vunpack.c.0.s8 %v4920
    %v4922 = vlaneseq
    %v4923 = vshrl.u32 %v4922, 7
    %v4924 = vsub.s32 %v4921, %v4923
    %v4925 = vrot.slane %v3990, %v4924
    %v4927 = vunpack.c.l.s4 1983009808
    %v4928 = vunpack.c.0.s8 %v4927
    %v4929 = vlaneseq
    %v4930 = vshrl.u32 %v4929, 7
    %v4931 = vsub.s32 %v4928, %v4930
    %v4932 = vrot.slane %v4918, %v4931
    %v4933 = vcombine.high %v4925, %v4925
    %v4934 = vcombine.high %v4932, %v4932
    %v4935 = vcombine.high %v3991, %v3991
    %v4937 = vunpack.c.l.s4 1983009808
    %v4938 = vunpack.c.0.s8 %v4937
    %v4939 = vlaneseq
    %v4940 = vshrl.u32 %v4939, 7
    %v4941 = vsub.s32 %v4938, %v4940
    %v4942 = vrot.slane %v3991, %v4941
    %v4944 = vunpack.c.l.s4 1983009808
    %v4945 = vunpack.c.0.s8 %v4944
    %v4946 = vlaneseq
    %v4947 = vshrl.u32 %v4946, 7
    %v4948 = vsub.s32 %v4945, %v4947
    %v4949 = vrot.slane %v4935, %v4948
    %v4950 = vcombine.high %v4942, %v4942
    %v4951 = vcombine.high %v4949, %v4949
    %v4952 = vcombine.high %v3992, %v3992
    %v4954 = vunpack.c.l.s4 1983009808
    %v4955 = vunpack.c.0.s8 %v4954
    %v4956 = vlaneseq
    %v4957 = vshrl.u32 %v4956, 7
    %v4958 = vsub.s32 %v4955, %v4957
    %v4959 = vrot.slane %v3992, %v4958
    %v4961 = vunpack.c.l.s4 1983009808
    %v4962 = vunpack.c.0.s8 %v4961
    %v4963 = vlaneseq
    %v4964 = vshrl.u32 %v4963, 7
    %v4965 = vsub.s32 %v4962, %v4964
    %v4966 = vrot.slane %v4952, %v4965
    %v4967 = vcombine.high %v4959, %v4959
    %v4968 = vcombine.high %v4966, %v4966
    %v4969 = vcombine.high %v3993, %v3993
    %v4971 = vunpack.c.l.s4 1983009808
    %v4972 = vunpack.c.0.s8 %v4971
    %v4973 = vlaneseq
    %v4974 = vshrl.u32 %v4973, 7
    %v4975 = vsub.s32 %v4972, %v4974
    %v4976 = vrot.slane %v3993, %v4975
    %v4978 = vunpack.c.l.s4 1983009808
    %v4979 = vunpack.c.0.s8 %v4978
    %v4980 = vlaneseq
    %v4981 = vshrl.u32 %v4980, 7
    %v4982 = vsub.s32 %v4979, %v4981
    %v4983 = vrot.slane %v4969, %v4982
    %v4984 = vcombine.high %v4976, %v4976
    %v4985 = vcombine.high %v4983, %v4983
    %v4986 = vcombine.high %v3994, %v3994
    %v4988 = vunpack.c.l.s4 1983009808
    %v4989 = vunpack.c.0.s8 %v4988
    %v4990 = vlaneseq
    %v4991 = vshrl.u32 %v4990, 7
    %v4992 = vsub.s32 %v4989, %v4991
    %v4993 = vrot.slane %v3994, %v4992
    %v4995 = vunpack.c.l.s4 1983009808
    %v4996 = vunpack.c.0.s8 %v4995
    %v4997 = vlaneseq
    %v4998 = vshrl.u32 %v4997, 7
    %v4999 = vsub.s32 %v4996, %v4998
    %v5000 = vrot.slane %v4986, %v4999
    %v5001 = vcombine.high %v4993, %v4993
    %v5002 = vcombine.high %v5000, %v5000
    %v5003 = vcombine.high %v3995, %v3995
    %v5005 = vunpack.c.l.s4 1983009808
    %v5006 = vunpack.c.0.s8 %v5005
    %v5007 = vlaneseq
    %v5008 = vshrl.u32 %v5007, 7
    %v5009 = vsub.s32 %v5006, %v5008
    %v5010 = vrot.slane %v3995, %v5009
    %v5012 = vunpack.c.l.s4 1983009808
    %v5013 = vunpack.c.0.s8 %v5012
    %v5014 = vlaneseq
    %v5015 = vshrl.u32 %v5014, 7
    %v5016 = vsub.s32 %v5013, %v5015
    %v5017 = vrot.slane %v5003, %v5016
    %v5018 = vcombine.high %v5010, %v5010
    %v5019 = vcombine.high %v5017, %v5017
    %v5020 = vcombine.high %v3996, %v3996
    %v5022 = vunpack.c.l.s4 1983009808
    %v5023 = vunpack.c.0.s8 %v5022
    %v5024 = vlaneseq
    %v5025 = vshrl.u32 %v5024, 7
    %v5026 = vsub.s32 %v5023, %v5025
    %v5027 = vrot.slane %v3996, %v5026
    %v5029 = vunpack.c.l.s4 1983009808
    %v5030 = vunpack.c.0.s8 %v5029
    %v5031 = vlaneseq
    %v5032 = vshrl.u32 %v5031, 7
    %v5033 = vsub.s32 %v5030, %v5032
    %v5034 = vrot.slane %v5020, %v5033
    %v5035 = vcombine.high %v5027, %v5027
    %v5036 = vcombine.high %v5034, %v5034
    %v5037 = vcombine.high %v3997, %v3997
    %v5039 = vunpack.c.l.s4 1983009808
    %v5040 = vunpack.c.0.s8 %v5039
    %v5041 = vlaneseq
    %v5042 = vshrl.u32 %v5041, 7
    %v5043 = vsub.s32 %v5040, %v5042
    %v5044 = vrot.slane %v3997, %v5043
    %v5046 = vunpack.c.l.s4 1983009808
    %v5047 = vunpack.c.0.s8 %v5046
    %v5048 = vlaneseq
    %v5049 = vshrl.u32 %v5048, 7
    %v5050 = vsub.s32 %v5047, %v5049
    %v5051 = vrot.slane %v5037, %v5050
    %v5052 = vcombine.high %v5044, %v5044
    %v5053 = vcombine.high %v5051, %v5051
    %v5054 = vcombine.high %v3998, %v3998
    %v5056 = vunpack.c.l.s4 1983009808
    %v5057 = vunpack.c.0.s8 %v5056
    %v5058 = vlaneseq
    %v5059 = vshrl.u32 %v5058, 7
    %v5060 = vsub.s32 %v5057, %v5059
    %v5061 = vrot.slane %v3998, %v5060
    %v5063 = vunpack.c.l.s4 1983009808
    %v5064 = vunpack.c.0.s8 %v5063
    %v5065 = vlaneseq
    %v5066 = vshrl.u32 %v5065, 7
    %v5067 = vsub.s32 %v5064, %v5066
    %v5068 = vrot.slane %v5054, %v5067
    %v5069 = vcombine.high %v5061, %v5061
    %v5070 = vcombine.high %v5068, %v5068
    %v5071 = vcombine.high %v3999, %v3999
    %v5073 = vunpack.c.l.s4 1983009808
    %v5074 = vunpack.c.0.s8 %v5073
    %v5075 = vlaneseq
    %v5076 = vshrl.u32 %v5075, 7
    %v5077 = vsub.s32 %v5074, %v5076
    %v5078 = vrot.slane %v3999, %v5077
    %v5080 = vunpack.c.l.s4 1983009808
    %v5081 = vunpack.c.0.s8 %v5080
    %v5082 = vlaneseq
    %v5083 = vshrl.u32 %v5082, 7
    %v5084 = vsub.s32 %v5081, %v5083
    %v5085 = vrot.slane %v5071, %v5084
    %v5086 = vcombine.high %v5078, %v5078
    %v5087 = vcombine.high %v5085, %v5085
    %v5088 = vcombine.high %v4000, %v4000
    %v5090 = vunpack.c.l.s4 1983009808
    %v5091 = vunpack.c.0.s8 %v5090
    %v5092 = vlaneseq
    %v5093 = vshrl.u32 %v5092, 7
    %v5094 = vsub.s32 %v5091, %v5093
    %v5095 = vrot.slane %v4000, %v5094
    %v5097 = vunpack.c.l.s4 1983009808
    %v5098 = vunpack.c.0.s8 %v5097
    %v5099 = vlaneseq
    %v5100 = vshrl.u32 %v5099, 7
    %v5101 = vsub.s32 %v5098, %v5100
    %v5102 = vrot.slane %v5088, %v5101
    %v5103 = vcombine.high %v5095, %v5095
    %v5104 = vcombine.high %v5102, %v5102
    %v5105 = vcombine.high %v4001, %v4001
    %v5107 = vunpack.c.l.s4 1983009808
    %v5108 = vunpack.c.0.s8 %v5107
    %v5109 = vlaneseq
    %v5110 = vshrl.u32 %v5109, 7
    %v5111 = vsub.s32 %v5108, %v5110
    %v5112 = vrot.slane %v4001, %v5111
    %v5114 = vunpack.c.l.s4 1983009808
    %v5115 = vunpack.c.0.s8 %v5114
    %v5116 = vlaneseq
    %v5117 = vshrl.u32 %v5116, 7
    %v5118 = vsub.s32 %v5115, %v5117
    %v5119 = vrot.slane %v5105, %v5118
    %v5120 = vcombine.high %v5112, %v5112
    %v5121 = vcombine.high %v5119, %v5119
    %v5122 = vcombine.high %v4002, %v4002
    %v5124 = vunpack.c.l.s4 1983009808
    %v5125 = vunpack.c.0.s8 %v5124
    %v5126 = vlaneseq
    %v5127 = vshrl.u32 %v5126, 7
    %v5128 = vsub.s32 %v5125, %v5127
    %v5129 = vrot.slane %v4002, %v5128
    %v5131 = vunpack.c.l.s4 1983009808
    %v5132 = vunpack.c.0.s8 %v5131
    %v5133 = vlaneseq
    %v5134 = vshrl.u32 %v5133, 7
    %v5135 = vsub.s32 %v5132, %v5134
    %v5136 = vrot.slane %v5122, %v5135
    %v5137 = vcombine.high %v5129, %v5129
    %v5138 = vcombine.high %v5136, %v5136
    %v5139 = vcombine.high %v4003, %v4003
    %v5141 = vunpack.c.l.s4 1983009808
    %v5142 = vunpack.c.0.s8 %v5141
    %v5143 = vlaneseq
    %v5144 = vshrl.u32 %v5143, 7
    %v5145 = vsub.s32 %v5142, %v5144
    %v5146 = vrot.slane %v4003, %v5145
    %v5148 = vunpack.c.l.s4 1983009808
    %v5149 = vunpack.c.0.s8 %v5148
    %v5150 = vlaneseq
    %v5151 = vshrl.u32 %v5150, 7
    %v5152 = vsub.s32 %v5149, %v5151
    %v5153 = vrot.slane %v5139, %v5152
    %v5154 = vcombine.high %v5146, %v5146
    %v5155 = vcombine.high %v5153, %v5153
    %vm5412 = vcmask 1041408
    %v5413 = vsel %vm5412, %v4075, 0.0
    %v5414 = vsel %vm5412, %v4083, 0.0
    %v5415 = vadd.f32 %v5413, %v5414
    %v5416 = vsel %vm5412, %v4082, 0.0
    %v5417 = vadd.f32 %v5415, %v5416
    %v5418 = vsel %vm5412, %v4084, 0.0
    %v5419 = vadd.f32 %v5417, %v5418
    %v5420 = vsel %vm5412, %v4092, 0.0
    %v5421 = vadd.f32 %v5419, %v5420
    %v5422 = vsel %vm5412, %v4100, 0.0
    %v5423 = vadd.f32 %v5421, %v5422
    %v5424 = vsel %vm5412, %v4099, 0.0
    %v5425 = vadd.f32 %v5423, %v5424
    %v5426 = vsel %vm5412, %v4101, 0.0
    %v5427 = vadd.f32 %v5425, %v5426
    %v5428 = vsel %vm5412, %v4109, 0.0
    %v5429 = vadd.f32 %v5427, %v5428
    %v5430 = vsel %vm5412, %v4117, 0.0
    %v5431 = vadd.f32 %v5429, %v5430
    %v5432 = vsel %vm5412, %v4116, 0.0
    %v5433 = vadd.f32 %v5431, %v5432
    %v5434 = vsel %vm5412, %v4118, 0.0
    %v5435 = vadd.f32 %v5433, %v5434
    %v5436 = vsel %vm5412, %v4126, 0.0
    %v5437 = vadd.f32 %v5435, %v5436
    %v5438 = vsel %vm5412, %v4134, 0.0
    %v5439 = vadd.f32 %v5437, %v5438
    %v5440 = vsel %vm5412, %v4133, 0.0
    %v5441 = vadd.f32 %v5439, %v5440
    %v5442 = vsel %vm5412, %v4135, 0.0
    %v5443 = vadd.f32 %v5441, %v5442
    %v5444 = vsel %vm5412, %v4143, 0.0
    %v5445 = vadd.f32 %v5443, %v5444
    %v5446 = vsel %vm5412, %v4151, 0.0
    %v5447 = vadd.f32 %v5445, %v5446
    %v5448 = vsel %vm5412, %v4150, 0.0
    %v5449 = vadd.f32 %v5447, %v5448
    %v5450 = vsel %vm5412, %v4152, 0.0
    %v5451 = vadd.f32 %v5449, %v5450
    %v5452 = vsel %vm5412, %v4160, 0.0
    %v5453 = vadd.f32 %v5451, %v5452
    %v5454 = vsel %vm5412, %v4168, 0.0
    %v5455 = vadd.f32 %v5453, %v5454
    %v5456 = vsel %vm5412, %v4167, 0.0
    %v5457 = vadd.f32 %v5455, %v5456
    %v5458 = vsel %vm5412, %v4169, 0.0
    %v5459 = vadd.f32 %v5457, %v5458
    %v5460 = vsel %vm5412, %v4177, 0.0
    %v5461 = vadd.f32 %v5459, %v5460
    %v5462 = vsel %vm5412, %v4185, 0.0
    %v5463 = vadd.f32 %v5461, %v5462
    %v5464 = vsel %vm5412, %v4184, 0.0
    %v5465 = vadd.f32 %v5463, %v5464
    %v5466 = vsel %vm5412, %v4186, 0.0
    %v5467 = vadd.f32 %v5465, %v5466
    %v5468 = vsel %vm5412, %v4194, 0.0
    %v5469 = vadd.f32 %v5467, %v5468
    %v5470 = vsel %vm5412, %v4202, 0.0
    %v5471 = vadd.f32 %v5469, %v5470
    %v5472 = vsel %vm5412, %v4201, 0.0
    %v5473 = vadd.f32 %v5471, %v5472
    %v5474 = vsel %vm5412, %v4203, 0.0
    %v5475 = vadd.f32 %v5473, %v5474
    %v5476 = vsel %vm5412, %v4211, 0.0
    %v5477 = vadd.f32 %v5475, %v5476
    %v5478 = vsel %vm5412, %v4219, 0.0
    %v5479 = vadd.f32 %v5477, %v5478
    %v5480 = vsel %vm5412, %v4218, 0.0
    %v5481 = vadd.f32 %v5479, %v5480
    %v5482 = vsel %vm5412, %v4220, 0.0
    %v5483 = vadd.f32 %v5481, %v5482
    %v5484 = vsel %vm5412, %v4228, 0.0
    %v5485 = vadd.f32 %v5483, %v5484
    %v5486 = vsel %vm5412, %v4236, 0.0
    %v5487 = vadd.f32 %v5485, %v5486
    %v5488 = vsel %vm5412, %v4235, 0.0
    %v5489 = vadd.f32 %v5487, %v5488
    %v5490 = vsel %vm5412, %v4237, 0.0
    %v5491 = vadd.f32 %v5489, %v5490
    %v5492 = vsel %vm5412, %v4245, 0.0
    %v5493 = vadd.f32 %v5491, %v5492
    %v5494 = vsel %vm5412, %v4253, 0.0
    %v5495 = vadd.f32 %v5493, %v5494
    %v5496 = vsel %vm5412, %v4252, 0.0
    %v5497 = vadd.f32 %v5495, %v5496
    %v5498 = vsel %vm5412, %v4254, 0.0
    %v5499 = vadd.f32 %v5497, %v5498
    %v5500 = vsel %vm5412, %v4262, 0.0
    %v5501 = vadd.f32 %v5499, %v5500
    %v5502 = vsel %vm5412, %v4270, 0.0
    %v5503 = vadd.f32 %v5501, %v5502
    %v5504 = vsel %vm5412, %v4269, 0.0
    %v5505 = vadd.f32 %v5503, %v5504
    %v5506 = vsel %vm5412, %v4271, 0.0
    %v5507 = vadd.f32 %v5505, %v5506
    %v5508 = vsel %vm5412, %v4279, 0.0
    %v5509 = vadd.f32 %v5507, %v5508
    %v5510 = vsel %vm5412, %v4287, 0.0
    %v5511 = vadd.f32 %v5509, %v5510
    %v5512 = vsel %vm5412, %v4286, 0.0
    %v5513 = vadd.f32 %v5511, %v5512
    %v5514 = vsel %vm5412, %v4288, 0.0
    %v5515 = vadd.f32 %v5513, %v5514
    %v5516 = vsel %vm5412, %v4296, 0.0
    %v5517 = vadd.f32 %v5515, %v5516
    %v5518 = vsel %vm5412, %v4304, 0.0
    %v5519 = vadd.f32 %v5517, %v5518
    %v5520 = vsel %vm5412, %v4303, 0.0
    %v5521 = vadd.f32 %v5519, %v5520
    %v5522 = vsel %vm5412, %v4305, 0.0
    %v5523 = vadd.f32 %v5521, %v5522
    %v5524 = vsel %vm5412, %v4313, 0.0
    %v5525 = vadd.f32 %v5523, %v5524
    %v5526 = vsel %vm5412, %v4321, 0.0
    %v5527 = vadd.f32 %v5525, %v5526
    %v5528 = vsel %vm5412, %v4320, 0.0
    %v5529 = vadd.f32 %v5527, %v5528
    %v5530 = vsel %vm5412, %v4322, 0.0
    %v5531 = vadd.f32 %v5529, %v5530
    %v5532 = vsel %vm5412, %v4330, 0.0
    %v5533 = vadd.f32 %v5531, %v5532
    %v5534 = vsel %vm5412, %v4338, 0.0
    %v5535 = vadd.f32 %v5533, %v5534
    %v5536 = vsel %vm5412, %v4337, 0.0
    %v5537 = vadd.f32 %v5535, %v5536
    %v5538 = vsel %vm5412, %v4339, 0.0
    %v5539 = vadd.f32 %v5537, %v5538
    %v5540 = vsel %vm5412, %v4347, 0.0
    %v5541 = vadd.f32 %v5539, %v5540
    %v5542 = vsel %vm5412, %v4355, 0.0
    %v5543 = vadd.f32 %v5541, %v5542
    %v5544 = vsel %vm5412, %v4354, 0.0
    %v5545 = vadd.f32 %v5543, %v5544
    %v5546 = vsel %vm5412, %v4356, 0.0
    %v5547 = vadd.f32 %v5545, %v5546
    %v5548 = vsel %vm5412, %v4364, 0.0
    %v5549 = vadd.f32 %v5547, %v5548
    %v5550 = vsel %vm5412, %v4372, 0.0
    %v5551 = vadd.f32 %v5549, %v5550
    %v5552 = vsel %vm5412, %v4371, 0.0
    %v5553 = vadd.f32 %v5551, %v5552
    %v5554 = vsel %vm5412, %v4373, 0.0
    %v5555 = vadd.f32 %v5553, %v5554
    %v5556 = vsel %vm5412, %v4381, 0.0
    %v5557 = vadd.f32 %v5555, %v5556
    %v5558 = vsel %vm5412, %v4389, 0.0
    %v5559 = vadd.f32 %v5557, %v5558
    %v5560 = vsel %vm5412, %v4388, 0.0
    %v5561 = vadd.f32 %v5559, %v5560
    %v5562 = vsel %vm5412, %v4390, 0.0
    %v5563 = vadd.f32 %v5561, %v5562
    %v5564 = vsel %vm5412, %v4398, 0.0
    %v5565 = vadd.f32 %v5563, %v5564
    %v5566 = vsel %vm5412, %v4406, 0.0
    %v5567 = vadd.f32 %v5565, %v5566
    %v5568 = vsel %vm5412, %v4405, 0.0
    %v5569 = vadd.f32 %v5567, %v5568
    %v5570 = vsel %vm5412, %v4407, 0.0
    %v5571 = vadd.f32 %v5569, %v5570
    %v5572 = vsel %vm5412, %v4415, 0.0
    %v5573 = vadd.f32 %v5571, %v5572
    %v5574 = vsel %vm5412, %v4423, 0.0
    %v5575 = vadd.f32 %v5573, %v5574
    %v5576 = vsel %vm5412, %v4422, 0.0
    %v5577 = vadd.f32 %v5575, %v5576
    %v5578 = vsel %vm5412, %v4424, 0.0
    %v5579 = vadd.f32 %v5577, %v5578
    %v5580 = vsel %vm5412, %v4432, 0.0
    %v5581 = vadd.f32 %v5579, %v5580
    %v5582 = vsel %vm5412, %v4440, 0.0
    %v5583 = vadd.f32 %v5581, %v5582
    %v5584 = vsel %vm5412, %v4439, 0.0
    %v5585 = vadd.f32 %v5583, %v5584
    %v5586 = vsel %vm5412, %v4441, 0.0
    %v5587 = vadd.f32 %v5585, %v5586
    %v5588 = vsel %vm5412, %v4449, 0.0
    %v5589 = vadd.f32 %v5587, %v5588
    %v5590 = vsel %vm5412, %v4457, 0.0
    %v5591 = vadd.f32 %v5589, %v5590
    %v5592 = vsel %vm5412, %v4456, 0.0
    %v5593 = vadd.f32 %v5591, %v5592
    %v5594 = vsel %vm5412, %v4458, 0.0
    %v5595 = vadd.f32 %v5593, %v5594
    %v5596 = vsel %vm5412, %v4466, 0.0
    %v5597 = vadd.f32 %v5595, %v5596
    %v5598 = vsel %vm5412, %v4474, 0.0
    %v5599 = vadd.f32 %v5597, %v5598
    %v5600 = vsel %vm5412, %v4473, 0.0
    %v5601 = vadd.f32 %v5599, %v5600
    %v5602 = vsel %vm5412, %v4475, 0.0
    %v5603 = vadd.f32 %v5601, %v5602
    %v5604 = vsel %vm5412, %v4483, 0.0
    %v5605 = vadd.f32 %v5603, %v5604
    %v5606 = vsel %vm5412, %v4491, 0.0
    %v5607 = vadd.f32 %v5605, %v5606
    %v5608 = vsel %vm5412, %v4490, 0.0
    %v5609 = vadd.f32 %v5607, %v5608
    %v5610 = vsel %vm5412, %v4492, 0.0
    %v5611 = vadd.f32 %v5609, %v5610
    %v5612 = vsel %vm5412, %v4500, 0.0
    %v5613 = vadd.f32 %v5611, %v5612
    %v5614 = vsel %vm5412, %v4508, 0.0
    %v5615 = vadd.f32 %v5613, %v5614
    %v5616 = vsel %vm5412, %v4507, 0.0
    %v5617 = vadd.f32 %v5615, %v5616
    %v5618 = vsel %vm5412, %v4509, 0.0
    %v5619 = vadd.f32 %v5617, %v5618
    %v5620 = vsel %vm5412, %v4517, 0.0
    %v5621 = vadd.f32 %v5619, %v5620
    %v5622 = vsel %vm5412, %v4525, 0.0
    %v5623 = vadd.f32 %v5621, %v5622
    %v5624 = vsel %vm5412, %v4524, 0.0
    %v5625 = vadd.f32 %v5623, %v5624
    %v5626 = vsel %vm5412, %v4526, 0.0
    %v5627 = vadd.f32 %v5625, %v5626
    %v5628 = vsel %vm5412, %v4534, 0.0
    %v5629 = vadd.f32 %v5627, %v5628
    %v5630 = vsel %vm5412, %v4542, 0.0
    %v5631 = vadd.f32 %v5629, %v5630
    %v5632 = vsel %vm5412, %v4541, 0.0
    %v5633 = vadd.f32 %v5631, %v5632
    %v5634 = vsel %vm5412, %v4543, 0.0
    %v5635 = vadd.f32 %v5633, %v5634
    %v5636 = vsel %vm5412, %v4551, 0.0
    %v5637 = vadd.f32 %v5635, %v5636
    %v5638 = vsel %vm5412, %v4559, 0.0
    %v5639 = vadd.f32 %v5637, %v5638
    %v5640 = vsel %vm5412, %v4558, 0.0
    %v5641 = vadd.f32 %v5639, %v5640
    %v5642 = vsel %vm5412, %v4560, 0.0
    %v5643 = vadd.f32 %v5641, %v5642
    %v5644 = vsel %vm5412, %v4568, 0.0
    %v5645 = vadd.f32 %v5643, %v5644
    %v5646 = vsel %vm5412, %v4576, 0.0
    %v5647 = vadd.f32 %v5645, %v5646
    %v5648 = vsel %vm5412, %v4575, 0.0
    %v5649 = vadd.f32 %v5647, %v5648
    %v5650 = vsel %vm5412, %v4577, 0.0
    %v5651 = vadd.f32 %v5649, %v5650
    %v5652 = vsel %vm5412, %v4585, 0.0
    %v5653 = vadd.f32 %v5651, %v5652
    %v5654 = vsel %vm5412, %v4593, 0.0
    %v5655 = vadd.f32 %v5653, %v5654
    %v5656 = vsel %vm5412, %v4592, 0.0
    %v5657 = vadd.f32 %v5655, %v5656
    %v5658 = vsel %vm5412, %v4594, 0.0
    %v5659 = vadd.f32 %v5657, %v5658
    %v5660 = vsel %vm5412, %v4602, 0.0
    %v5661 = vadd.f32 %v5659, %v5660
    %v5662 = vsel %vm5412, %v4610, 0.0
    %v5663 = vadd.f32 %v5661, %v5662
    %v5664 = vsel %vm5412, %v4609, 0.0
    %v5665 = vadd.f32 %v5663, %v5664
    %v5666 = vsel %vm5412, %v4611, 0.0
    %v5667 = vadd.f32 %v5665, %v5666
    %v5668 = vsel %vm5412, %v4619, 0.0
    %v5669 = vadd.f32 %v5667, %v5668
    %v5670 = vsel %vm5412, %v4627, 0.0
    %v5671 = vadd.f32 %v5669, %v5670
    %v5672 = vsel %vm5412, %v4626, 0.0
    %v5673 = vadd.f32 %v5671, %v5672
    %v5674 = vsel %vm5412, %v4628, 0.0
    %v5675 = vadd.f32 %v5673, %v5674
    %v5676 = vsel %vm5412, %v4636, 0.0
    %v5677 = vadd.f32 %v5675, %v5676
    %v5678 = vsel %vm5412, %v4644, 0.0
    %v5679 = vadd.f32 %v5677, %v5678
    %v5680 = vsel %vm5412, %v4643, 0.0
    %v5681 = vadd.f32 %v5679, %v5680
    %v5682 = vsel %vm5412, %v4645, 0.0
    %v5683 = vadd.f32 %v5681, %v5682
    %v5684 = vsel %vm5412, %v4653, 0.0
    %v5685 = vadd.f32 %v5683, %v5684
    %v5686 = vsel %vm5412, %v4661, 0.0
    %v5687 = vadd.f32 %v5685, %v5686
    %v5688 = vsel %vm5412, %v4660, 0.0
    %v5689 = vadd.f32 %v5687, %v5688
    %v5690 = vsel %vm5412, %v4662, 0.0
    %v5691 = vadd.f32 %v5689, %v5690
    %v5692 = vsel %vm5412, %v4670, 0.0
    %v5693 = vadd.f32 %v5691, %v5692
    %v5694 = vsel %vm5412, %v4678, 0.0
    %v5695 = vadd.f32 %v5693, %v5694
    %v5696 = vsel %vm5412, %v4677, 0.0
    %v5697 = vadd.f32 %v5695, %v5696
    %v5698 = vsel %vm5412, %v4679, 0.0
    %v5699 = vadd.f32 %v5697, %v5698
    %v5700 = vsel %vm5412, %v4687, 0.0
    %v5701 = vadd.f32 %v5699, %v5700
    %v5702 = vsel %vm5412, %v4695, 0.0
    %v5703 = vadd.f32 %v5701, %v5702
    %v5704 = vsel %vm5412, %v4694, 0.0
    %v5705 = vadd.f32 %v5703, %v5704
    %v5706 = vsel %vm5412, %v4696, 0.0
    %v5707 = vadd.f32 %v5705, %v5706
    %v5708 = vsel %vm5412, %v4704, 0.0
    %v5709 = vadd.f32 %v5707, %v5708
    %v5710 = vsel %vm5412, %v4712, 0.0
    %v5711 = vadd.f32 %v5709, %v5710
    %v5712 = vsel %vm5412, %v4711, 0.0
    %v5713 = vadd.f32 %v5711, %v5712
    %v5714 = vsel %vm5412, %v4713, 0.0
    %v5715 = vadd.f32 %v5713, %v5714
    %v5716 = vsel %vm5412, %v4721, 0.0
    %v5717 = vadd.f32 %v5715, %v5716
    %v5718 = vsel %vm5412, %v4729, 0.0
    %v5719 = vadd.f32 %v5717, %v5718
    %v5720 = vsel %vm5412, %v4728, 0.0
    %v5721 = vadd.f32 %v5719, %v5720
    %v5722 = vsel %vm5412, %v4730, 0.0
    %v5723 = vadd.f32 %v5721, %v5722
    %v5724 = vsel %vm5412, %v4738, 0.0
    %v5725 = vadd.f32 %v5723, %v5724
    %v5726 = vsel %vm5412, %v4746, 0.0
    %v5727 = vadd.f32 %v5725, %v5726
    %v5728 = vsel %vm5412, %v4745, 0.0
    %v5729 = vadd.f32 %v5727, %v5728
    %v5730 = vsel %vm5412, %v4747, 0.0
    %v5731 = vadd.f32 %v5729, %v5730
    %v5732 = vsel %vm5412, %v4755, 0.0
    %v5733 = vadd.f32 %v5731, %v5732
    %v5734 = vsel %vm5412, %v4763, 0.0
    %v5735 = vadd.f32 %v5733, %v5734
    %v5736 = vsel %vm5412, %v4762, 0.0
    %v5737 = vadd.f32 %v5735, %v5736
    %v5738 = vsel %vm5412, %v4764, 0.0
    %v5739 = vadd.f32 %v5737, %v5738
    %v5740 = vsel %vm5412, %v4772, 0.0
    %v5741 = vadd.f32 %v5739, %v5740
    %v5742 = vsel %vm5412, %v4780, 0.0
    %v5743 = vadd.f32 %v5741, %v5742
    %v5744 = vsel %vm5412, %v4779, 0.0
    %v5745 = vadd.f32 %v5743, %v5744
    %v5746 = vsel %vm5412, %v4781, 0.0
    %v5747 = vadd.f32 %v5745, %v5746
    %v5748 = vsel %vm5412, %v4789, 0.0
    %v5749 = vadd.f32 %v5747, %v5748
    %v5750 = vsel %vm5412, %v4797, 0.0
    %v5751 = vadd.f32 %v5749, %v5750
    %v5752 = vsel %vm5412, %v4796, 0.0
    %v5753 = vadd.f32 %v5751, %v5752
    %v5754 = vsel %vm5412, %v4798, 0.0
    %v5755 = vadd.f32 %v5753, %v5754
    %v5756 = vsel %vm5412, %v4806, 0.0
    %v5757 = vadd.f32 %v5755, %v5756
    %v5758 = vsel %vm5412, %v4814, 0.0
    %v5759 = vadd.f32 %v5757, %v5758
    %v5760 = vsel %vm5412, %v4813, 0.0
    %v5761 = vadd.f32 %v5759, %v5760
    %v5762 = vsel %vm5412, %v4815, 0.0
    %v5763 = vadd.f32 %v5761, %v5762
    %v5764 = vsel %vm5412, %v4823, 0.0
    %v5765 = vadd.f32 %v5763, %v5764
    %v5766 = vsel %vm5412, %v4831, 0.0
    %v5767 = vadd.f32 %v5765, %v5766
    %v5768 = vsel %vm5412, %v4830, 0.0
    %v5769 = vadd.f32 %v5767, %v5768
    %v5770 = vsel %vm5412, %v4832, 0.0
    %v5771 = vadd.f32 %v5769, %v5770
    %v5772 = vsel %vm5412, %v4840, 0.0
    %v5773 = vadd.f32 %v5771, %v5772
    %v5774 = vsel %vm5412, %v4848, 0.0
    %v5775 = vadd.f32 %v5773, %v5774
    %v5776 = vsel %vm5412, %v4847, 0.0
    %v5777 = vadd.f32 %v5775, %v5776
    %v5778 = vsel %vm5412, %v4849, 0.0
    %v5779 = vadd.f32 %v5777, %v5778
    %v5780 = vsel %vm5412, %v4857, 0.0
    %v5781 = vadd.f32 %v5779, %v5780
    %v5782 = vsel %vm5412, %v4865, 0.0
    %v5783 = vadd.f32 %v5781, %v5782
    %v5784 = vsel %vm5412, %v4864, 0.0
    %v5785 = vadd.f32 %v5783, %v5784
    %v5786 = vsel %vm5412, %v4866, 0.0
    %v5787 = vadd.f32 %v5785, %v5786
    %v5788 = vsel %vm5412, %v4874, 0.0
    %v5789 = vadd.f32 %v5787, %v5788
    %v5790 = vsel %vm5412, %v4882, 0.0
    %v5791 = vadd.f32 %v5789, %v5790
    %v5792 = vsel %vm5412, %v4881, 0.0
    %v5793 = vadd.f32 %v5791, %v5792
    %v5794 = vsel %vm5412, %v4883, 0.0
    %v5795 = vadd.f32 %v5793, %v5794
    %v5796 = vsel %vm5412, %v4891, 0.0
    %v5797 = vadd.f32 %v5795, %v5796
    %v5798 = vsel %vm5412, %v4899, 0.0
    %v5799 = vadd.f32 %v5797, %v5798
    %v5800 = vsel %vm5412, %v4898, 0.0
    %v5801 = vadd.f32 %v5799, %v5800
    %v5802 = vsel %vm5412, %v4900, 0.0
    %v5803 = vadd.f32 %v5801, %v5802
    %v5804 = vsel %vm5412, %v4908, 0.0
    %v5805 = vadd.f32 %v5803, %v5804
    %v5806 = vsel %vm5412, %v4916, 0.0
    %v5807 = vadd.f32 %v5805, %v5806
    %v5808 = vsel %vm5412, %v4915, 0.0
    %v5809 = vadd.f32 %v5807, %v5808
    %v5810 = vsel %vm5412, %v4917, 0.0
    %v5811 = vadd.f32 %v5809, %v5810
    %v5812 = vsel %vm5412, %v4925, 0.0
    %v5813 = vadd.f32 %v5811, %v5812
    %v5814 = vsel %vm5412, %v4933, 0.0
    %v5815 = vadd.f32 %v5813, %v5814
    %v5816 = vsel %vm5412, %v4932, 0.0
    %v5817 = vadd.f32 %v5815, %v5816
    %v5818 = vsel %vm5412, %v4934, 0.0
    %v5819 = vadd.f32 %v5817, %v5818
    %v5820 = vsel %vm5412, %v4942, 0.0
    %v5821 = vadd.f32 %v5819, %v5820
    %v5822 = vsel %vm5412, %v4950, 0.0
    %v5823 = vadd.f32 %v5821, %v5822
    %v5824 = vsel %vm5412, %v4949, 0.0
    %v5825 = vadd.f32 %v5823, %v5824
    %v5826 = vsel %vm5412, %v4951, 0.0
    %v5827 = vadd.f32 %v5825, %v5826
    %v5828 = vsel %vm5412, %v4959, 0.0
    %v5829 = vadd.f32 %v5827, %v5828
    %v5830 = vsel %vm5412, %v4967, 0.0
    %v5831 = vadd.f32 %v5829, %v5830
    %v5832 = vsel %vm5412, %v4966, 0.0
    %v5833 = vadd.f32 %v5831, %v5832
    %v5834 = vsel %vm5412, %v4968, 0.0
    %v5835 = vadd.f32 %v5833, %v5834
    %v5836 = vsel %vm5412, %v4976, 0.0
    %v5837 = vadd.f32 %v5835, %v5836
    %v5838 = vsel %vm5412, %v4984, 0.0
    %v5839 = vadd.f32 %v5837, %v5838
    %v5840 = vsel %vm5412, %v4983, 0.0
    %v5841 = vadd.f32 %v5839, %v5840
    %v5842 = vsel %vm5412, %v4985, 0.0
    %v5843 = vadd.f32 %v5841, %v5842
    %v5844 = vsel %vm5412, %v4993, 0.0
    %v5845 = vadd.f32 %v5843, %v5844
    %v5846 = vsel %vm5412, %v5001, 0.0
    %v5847 = vadd.f32 %v5845, %v5846
    %v5848 = vsel %vm5412, %v5000, 0.0
    %v5849 = vadd.f32 %v5847, %v5848
    %v5850 = vsel %vm5412, %v5002, 0.0
    %v5851 = vadd.f32 %v5849, %v5850
    %v5852 = vsel %vm5412, %v5010, 0.0
    %v5853 = vadd.f32 %v5851, %v5852
    %v5854 = vsel %vm5412, %v5018, 0.0
    %v5855 = vadd.f32 %v5853, %v5854
    %v5856 = vsel %vm5412, %v5017, 0.0
    %v5857 = vadd.f32 %v5855, %v5856
    %v5858 = vsel %vm5412, %v5019, 0.0
    %v5859 = vadd.f32 %v5857, %v5858
    %v5860 = vsel %vm5412, %v5027, 0.0
    %v5861 = vadd.f32 %v5859, %v5860
    %v5862 = vsel %vm5412, %v5035, 0.0
    %v5863 = vadd.f32 %v5861, %v5862
    %v5864 = vsel %vm5412, %v5034, 0.0
    %v5865 = vadd.f32 %v5863, %v5864
    %v5866 = vsel %vm5412, %v5036, 0.0
    %v5867 = vadd.f32 %v5865, %v5866
    %v5868 = vsel %vm5412, %v5044, 0.0
    %v5869 = vadd.f32 %v5867, %v5868
    %v5870 = vsel %vm5412, %v5052, 0.0
    %v5871 = vadd.f32 %v5869, %v5870
    %v5872 = vsel %vm5412, %v5051, 0.0
    %v5873 = vadd.f32 %v5871, %v5872
    %v5874 = vsel %vm5412, %v5053, 0.0
    %v5875 = vadd.f32 %v5873, %v5874
    %v5876 = vsel %vm5412, %v5061, 0.0
    %v5877 = vadd.f32 %v5875, %v5876
    %v5878 = vsel %vm5412, %v5069, 0.0
    %v5879 = vadd.f32 %v5877, %v5878
    %v5880 = vsel %vm5412, %v5068, 0.0
    %v5881 = vadd.f32 %v5879, %v5880
    %v5882 = vsel %vm5412, %v5070, 0.0
    %v5883 = vadd.f32 %v5881, %v5882
    %v5884 = vsel %vm5412, %v5078, 0.0
    %v5885 = vadd.f32 %v5883, %v5884
    %v5886 = vsel %vm5412, %v5086, 0.0
    %v5887 = vadd.f32 %v5885, %v5886
    %v5888 = vsel %vm5412, %v5085, 0.0
    %v5889 = vadd.f32 %v5887, %v5888
    %v5890 = vsel %vm5412, %v5087, 0.0
    %v5891 = vadd.f32 %v5889, %v5890
    %v5892 = vsel %vm5412, %v5095, 0.0
    %v5893 = vadd.f32 %v5891, %v5892
    %v5894 = vsel %vm5412, %v5103, 0.0
    %v5895 = vadd.f32 %v5893, %v5894
    %v5896 = vsel %vm5412, %v5102, 0.0
    %v5897 = vadd.f32 %v5895, %v5896
    %v5898 = vsel %vm5412, %v5104, 0.0
    %v5899 = vadd.f32 %v5897, %v5898
    %v5900 = vsel %vm5412, %v5112, 0.0
    %v5901 = vadd.f32 %v5899, %v5900
    %v5902 = vsel %vm5412, %v5120, 0.0
    %v5903 = vadd.f32 %v5901, %v5902
    %v5904 = vsel %vm5412, %v5119, 0.0
    %v5905 = vadd.f32 %v5903, %v5904
    %v5906 = vsel %vm5412, %v5121, 0.0
    %v5907 = vadd.f32 %v5905, %v5906
    %v5908 = vsel %vm5412, %v5129, 0.0
    %v5909 = vadd.f32 %v5907, %v5908
    %v5910 = vsel %vm5412, %v5137, 0.0
    %v5911 = vadd.f32 %v5909, %v5910
    %v5912 = vsel %vm5412, %v5136, 0.0
    %v5913 = vadd.f32 %v5911, %v5912
    %v5914 = vsel %vm5412, %v5138, 0.0
    %v5915 = vadd.f32 %v5913, %v5914
    %v5916 = vsel %vm5412, %v5146, 0.0
    %v5917 = vadd.f32 %v5915, %v5916
    %v5918 = vsel %vm5412, %v5154, 0.0
    %v5919 = vadd.f32 %v5917, %v5918
    %v5920 = vsel %vm5412, %v5153, 0.0
    %v5921 = vadd.f32 %v5919, %v5920
    %v5922 = vsel %vm5412, %v5155, 0.0
    %v5923 = vadd.f32 %v5921, %v5922
    %5924 = vadd.xlane.f32.xlu0 %v5923
    %v5925 = vpop.xlane.xlu0 %5924
    %v5926 = vlaneseq
    %v5927 = vshrl.u32 %v5926, 7
    %v5928 = vsub.s32 1, %v5927
    %v5929 = vrot.slane %v100, %v5928
    %v5930 = vlaneseq
    %v5931 = vshrl.u32 %v5930, 7
    %v5932 = vsub.s32 3, %v5931
    %v5933 = vrot.slane %v100, %v5932
    %v5934 = vlaneseq
    %v5935 = vshrl.u32 %v5934, 7
    %v5936 = vsub.s32 5, %v5935
    %v5937 = vrot.slane %v100, %v5936
    %v5938 = vlaneseq
    %v5939 = vshrl.u32 %v5938, 7
    %v5940 = vsub.s32 7, %v5939
    %v5941 = vrot.slane %v100, %v5940
    %v5942 = vlaneseq
    %v5943 = vshrl.u32 %v5942, 7
    %v5944 = vsub.s32 1, %v5943
    %v5945 = vrot.slane %v101, %v5944
    %v5946 = vlaneseq
    %v5947 = vshrl.u32 %v5946, 7
    %v5948 = vsub.s32 3, %v5947
    %v5949 = vrot.slane %v101, %v5948
    %v5950 = vlaneseq
    %v5951 = vshrl.u32 %v5950, 7
    %v5952 = vsub.s32 5, %v5951
    %v5953 = vrot.slane %v101, %v5952
    %v5954 = vlaneseq
    %v5955 = vshrl.u32 %v5954, 7
    %v5956 = vsub.s32 7, %v5955
    %v5957 = vrot.slane %v101, %v5956
    %v5958 = vlaneseq
    %v5959 = vshrl.u32 %v5958, 7
    %v5960 = vsub.s32 1, %v5959
    %v5961 = vrot.slane %v102, %v5960
    %v5962 = vlaneseq
    %v5963 = vshrl.u32 %v5962, 7
    %v5964 = vsub.s32 3, %v5963
    %v5965 = vrot.slane %v102, %v5964
    %v5966 = vlaneseq
    %v5967 = vshrl.u32 %v5966, 7
    %v5968 = vsub.s32 5, %v5967
    %v5969 = vrot.slane %v102, %v5968
    %v5970 = vlaneseq
    %v5971 = vshrl.u32 %v5970, 7
    %v5972 = vsub.s32 7, %v5971
    %v5973 = vrot.slane %v102, %v5972
    %v5974 = vlaneseq
    %v5975 = vshrl.u32 %v5974, 7
    %v5976 = vsub.s32 1, %v5975
    %v5977 = vrot.slane %v103, %v5976
    %v5978 = vlaneseq
    %v5979 = vshrl.u32 %v5978, 7
    %v5980 = vsub.s32 3, %v5979
    %v5981 = vrot.slane %v103, %v5980
    %v5982 = vlaneseq
    %v5983 = vshrl.u32 %v5982, 7
    %v5984 = vsub.s32 5, %v5983
    %v5985 = vrot.slane %v103, %v5984
    %v5986 = vlaneseq
    %v5987 = vshrl.u32 %v5986, 7
    %v5988 = vsub.s32 7, %v5987
    %v5989 = vrot.slane %v103, %v5988
    %v5990 = vlaneseq
    %v5991 = vshrl.u32 %v5990, 7
    %v5992 = vsub.s32 1, %v5991
    %v5993 = vrot.slane %v104, %v5992
    %v5994 = vlaneseq
    %v5995 = vshrl.u32 %v5994, 7
    %v5996 = vsub.s32 3, %v5995
    %v5997 = vrot.slane %v104, %v5996
    %v5998 = vlaneseq
    %v5999 = vshrl.u32 %v5998, 7
    %v6000 = vsub.s32 5, %v5999
    %v6001 = vrot.slane %v104, %v6000
    %v6002 = vlaneseq
    %v6003 = vshrl.u32 %v6002, 7
    %v6004 = vsub.s32 7, %v6003
    %v6005 = vrot.slane %v104, %v6004
    %v6006 = vlaneseq
    %v6007 = vshrl.u32 %v6006, 7
    %v6008 = vsub.s32 1, %v6007
    %v6009 = vrot.slane %v105, %v6008
    %v6010 = vlaneseq
    %v6011 = vshrl.u32 %v6010, 7
    %v6012 = vsub.s32 3, %v6011
    %v6013 = vrot.slane %v105, %v6012
    %v6014 = vlaneseq
    %v6015 = vshrl.u32 %v6014, 7
    %v6016 = vsub.s32 5, %v6015
    %v6017 = vrot.slane %v105, %v6016
    %v6018 = vlaneseq
    %v6019 = vshrl.u32 %v6018, 7
    %v6020 = vsub.s32 7, %v6019
    %v6021 = vrot.slane %v105, %v6020
    %v6022 = vlaneseq
    %v6023 = vshrl.u32 %v6022, 7
    %v6024 = vsub.s32 1, %v6023
    %v6025 = vrot.slane %v106, %v6024
    %v6026 = vlaneseq
    %v6027 = vshrl.u32 %v6026, 7
    %v6028 = vsub.s32 3, %v6027
    %v6029 = vrot.slane %v106, %v6028
    %v6030 = vlaneseq
    %v6031 = vshrl.u32 %v6030, 7
    %v6032 = vsub.s32 5, %v6031
    %v6033 = vrot.slane %v106, %v6032
    %v6034 = vlaneseq
    %v6035 = vshrl.u32 %v6034, 7
    %v6036 = vsub.s32 7, %v6035
    %v6037 = vrot.slane %v106, %v6036
    %v6038 = vlaneseq
    %v6039 = vshrl.u32 %v6038, 7
    %v6040 = vsub.s32 1, %v6039
    %v6041 = vrot.slane %v107, %v6040
    %v6042 = vlaneseq
    %v6043 = vshrl.u32 %v6042, 7
    %v6044 = vsub.s32 3, %v6043
    %v6045 = vrot.slane %v107, %v6044
    %v6046 = vlaneseq
    %v6047 = vshrl.u32 %v6046, 7
    %v6048 = vsub.s32 5, %v6047
    %v6049 = vrot.slane %v107, %v6048
    %v6050 = vlaneseq
    %v6051 = vshrl.u32 %v6050, 7
    %v6052 = vsub.s32 7, %v6051
    %v6053 = vrot.slane %v107, %v6052
    %v6054 = vlaneseq
    %v6055 = vshrl.u32 %v6054, 7
    %v6056 = vsub.s32 1, %v6055
    %v6057 = vrot.slane %v108, %v6056
    %v6058 = vlaneseq
    %v6059 = vshrl.u32 %v6058, 7
    %v6060 = vsub.s32 3, %v6059
    %v6061 = vrot.slane %v108, %v6060
    %v6062 = vlaneseq
    %v6063 = vshrl.u32 %v6062, 7
    %v6064 = vsub.s32 5, %v6063
    %v6065 = vrot.slane %v108, %v6064
    %v6066 = vlaneseq
    %v6067 = vshrl.u32 %v6066, 7
    %v6068 = vsub.s32 7, %v6067
    %v6069 = vrot.slane %v108, %v6068
    %v6070 = vlaneseq
    %v6071 = vshrl.u32 %v6070, 7
    %v6072 = vsub.s32 1, %v6071
    %v6073 = vrot.slane %v109, %v6072
    %v6074 = vlaneseq
    %v6075 = vshrl.u32 %v6074, 7
    %v6076 = vsub.s32 3, %v6075
    %v6077 = vrot.slane %v109, %v6076
    %v6078 = vlaneseq
    %v6079 = vshrl.u32 %v6078, 7
    %v6080 = vsub.s32 5, %v6079
    %v6081 = vrot.slane %v109, %v6080
    %v6082 = vlaneseq
    %v6083 = vshrl.u32 %v6082, 7
    %v6084 = vsub.s32 7, %v6083
    %v6085 = vrot.slane %v109, %v6084
    %v6086 = vlaneseq
    %v6087 = vshrl.u32 %v6086, 7
    %v6088 = vsub.s32 1, %v6087
    %v6089 = vrot.slane %v110, %v6088
    %v6090 = vlaneseq
    %v6091 = vshrl.u32 %v6090, 7
    %v6092 = vsub.s32 3, %v6091
    %v6093 = vrot.slane %v110, %v6092
    %v6094 = vlaneseq
    %v6095 = vshrl.u32 %v6094, 7
    %v6096 = vsub.s32 5, %v6095
    %v6097 = vrot.slane %v110, %v6096
    %v6098 = vlaneseq
    %v6099 = vshrl.u32 %v6098, 7
    %v6100 = vsub.s32 7, %v6099
    %v6101 = vrot.slane %v110, %v6100
    %v6102 = vlaneseq
    %v6103 = vshrl.u32 %v6102, 7
    %v6104 = vsub.s32 1, %v6103
    %v6105 = vrot.slane %v111, %v6104
    %v6106 = vlaneseq
    %v6107 = vshrl.u32 %v6106, 7
    %v6108 = vsub.s32 3, %v6107
    %v6109 = vrot.slane %v111, %v6108
    %v6110 = vlaneseq
    %v6111 = vshrl.u32 %v6110, 7
    %v6112 = vsub.s32 5, %v6111
    %v6113 = vrot.slane %v111, %v6112
    %v6114 = vlaneseq
    %v6115 = vshrl.u32 %v6114, 7
    %v6116 = vsub.s32 7, %v6115
    %v6117 = vrot.slane %v111, %v6116
    %v6118 = vlaneseq
    %v6119 = vshrl.u32 %v6118, 7
    %v6120 = vsub.s32 1, %v6119
    %v6121 = vrot.slane %v112, %v6120
    %v6122 = vlaneseq
    %v6123 = vshrl.u32 %v6122, 7
    %v6124 = vsub.s32 3, %v6123
    %v6125 = vrot.slane %v112, %v6124
    %v6126 = vlaneseq
    %v6127 = vshrl.u32 %v6126, 7
    %v6128 = vsub.s32 5, %v6127
    %v6129 = vrot.slane %v112, %v6128
    %v6130 = vlaneseq
    %v6131 = vshrl.u32 %v6130, 7
    %v6132 = vsub.s32 7, %v6131
    %v6133 = vrot.slane %v112, %v6132
    %v6134 = vlaneseq
    %v6135 = vshrl.u32 %v6134, 7
    %v6136 = vsub.s32 1, %v6135
    %v6137 = vrot.slane %v113, %v6136
    %v6138 = vlaneseq
    %v6139 = vshrl.u32 %v6138, 7
    %v6140 = vsub.s32 3, %v6139
    %v6141 = vrot.slane %v113, %v6140
    %v6142 = vlaneseq
    %v6143 = vshrl.u32 %v6142, 7
    %v6144 = vsub.s32 5, %v6143
    %v6145 = vrot.slane %v113, %v6144
    %v6146 = vlaneseq
    %v6147 = vshrl.u32 %v6146, 7
    %v6148 = vsub.s32 7, %v6147
    %v6149 = vrot.slane %v113, %v6148
    %v6150 = vlaneseq
    %v6151 = vshrl.u32 %v6150, 7
    %v6152 = vsub.s32 1, %v6151
    %v6153 = vrot.slane %v114, %v6152
    %v6154 = vlaneseq
    %v6155 = vshrl.u32 %v6154, 7
    %v6156 = vsub.s32 3, %v6155
    %v6157 = vrot.slane %v114, %v6156
    %v6158 = vlaneseq
    %v6159 = vshrl.u32 %v6158, 7
    %v6160 = vsub.s32 5, %v6159
    %v6161 = vrot.slane %v114, %v6160
    %v6162 = vlaneseq
    %v6163 = vshrl.u32 %v6162, 7
    %v6164 = vsub.s32 7, %v6163
    %v6165 = vrot.slane %v114, %v6164
    %v6166 = vlaneseq
    %v6167 = vshrl.u32 %v6166, 7
    %v6168 = vsub.s32 1, %v6167
    %v6169 = vrot.slane %v115, %v6168
    %v6170 = vlaneseq
    %v6171 = vshrl.u32 %v6170, 7
    %v6172 = vsub.s32 3, %v6171
    %v6173 = vrot.slane %v115, %v6172
    %v6174 = vlaneseq
    %v6175 = vshrl.u32 %v6174, 7
    %v6176 = vsub.s32 5, %v6175
    %v6177 = vrot.slane %v115, %v6176
    %v6178 = vlaneseq
    %v6179 = vshrl.u32 %v6178, 7
    %v6180 = vsub.s32 7, %v6179
    %v6181 = vrot.slane %v115, %v6180
    %v6182 = vlaneseq
    %v6183 = vshrl.u32 %v6182, 7
    %v6184 = vsub.s32 1, %v6183
    %v6185 = vrot.slane %v116, %v6184
    %v6186 = vlaneseq
    %v6187 = vshrl.u32 %v6186, 7
    %v6188 = vsub.s32 3, %v6187
    %v6189 = vrot.slane %v116, %v6188
    %v6190 = vlaneseq
    %v6191 = vshrl.u32 %v6190, 7
    %v6192 = vsub.s32 5, %v6191
    %v6193 = vrot.slane %v116, %v6192
    %v6194 = vlaneseq
    %v6195 = vshrl.u32 %v6194, 7
    %v6196 = vsub.s32 7, %v6195
    %v6197 = vrot.slane %v116, %v6196
    %v6198 = vlaneseq
    %v6199 = vshrl.u32 %v6198, 7
    %v6200 = vsub.s32 1, %v6199
    %v6201 = vrot.slane %v117, %v6200
    %v6202 = vlaneseq
    %v6203 = vshrl.u32 %v6202, 7
    %v6204 = vsub.s32 3, %v6203
    %v6205 = vrot.slane %v117, %v6204
    %v6206 = vlaneseq
    %v6207 = vshrl.u32 %v6206, 7
    %v6208 = vsub.s32 5, %v6207
    %v6209 = vrot.slane %v117, %v6208
    %v6210 = vlaneseq
    %v6211 = vshrl.u32 %v6210, 7
    %v6212 = vsub.s32 7, %v6211
    %v6213 = vrot.slane %v117, %v6212
    %v6214 = vlaneseq
    %v6215 = vshrl.u32 %v6214, 7
    %v6216 = vsub.s32 1, %v6215
    %v6217 = vrot.slane %v118, %v6216
    %v6218 = vlaneseq
    %v6219 = vshrl.u32 %v6218, 7
    %v6220 = vsub.s32 3, %v6219
    %v6221 = vrot.slane %v118, %v6220
    %v6222 = vlaneseq
    %v6223 = vshrl.u32 %v6222, 7
    %v6224 = vsub.s32 5, %v6223
    %v6225 = vrot.slane %v118, %v6224
    %v6226 = vlaneseq
    %v6227 = vshrl.u32 %v6226, 7
    %v6228 = vsub.s32 7, %v6227
    %v6229 = vrot.slane %v118, %v6228
    %v6230 = vlaneseq
    %v6231 = vshrl.u32 %v6230, 7
    %v6232 = vsub.s32 1, %v6231
    %v6233 = vrot.slane %v119, %v6232
    %v6234 = vlaneseq
    %v6235 = vshrl.u32 %v6234, 7
    %v6236 = vsub.s32 3, %v6235
    %v6237 = vrot.slane %v119, %v6236
    %v6238 = vlaneseq
    %v6239 = vshrl.u32 %v6238, 7
    %v6240 = vsub.s32 5, %v6239
    %v6241 = vrot.slane %v119, %v6240
    %v6242 = vlaneseq
    %v6243 = vshrl.u32 %v6242, 7
    %v6244 = vsub.s32 7, %v6243
    %v6245 = vrot.slane %v119, %v6244
    %v6246 = vlaneseq
    %v6247 = vshrl.u32 %v6246, 7
    %v6248 = vsub.s32 1, %v6247
    %v6249 = vrot.slane %v120, %v6248
    %v6250 = vlaneseq
    %v6251 = vshrl.u32 %v6250, 7
    %v6252 = vsub.s32 3, %v6251
    %v6253 = vrot.slane %v120, %v6252
    %v6254 = vlaneseq
    %v6255 = vshrl.u32 %v6254, 7
    %v6256 = vsub.s32 5, %v6255
    %v6257 = vrot.slane %v120, %v6256
    %v6258 = vlaneseq
    %v6259 = vshrl.u32 %v6258, 7
    %v6260 = vsub.s32 7, %v6259
    %v6261 = vrot.slane %v120, %v6260
    %v6262 = vlaneseq
    %v6263 = vshrl.u32 %v6262, 7
    %v6264 = vsub.s32 1, %v6263
    %v6265 = vrot.slane %v121, %v6264
    %v6266 = vlaneseq
    %v6267 = vshrl.u32 %v6266, 7
    %v6268 = vsub.s32 3, %v6267
    %v6269 = vrot.slane %v121, %v6268
    %v6270 = vlaneseq
    %v6271 = vshrl.u32 %v6270, 7
    %v6272 = vsub.s32 5, %v6271
    %v6273 = vrot.slane %v121, %v6272
    %v6274 = vlaneseq
    %v6275 = vshrl.u32 %v6274, 7
    %v6276 = vsub.s32 7, %v6275
    %v6277 = vrot.slane %v121, %v6276
    %v6278 = vlaneseq
    %v6279 = vshrl.u32 %v6278, 7
    %v6280 = vsub.s32 1, %v6279
    %v6281 = vrot.slane %v122, %v6280
    %v6282 = vlaneseq
    %v6283 = vshrl.u32 %v6282, 7
    %v6284 = vsub.s32 3, %v6283
    %v6285 = vrot.slane %v122, %v6284
    %v6286 = vlaneseq
    %v6287 = vshrl.u32 %v6286, 7
    %v6288 = vsub.s32 5, %v6287
    %v6289 = vrot.slane %v122, %v6288
    %v6290 = vlaneseq
    %v6291 = vshrl.u32 %v6290, 7
    %v6292 = vsub.s32 7, %v6291
    %v6293 = vrot.slane %v122, %v6292
    %v6294 = vlaneseq
    %v6295 = vshrl.u32 %v6294, 7
    %v6296 = vsub.s32 1, %v6295
    %v6297 = vrot.slane %v123, %v6296
    %v6298 = vlaneseq
    %v6299 = vshrl.u32 %v6298, 7
    %v6300 = vsub.s32 3, %v6299
    %v6301 = vrot.slane %v123, %v6300
    %v6302 = vlaneseq
    %v6303 = vshrl.u32 %v6302, 7
    %v6304 = vsub.s32 5, %v6303
    %v6305 = vrot.slane %v123, %v6304
    %v6306 = vlaneseq
    %v6307 = vshrl.u32 %v6306, 7
    %v6308 = vsub.s32 7, %v6307
    %v6309 = vrot.slane %v123, %v6308
    %v6310 = vlaneseq
    %v6311 = vshrl.u32 %v6310, 7
    %v6312 = vsub.s32 1, %v6311
    %v6313 = vrot.slane %v124, %v6312
    %v6314 = vlaneseq
    %v6315 = vshrl.u32 %v6314, 7
    %v6316 = vsub.s32 3, %v6315
    %v6317 = vrot.slane %v124, %v6316
    %v6318 = vlaneseq
    %v6319 = vshrl.u32 %v6318, 7
    %v6320 = vsub.s32 5, %v6319
    %v6321 = vrot.slane %v124, %v6320
    %v6322 = vlaneseq
    %v6323 = vshrl.u32 %v6322, 7
    %v6324 = vsub.s32 7, %v6323
    %v6325 = vrot.slane %v124, %v6324
    %v6326 = vlaneseq
    %v6327 = vshrl.u32 %v6326, 7
    %v6328 = vsub.s32 1, %v6327
    %v6329 = vrot.slane %v125, %v6328
    %v6330 = vlaneseq
    %v6331 = vshrl.u32 %v6330, 7
    %v6332 = vsub.s32 3, %v6331
    %v6333 = vrot.slane %v125, %v6332
    %v6334 = vlaneseq
    %v6335 = vshrl.u32 %v6334, 7
    %v6336 = vsub.s32 5, %v6335
    %v6337 = vrot.slane %v125, %v6336
    %v6338 = vlaneseq
    %v6339 = vshrl.u32 %v6338, 7
    %v6340 = vsub.s32 7, %v6339
    %v6341 = vrot.slane %v125, %v6340
    %v6342 = vlaneseq
    %v6343 = vshrl.u32 %v6342, 7
    %v6344 = vsub.s32 1, %v6343
    %v6345 = vrot.slane %v126, %v6344
    %v6346 = vlaneseq
    %v6347 = vshrl.u32 %v6346, 7
    %v6348 = vsub.s32 3, %v6347
    %v6349 = vrot.slane %v126, %v6348
    %v6350 = vlaneseq
    %v6351 = vshrl.u32 %v6350, 7
    %v6352 = vsub.s32 5, %v6351
    %v6353 = vrot.slane %v126, %v6352
    %v6354 = vlaneseq
    %v6355 = vshrl.u32 %v6354, 7
    %v6356 = vsub.s32 7, %v6355
    %v6357 = vrot.slane %v126, %v6356
    %v6358 = vlaneseq
    %v6359 = vshrl.u32 %v6358, 7
    %v6360 = vsub.s32 1, %v6359
    %v6361 = vrot.slane %v127, %v6360
    %v6362 = vlaneseq
    %v6363 = vshrl.u32 %v6362, 7
    %v6364 = vsub.s32 3, %v6363
    %v6365 = vrot.slane %v127, %v6364
    %v6366 = vlaneseq
    %v6367 = vshrl.u32 %v6366, 7
    %v6368 = vsub.s32 5, %v6367
    %v6369 = vrot.slane %v127, %v6368
    %v6370 = vlaneseq
    %v6371 = vshrl.u32 %v6370, 7
    %v6372 = vsub.s32 7, %v6371
    %v6373 = vrot.slane %v127, %v6372
    %v6374 = vlaneseq
    %v6375 = vshrl.u32 %v6374, 7
    %v6376 = vsub.s32 1, %v6375
    %v6377 = vrot.slane %v128, %v6376
    %v6378 = vlaneseq
    %v6379 = vshrl.u32 %v6378, 7
    %v6380 = vsub.s32 3, %v6379
    %v6381 = vrot.slane %v128, %v6380
    %v6382 = vlaneseq
    %v6383 = vshrl.u32 %v6382, 7
    %v6384 = vsub.s32 5, %v6383
    %v6385 = vrot.slane %v128, %v6384
    %v6386 = vlaneseq
    %v6387 = vshrl.u32 %v6386, 7
    %v6388 = vsub.s32 7, %v6387
    %v6389 = vrot.slane %v128, %v6388
    %v6390 = vlaneseq
    %v6391 = vshrl.u32 %v6390, 7
    %v6392 = vsub.s32 1, %v6391
    %v6393 = vrot.slane %v129, %v6392
    %v6394 = vlaneseq
    %v6395 = vshrl.u32 %v6394, 7
    %v6396 = vsub.s32 3, %v6395
    %v6397 = vrot.slane %v129, %v6396
    %v6398 = vlaneseq
    %v6399 = vshrl.u32 %v6398, 7
    %v6400 = vsub.s32 5, %v6399
    %v6401 = vrot.slane %v129, %v6400
    %v6402 = vlaneseq
    %v6403 = vshrl.u32 %v6402, 7
    %v6404 = vsub.s32 7, %v6403
    %v6405 = vrot.slane %v129, %v6404
    %v6406 = vlaneseq
    %v6407 = vshrl.u32 %v6406, 7
    %v6408 = vsub.s32 1, %v6407
    %v6409 = vrot.slane %v130, %v6408
    %v6410 = vlaneseq
    %v6411 = vshrl.u32 %v6410, 7
    %v6412 = vsub.s32 3, %v6411
    %v6413 = vrot.slane %v130, %v6412
    %v6414 = vlaneseq
    %v6415 = vshrl.u32 %v6414, 7
    %v6416 = vsub.s32 5, %v6415
    %v6417 = vrot.slane %v130, %v6416
    %v6418 = vlaneseq
    %v6419 = vshrl.u32 %v6418, 7
    %v6420 = vsub.s32 7, %v6419
    %v6421 = vrot.slane %v130, %v6420
    %v6422 = vlaneseq
    %v6423 = vshrl.u32 %v6422, 7
    %v6424 = vsub.s32 1, %v6423
    %v6425 = vrot.slane %v131, %v6424
    %v6426 = vlaneseq
    %v6427 = vshrl.u32 %v6426, 7
    %v6428 = vsub.s32 3, %v6427
    %v6429 = vrot.slane %v131, %v6428
    %v6430 = vlaneseq
    %v6431 = vshrl.u32 %v6430, 7
    %v6432 = vsub.s32 5, %v6431
    %v6433 = vrot.slane %v131, %v6432
    %v6434 = vlaneseq
    %v6435 = vshrl.u32 %v6434, 7
    %v6436 = vsub.s32 7, %v6435
    %v6437 = vrot.slane %v131, %v6436
    %v6438 = vlaneseq
    %v6439 = vshrl.u32 %v6438, 7
    %v6440 = vsub.s32 1, %v6439
    %v6441 = vrot.slane %v132, %v6440
    %v6442 = vlaneseq
    %v6443 = vshrl.u32 %v6442, 7
    %v6444 = vsub.s32 3, %v6443
    %v6445 = vrot.slane %v132, %v6444
    %v6446 = vlaneseq
    %v6447 = vshrl.u32 %v6446, 7
    %v6448 = vsub.s32 5, %v6447
    %v6449 = vrot.slane %v132, %v6448
    %v6450 = vlaneseq
    %v6451 = vshrl.u32 %v6450, 7
    %v6452 = vsub.s32 7, %v6451
    %v6453 = vrot.slane %v132, %v6452
    %v6454 = vlaneseq
    %v6455 = vshrl.u32 %v6454, 7
    %v6456 = vsub.s32 1, %v6455
    %v6457 = vrot.slane %v133, %v6456
    %v6458 = vlaneseq
    %v6459 = vshrl.u32 %v6458, 7
    %v6460 = vsub.s32 3, %v6459
    %v6461 = vrot.slane %v133, %v6460
    %v6462 = vlaneseq
    %v6463 = vshrl.u32 %v6462, 7
    %v6464 = vsub.s32 5, %v6463
    %v6465 = vrot.slane %v133, %v6464
    %v6466 = vlaneseq
    %v6467 = vshrl.u32 %v6466, 7
    %v6468 = vsub.s32 7, %v6467
    %v6469 = vrot.slane %v133, %v6468
    %v6470 = vlaneseq
    %v6471 = vshrl.u32 %v6470, 7
    %v6472 = vsub.s32 1, %v6471
    %v6473 = vrot.slane %v134, %v6472
    %v6474 = vlaneseq
    %v6475 = vshrl.u32 %v6474, 7
    %v6476 = vsub.s32 3, %v6475
    %v6477 = vrot.slane %v134, %v6476
    %v6478 = vlaneseq
    %v6479 = vshrl.u32 %v6478, 7
    %v6480 = vsub.s32 5, %v6479
    %v6481 = vrot.slane %v134, %v6480
    %v6482 = vlaneseq
    %v6483 = vshrl.u32 %v6482, 7
    %v6484 = vsub.s32 7, %v6483
    %v6485 = vrot.slane %v134, %v6484
    %v6486 = vlaneseq
    %v6487 = vshrl.u32 %v6486, 7
    %v6488 = vsub.s32 1, %v6487
    %v6489 = vrot.slane %v135, %v6488
    %v6490 = vlaneseq
    %v6491 = vshrl.u32 %v6490, 7
    %v6492 = vsub.s32 3, %v6491
    %v6493 = vrot.slane %v135, %v6492
    %v6494 = vlaneseq
    %v6495 = vshrl.u32 %v6494, 7
    %v6496 = vsub.s32 5, %v6495
    %v6497 = vrot.slane %v135, %v6496
    %v6498 = vlaneseq
    %v6499 = vshrl.u32 %v6498, 7
    %v6500 = vsub.s32 7, %v6499
    %v6501 = vrot.slane %v135, %v6500
    %v6502 = vlaneseq
    %v6503 = vshrl.u32 %v6502, 7
    %v6504 = vsub.s32 1, %v6503
    %v6505 = vrot.slane %v136, %v6504
    %v6506 = vlaneseq
    %v6507 = vshrl.u32 %v6506, 7
    %v6508 = vsub.s32 3, %v6507
    %v6509 = vrot.slane %v136, %v6508
    %v6510 = vlaneseq
    %v6511 = vshrl.u32 %v6510, 7
    %v6512 = vsub.s32 5, %v6511
    %v6513 = vrot.slane %v136, %v6512
    %v6514 = vlaneseq
    %v6515 = vshrl.u32 %v6514, 7
    %v6516 = vsub.s32 7, %v6515
    %v6517 = vrot.slane %v136, %v6516
    %v6518 = vlaneseq
    %v6519 = vshrl.u32 %v6518, 7
    %v6520 = vsub.s32 1, %v6519
    %v6521 = vrot.slane %v137, %v6520
    %v6522 = vlaneseq
    %v6523 = vshrl.u32 %v6522, 7
    %v6524 = vsub.s32 3, %v6523
    %v6525 = vrot.slane %v137, %v6524
    %v6526 = vlaneseq
    %v6527 = vshrl.u32 %v6526, 7
    %v6528 = vsub.s32 5, %v6527
    %v6529 = vrot.slane %v137, %v6528
    %v6530 = vlaneseq
    %v6531 = vshrl.u32 %v6530, 7
    %v6532 = vsub.s32 7, %v6531
    %v6533 = vrot.slane %v137, %v6532
    %v6534 = vlaneseq
    %v6535 = vshrl.u32 %v6534, 7
    %v6536 = vsub.s32 1, %v6535
    %v6537 = vrot.slane %v138, %v6536
    %v6538 = vlaneseq
    %v6539 = vshrl.u32 %v6538, 7
    %v6540 = vsub.s32 3, %v6539
    %v6541 = vrot.slane %v138, %v6540
    %v6542 = vlaneseq
    %v6543 = vshrl.u32 %v6542, 7
    %v6544 = vsub.s32 5, %v6543
    %v6545 = vrot.slane %v138, %v6544
    %v6546 = vlaneseq
    %v6547 = vshrl.u32 %v6546, 7
    %v6548 = vsub.s32 7, %v6547
    %v6549 = vrot.slane %v138, %v6548
    %v6550 = vlaneseq
    %v6551 = vshrl.u32 %v6550, 7
    %v6552 = vsub.s32 1, %v6551
    %v6553 = vrot.slane %v139, %v6552
    %v6554 = vlaneseq
    %v6555 = vshrl.u32 %v6554, 7
    %v6556 = vsub.s32 3, %v6555
    %v6557 = vrot.slane %v139, %v6556
    %v6558 = vlaneseq
    %v6559 = vshrl.u32 %v6558, 7
    %v6560 = vsub.s32 5, %v6559
    %v6561 = vrot.slane %v139, %v6560
    %v6562 = vlaneseq
    %v6563 = vshrl.u32 %v6562, 7
    %v6564 = vsub.s32 7, %v6563
    %v6565 = vrot.slane %v139, %v6564
    %v6566 = vlaneseq
    %v6567 = vshrl.u32 %v6566, 7
    %v6568 = vsub.s32 1, %v6567
    %v6569 = vrot.slane %v140, %v6568
    %v6570 = vlaneseq
    %v6571 = vshrl.u32 %v6570, 7
    %v6572 = vsub.s32 3, %v6571
    %v6573 = vrot.slane %v140, %v6572
    %v6574 = vlaneseq
    %v6575 = vshrl.u32 %v6574, 7
    %v6576 = vsub.s32 5, %v6575
    %v6577 = vrot.slane %v140, %v6576
    %v6578 = vlaneseq
    %v6579 = vshrl.u32 %v6578, 7
    %v6580 = vsub.s32 7, %v6579
    %v6581 = vrot.slane %v140, %v6580
    %v6582 = vlaneseq
    %v6583 = vshrl.u32 %v6582, 7
    %v6584 = vsub.s32 1, %v6583
    %v6585 = vrot.slane %v141, %v6584
    %v6586 = vlaneseq
    %v6587 = vshrl.u32 %v6586, 7
    %v6588 = vsub.s32 3, %v6587
    %v6589 = vrot.slane %v141, %v6588
    %v6590 = vlaneseq
    %v6591 = vshrl.u32 %v6590, 7
    %v6592 = vsub.s32 5, %v6591
    %v6593 = vrot.slane %v141, %v6592
    %v6594 = vlaneseq
    %v6595 = vshrl.u32 %v6594, 7
    %v6596 = vsub.s32 7, %v6595
    %v6597 = vrot.slane %v141, %v6596
    %v6598 = vlaneseq
    %v6599 = vshrl.u32 %v6598, 7
    %v6600 = vsub.s32 1, %v6599
    %v6601 = vrot.slane %v142, %v6600
    %v6602 = vlaneseq
    %v6603 = vshrl.u32 %v6602, 7
    %v6604 = vsub.s32 3, %v6603
    %v6605 = vrot.slane %v142, %v6604
    %v6606 = vlaneseq
    %v6607 = vshrl.u32 %v6606, 7
    %v6608 = vsub.s32 5, %v6607
    %v6609 = vrot.slane %v142, %v6608
    %v6610 = vlaneseq
    %v6611 = vshrl.u32 %v6610, 7
    %v6612 = vsub.s32 7, %v6611
    %v6613 = vrot.slane %v142, %v6612
    %v6614 = vlaneseq
    %v6615 = vshrl.u32 %v6614, 7
    %v6616 = vsub.s32 1, %v6615
    %v6617 = vrot.slane %v143, %v6616
    %v6618 = vlaneseq
    %v6619 = vshrl.u32 %v6618, 7
    %v6620 = vsub.s32 3, %v6619
    %v6621 = vrot.slane %v143, %v6620
    %v6622 = vlaneseq
    %v6623 = vshrl.u32 %v6622, 7
    %v6624 = vsub.s32 5, %v6623
    %v6625 = vrot.slane %v143, %v6624
    %v6626 = vlaneseq
    %v6627 = vshrl.u32 %v6626, 7
    %v6628 = vsub.s32 7, %v6627
    %v6629 = vrot.slane %v143, %v6628
    %v6630 = vlaneseq
    %v6631 = vshrl.u32 %v6630, 7
    %v6632 = vsub.s32 1, %v6631
    %v6633 = vrot.slane %v144, %v6632
    %v6634 = vlaneseq
    %v6635 = vshrl.u32 %v6634, 7
    %v6636 = vsub.s32 3, %v6635
    %v6637 = vrot.slane %v144, %v6636
    %v6638 = vlaneseq
    %v6639 = vshrl.u32 %v6638, 7
    %v6640 = vsub.s32 5, %v6639
    %v6641 = vrot.slane %v144, %v6640
    %v6642 = vlaneseq
    %v6643 = vshrl.u32 %v6642, 7
    %v6644 = vsub.s32 7, %v6643
    %v6645 = vrot.slane %v144, %v6644
    %v6646 = vlaneseq
    %v6647 = vshrl.u32 %v6646, 7
    %v6648 = vsub.s32 1, %v6647
    %v6649 = vrot.slane %v145, %v6648
    %v6650 = vlaneseq
    %v6651 = vshrl.u32 %v6650, 7
    %v6652 = vsub.s32 3, %v6651
    %v6653 = vrot.slane %v145, %v6652
    %v6654 = vlaneseq
    %v6655 = vshrl.u32 %v6654, 7
    %v6656 = vsub.s32 5, %v6655
    %v6657 = vrot.slane %v145, %v6656
    %v6658 = vlaneseq
    %v6659 = vshrl.u32 %v6658, 7
    %v6660 = vsub.s32 7, %v6659
    %v6661 = vrot.slane %v145, %v6660
    %v6662 = vlaneseq
    %v6663 = vshrl.u32 %v6662, 7
    %v6664 = vsub.s32 1, %v6663
    %v6665 = vrot.slane %v146, %v6664
    %v6666 = vlaneseq
    %v6667 = vshrl.u32 %v6666, 7
    %v6668 = vsub.s32 3, %v6667
    %v6669 = vrot.slane %v146, %v6668
    %v6670 = vlaneseq
    %v6671 = vshrl.u32 %v6670, 7
    %v6672 = vsub.s32 5, %v6671
    %v6673 = vrot.slane %v146, %v6672
    %v6674 = vlaneseq
    %v6675 = vshrl.u32 %v6674, 7
    %v6676 = vsub.s32 7, %v6675
    %v6677 = vrot.slane %v146, %v6676
    %v6678 = vlaneseq
    %v6679 = vshrl.u32 %v6678, 7
    %v6680 = vsub.s32 1, %v6679
    %v6681 = vrot.slane %v147, %v6680
    %v6682 = vlaneseq
    %v6683 = vshrl.u32 %v6682, 7
    %v6684 = vsub.s32 3, %v6683
    %v6685 = vrot.slane %v147, %v6684
    %v6686 = vlaneseq
    %v6687 = vshrl.u32 %v6686, 7
    %v6688 = vsub.s32 5, %v6687
    %v6689 = vrot.slane %v147, %v6688
    %v6690 = vlaneseq
    %v6691 = vshrl.u32 %v6690, 7
    %v6692 = vsub.s32 7, %v6691
    %v6693 = vrot.slane %v147, %v6692
    %v6694 = vlaneseq
    %v6695 = vshrl.u32 %v6694, 7
    %v6696 = vsub.s32 1, %v6695
    %v6697 = vrot.slane %v148, %v6696
    %v6698 = vlaneseq
    %v6699 = vshrl.u32 %v6698, 7
    %v6700 = vsub.s32 3, %v6699
    %v6701 = vrot.slane %v148, %v6700
    %v6702 = vlaneseq
    %v6703 = vshrl.u32 %v6702, 7
    %v6704 = vsub.s32 5, %v6703
    %v6705 = vrot.slane %v148, %v6704
    %v6706 = vlaneseq
    %v6707 = vshrl.u32 %v6706, 7
    %v6708 = vsub.s32 7, %v6707
    %v6709 = vrot.slane %v148, %v6708
    %v6710 = vlaneseq
    %v6711 = vshrl.u32 %v6710, 7
    %v6712 = vsub.s32 1, %v6711
    %v6713 = vrot.slane %v149, %v6712
    %v6714 = vlaneseq
    %v6715 = vshrl.u32 %v6714, 7
    %v6716 = vsub.s32 3, %v6715
    %v6717 = vrot.slane %v149, %v6716
    %v6718 = vlaneseq
    %v6719 = vshrl.u32 %v6718, 7
    %v6720 = vsub.s32 5, %v6719
    %v6721 = vrot.slane %v149, %v6720
    %v6722 = vlaneseq
    %v6723 = vshrl.u32 %v6722, 7
    %v6724 = vsub.s32 7, %v6723
    %v6725 = vrot.slane %v149, %v6724
    %v6726 = vlaneseq
    %v6727 = vshrl.u32 %v6726, 7
    %v6728 = vsub.s32 1, %v6727
    %v6729 = vrot.slane %v150, %v6728
    %v6730 = vlaneseq
    %v6731 = vshrl.u32 %v6730, 7
    %v6732 = vsub.s32 3, %v6731
    %v6733 = vrot.slane %v150, %v6732
    %v6734 = vlaneseq
    %v6735 = vshrl.u32 %v6734, 7
    %v6736 = vsub.s32 5, %v6735
    %v6737 = vrot.slane %v150, %v6736
    %v6738 = vlaneseq
    %v6739 = vshrl.u32 %v6738, 7
    %v6740 = vsub.s32 7, %v6739
    %v6741 = vrot.slane %v150, %v6740
    %v6742 = vlaneseq
    %v6743 = vshrl.u32 %v6742, 7
    %v6744 = vsub.s32 1, %v6743
    %v6745 = vrot.slane %v151, %v6744
    %v6746 = vlaneseq
    %v6747 = vshrl.u32 %v6746, 7
    %v6748 = vsub.s32 3, %v6747
    %v6749 = vrot.slane %v151, %v6748
    %v6750 = vlaneseq
    %v6751 = vshrl.u32 %v6750, 7
    %v6752 = vsub.s32 5, %v6751
    %v6753 = vrot.slane %v151, %v6752
    %v6754 = vlaneseq
    %v6755 = vshrl.u32 %v6754, 7
    %v6756 = vsub.s32 7, %v6755
    %v6757 = vrot.slane %v151, %v6756
    %v6758 = vlaneseq
    %v6759 = vshrl.u32 %v6758, 7
    %v6760 = vsub.s32 1, %v6759
    %v6761 = vrot.slane %v152, %v6760
    %v6762 = vlaneseq
    %v6763 = vshrl.u32 %v6762, 7
    %v6764 = vsub.s32 3, %v6763
    %v6765 = vrot.slane %v152, %v6764
    %v6766 = vlaneseq
    %v6767 = vshrl.u32 %v6766, 7
    %v6768 = vsub.s32 5, %v6767
    %v6769 = vrot.slane %v152, %v6768
    %v6770 = vlaneseq
    %v6771 = vshrl.u32 %v6770, 7
    %v6772 = vsub.s32 7, %v6771
    %v6773 = vrot.slane %v152, %v6772
    %v6774 = vlaneseq
    %v6775 = vshrl.u32 %v6774, 7
    %v6776 = vsub.s32 1, %v6775
    %v6777 = vrot.slane %v153, %v6776
    %v6778 = vlaneseq
    %v6779 = vshrl.u32 %v6778, 7
    %v6780 = vsub.s32 3, %v6779
    %v6781 = vrot.slane %v153, %v6780
    %v6782 = vlaneseq
    %v6783 = vshrl.u32 %v6782, 7
    %v6784 = vsub.s32 5, %v6783
    %v6785 = vrot.slane %v153, %v6784
    %v6786 = vlaneseq
    %v6787 = vshrl.u32 %v6786, 7
    %v6788 = vsub.s32 7, %v6787
    %v6789 = vrot.slane %v153, %v6788
    %v6790 = vlaneseq
    %v6791 = vshrl.u32 %v6790, 7
    %v6792 = vsub.s32 1, %v6791
    %v6793 = vrot.slane %v154, %v6792
    %v6794 = vlaneseq
    %v6795 = vshrl.u32 %v6794, 7
    %v6796 = vsub.s32 3, %v6795
    %v6797 = vrot.slane %v154, %v6796
    %v6798 = vlaneseq
    %v6799 = vshrl.u32 %v6798, 7
    %v6800 = vsub.s32 5, %v6799
    %v6801 = vrot.slane %v154, %v6800
    %v6802 = vlaneseq
    %v6803 = vshrl.u32 %v6802, 7
    %v6804 = vsub.s32 7, %v6803
    %v6805 = vrot.slane %v154, %v6804
    %v6806 = vlaneseq
    %v6807 = vshrl.u32 %v6806, 7
    %v6808 = vsub.s32 1, %v6807
    %v6809 = vrot.slane %v155, %v6808
    %v6810 = vlaneseq
    %v6811 = vshrl.u32 %v6810, 7
    %v6812 = vsub.s32 3, %v6811
    %v6813 = vrot.slane %v155, %v6812
    %v6814 = vlaneseq
    %v6815 = vshrl.u32 %v6814, 7
    %v6816 = vsub.s32 5, %v6815
    %v6817 = vrot.slane %v155, %v6816
    %v6818 = vlaneseq
    %v6819 = vshrl.u32 %v6818, 7
    %v6820 = vsub.s32 7, %v6819
    %v6821 = vrot.slane %v155, %v6820
    %v6822 = vlaneseq
    %v6823 = vshrl.u32 %v6822, 7
    %v6824 = vsub.s32 1, %v6823
    %v6825 = vrot.slane %v156, %v6824
    %v6826 = vlaneseq
    %v6827 = vshrl.u32 %v6826, 7
    %v6828 = vsub.s32 3, %v6827
    %v6829 = vrot.slane %v156, %v6828
    %v6830 = vlaneseq
    %v6831 = vshrl.u32 %v6830, 7
    %v6832 = vsub.s32 5, %v6831
    %v6833 = vrot.slane %v156, %v6832
    %v6834 = vlaneseq
    %v6835 = vshrl.u32 %v6834, 7
    %v6836 = vsub.s32 7, %v6835
    %v6837 = vrot.slane %v156, %v6836
    %v6838 = vlaneseq
    %v6839 = vshrl.u32 %v6838, 7
    %v6840 = vsub.s32 1, %v6839
    %v6841 = vrot.slane %v157, %v6840
    %v6842 = vlaneseq
    %v6843 = vshrl.u32 %v6842, 7
    %v6844 = vsub.s32 3, %v6843
    %v6845 = vrot.slane %v157, %v6844
    %v6846 = vlaneseq
    %v6847 = vshrl.u32 %v6846, 7
    %v6848 = vsub.s32 5, %v6847
    %v6849 = vrot.slane %v157, %v6848
    %v6850 = vlaneseq
    %v6851 = vshrl.u32 %v6850, 7
    %v6852 = vsub.s32 7, %v6851
    %v6853 = vrot.slane %v157, %v6852
    %v6854 = vlaneseq
    %v6855 = vshrl.u32 %v6854, 7
    %v6856 = vsub.s32 1, %v6855
    %v6857 = vrot.slane %v158, %v6856
    %v6858 = vlaneseq
    %v6859 = vshrl.u32 %v6858, 7
    %v6860 = vsub.s32 3, %v6859
    %v6861 = vrot.slane %v158, %v6860
    %v6862 = vlaneseq
    %v6863 = vshrl.u32 %v6862, 7
    %v6864 = vsub.s32 5, %v6863
    %v6865 = vrot.slane %v158, %v6864
    %v6866 = vlaneseq
    %v6867 = vshrl.u32 %v6866, 7
    %v6868 = vsub.s32 7, %v6867
    %v6869 = vrot.slane %v158, %v6868
    %v6870 = vlaneseq
    %v6871 = vshrl.u32 %v6870, 7
    %v6872 = vsub.s32 1, %v6871
    %v6873 = vrot.slane %v159, %v6872
    %v6874 = vlaneseq
    %v6875 = vshrl.u32 %v6874, 7
    %v6876 = vsub.s32 3, %v6875
    %v6877 = vrot.slane %v159, %v6876
    %v6878 = vlaneseq
    %v6879 = vshrl.u32 %v6878, 7
    %v6880 = vsub.s32 5, %v6879
    %v6881 = vrot.slane %v159, %v6880
    %v6882 = vlaneseq
    %v6883 = vshrl.u32 %v6882, 7
    %v6884 = vsub.s32 7, %v6883
    %v6885 = vrot.slane %v159, %v6884
    %v6886 = vlaneseq
    %v6887 = vshrl.u32 %v6886, 7
    %v6888 = vsub.s32 1, %v6887
    %v6889 = vrot.slane %v160, %v6888
    %v6890 = vlaneseq
    %v6891 = vshrl.u32 %v6890, 7
    %v6892 = vsub.s32 3, %v6891
    %v6893 = vrot.slane %v160, %v6892
    %v6894 = vlaneseq
    %v6895 = vshrl.u32 %v6894, 7
    %v6896 = vsub.s32 5, %v6895
    %v6897 = vrot.slane %v160, %v6896
    %v6898 = vlaneseq
    %v6899 = vshrl.u32 %v6898, 7
    %v6900 = vsub.s32 7, %v6899
    %v6901 = vrot.slane %v160, %v6900
    %v6902 = vlaneseq
    %v6903 = vshrl.u32 %v6902, 7
    %v6904 = vsub.s32 1, %v6903
    %v6905 = vrot.slane %v161, %v6904
    %v6906 = vlaneseq
    %v6907 = vshrl.u32 %v6906, 7
    %v6908 = vsub.s32 3, %v6907
    %v6909 = vrot.slane %v161, %v6908
    %v6910 = vlaneseq
    %v6911 = vshrl.u32 %v6910, 7
    %v6912 = vsub.s32 5, %v6911
    %v6913 = vrot.slane %v161, %v6912
    %v6914 = vlaneseq
    %v6915 = vshrl.u32 %v6914, 7
    %v6916 = vsub.s32 7, %v6915
    %v6917 = vrot.slane %v161, %v6916
    %v6918 = vlaneseq
    %v6919 = vshrl.u32 %v6918, 7
    %v6920 = vsub.s32 1, %v6919
    %v6921 = vrot.slane %v162, %v6920
    %v6922 = vlaneseq
    %v6923 = vshrl.u32 %v6922, 7
    %v6924 = vsub.s32 3, %v6923
    %v6925 = vrot.slane %v162, %v6924
    %v6926 = vlaneseq
    %v6927 = vshrl.u32 %v6926, 7
    %v6928 = vsub.s32 5, %v6927
    %v6929 = vrot.slane %v162, %v6928
    %v6930 = vlaneseq
    %v6931 = vshrl.u32 %v6930, 7
    %v6932 = vsub.s32 7, %v6931
    %v6933 = vrot.slane %v162, %v6932
    %v6934 = vlaneseq
    %v6935 = vshrl.u32 %v6934, 7
    %v6936 = vsub.s32 1, %v6935
    %v6937 = vrot.slane %v163, %v6936
    %v6938 = vlaneseq
    %v6939 = vshrl.u32 %v6938, 7
    %v6940 = vsub.s32 3, %v6939
    %v6941 = vrot.slane %v163, %v6940
    %v6942 = vlaneseq
    %v6943 = vshrl.u32 %v6942, 7
    %v6944 = vsub.s32 5, %v6943
    %v6945 = vrot.slane %v163, %v6944
    %v6946 = vlaneseq
    %v6947 = vshrl.u32 %v6946, 7
    %v6948 = vsub.s32 7, %v6947
    %v6949 = vrot.slane %v163, %v6948
    %v7206 = vlaneseq
    %v7207 = vshrl.u32 %v7206, 7
    %v7208 = vsub.s32 1, %v7207
    %v7209 = vrot.slane %v5929, %v7208
    %v7210 = vlaneseq
    %v7211 = vshrl.u32 %v7210, 7
    %v7212 = vsub.s32 1, %v7211
    %v7213 = vrot.slane %v5933, %v7212
    %v7214 = vlaneseq
    %v7215 = vshrl.u32 %v7214, 7
    %v7216 = vsub.s32 1, %v7215
    %v7217 = vrot.slane %v5937, %v7216
    %v7218 = vlaneseq
    %v7219 = vshrl.u32 %v7218, 7
    %v7220 = vsub.s32 1, %v7219
    %v7221 = vrot.slane %v5941, %v7220
    %v7222 = vlaneseq
    %v7223 = vshrl.u32 %v7222, 7
    %v7224 = vsub.s32 1, %v7223
    %v7225 = vrot.slane %v5945, %v7224
    %v7226 = vlaneseq
    %v7227 = vshrl.u32 %v7226, 7
    %v7228 = vsub.s32 1, %v7227
    %v7229 = vrot.slane %v5949, %v7228
    %v7230 = vlaneseq
    %v7231 = vshrl.u32 %v7230, 7
    %v7232 = vsub.s32 1, %v7231
    %v7233 = vrot.slane %v5953, %v7232
    %v7234 = vlaneseq
    %v7235 = vshrl.u32 %v7234, 7
    %v7236 = vsub.s32 1, %v7235
    %v7237 = vrot.slane %v5957, %v7236
    %v7238 = vlaneseq
    %v7239 = vshrl.u32 %v7238, 7
    %v7240 = vsub.s32 1, %v7239
    %v7241 = vrot.slane %v5961, %v7240
    %v7242 = vlaneseq
    %v7243 = vshrl.u32 %v7242, 7
    %v7244 = vsub.s32 1, %v7243
    %v7245 = vrot.slane %v5965, %v7244
    %v7246 = vlaneseq
    %v7247 = vshrl.u32 %v7246, 7
    %v7248 = vsub.s32 1, %v7247
    %v7249 = vrot.slane %v5969, %v7248
    %v7250 = vlaneseq
    %v7251 = vshrl.u32 %v7250, 7
    %v7252 = vsub.s32 1, %v7251
    %v7253 = vrot.slane %v5973, %v7252
    %v7254 = vlaneseq
    %v7255 = vshrl.u32 %v7254, 7
    %v7256 = vsub.s32 1, %v7255
    %v7257 = vrot.slane %v5977, %v7256
    %v7258 = vlaneseq
    %v7259 = vshrl.u32 %v7258, 7
    %v7260 = vsub.s32 1, %v7259
    %v7261 = vrot.slane %v5981, %v7260
    %v7262 = vlaneseq
    %v7263 = vshrl.u32 %v7262, 7
    %v7264 = vsub.s32 1, %v7263
    %v7265 = vrot.slane %v5985, %v7264
    %v7266 = vlaneseq
    %v7267 = vshrl.u32 %v7266, 7
    %v7268 = vsub.s32 1, %v7267
    %v7269 = vrot.slane %v5989, %v7268
    %v7270 = vlaneseq
    %v7271 = vshrl.u32 %v7270, 7
    %v7272 = vsub.s32 1, %v7271
    %v7273 = vrot.slane %v5993, %v7272
    %v7274 = vlaneseq
    %v7275 = vshrl.u32 %v7274, 7
    %v7276 = vsub.s32 1, %v7275
    %v7277 = vrot.slane %v5997, %v7276
    %v7278 = vlaneseq
    %v7279 = vshrl.u32 %v7278, 7
    %v7280 = vsub.s32 1, %v7279
    %v7281 = vrot.slane %v6001, %v7280
    %v7282 = vlaneseq
    %v7283 = vshrl.u32 %v7282, 7
    %v7284 = vsub.s32 1, %v7283
    %v7285 = vrot.slane %v6005, %v7284
    %v7286 = vlaneseq
    %v7287 = vshrl.u32 %v7286, 7
    %v7288 = vsub.s32 1, %v7287
    %v7289 = vrot.slane %v6009, %v7288
    %v7290 = vlaneseq
    %v7291 = vshrl.u32 %v7290, 7
    %v7292 = vsub.s32 1, %v7291
    %v7293 = vrot.slane %v6013, %v7292
    %v7294 = vlaneseq
    %v7295 = vshrl.u32 %v7294, 7
    %v7296 = vsub.s32 1, %v7295
    %v7297 = vrot.slane %v6017, %v7296
    %v7298 = vlaneseq
    %v7299 = vshrl.u32 %v7298, 7
    %v7300 = vsub.s32 1, %v7299
    %v7301 = vrot.slane %v6021, %v7300
    %v7302 = vlaneseq
    %v7303 = vshrl.u32 %v7302, 7
    %v7304 = vsub.s32 1, %v7303
    %v7305 = vrot.slane %v6025, %v7304
    %v7306 = vlaneseq
    %v7307 = vshrl.u32 %v7306, 7
    %v7308 = vsub.s32 1, %v7307
    %v7309 = vrot.slane %v6029, %v7308
    %v7310 = vlaneseq
    %v7311 = vshrl.u32 %v7310, 7
    %v7312 = vsub.s32 1, %v7311
    %v7313 = vrot.slane %v6033, %v7312
    %v7314 = vlaneseq
    %v7315 = vshrl.u32 %v7314, 7
    %v7316 = vsub.s32 1, %v7315
    %v7317 = vrot.slane %v6037, %v7316
    %v7318 = vlaneseq
    %v7319 = vshrl.u32 %v7318, 7
    %v7320 = vsub.s32 1, %v7319
    %v7321 = vrot.slane %v6041, %v7320
    %v7322 = vlaneseq
    %v7323 = vshrl.u32 %v7322, 7
    %v7324 = vsub.s32 1, %v7323
    %v7325 = vrot.slane %v6045, %v7324
    %v7326 = vlaneseq
    %v7327 = vshrl.u32 %v7326, 7
    %v7328 = vsub.s32 1, %v7327
    %v7329 = vrot.slane %v6049, %v7328
    %v7330 = vlaneseq
    %v7331 = vshrl.u32 %v7330, 7
    %v7332 = vsub.s32 1, %v7331
    %v7333 = vrot.slane %v6053, %v7332
    %v7334 = vlaneseq
    %v7335 = vshrl.u32 %v7334, 7
    %v7336 = vsub.s32 1, %v7335
    %v7337 = vrot.slane %v6057, %v7336
    %v7338 = vlaneseq
    %v7339 = vshrl.u32 %v7338, 7
    %v7340 = vsub.s32 1, %v7339
    %v7341 = vrot.slane %v6061, %v7340
    %v7342 = vlaneseq
    %v7343 = vshrl.u32 %v7342, 7
    %v7344 = vsub.s32 1, %v7343
    %v7345 = vrot.slane %v6065, %v7344
    %v7346 = vlaneseq
    %v7347 = vshrl.u32 %v7346, 7
    %v7348 = vsub.s32 1, %v7347
    %v7349 = vrot.slane %v6069, %v7348
    %v7350 = vlaneseq
    %v7351 = vshrl.u32 %v7350, 7
    %v7352 = vsub.s32 1, %v7351
    %v7353 = vrot.slane %v6073, %v7352
    %v7354 = vlaneseq
    %v7355 = vshrl.u32 %v7354, 7
    %v7356 = vsub.s32 1, %v7355
    %v7357 = vrot.slane %v6077, %v7356
    %v7358 = vlaneseq
    %v7359 = vshrl.u32 %v7358, 7
    %v7360 = vsub.s32 1, %v7359
    %v7361 = vrot.slane %v6081, %v7360
    %v7362 = vlaneseq
    %v7363 = vshrl.u32 %v7362, 7
    %v7364 = vsub.s32 1, %v7363
    %v7365 = vrot.slane %v6085, %v7364
    %v7366 = vlaneseq
    %v7367 = vshrl.u32 %v7366, 7
    %v7368 = vsub.s32 1, %v7367
    %v7369 = vrot.slane %v6089, %v7368
    %v7370 = vlaneseq
    %v7371 = vshrl.u32 %v7370, 7
    %v7372 = vsub.s32 1, %v7371
    %v7373 = vrot.slane %v6093, %v7372
    %v7374 = vlaneseq
    %v7375 = vshrl.u32 %v7374, 7
    %v7376 = vsub.s32 1, %v7375
    %v7377 = vrot.slane %v6097, %v7376
    %v7378 = vlaneseq
    %v7379 = vshrl.u32 %v7378, 7
    %v7380 = vsub.s32 1, %v7379
    %v7381 = vrot.slane %v6101, %v7380
    %v7382 = vlaneseq
    %v7383 = vshrl.u32 %v7382, 7
    %v7384 = vsub.s32 1, %v7383
    %v7385 = vrot.slane %v6105, %v7384
    %v7386 = vlaneseq
    %v7387 = vshrl.u32 %v7386, 7
    %v7388 = vsub.s32 1, %v7387
    %v7389 = vrot.slane %v6109, %v7388
    %v7390 = vlaneseq
    %v7391 = vshrl.u32 %v7390, 7
    %v7392 = vsub.s32 1, %v7391
    %v7393 = vrot.slane %v6113, %v7392
    %v7394 = vlaneseq
    %v7395 = vshrl.u32 %v7394, 7
    %v7396 = vsub.s32 1, %v7395
    %v7397 = vrot.slane %v6117, %v7396
    %v7398 = vlaneseq
    %v7399 = vshrl.u32 %v7398, 7
    %v7400 = vsub.s32 1, %v7399
    %v7401 = vrot.slane %v6121, %v7400
    %v7402 = vlaneseq
    %v7403 = vshrl.u32 %v7402, 7
    %v7404 = vsub.s32 1, %v7403
    %v7405 = vrot.slane %v6125, %v7404
    %v7406 = vlaneseq
    %v7407 = vshrl.u32 %v7406, 7
    %v7408 = vsub.s32 1, %v7407
    %v7409 = vrot.slane %v6129, %v7408
    %v7410 = vlaneseq
    %v7411 = vshrl.u32 %v7410, 7
    %v7412 = vsub.s32 1, %v7411
    %v7413 = vrot.slane %v6133, %v7412
    %v7414 = vlaneseq
    %v7415 = vshrl.u32 %v7414, 7
    %v7416 = vsub.s32 1, %v7415
    %v7417 = vrot.slane %v6137, %v7416
    %v7418 = vlaneseq
    %v7419 = vshrl.u32 %v7418, 7
    %v7420 = vsub.s32 1, %v7419
    %v7421 = vrot.slane %v6141, %v7420
    %v7422 = vlaneseq
    %v7423 = vshrl.u32 %v7422, 7
    %v7424 = vsub.s32 1, %v7423
    %v7425 = vrot.slane %v6145, %v7424
    %v7426 = vlaneseq
    %v7427 = vshrl.u32 %v7426, 7
    %v7428 = vsub.s32 1, %v7427
    %v7429 = vrot.slane %v6149, %v7428
    %v7430 = vlaneseq
    %v7431 = vshrl.u32 %v7430, 7
    %v7432 = vsub.s32 1, %v7431
    %v7433 = vrot.slane %v6153, %v7432
    %v7434 = vlaneseq
    %v7435 = vshrl.u32 %v7434, 7
    %v7436 = vsub.s32 1, %v7435
    %v7437 = vrot.slane %v6157, %v7436
    %v7438 = vlaneseq
    %v7439 = vshrl.u32 %v7438, 7
    %v7440 = vsub.s32 1, %v7439
    %v7441 = vrot.slane %v6161, %v7440
    %v7442 = vlaneseq
    %v7443 = vshrl.u32 %v7442, 7
    %v7444 = vsub.s32 1, %v7443
    %v7445 = vrot.slane %v6165, %v7444
    %v7446 = vlaneseq
    %v7447 = vshrl.u32 %v7446, 7
    %v7448 = vsub.s32 1, %v7447
    %v7449 = vrot.slane %v6169, %v7448
    %v7450 = vlaneseq
    %v7451 = vshrl.u32 %v7450, 7
    %v7452 = vsub.s32 1, %v7451
    %v7453 = vrot.slane %v6173, %v7452
    %v7454 = vlaneseq
    %v7455 = vshrl.u32 %v7454, 7
    %v7456 = vsub.s32 1, %v7455
    %v7457 = vrot.slane %v6177, %v7456
    %v7458 = vlaneseq
    %v7459 = vshrl.u32 %v7458, 7
    %v7460 = vsub.s32 1, %v7459
    %v7461 = vrot.slane %v6181, %v7460
    %v7462 = vlaneseq
    %v7463 = vshrl.u32 %v7462, 7
    %v7464 = vsub.s32 1, %v7463
    %v7465 = vrot.slane %v6185, %v7464
    %v7466 = vlaneseq
    %v7467 = vshrl.u32 %v7466, 7
    %v7468 = vsub.s32 1, %v7467
    %v7469 = vrot.slane %v6189, %v7468
    %v7470 = vlaneseq
    %v7471 = vshrl.u32 %v7470, 7
    %v7472 = vsub.s32 1, %v7471
    %v7473 = vrot.slane %v6193, %v7472
    %v7474 = vlaneseq
    %v7475 = vshrl.u32 %v7474, 7
    %v7476 = vsub.s32 1, %v7475
    %v7477 = vrot.slane %v6197, %v7476
    %v7478 = vlaneseq
    %v7479 = vshrl.u32 %v7478, 7
    %v7480 = vsub.s32 1, %v7479
    %v7481 = vrot.slane %v6201, %v7480
    %v7482 = vlaneseq
    %v7483 = vshrl.u32 %v7482, 7
    %v7484 = vsub.s32 1, %v7483
    %v7485 = vrot.slane %v6205, %v7484
    %v7486 = vlaneseq
    %v7487 = vshrl.u32 %v7486, 7
    %v7488 = vsub.s32 1, %v7487
    %v7489 = vrot.slane %v6209, %v7488
    %v7490 = vlaneseq
    %v7491 = vshrl.u32 %v7490, 7
    %v7492 = vsub.s32 1, %v7491
    %v7493 = vrot.slane %v6213, %v7492
    %v7494 = vlaneseq
    %v7495 = vshrl.u32 %v7494, 7
    %v7496 = vsub.s32 1, %v7495
    %v7497 = vrot.slane %v6217, %v7496
    %v7498 = vlaneseq
    %v7499 = vshrl.u32 %v7498, 7
    %v7500 = vsub.s32 1, %v7499
    %v7501 = vrot.slane %v6221, %v7500
    %v7502 = vlaneseq
    %v7503 = vshrl.u32 %v7502, 7
    %v7504 = vsub.s32 1, %v7503
    %v7505 = vrot.slane %v6225, %v7504
    %v7506 = vlaneseq
    %v7507 = vshrl.u32 %v7506, 7
    %v7508 = vsub.s32 1, %v7507
    %v7509 = vrot.slane %v6229, %v7508
    %v7510 = vlaneseq
    %v7511 = vshrl.u32 %v7510, 7
    %v7512 = vsub.s32 1, %v7511
    %v7513 = vrot.slane %v6233, %v7512
    %v7514 = vlaneseq
    %v7515 = vshrl.u32 %v7514, 7
    %v7516 = vsub.s32 1, %v7515
    %v7517 = vrot.slane %v6237, %v7516
    %v7518 = vlaneseq
    %v7519 = vshrl.u32 %v7518, 7
    %v7520 = vsub.s32 1, %v7519
    %v7521 = vrot.slane %v6241, %v7520
    %v7522 = vlaneseq
    %v7523 = vshrl.u32 %v7522, 7
    %v7524 = vsub.s32 1, %v7523
    %v7525 = vrot.slane %v6245, %v7524
    %v7526 = vlaneseq
    %v7527 = vshrl.u32 %v7526, 7
    %v7528 = vsub.s32 1, %v7527
    %v7529 = vrot.slane %v6249, %v7528
    %v7530 = vlaneseq
    %v7531 = vshrl.u32 %v7530, 7
    %v7532 = vsub.s32 1, %v7531
    %v7533 = vrot.slane %v6253, %v7532
    %v7534 = vlaneseq
    %v7535 = vshrl.u32 %v7534, 7
    %v7536 = vsub.s32 1, %v7535
    %v7537 = vrot.slane %v6257, %v7536
    %v7538 = vlaneseq
    %v7539 = vshrl.u32 %v7538, 7
    %v7540 = vsub.s32 1, %v7539
    %v7541 = vrot.slane %v6261, %v7540
    %v7542 = vlaneseq
    %v7543 = vshrl.u32 %v7542, 7
    %v7544 = vsub.s32 1, %v7543
    %v7545 = vrot.slane %v6265, %v7544
    %v7546 = vlaneseq
    %v7547 = vshrl.u32 %v7546, 7
    %v7548 = vsub.s32 1, %v7547
    %v7549 = vrot.slane %v6269, %v7548
    %v7550 = vlaneseq
    %v7551 = vshrl.u32 %v7550, 7
    %v7552 = vsub.s32 1, %v7551
    %v7553 = vrot.slane %v6273, %v7552
    %v7554 = vlaneseq
    %v7555 = vshrl.u32 %v7554, 7
    %v7556 = vsub.s32 1, %v7555
    %v7557 = vrot.slane %v6277, %v7556
    %v7558 = vlaneseq
    %v7559 = vshrl.u32 %v7558, 7
    %v7560 = vsub.s32 1, %v7559
    %v7561 = vrot.slane %v6281, %v7560
    %v7562 = vlaneseq
    %v7563 = vshrl.u32 %v7562, 7
    %v7564 = vsub.s32 1, %v7563
    %v7565 = vrot.slane %v6285, %v7564
    %v7566 = vlaneseq
    %v7567 = vshrl.u32 %v7566, 7
    %v7568 = vsub.s32 1, %v7567
    %v7569 = vrot.slane %v6289, %v7568
    %v7570 = vlaneseq
    %v7571 = vshrl.u32 %v7570, 7
    %v7572 = vsub.s32 1, %v7571
    %v7573 = vrot.slane %v6293, %v7572
    %v7574 = vlaneseq
    %v7575 = vshrl.u32 %v7574, 7
    %v7576 = vsub.s32 1, %v7575
    %v7577 = vrot.slane %v6297, %v7576
    %v7578 = vlaneseq
    %v7579 = vshrl.u32 %v7578, 7
    %v7580 = vsub.s32 1, %v7579
    %v7581 = vrot.slane %v6301, %v7580
    %v7582 = vlaneseq
    %v7583 = vshrl.u32 %v7582, 7
    %v7584 = vsub.s32 1, %v7583
    %v7585 = vrot.slane %v6305, %v7584
    %v7586 = vlaneseq
    %v7587 = vshrl.u32 %v7586, 7
    %v7588 = vsub.s32 1, %v7587
    %v7589 = vrot.slane %v6309, %v7588
    %v7590 = vlaneseq
    %v7591 = vshrl.u32 %v7590, 7
    %v7592 = vsub.s32 1, %v7591
    %v7593 = vrot.slane %v6313, %v7592
    %v7594 = vlaneseq
    %v7595 = vshrl.u32 %v7594, 7
    %v7596 = vsub.s32 1, %v7595
    %v7597 = vrot.slane %v6317, %v7596
    %v7598 = vlaneseq
    %v7599 = vshrl.u32 %v7598, 7
    %v7600 = vsub.s32 1, %v7599
    %v7601 = vrot.slane %v6321, %v7600
    %v7602 = vlaneseq
    %v7603 = vshrl.u32 %v7602, 7
    %v7604 = vsub.s32 1, %v7603
    %v7605 = vrot.slane %v6325, %v7604
    %v7606 = vlaneseq
    %v7607 = vshrl.u32 %v7606, 7
    %v7608 = vsub.s32 1, %v7607
    %v7609 = vrot.slane %v6329, %v7608
    %v7610 = vlaneseq
    %v7611 = vshrl.u32 %v7610, 7
    %v7612 = vsub.s32 1, %v7611
    %v7613 = vrot.slane %v6333, %v7612
    %v7614 = vlaneseq
    %v7615 = vshrl.u32 %v7614, 7
    %v7616 = vsub.s32 1, %v7615
    %v7617 = vrot.slane %v6337, %v7616
    %v7618 = vlaneseq
    %v7619 = vshrl.u32 %v7618, 7
    %v7620 = vsub.s32 1, %v7619
    %v7621 = vrot.slane %v6341, %v7620
    %v7622 = vlaneseq
    %v7623 = vshrl.u32 %v7622, 7
    %v7624 = vsub.s32 1, %v7623
    %v7625 = vrot.slane %v6345, %v7624
    %v7626 = vlaneseq
    %v7627 = vshrl.u32 %v7626, 7
    %v7628 = vsub.s32 1, %v7627
    %v7629 = vrot.slane %v6349, %v7628
    %v7630 = vlaneseq
    %v7631 = vshrl.u32 %v7630, 7
    %v7632 = vsub.s32 1, %v7631
    %v7633 = vrot.slane %v6353, %v7632
    %v7634 = vlaneseq
    %v7635 = vshrl.u32 %v7634, 7
    %v7636 = vsub.s32 1, %v7635
    %v7637 = vrot.slane %v6357, %v7636
    %v7638 = vlaneseq
    %v7639 = vshrl.u32 %v7638, 7
    %v7640 = vsub.s32 1, %v7639
    %v7641 = vrot.slane %v6361, %v7640
    %v7642 = vlaneseq
    %v7643 = vshrl.u32 %v7642, 7
    %v7644 = vsub.s32 1, %v7643
    %v7645 = vrot.slane %v6365, %v7644
    %v7646 = vlaneseq
    %v7647 = vshrl.u32 %v7646, 7
    %v7648 = vsub.s32 1, %v7647
    %v7649 = vrot.slane %v6369, %v7648
    %v7650 = vlaneseq
    %v7651 = vshrl.u32 %v7650, 7
    %v7652 = vsub.s32 1, %v7651
    %v7653 = vrot.slane %v6373, %v7652
    %v7654 = vlaneseq
    %v7655 = vshrl.u32 %v7654, 7
    %v7656 = vsub.s32 1, %v7655
    %v7657 = vrot.slane %v6377, %v7656
    %v7658 = vlaneseq
    %v7659 = vshrl.u32 %v7658, 7
    %v7660 = vsub.s32 1, %v7659
    %v7661 = vrot.slane %v6381, %v7660
    %v7662 = vlaneseq
    %v7663 = vshrl.u32 %v7662, 7
    %v7664 = vsub.s32 1, %v7663
    %v7665 = vrot.slane %v6385, %v7664
    %v7666 = vlaneseq
    %v7667 = vshrl.u32 %v7666, 7
    %v7668 = vsub.s32 1, %v7667
    %v7669 = vrot.slane %v6389, %v7668
    %v7670 = vlaneseq
    %v7671 = vshrl.u32 %v7670, 7
    %v7672 = vsub.s32 1, %v7671
    %v7673 = vrot.slane %v6393, %v7672
    %v7674 = vlaneseq
    %v7675 = vshrl.u32 %v7674, 7
    %v7676 = vsub.s32 1, %v7675
    %v7677 = vrot.slane %v6397, %v7676
    %v7678 = vlaneseq
    %v7679 = vshrl.u32 %v7678, 7
    %v7680 = vsub.s32 1, %v7679
    %v7681 = vrot.slane %v6401, %v7680
    %v7682 = vlaneseq
    %v7683 = vshrl.u32 %v7682, 7
    %v7684 = vsub.s32 1, %v7683
    %v7685 = vrot.slane %v6405, %v7684
    %v7686 = vlaneseq
    %v7687 = vshrl.u32 %v7686, 7
    %v7688 = vsub.s32 1, %v7687
    %v7689 = vrot.slane %v6409, %v7688
    %v7690 = vlaneseq
    %v7691 = vshrl.u32 %v7690, 7
    %v7692 = vsub.s32 1, %v7691
    %v7693 = vrot.slane %v6413, %v7692
    %v7694 = vlaneseq
    %v7695 = vshrl.u32 %v7694, 7
    %v7696 = vsub.s32 1, %v7695
    %v7697 = vrot.slane %v6417, %v7696
    %v7698 = vlaneseq
    %v7699 = vshrl.u32 %v7698, 7
    %v7700 = vsub.s32 1, %v7699
    %v7701 = vrot.slane %v6421, %v7700
    %v7702 = vlaneseq
    %v7703 = vshrl.u32 %v7702, 7
    %v7704 = vsub.s32 1, %v7703
    %v7705 = vrot.slane %v6425, %v7704
    %v7706 = vlaneseq
    %v7707 = vshrl.u32 %v7706, 7
    %v7708 = vsub.s32 1, %v7707
    %v7709 = vrot.slane %v6429, %v7708
    %v7710 = vlaneseq
    %v7711 = vshrl.u32 %v7710, 7
    %v7712 = vsub.s32 1, %v7711
    %v7713 = vrot.slane %v6433, %v7712
    %v7714 = vlaneseq
    %v7715 = vshrl.u32 %v7714, 7
    %v7716 = vsub.s32 1, %v7715
    %v7717 = vrot.slane %v6437, %v7716
    %v7718 = vlaneseq
    %v7719 = vshrl.u32 %v7718, 7
    %v7720 = vsub.s32 1, %v7719
    %v7721 = vrot.slane %v6441, %v7720
    %v7722 = vlaneseq
    %v7723 = vshrl.u32 %v7722, 7
    %v7724 = vsub.s32 1, %v7723
    %v7725 = vrot.slane %v6445, %v7724
    %v7726 = vlaneseq
    %v7727 = vshrl.u32 %v7726, 7
    %v7728 = vsub.s32 1, %v7727
    %v7729 = vrot.slane %v6449, %v7728
    %v7730 = vlaneseq
    %v7731 = vshrl.u32 %v7730, 7
    %v7732 = vsub.s32 1, %v7731
    %v7733 = vrot.slane %v6453, %v7732
    %v7734 = vlaneseq
    %v7735 = vshrl.u32 %v7734, 7
    %v7736 = vsub.s32 1, %v7735
    %v7737 = vrot.slane %v6457, %v7736
    %v7738 = vlaneseq
    %v7739 = vshrl.u32 %v7738, 7
    %v7740 = vsub.s32 1, %v7739
    %v7741 = vrot.slane %v6461, %v7740
    %v7742 = vlaneseq
    %v7743 = vshrl.u32 %v7742, 7
    %v7744 = vsub.s32 1, %v7743
    %v7745 = vrot.slane %v6465, %v7744
    %v7746 = vlaneseq
    %v7747 = vshrl.u32 %v7746, 7
    %v7748 = vsub.s32 1, %v7747
    %v7749 = vrot.slane %v6469, %v7748
    %v7750 = vlaneseq
    %v7751 = vshrl.u32 %v7750, 7
    %v7752 = vsub.s32 1, %v7751
    %v7753 = vrot.slane %v6473, %v7752
    %v7754 = vlaneseq
    %v7755 = vshrl.u32 %v7754, 7
    %v7756 = vsub.s32 1, %v7755
    %v7757 = vrot.slane %v6477, %v7756
    %v7758 = vlaneseq
    %v7759 = vshrl.u32 %v7758, 7
    %v7760 = vsub.s32 1, %v7759
    %v7761 = vrot.slane %v6481, %v7760
    %v7762 = vlaneseq
    %v7763 = vshrl.u32 %v7762, 7
    %v7764 = vsub.s32 1, %v7763
    %v7765 = vrot.slane %v6485, %v7764
    %v7766 = vlaneseq
    %v7767 = vshrl.u32 %v7766, 7
    %v7768 = vsub.s32 1, %v7767
    %v7769 = vrot.slane %v6489, %v7768
    %v7770 = vlaneseq
    %v7771 = vshrl.u32 %v7770, 7
    %v7772 = vsub.s32 1, %v7771
    %v7773 = vrot.slane %v6493, %v7772
    %v7774 = vlaneseq
    %v7775 = vshrl.u32 %v7774, 7
    %v7776 = vsub.s32 1, %v7775
    %v7777 = vrot.slane %v6497, %v7776
    %v7778 = vlaneseq
    %v7779 = vshrl.u32 %v7778, 7
    %v7780 = vsub.s32 1, %v7779
    %v7781 = vrot.slane %v6501, %v7780
    %v7782 = vlaneseq
    %v7783 = vshrl.u32 %v7782, 7
    %v7784 = vsub.s32 1, %v7783
    %v7785 = vrot.slane %v6505, %v7784
    %v7786 = vlaneseq
    %v7787 = vshrl.u32 %v7786, 7
    %v7788 = vsub.s32 1, %v7787
    %v7789 = vrot.slane %v6509, %v7788
    %v7790 = vlaneseq
    %v7791 = vshrl.u32 %v7790, 7
    %v7792 = vsub.s32 1, %v7791
    %v7793 = vrot.slane %v6513, %v7792
    %v7794 = vlaneseq
    %v7795 = vshrl.u32 %v7794, 7
    %v7796 = vsub.s32 1, %v7795
    %v7797 = vrot.slane %v6517, %v7796
    %v7798 = vlaneseq
    %v7799 = vshrl.u32 %v7798, 7
    %v7800 = vsub.s32 1, %v7799
    %v7801 = vrot.slane %v6521, %v7800
    %v7802 = vlaneseq
    %v7803 = vshrl.u32 %v7802, 7
    %v7804 = vsub.s32 1, %v7803
    %v7805 = vrot.slane %v6525, %v7804
    %v7806 = vlaneseq
    %v7807 = vshrl.u32 %v7806, 7
    %v7808 = vsub.s32 1, %v7807
    %v7809 = vrot.slane %v6529, %v7808
    %v7810 = vlaneseq
    %v7811 = vshrl.u32 %v7810, 7
    %v7812 = vsub.s32 1, %v7811
    %v7813 = vrot.slane %v6533, %v7812
    %v7814 = vlaneseq
    %v7815 = vshrl.u32 %v7814, 7
    %v7816 = vsub.s32 1, %v7815
    %v7817 = vrot.slane %v6537, %v7816
    %v7818 = vlaneseq
    %v7819 = vshrl.u32 %v7818, 7
    %v7820 = vsub.s32 1, %v7819
    %v7821 = vrot.slane %v6541, %v7820
    %v7822 = vlaneseq
    %v7823 = vshrl.u32 %v7822, 7
    %v7824 = vsub.s32 1, %v7823
    %v7825 = vrot.slane %v6545, %v7824
    %v7826 = vlaneseq
    %v7827 = vshrl.u32 %v7826, 7
    %v7828 = vsub.s32 1, %v7827
    %v7829 = vrot.slane %v6549, %v7828
    %v7830 = vlaneseq
    %v7831 = vshrl.u32 %v7830, 7
    %v7832 = vsub.s32 1, %v7831
    %v7833 = vrot.slane %v6553, %v7832
    %v7834 = vlaneseq
    %v7835 = vshrl.u32 %v7834, 7
    %v7836 = vsub.s32 1, %v7835
    %v7837 = vrot.slane %v6557, %v7836
    %v7838 = vlaneseq
    %v7839 = vshrl.u32 %v7838, 7
    %v7840 = vsub.s32 1, %v7839
    %v7841 = vrot.slane %v6561, %v7840
    %v7842 = vlaneseq
    %v7843 = vshrl.u32 %v7842, 7
    %v7844 = vsub.s32 1, %v7843
    %v7845 = vrot.slane %v6565, %v7844
    %v7846 = vlaneseq
    %v7847 = vshrl.u32 %v7846, 7
    %v7848 = vsub.s32 1, %v7847
    %v7849 = vrot.slane %v6569, %v7848
    %v7850 = vlaneseq
    %v7851 = vshrl.u32 %v7850, 7
    %v7852 = vsub.s32 1, %v7851
    %v7853 = vrot.slane %v6573, %v7852
    %v7854 = vlaneseq
    %v7855 = vshrl.u32 %v7854, 7
    %v7856 = vsub.s32 1, %v7855
    %v7857 = vrot.slane %v6577, %v7856
    %v7858 = vlaneseq
    %v7859 = vshrl.u32 %v7858, 7
    %v7860 = vsub.s32 1, %v7859
    %v7861 = vrot.slane %v6581, %v7860
    %v7862 = vlaneseq
    %v7863 = vshrl.u32 %v7862, 7
    %v7864 = vsub.s32 1, %v7863
    %v7865 = vrot.slane %v6585, %v7864
    %v7866 = vlaneseq
    %v7867 = vshrl.u32 %v7866, 7
    %v7868 = vsub.s32 1, %v7867
    %v7869 = vrot.slane %v6589, %v7868
    %v7870 = vlaneseq
    %v7871 = vshrl.u32 %v7870, 7
    %v7872 = vsub.s32 1, %v7871
    %v7873 = vrot.slane %v6593, %v7872
    %v7874 = vlaneseq
    %v7875 = vshrl.u32 %v7874, 7
    %v7876 = vsub.s32 1, %v7875
    %v7877 = vrot.slane %v6597, %v7876
    %v7878 = vlaneseq
    %v7879 = vshrl.u32 %v7878, 7
    %v7880 = vsub.s32 1, %v7879
    %v7881 = vrot.slane %v6601, %v7880
    %v7882 = vlaneseq
    %v7883 = vshrl.u32 %v7882, 7
    %v7884 = vsub.s32 1, %v7883
    %v7885 = vrot.slane %v6605, %v7884
    %v7886 = vlaneseq
    %v7887 = vshrl.u32 %v7886, 7
    %v7888 = vsub.s32 1, %v7887
    %v7889 = vrot.slane %v6609, %v7888
    %v7890 = vlaneseq
    %v7891 = vshrl.u32 %v7890, 7
    %v7892 = vsub.s32 1, %v7891
    %v7893 = vrot.slane %v6613, %v7892
    %v7894 = vlaneseq
    %v7895 = vshrl.u32 %v7894, 7
    %v7896 = vsub.s32 1, %v7895
    %v7897 = vrot.slane %v6617, %v7896
    %v7898 = vlaneseq
    %v7899 = vshrl.u32 %v7898, 7
    %v7900 = vsub.s32 1, %v7899
    %v7901 = vrot.slane %v6621, %v7900
    %v7902 = vlaneseq
    %v7903 = vshrl.u32 %v7902, 7
    %v7904 = vsub.s32 1, %v7903
    %v7905 = vrot.slane %v6625, %v7904
    %v7906 = vlaneseq
    %v7907 = vshrl.u32 %v7906, 7
    %v7908 = vsub.s32 1, %v7907
    %v7909 = vrot.slane %v6629, %v7908
    %v7910 = vlaneseq
    %v7911 = vshrl.u32 %v7910, 7
    %v7912 = vsub.s32 1, %v7911
    %v7913 = vrot.slane %v6633, %v7912
    %v7914 = vlaneseq
    %v7915 = vshrl.u32 %v7914, 7
    %v7916 = vsub.s32 1, %v7915
    %v7917 = vrot.slane %v6637, %v7916
    %v7918 = vlaneseq
    %v7919 = vshrl.u32 %v7918, 7
    %v7920 = vsub.s32 1, %v7919
    %v7921 = vrot.slane %v6641, %v7920
    %v7922 = vlaneseq
    %v7923 = vshrl.u32 %v7922, 7
    %v7924 = vsub.s32 1, %v7923
    %v7925 = vrot.slane %v6645, %v7924
    %v7926 = vlaneseq
    %v7927 = vshrl.u32 %v7926, 7
    %v7928 = vsub.s32 1, %v7927
    %v7929 = vrot.slane %v6649, %v7928
    %v7930 = vlaneseq
    %v7931 = vshrl.u32 %v7930, 7
    %v7932 = vsub.s32 1, %v7931
    %v7933 = vrot.slane %v6653, %v7932
    %v7934 = vlaneseq
    %v7935 = vshrl.u32 %v7934, 7
    %v7936 = vsub.s32 1, %v7935
    %v7937 = vrot.slane %v6657, %v7936
    %v7938 = vlaneseq
    %v7939 = vshrl.u32 %v7938, 7
    %v7940 = vsub.s32 1, %v7939
    %v7941 = vrot.slane %v6661, %v7940
    %v7942 = vlaneseq
    %v7943 = vshrl.u32 %v7942, 7
    %v7944 = vsub.s32 1, %v7943
    %v7945 = vrot.slane %v6665, %v7944
    %v7946 = vlaneseq
    %v7947 = vshrl.u32 %v7946, 7
    %v7948 = vsub.s32 1, %v7947
    %v7949 = vrot.slane %v6669, %v7948
    %v7950 = vlaneseq
    %v7951 = vshrl.u32 %v7950, 7
    %v7952 = vsub.s32 1, %v7951
    %v7953 = vrot.slane %v6673, %v7952
    %v7954 = vlaneseq
    %v7955 = vshrl.u32 %v7954, 7
    %v7956 = vsub.s32 1, %v7955
    %v7957 = vrot.slane %v6677, %v7956
    %v7958 = vlaneseq
    %v7959 = vshrl.u32 %v7958, 7
    %v7960 = vsub.s32 1, %v7959
    %v7961 = vrot.slane %v6681, %v7960
    %v7962 = vlaneseq
    %v7963 = vshrl.u32 %v7962, 7
    %v7964 = vsub.s32 1, %v7963
    %v7965 = vrot.slane %v6685, %v7964
    %v7966 = vlaneseq
    %v7967 = vshrl.u32 %v7966, 7
    %v7968 = vsub.s32 1, %v7967
    %v7969 = vrot.slane %v6689, %v7968
    %v7970 = vlaneseq
    %v7971 = vshrl.u32 %v7970, 7
    %v7972 = vsub.s32 1, %v7971
    %v7973 = vrot.slane %v6693, %v7972
    %v7974 = vlaneseq
    %v7975 = vshrl.u32 %v7974, 7
    %v7976 = vsub.s32 1, %v7975
    %v7977 = vrot.slane %v6697, %v7976
    %v7978 = vlaneseq
    %v7979 = vshrl.u32 %v7978, 7
    %v7980 = vsub.s32 1, %v7979
    %v7981 = vrot.slane %v6701, %v7980
    %v7982 = vlaneseq
    %v7983 = vshrl.u32 %v7982, 7
    %v7984 = vsub.s32 1, %v7983
    %v7985 = vrot.slane %v6705, %v7984
    %v7986 = vlaneseq
    %v7987 = vshrl.u32 %v7986, 7
    %v7988 = vsub.s32 1, %v7987
    %v7989 = vrot.slane %v6709, %v7988
    %v7990 = vlaneseq
    %v7991 = vshrl.u32 %v7990, 7
    %v7992 = vsub.s32 1, %v7991
    %v7993 = vrot.slane %v6713, %v7992
    %v7994 = vlaneseq
    %v7995 = vshrl.u32 %v7994, 7
    %v7996 = vsub.s32 1, %v7995
    %v7997 = vrot.slane %v6717, %v7996
    %v7998 = vlaneseq
    %v7999 = vshrl.u32 %v7998, 7
    %v8000 = vsub.s32 1, %v7999
    %v8001 = vrot.slane %v6721, %v8000
    %v8002 = vlaneseq
    %v8003 = vshrl.u32 %v8002, 7
    %v8004 = vsub.s32 1, %v8003
    %v8005 = vrot.slane %v6725, %v8004
    %v8006 = vlaneseq
    %v8007 = vshrl.u32 %v8006, 7
    %v8008 = vsub.s32 1, %v8007
    %v8009 = vrot.slane %v6729, %v8008
    %v8010 = vlaneseq
    %v8011 = vshrl.u32 %v8010, 7
    %v8012 = vsub.s32 1, %v8011
    %v8013 = vrot.slane %v6733, %v8012
    %v8014 = vlaneseq
    %v8015 = vshrl.u32 %v8014, 7
    %v8016 = vsub.s32 1, %v8015
    %v8017 = vrot.slane %v6737, %v8016
    %v8018 = vlaneseq
    %v8019 = vshrl.u32 %v8018, 7
    %v8020 = vsub.s32 1, %v8019
    %v8021 = vrot.slane %v6741, %v8020
    %v8022 = vlaneseq
    %v8023 = vshrl.u32 %v8022, 7
    %v8024 = vsub.s32 1, %v8023
    %v8025 = vrot.slane %v6745, %v8024
    %v8026 = vlaneseq
    %v8027 = vshrl.u32 %v8026, 7
    %v8028 = vsub.s32 1, %v8027
    %v8029 = vrot.slane %v6749, %v8028
    %v8030 = vlaneseq
    %v8031 = vshrl.u32 %v8030, 7
    %v8032 = vsub.s32 1, %v8031
    %v8033 = vrot.slane %v6753, %v8032
    %v8034 = vlaneseq
    %v8035 = vshrl.u32 %v8034, 7
    %v8036 = vsub.s32 1, %v8035
    %v8037 = vrot.slane %v6757, %v8036
    %v8038 = vlaneseq
    %v8039 = vshrl.u32 %v8038, 7
    %v8040 = vsub.s32 1, %v8039
    %v8041 = vrot.slane %v6761, %v8040
    %v8042 = vlaneseq
    %v8043 = vshrl.u32 %v8042, 7
    %v8044 = vsub.s32 1, %v8043
    %v8045 = vrot.slane %v6765, %v8044
    %v8046 = vlaneseq
    %v8047 = vshrl.u32 %v8046, 7
    %v8048 = vsub.s32 1, %v8047
    %v8049 = vrot.slane %v6769, %v8048
    %v8050 = vlaneseq
    %v8051 = vshrl.u32 %v8050, 7
    %v8052 = vsub.s32 1, %v8051
    %v8053 = vrot.slane %v6773, %v8052
    %v8054 = vlaneseq
    %v8055 = vshrl.u32 %v8054, 7
    %v8056 = vsub.s32 1, %v8055
    %v8057 = vrot.slane %v6777, %v8056
    %v8058 = vlaneseq
    %v8059 = vshrl.u32 %v8058, 7
    %v8060 = vsub.s32 1, %v8059
    %v8061 = vrot.slane %v6781, %v8060
    %v8062 = vlaneseq
    %v8063 = vshrl.u32 %v8062, 7
    %v8064 = vsub.s32 1, %v8063
    %v8065 = vrot.slane %v6785, %v8064
    %v8066 = vlaneseq
    %v8067 = vshrl.u32 %v8066, 7
    %v8068 = vsub.s32 1, %v8067
    %v8069 = vrot.slane %v6789, %v8068
    %v8070 = vlaneseq
    %v8071 = vshrl.u32 %v8070, 7
    %v8072 = vsub.s32 1, %v8071
    %v8073 = vrot.slane %v6793, %v8072
    %v8074 = vlaneseq
    %v8075 = vshrl.u32 %v8074, 7
    %v8076 = vsub.s32 1, %v8075
    %v8077 = vrot.slane %v6797, %v8076
    %v8078 = vlaneseq
    %v8079 = vshrl.u32 %v8078, 7
    %v8080 = vsub.s32 1, %v8079
    %v8081 = vrot.slane %v6801, %v8080
    %v8082 = vlaneseq
    %v8083 = vshrl.u32 %v8082, 7
    %v8084 = vsub.s32 1, %v8083
    %v8085 = vrot.slane %v6805, %v8084
    %v8086 = vlaneseq
    %v8087 = vshrl.u32 %v8086, 7
    %v8088 = vsub.s32 1, %v8087
    %v8089 = vrot.slane %v6809, %v8088
    %v8090 = vlaneseq
    %v8091 = vshrl.u32 %v8090, 7
    %v8092 = vsub.s32 1, %v8091
    %v8093 = vrot.slane %v6813, %v8092
    %v8094 = vlaneseq
    %v8095 = vshrl.u32 %v8094, 7
    %v8096 = vsub.s32 1, %v8095
    %v8097 = vrot.slane %v6817, %v8096
    %v8098 = vlaneseq
    %v8099 = vshrl.u32 %v8098, 7
    %v8100 = vsub.s32 1, %v8099
    %v8101 = vrot.slane %v6821, %v8100
    %v8102 = vlaneseq
    %v8103 = vshrl.u32 %v8102, 7
    %v8104 = vsub.s32 1, %v8103
    %v8105 = vrot.slane %v6825, %v8104
    %v8106 = vlaneseq
    %v8107 = vshrl.u32 %v8106, 7
    %v8108 = vsub.s32 1, %v8107
    %v8109 = vrot.slane %v6829, %v8108
    %v8110 = vlaneseq
    %v8111 = vshrl.u32 %v8110, 7
    %v8112 = vsub.s32 1, %v8111
    %v8113 = vrot.slane %v6833, %v8112
    %v8114 = vlaneseq
    %v8115 = vshrl.u32 %v8114, 7
    %v8116 = vsub.s32 1, %v8115
    %v8117 = vrot.slane %v6837, %v8116
    %v8118 = vlaneseq
    %v8119 = vshrl.u32 %v8118, 7
    %v8120 = vsub.s32 1, %v8119
    %v8121 = vrot.slane %v6841, %v8120
    %v8122 = vlaneseq
    %v8123 = vshrl.u32 %v8122, 7
    %v8124 = vsub.s32 1, %v8123
    %v8125 = vrot.slane %v6845, %v8124
    %v8126 = vlaneseq
    %v8127 = vshrl.u32 %v8126, 7
    %v8128 = vsub.s32 1, %v8127
    %v8129 = vrot.slane %v6849, %v8128
    %v8130 = vlaneseq
    %v8131 = vshrl.u32 %v8130, 7
    %v8132 = vsub.s32 1, %v8131
    %v8133 = vrot.slane %v6853, %v8132
    %v8134 = vlaneseq
    %v8135 = vshrl.u32 %v8134, 7
    %v8136 = vsub.s32 1, %v8135
    %v8137 = vrot.slane %v6857, %v8136
    %v8138 = vlaneseq
    %v8139 = vshrl.u32 %v8138, 7
    %v8140 = vsub.s32 1, %v8139
    %v8141 = vrot.slane %v6861, %v8140
    %v8142 = vlaneseq
    %v8143 = vshrl.u32 %v8142, 7
    %v8144 = vsub.s32 1, %v8143
    %v8145 = vrot.slane %v6865, %v8144
    %v8146 = vlaneseq
    %v8147 = vshrl.u32 %v8146, 7
    %v8148 = vsub.s32 1, %v8147
    %v8149 = vrot.slane %v6869, %v8148
    %v8150 = vlaneseq
    %v8151 = vshrl.u32 %v8150, 7
    %v8152 = vsub.s32 1, %v8151
    %v8153 = vrot.slane %v6873, %v8152
    %v8154 = vlaneseq
    %v8155 = vshrl.u32 %v8154, 7
    %v8156 = vsub.s32 1, %v8155
    %v8157 = vrot.slane %v6877, %v8156
    %v8158 = vlaneseq
    %v8159 = vshrl.u32 %v8158, 7
    %v8160 = vsub.s32 1, %v8159
    %v8161 = vrot.slane %v6881, %v8160
    %v8162 = vlaneseq
    %v8163 = vshrl.u32 %v8162, 7
    %v8164 = vsub.s32 1, %v8163
    %v8165 = vrot.slane %v6885, %v8164
    %v8166 = vlaneseq
    %v8167 = vshrl.u32 %v8166, 7
    %v8168 = vsub.s32 1, %v8167
    %v8169 = vrot.slane %v6889, %v8168
    %v8170 = vlaneseq
    %v8171 = vshrl.u32 %v8170, 7
    %v8172 = vsub.s32 1, %v8171
    %v8173 = vrot.slane %v6893, %v8172
    %v8174 = vlaneseq
    %v8175 = vshrl.u32 %v8174, 7
    %v8176 = vsub.s32 1, %v8175
    %v8177 = vrot.slane %v6897, %v8176
    %v8178 = vlaneseq
    %v8179 = vshrl.u32 %v8178, 7
    %v8180 = vsub.s32 1, %v8179
    %v8181 = vrot.slane %v6901, %v8180
    %v8182 = vlaneseq
    %v8183 = vshrl.u32 %v8182, 7
    %v8184 = vsub.s32 1, %v8183
    %v8185 = vrot.slane %v6905, %v8184
    %v8186 = vlaneseq
    %v8187 = vshrl.u32 %v8186, 7
    %v8188 = vsub.s32 1, %v8187
    %v8189 = vrot.slane %v6909, %v8188
    %v8190 = vlaneseq
    %v8191 = vshrl.u32 %v8190, 7
    %v8192 = vsub.s32 1, %v8191
    %v8193 = vrot.slane %v6913, %v8192
    %v8194 = vlaneseq
    %v8195 = vshrl.u32 %v8194, 7
    %v8196 = vsub.s32 1, %v8195
    %v8197 = vrot.slane %v6917, %v8196
    %v8198 = vlaneseq
    %v8199 = vshrl.u32 %v8198, 7
    %v8200 = vsub.s32 1, %v8199
    %v8201 = vrot.slane %v6921, %v8200
    %v8202 = vlaneseq
    %v8203 = vshrl.u32 %v8202, 7
    %v8204 = vsub.s32 1, %v8203
    %v8205 = vrot.slane %v6925, %v8204
    %v8206 = vlaneseq
    %v8207 = vshrl.u32 %v8206, 7
    %v8208 = vsub.s32 1, %v8207
    %v8209 = vrot.slane %v6929, %v8208
    %v8210 = vlaneseq
    %v8211 = vshrl.u32 %v8210, 7
    %v8212 = vsub.s32 1, %v8211
    %v8213 = vrot.slane %v6933, %v8212
    %v8214 = vlaneseq
    %v8215 = vshrl.u32 %v8214, 7
    %v8216 = vsub.s32 1, %v8215
    %v8217 = vrot.slane %v6937, %v8216
    %v8218 = vlaneseq
    %v8219 = vshrl.u32 %v8218, 7
    %v8220 = vsub.s32 1, %v8219
    %v8221 = vrot.slane %v6941, %v8220
    %v8222 = vlaneseq
    %v8223 = vshrl.u32 %v8222, 7
    %v8224 = vsub.s32 1, %v8223
    %v8225 = vrot.slane %v6945, %v8224
    %v8226 = vlaneseq
    %v8227 = vshrl.u32 %v8226, 7
    %v8228 = vsub.s32 1, %v8227
    %v8229 = vrot.slane %v6949, %v8228
    %v8486 = vcombine.low %v7209, %v7213
    %v8487 = vcombine.low %v7217, %v7221
    %v8489 = vunpack.c.l.s4 1983009808
    %v8490 = vunpack.c.0.s8 %v8489
    %v8491 = vlaneseq
    %v8492 = vshrl.u32 %v8491, 7
    %v8493 = vsub.s32 %v8490, %v8492
    %v8494 = vrot.slane %v8486, %v8493
    %v8496 = vunpack.c.l.s4 1983009808
    %v8497 = vunpack.c.0.s8 %v8496
    %v8498 = vlaneseq
    %v8499 = vshrl.u32 %v8498, 7
    %v8500 = vsub.s32 %v8497, %v8499
    %v8501 = vrot.slane %v8487, %v8500
    %v8502 = vcombine.low %v8494, %v8501
    %v8503 = vcombine.low %v7225, %v7229
    %v8504 = vcombine.low %v7233, %v7237
    %v8506 = vunpack.c.l.s4 1983009808
    %v8507 = vunpack.c.0.s8 %v8506
    %v8508 = vlaneseq
    %v8509 = vshrl.u32 %v8508, 7
    %v8510 = vsub.s32 %v8507, %v8509
    %v8511 = vrot.slane %v8503, %v8510
    %v8513 = vunpack.c.l.s4 1983009808
    %v8514 = vunpack.c.0.s8 %v8513
    %v8515 = vlaneseq
    %v8516 = vshrl.u32 %v8515, 7
    %v8517 = vsub.s32 %v8514, %v8516
    %v8518 = vrot.slane %v8504, %v8517
    %v8519 = vcombine.low %v8511, %v8518
    %v8520 = vcombine.low %v7241, %v7245
    %v8521 = vcombine.low %v7249, %v7253
    %v8523 = vunpack.c.l.s4 1983009808
    %v8524 = vunpack.c.0.s8 %v8523
    %v8525 = vlaneseq
    %v8526 = vshrl.u32 %v8525, 7
    %v8527 = vsub.s32 %v8524, %v8526
    %v8528 = vrot.slane %v8520, %v8527
    %v8530 = vunpack.c.l.s4 1983009808
    %v8531 = vunpack.c.0.s8 %v8530
    %v8532 = vlaneseq
    %v8533 = vshrl.u32 %v8532, 7
    %v8534 = vsub.s32 %v8531, %v8533
    %v8535 = vrot.slane %v8521, %v8534
    %v8536 = vcombine.low %v8528, %v8535
    %v8537 = vcombine.low %v7257, %v7261
    %v8538 = vcombine.low %v7265, %v7269
    %v8540 = vunpack.c.l.s4 1983009808
    %v8541 = vunpack.c.0.s8 %v8540
    %v8542 = vlaneseq
    %v8543 = vshrl.u32 %v8542, 7
    %v8544 = vsub.s32 %v8541, %v8543
    %v8545 = vrot.slane %v8537, %v8544
    %v8547 = vunpack.c.l.s4 1983009808
    %v8548 = vunpack.c.0.s8 %v8547
    %v8549 = vlaneseq
    %v8550 = vshrl.u32 %v8549, 7
    %v8551 = vsub.s32 %v8548, %v8550
    %v8552 = vrot.slane %v8538, %v8551
    %v8553 = vcombine.low %v8545, %v8552
    %v8554 = vcombine.low %v7273, %v7277
    %v8555 = vcombine.low %v7281, %v7285
    %v8557 = vunpack.c.l.s4 1983009808
    %v8558 = vunpack.c.0.s8 %v8557
    %v8559 = vlaneseq
    %v8560 = vshrl.u32 %v8559, 7
    %v8561 = vsub.s32 %v8558, %v8560
    %v8562 = vrot.slane %v8554, %v8561
    %v8564 = vunpack.c.l.s4 1983009808
    %v8565 = vunpack.c.0.s8 %v8564
    %v8566 = vlaneseq
    %v8567 = vshrl.u32 %v8566, 7
    %v8568 = vsub.s32 %v8565, %v8567
    %v8569 = vrot.slane %v8555, %v8568
    %v8570 = vcombine.low %v8562, %v8569
    %v8571 = vcombine.low %v7289, %v7293
    %v8572 = vcombine.low %v7297, %v7301
    %v8574 = vunpack.c.l.s4 1983009808
    %v8575 = vunpack.c.0.s8 %v8574
    %v8576 = vlaneseq
    %v8577 = vshrl.u32 %v8576, 7
    %v8578 = vsub.s32 %v8575, %v8577
    %v8579 = vrot.slane %v8571, %v8578
    %v8581 = vunpack.c.l.s4 1983009808
    %v8582 = vunpack.c.0.s8 %v8581
    %v8583 = vlaneseq
    %v8584 = vshrl.u32 %v8583, 7
    %v8585 = vsub.s32 %v8582, %v8584
    %v8586 = vrot.slane %v8572, %v8585
    %v8587 = vcombine.low %v8579, %v8586
    %v8588 = vcombine.low %v7305, %v7309
    %v8589 = vcombine.low %v7313, %v7317
    %v8591 = vunpack.c.l.s4 1983009808
    %v8592 = vunpack.c.0.s8 %v8591
    %v8593 = vlaneseq
    %v8594 = vshrl.u32 %v8593, 7
    %v8595 = vsub.s32 %v8592, %v8594
    %v8596 = vrot.slane %v8588, %v8595
    %v8598 = vunpack.c.l.s4 1983009808
    %v8599 = vunpack.c.0.s8 %v8598
    %v8600 = vlaneseq
    %v8601 = vshrl.u32 %v8600, 7
    %v8602 = vsub.s32 %v8599, %v8601
    %v8603 = vrot.slane %v8589, %v8602
    %v8604 = vcombine.low %v8596, %v8603
    %v8605 = vcombine.low %v7321, %v7325
    %v8606 = vcombine.low %v7329, %v7333
    %v8608 = vunpack.c.l.s4 1983009808
    %v8609 = vunpack.c.0.s8 %v8608
    %v8610 = vlaneseq
    %v8611 = vshrl.u32 %v8610, 7
    %v8612 = vsub.s32 %v8609, %v8611
    %v8613 = vrot.slane %v8605, %v8612
    %v8615 = vunpack.c.l.s4 1983009808
    %v8616 = vunpack.c.0.s8 %v8615
    %v8617 = vlaneseq
    %v8618 = vshrl.u32 %v8617, 7
    %v8619 = vsub.s32 %v8616, %v8618
    %v8620 = vrot.slane %v8606, %v8619
    %v8621 = vcombine.low %v8613, %v8620
    %v8622 = vcombine.low %v7337, %v7341
    %v8623 = vcombine.low %v7345, %v7349
    %v8625 = vunpack.c.l.s4 1983009808
    %v8626 = vunpack.c.0.s8 %v8625
    %v8627 = vlaneseq
    %v8628 = vshrl.u32 %v8627, 7
    %v8629 = vsub.s32 %v8626, %v8628
    %v8630 = vrot.slane %v8622, %v8629
    %v8632 = vunpack.c.l.s4 1983009808
    %v8633 = vunpack.c.0.s8 %v8632
    %v8634 = vlaneseq
    %v8635 = vshrl.u32 %v8634, 7
    %v8636 = vsub.s32 %v8633, %v8635
    %v8637 = vrot.slane %v8623, %v8636
    %v8638 = vcombine.low %v8630, %v8637
    %v8639 = vcombine.low %v7353, %v7357
    %v8640 = vcombine.low %v7361, %v7365
    %v8642 = vunpack.c.l.s4 1983009808
    %v8643 = vunpack.c.0.s8 %v8642
    %v8644 = vlaneseq
    %v8645 = vshrl.u32 %v8644, 7
    %v8646 = vsub.s32 %v8643, %v8645
    %v8647 = vrot.slane %v8639, %v8646
    %v8649 = vunpack.c.l.s4 1983009808
    %v8650 = vunpack.c.0.s8 %v8649
    %v8651 = vlaneseq
    %v8652 = vshrl.u32 %v8651, 7
    %v8653 = vsub.s32 %v8650, %v8652
    %v8654 = vrot.slane %v8640, %v8653
    %v8655 = vcombine.low %v8647, %v8654
    %v8656 = vcombine.low %v7369, %v7373
    %v8657 = vcombine.low %v7377, %v7381
    %v8659 = vunpack.c.l.s4 1983009808
    %v8660 = vunpack.c.0.s8 %v8659
    %v8661 = vlaneseq
    %v8662 = vshrl.u32 %v8661, 7
    %v8663 = vsub.s32 %v8660, %v8662
    %v8664 = vrot.slane %v8656, %v8663
    %v8666 = vunpack.c.l.s4 1983009808
    %v8667 = vunpack.c.0.s8 %v8666
    %v8668 = vlaneseq
    %v8669 = vshrl.u32 %v8668, 7
    %v8670 = vsub.s32 %v8667, %v8669
    %v8671 = vrot.slane %v8657, %v8670
    %v8672 = vcombine.low %v8664, %v8671
    %v8673 = vcombine.low %v7385, %v7389
    %v8674 = vcombine.low %v7393, %v7397
    %v8676 = vunpack.c.l.s4 1983009808
    %v8677 = vunpack.c.0.s8 %v8676
    %v8678 = vlaneseq
    %v8679 = vshrl.u32 %v8678, 7
    %v8680 = vsub.s32 %v8677, %v8679
    %v8681 = vrot.slane %v8673, %v8680
    %v8683 = vunpack.c.l.s4 1983009808
    %v8684 = vunpack.c.0.s8 %v8683
    %v8685 = vlaneseq
    %v8686 = vshrl.u32 %v8685, 7
    %v8687 = vsub.s32 %v8684, %v8686
    %v8688 = vrot.slane %v8674, %v8687
    %v8689 = vcombine.low %v8681, %v8688
    %v8690 = vcombine.low %v7401, %v7405
    %v8691 = vcombine.low %v7409, %v7413
    %v8693 = vunpack.c.l.s4 1983009808
    %v8694 = vunpack.c.0.s8 %v8693
    %v8695 = vlaneseq
    %v8696 = vshrl.u32 %v8695, 7
    %v8697 = vsub.s32 %v8694, %v8696
    %v8698 = vrot.slane %v8690, %v8697
    %v8700 = vunpack.c.l.s4 1983009808
    %v8701 = vunpack.c.0.s8 %v8700
    %v8702 = vlaneseq
    %v8703 = vshrl.u32 %v8702, 7
    %v8704 = vsub.s32 %v8701, %v8703
    %v8705 = vrot.slane %v8691, %v8704
    %v8706 = vcombine.low %v8698, %v8705
    %v8707 = vcombine.low %v7417, %v7421
    %v8708 = vcombine.low %v7425, %v7429
    %v8710 = vunpack.c.l.s4 1983009808
    %v8711 = vunpack.c.0.s8 %v8710
    %v8712 = vlaneseq
    %v8713 = vshrl.u32 %v8712, 7
    %v8714 = vsub.s32 %v8711, %v8713
    %v8715 = vrot.slane %v8707, %v8714
    %v8717 = vunpack.c.l.s4 1983009808
    %v8718 = vunpack.c.0.s8 %v8717
    %v8719 = vlaneseq
    %v8720 = vshrl.u32 %v8719, 7
    %v8721 = vsub.s32 %v8718, %v8720
    %v8722 = vrot.slane %v8708, %v8721
    %v8723 = vcombine.low %v8715, %v8722
    %v8724 = vcombine.low %v7433, %v7437
    %v8725 = vcombine.low %v7441, %v7445
    %v8727 = vunpack.c.l.s4 1983009808
    %v8728 = vunpack.c.0.s8 %v8727
    %v8729 = vlaneseq
    %v8730 = vshrl.u32 %v8729, 7
    %v8731 = vsub.s32 %v8728, %v8730
    %v8732 = vrot.slane %v8724, %v8731
    %v8734 = vunpack.c.l.s4 1983009808
    %v8735 = vunpack.c.0.s8 %v8734
    %v8736 = vlaneseq
    %v8737 = vshrl.u32 %v8736, 7
    %v8738 = vsub.s32 %v8735, %v8737
    %v8739 = vrot.slane %v8725, %v8738
    %v8740 = vcombine.low %v8732, %v8739
    %v8741 = vcombine.low %v7449, %v7453
    %v8742 = vcombine.low %v7457, %v7461
    %v8744 = vunpack.c.l.s4 1983009808
    %v8745 = vunpack.c.0.s8 %v8744
    %v8746 = vlaneseq
    %v8747 = vshrl.u32 %v8746, 7
    %v8748 = vsub.s32 %v8745, %v8747
    %v8749 = vrot.slane %v8741, %v8748
    %v8751 = vunpack.c.l.s4 1983009808
    %v8752 = vunpack.c.0.s8 %v8751
    %v8753 = vlaneseq
    %v8754 = vshrl.u32 %v8753, 7
    %v8755 = vsub.s32 %v8752, %v8754
    %v8756 = vrot.slane %v8742, %v8755
    %v8757 = vcombine.low %v8749, %v8756
    %v8758 = vcombine.low %v7465, %v7469
    %v8759 = vcombine.low %v7473, %v7477
    %v8761 = vunpack.c.l.s4 1983009808
    %v8762 = vunpack.c.0.s8 %v8761
    %v8763 = vlaneseq
    %v8764 = vshrl.u32 %v8763, 7
    %v8765 = vsub.s32 %v8762, %v8764
    %v8766 = vrot.slane %v8758, %v8765
    %v8768 = vunpack.c.l.s4 1983009808
    %v8769 = vunpack.c.0.s8 %v8768
    %v8770 = vlaneseq
    %v8771 = vshrl.u32 %v8770, 7
    %v8772 = vsub.s32 %v8769, %v8771
    %v8773 = vrot.slane %v8759, %v8772
    %v8774 = vcombine.low %v8766, %v8773
    %v8775 = vcombine.low %v7481, %v7485
    %v8776 = vcombine.low %v7489, %v7493
    %v8778 = vunpack.c.l.s4 1983009808
    %v8779 = vunpack.c.0.s8 %v8778
    %v8780 = vlaneseq
    %v8781 = vshrl.u32 %v8780, 7
    %v8782 = vsub.s32 %v8779, %v8781
    %v8783 = vrot.slane %v8775, %v8782
    %v8785 = vunpack.c.l.s4 1983009808
    %v8786 = vunpack.c.0.s8 %v8785
    %v8787 = vlaneseq
    %v8788 = vshrl.u32 %v8787, 7
    %v8789 = vsub.s32 %v8786, %v8788
    %v8790 = vrot.slane %v8776, %v8789
    %v8791 = vcombine.low %v8783, %v8790
    %v8792 = vcombine.low %v7497, %v7501
    %v8793 = vcombine.low %v7505, %v7509
    %v8795 = vunpack.c.l.s4 1983009808
    %v8796 = vunpack.c.0.s8 %v8795
    %v8797 = vlaneseq
    %v8798 = vshrl.u32 %v8797, 7
    %v8799 = vsub.s32 %v8796, %v8798
    %v8800 = vrot.slane %v8792, %v8799
    %v8802 = vunpack.c.l.s4 1983009808
    %v8803 = vunpack.c.0.s8 %v8802
    %v8804 = vlaneseq
    %v8805 = vshrl.u32 %v8804, 7
    %v8806 = vsub.s32 %v8803, %v8805
    %v8807 = vrot.slane %v8793, %v8806
    %v8808 = vcombine.low %v8800, %v8807
    %v8809 = vcombine.low %v7513, %v7517
    %v8810 = vcombine.low %v7521, %v7525
    %v8812 = vunpack.c.l.s4 1983009808
    %v8813 = vunpack.c.0.s8 %v8812
    %v8814 = vlaneseq
    %v8815 = vshrl.u32 %v8814, 7
    %v8816 = vsub.s32 %v8813, %v8815
    %v8817 = vrot.slane %v8809, %v8816
    %v8819 = vunpack.c.l.s4 1983009808
    %v8820 = vunpack.c.0.s8 %v8819
    %v8821 = vlaneseq
    %v8822 = vshrl.u32 %v8821, 7
    %v8823 = vsub.s32 %v8820, %v8822
    %v8824 = vrot.slane %v8810, %v8823
    %v8825 = vcombine.low %v8817, %v8824
    %v8826 = vcombine.low %v7529, %v7533
    %v8827 = vcombine.low %v7537, %v7541
    %v8829 = vunpack.c.l.s4 1983009808
    %v8830 = vunpack.c.0.s8 %v8829
    %v8831 = vlaneseq
    %v8832 = vshrl.u32 %v8831, 7
    %v8833 = vsub.s32 %v8830, %v8832
    %v8834 = vrot.slane %v8826, %v8833
    %v8836 = vunpack.c.l.s4 1983009808
    %v8837 = vunpack.c.0.s8 %v8836
    %v8838 = vlaneseq
    %v8839 = vshrl.u32 %v8838, 7
    %v8840 = vsub.s32 %v8837, %v8839
    %v8841 = vrot.slane %v8827, %v8840
    %v8842 = vcombine.low %v8834, %v8841
    %v8843 = vcombine.low %v7545, %v7549
    %v8844 = vcombine.low %v7553, %v7557
    %v8846 = vunpack.c.l.s4 1983009808
    %v8847 = vunpack.c.0.s8 %v8846
    %v8848 = vlaneseq
    %v8849 = vshrl.u32 %v8848, 7
    %v8850 = vsub.s32 %v8847, %v8849
    %v8851 = vrot.slane %v8843, %v8850
    %v8853 = vunpack.c.l.s4 1983009808
    %v8854 = vunpack.c.0.s8 %v8853
    %v8855 = vlaneseq
    %v8856 = vshrl.u32 %v8855, 7
    %v8857 = vsub.s32 %v8854, %v8856
    %v8858 = vrot.slane %v8844, %v8857
    %v8859 = vcombine.low %v8851, %v8858
    %v8860 = vcombine.low %v7561, %v7565
    %v8861 = vcombine.low %v7569, %v7573
    %v8863 = vunpack.c.l.s4 1983009808
    %v8864 = vunpack.c.0.s8 %v8863
    %v8865 = vlaneseq
    %v8866 = vshrl.u32 %v8865, 7
    %v8867 = vsub.s32 %v8864, %v8866
    %v8868 = vrot.slane %v8860, %v8867
    %v8870 = vunpack.c.l.s4 1983009808
    %v8871 = vunpack.c.0.s8 %v8870
    %v8872 = vlaneseq
    %v8873 = vshrl.u32 %v8872, 7
    %v8874 = vsub.s32 %v8871, %v8873
    %v8875 = vrot.slane %v8861, %v8874
    %v8876 = vcombine.low %v8868, %v8875
    %v8877 = vcombine.low %v7577, %v7581
    %v8878 = vcombine.low %v7585, %v7589
    %v8880 = vunpack.c.l.s4 1983009808
    %v8881 = vunpack.c.0.s8 %v8880
    %v8882 = vlaneseq
    %v8883 = vshrl.u32 %v8882, 7
    %v8884 = vsub.s32 %v8881, %v8883
    %v8885 = vrot.slane %v8877, %v8884
    %v8887 = vunpack.c.l.s4 1983009808
    %v8888 = vunpack.c.0.s8 %v8887
    %v8889 = vlaneseq
    %v8890 = vshrl.u32 %v8889, 7
    %v8891 = vsub.s32 %v8888, %v8890
    %v8892 = vrot.slane %v8878, %v8891
    %v8893 = vcombine.low %v8885, %v8892
    %v8894 = vcombine.low %v7593, %v7597
    %v8895 = vcombine.low %v7601, %v7605
    %v8897 = vunpack.c.l.s4 1983009808
    %v8898 = vunpack.c.0.s8 %v8897
    %v8899 = vlaneseq
    %v8900 = vshrl.u32 %v8899, 7
    %v8901 = vsub.s32 %v8898, %v8900
    %v8902 = vrot.slane %v8894, %v8901
    %v8904 = vunpack.c.l.s4 1983009808
    %v8905 = vunpack.c.0.s8 %v8904
    %v8906 = vlaneseq
    %v8907 = vshrl.u32 %v8906, 7
    %v8908 = vsub.s32 %v8905, %v8907
    %v8909 = vrot.slane %v8895, %v8908
    %v8910 = vcombine.low %v8902, %v8909
    %v8911 = vcombine.low %v7609, %v7613
    %v8912 = vcombine.low %v7617, %v7621
    %v8914 = vunpack.c.l.s4 1983009808
    %v8915 = vunpack.c.0.s8 %v8914
    %v8916 = vlaneseq
    %v8917 = vshrl.u32 %v8916, 7
    %v8918 = vsub.s32 %v8915, %v8917
    %v8919 = vrot.slane %v8911, %v8918
    %v8921 = vunpack.c.l.s4 1983009808
    %v8922 = vunpack.c.0.s8 %v8921
    %v8923 = vlaneseq
    %v8924 = vshrl.u32 %v8923, 7
    %v8925 = vsub.s32 %v8922, %v8924
    %v8926 = vrot.slane %v8912, %v8925
    %v8927 = vcombine.low %v8919, %v8926
    %v8928 = vcombine.low %v7625, %v7629
    %v8929 = vcombine.low %v7633, %v7637
    %v8931 = vunpack.c.l.s4 1983009808
    %v8932 = vunpack.c.0.s8 %v8931
    %v8933 = vlaneseq
    %v8934 = vshrl.u32 %v8933, 7
    %v8935 = vsub.s32 %v8932, %v8934
    %v8936 = vrot.slane %v8928, %v8935
    %v8938 = vunpack.c.l.s4 1983009808
    %v8939 = vunpack.c.0.s8 %v8938
    %v8940 = vlaneseq
    %v8941 = vshrl.u32 %v8940, 7
    %v8942 = vsub.s32 %v8939, %v8941
    %v8943 = vrot.slane %v8929, %v8942
    %v8944 = vcombine.low %v8936, %v8943
    %v8945 = vcombine.low %v7641, %v7645
    %v8946 = vcombine.low %v7649, %v7653
    %v8948 = vunpack.c.l.s4 1983009808
    %v8949 = vunpack.c.0.s8 %v8948
    %v8950 = vlaneseq
    %v8951 = vshrl.u32 %v8950, 7
    %v8952 = vsub.s32 %v8949, %v8951
    %v8953 = vrot.slane %v8945, %v8952
    %v8955 = vunpack.c.l.s4 1983009808
    %v8956 = vunpack.c.0.s8 %v8955
    %v8957 = vlaneseq
    %v8958 = vshrl.u32 %v8957, 7
    %v8959 = vsub.s32 %v8956, %v8958
    %v8960 = vrot.slane %v8946, %v8959
    %v8961 = vcombine.low %v8953, %v8960
    %v8962 = vcombine.low %v7657, %v7661
    %v8963 = vcombine.low %v7665, %v7669
    %v8965 = vunpack.c.l.s4 1983009808
    %v8966 = vunpack.c.0.s8 %v8965
    %v8967 = vlaneseq
    %v8968 = vshrl.u32 %v8967, 7
    %v8969 = vsub.s32 %v8966, %v8968
    %v8970 = vrot.slane %v8962, %v8969
    %v8972 = vunpack.c.l.s4 1983009808
    %v8973 = vunpack.c.0.s8 %v8972
    %v8974 = vlaneseq
    %v8975 = vshrl.u32 %v8974, 7
    %v8976 = vsub.s32 %v8973, %v8975
    %v8977 = vrot.slane %v8963, %v8976
    %v8978 = vcombine.low %v8970, %v8977
    %v8979 = vcombine.low %v7673, %v7677
    %v8980 = vcombine.low %v7681, %v7685
    %v8982 = vunpack.c.l.s4 1983009808
    %v8983 = vunpack.c.0.s8 %v8982
    %v8984 = vlaneseq
    %v8985 = vshrl.u32 %v8984, 7
    %v8986 = vsub.s32 %v8983, %v8985
    %v8987 = vrot.slane %v8979, %v8986
    %v8989 = vunpack.c.l.s4 1983009808
    %v8990 = vunpack.c.0.s8 %v8989
    %v8991 = vlaneseq
    %v8992 = vshrl.u32 %v8991, 7
    %v8993 = vsub.s32 %v8990, %v8992
    %v8994 = vrot.slane %v8980, %v8993
    %v8995 = vcombine.low %v8987, %v8994
    %v8996 = vcombine.low %v7689, %v7693
    %v8997 = vcombine.low %v7697, %v7701
    %v8999 = vunpack.c.l.s4 1983009808
    %v9000 = vunpack.c.0.s8 %v8999
    %v9001 = vlaneseq
    %v9002 = vshrl.u32 %v9001, 7
    %v9003 = vsub.s32 %v9000, %v9002
    %v9004 = vrot.slane %v8996, %v9003
    %v9006 = vunpack.c.l.s4 1983009808
    %v9007 = vunpack.c.0.s8 %v9006
    %v9008 = vlaneseq
    %v9009 = vshrl.u32 %v9008, 7
    %v9010 = vsub.s32 %v9007, %v9009
    %v9011 = vrot.slane %v8997, %v9010
    %v9012 = vcombine.low %v9004, %v9011
    %v9013 = vcombine.low %v7705, %v7709
    %v9014 = vcombine.low %v7713, %v7717
    %v9016 = vunpack.c.l.s4 1983009808
    %v9017 = vunpack.c.0.s8 %v9016
    %v9018 = vlaneseq
    %v9019 = vshrl.u32 %v9018, 7
    %v9020 = vsub.s32 %v9017, %v9019
    %v9021 = vrot.slane %v9013, %v9020
    %v9023 = vunpack.c.l.s4 1983009808
    %v9024 = vunpack.c.0.s8 %v9023
    %v9025 = vlaneseq
    %v9026 = vshrl.u32 %v9025, 7
    %v9027 = vsub.s32 %v9024, %v9026
    %v9028 = vrot.slane %v9014, %v9027
    %v9029 = vcombine.low %v9021, %v9028
    %v9030 = vcombine.low %v7721, %v7725
    %v9031 = vcombine.low %v7729, %v7733
    %v9033 = vunpack.c.l.s4 1983009808
    %v9034 = vunpack.c.0.s8 %v9033
    %v9035 = vlaneseq
    %v9036 = vshrl.u32 %v9035, 7
    %v9037 = vsub.s32 %v9034, %v9036
    %v9038 = vrot.slane %v9030, %v9037
    %v9040 = vunpack.c.l.s4 1983009808
    %v9041 = vunpack.c.0.s8 %v9040
    %v9042 = vlaneseq
    %v9043 = vshrl.u32 %v9042, 7
    %v9044 = vsub.s32 %v9041, %v9043
    %v9045 = vrot.slane %v9031, %v9044
    %v9046 = vcombine.low %v9038, %v9045
    %v9047 = vcombine.low %v7737, %v7741
    %v9048 = vcombine.low %v7745, %v7749
    %v9050 = vunpack.c.l.s4 1983009808
    %v9051 = vunpack.c.0.s8 %v9050
    %v9052 = vlaneseq
    %v9053 = vshrl.u32 %v9052, 7
    %v9054 = vsub.s32 %v9051, %v9053
    %v9055 = vrot.slane %v9047, %v9054
    %v9057 = vunpack.c.l.s4 1983009808
    %v9058 = vunpack.c.0.s8 %v9057
    %v9059 = vlaneseq
    %v9060 = vshrl.u32 %v9059, 7
    %v9061 = vsub.s32 %v9058, %v9060
    %v9062 = vrot.slane %v9048, %v9061
    %v9063 = vcombine.low %v9055, %v9062
    %v9064 = vcombine.low %v7753, %v7757
    %v9065 = vcombine.low %v7761, %v7765
    %v9067 = vunpack.c.l.s4 1983009808
    %v9068 = vunpack.c.0.s8 %v9067
    %v9069 = vlaneseq
    %v9070 = vshrl.u32 %v9069, 7
    %v9071 = vsub.s32 %v9068, %v9070
    %v9072 = vrot.slane %v9064, %v9071
    %v9074 = vunpack.c.l.s4 1983009808
    %v9075 = vunpack.c.0.s8 %v9074
    %v9076 = vlaneseq
    %v9077 = vshrl.u32 %v9076, 7
    %v9078 = vsub.s32 %v9075, %v9077
    %v9079 = vrot.slane %v9065, %v9078
    %v9080 = vcombine.low %v9072, %v9079
    %v9081 = vcombine.low %v7769, %v7773
    %v9082 = vcombine.low %v7777, %v7781
    %v9084 = vunpack.c.l.s4 1983009808
    %v9085 = vunpack.c.0.s8 %v9084
    %v9086 = vlaneseq
    %v9087 = vshrl.u32 %v9086, 7
    %v9088 = vsub.s32 %v9085, %v9087
    %v9089 = vrot.slane %v9081, %v9088
    %v9091 = vunpack.c.l.s4 1983009808
    %v9092 = vunpack.c.0.s8 %v9091
    %v9093 = vlaneseq
    %v9094 = vshrl.u32 %v9093, 7
    %v9095 = vsub.s32 %v9092, %v9094
    %v9096 = vrot.slane %v9082, %v9095
    %v9097 = vcombine.low %v9089, %v9096
    %v9098 = vcombine.low %v7785, %v7789
    %v9099 = vcombine.low %v7793, %v7797
    %v9101 = vunpack.c.l.s4 1983009808
    %v9102 = vunpack.c.0.s8 %v9101
    %v9103 = vlaneseq
    %v9104 = vshrl.u32 %v9103, 7
    %v9105 = vsub.s32 %v9102, %v9104
    %v9106 = vrot.slane %v9098, %v9105
    %v9108 = vunpack.c.l.s4 1983009808
    %v9109 = vunpack.c.0.s8 %v9108
    %v9110 = vlaneseq
    %v9111 = vshrl.u32 %v9110, 7
    %v9112 = vsub.s32 %v9109, %v9111
    %v9113 = vrot.slane %v9099, %v9112
    %v9114 = vcombine.low %v9106, %v9113
    %v9115 = vcombine.low %v7801, %v7805
    %v9116 = vcombine.low %v7809, %v7813
    %v9118 = vunpack.c.l.s4 1983009808
    %v9119 = vunpack.c.0.s8 %v9118
    %v9120 = vlaneseq
    %v9121 = vshrl.u32 %v9120, 7
    %v9122 = vsub.s32 %v9119, %v9121
    %v9123 = vrot.slane %v9115, %v9122
    %v9125 = vunpack.c.l.s4 1983009808
    %v9126 = vunpack.c.0.s8 %v9125
    %v9127 = vlaneseq
    %v9128 = vshrl.u32 %v9127, 7
    %v9129 = vsub.s32 %v9126, %v9128
    %v9130 = vrot.slane %v9116, %v9129
    %v9131 = vcombine.low %v9123, %v9130
    %v9132 = vcombine.low %v7817, %v7821
    %v9133 = vcombine.low %v7825, %v7829
    %v9135 = vunpack.c.l.s4 1983009808
    %v9136 = vunpack.c.0.s8 %v9135
    %v9137 = vlaneseq
    %v9138 = vshrl.u32 %v9137, 7
    %v9139 = vsub.s32 %v9136, %v9138
    %v9140 = vrot.slane %v9132, %v9139
    %v9142 = vunpack.c.l.s4 1983009808
    %v9143 = vunpack.c.0.s8 %v9142
    %v9144 = vlaneseq
    %v9145 = vshrl.u32 %v9144, 7
    %v9146 = vsub.s32 %v9143, %v9145
    %v9147 = vrot.slane %v9133, %v9146
    %v9148 = vcombine.low %v9140, %v9147
    %v9149 = vcombine.low %v7833, %v7837
    %v9150 = vcombine.low %v7841, %v7845
    %v9152 = vunpack.c.l.s4 1983009808
    %v9153 = vunpack.c.0.s8 %v9152
    %v9154 = vlaneseq
    %v9155 = vshrl.u32 %v9154, 7
    %v9156 = vsub.s32 %v9153, %v9155
    %v9157 = vrot.slane %v9149, %v9156
    %v9159 = vunpack.c.l.s4 1983009808
    %v9160 = vunpack.c.0.s8 %v9159
    %v9161 = vlaneseq
    %v9162 = vshrl.u32 %v9161, 7
    %v9163 = vsub.s32 %v9160, %v9162
    %v9164 = vrot.slane %v9150, %v9163
    %v9165 = vcombine.low %v9157, %v9164
    %v9166 = vcombine.low %v7849, %v7853
    %v9167 = vcombine.low %v7857, %v7861
    %v9169 = vunpack.c.l.s4 1983009808
    %v9170 = vunpack.c.0.s8 %v9169
    %v9171 = vlaneseq
    %v9172 = vshrl.u32 %v9171, 7
    %v9173 = vsub.s32 %v9170, %v9172
    %v9174 = vrot.slane %v9166, %v9173
    %v9176 = vunpack.c.l.s4 1983009808
    %v9177 = vunpack.c.0.s8 %v9176
    %v9178 = vlaneseq
    %v9179 = vshrl.u32 %v9178, 7
    %v9180 = vsub.s32 %v9177, %v9179
    %v9181 = vrot.slane %v9167, %v9180
    %v9182 = vcombine.low %v9174, %v9181
    %v9183 = vcombine.low %v7865, %v7869
    %v9184 = vcombine.low %v7873, %v7877
    %v9186 = vunpack.c.l.s4 1983009808
    %v9187 = vunpack.c.0.s8 %v9186
    %v9188 = vlaneseq
    %v9189 = vshrl.u32 %v9188, 7
    %v9190 = vsub.s32 %v9187, %v9189
    %v9191 = vrot.slane %v9183, %v9190
    %v9193 = vunpack.c.l.s4 1983009808
    %v9194 = vunpack.c.0.s8 %v9193
    %v9195 = vlaneseq
    %v9196 = vshrl.u32 %v9195, 7
    %v9197 = vsub.s32 %v9194, %v9196
    %v9198 = vrot.slane %v9184, %v9197
    %v9199 = vcombine.low %v9191, %v9198
    %v9200 = vcombine.low %v7881, %v7885
    %v9201 = vcombine.low %v7889, %v7893
    %v9203 = vunpack.c.l.s4 1983009808
    %v9204 = vunpack.c.0.s8 %v9203
    %v9205 = vlaneseq
    %v9206 = vshrl.u32 %v9205, 7
    %v9207 = vsub.s32 %v9204, %v9206
    %v9208 = vrot.slane %v9200, %v9207
    %v9210 = vunpack.c.l.s4 1983009808
    %v9211 = vunpack.c.0.s8 %v9210
    %v9212 = vlaneseq
    %v9213 = vshrl.u32 %v9212, 7
    %v9214 = vsub.s32 %v9211, %v9213
    %v9215 = vrot.slane %v9201, %v9214
    %v9216 = vcombine.low %v9208, %v9215
    %v9217 = vcombine.low %v7897, %v7901
    %v9218 = vcombine.low %v7905, %v7909
    %v9220 = vunpack.c.l.s4 1983009808
    %v9221 = vunpack.c.0.s8 %v9220
    %v9222 = vlaneseq
    %v9223 = vshrl.u32 %v9222, 7
    %v9224 = vsub.s32 %v9221, %v9223
    %v9225 = vrot.slane %v9217, %v9224
    %v9227 = vunpack.c.l.s4 1983009808
    %v9228 = vunpack.c.0.s8 %v9227
    %v9229 = vlaneseq
    %v9230 = vshrl.u32 %v9229, 7
    %v9231 = vsub.s32 %v9228, %v9230
    %v9232 = vrot.slane %v9218, %v9231
    %v9233 = vcombine.low %v9225, %v9232
    %v9234 = vcombine.low %v7913, %v7917
    %v9235 = vcombine.low %v7921, %v7925
    %v9237 = vunpack.c.l.s4 1983009808
    %v9238 = vunpack.c.0.s8 %v9237
    %v9239 = vlaneseq
    %v9240 = vshrl.u32 %v9239, 7
    %v9241 = vsub.s32 %v9238, %v9240
    %v9242 = vrot.slane %v9234, %v9241
    %v9244 = vunpack.c.l.s4 1983009808
    %v9245 = vunpack.c.0.s8 %v9244
    %v9246 = vlaneseq
    %v9247 = vshrl.u32 %v9246, 7
    %v9248 = vsub.s32 %v9245, %v9247
    %v9249 = vrot.slane %v9235, %v9248
    %v9250 = vcombine.low %v9242, %v9249
    %v9251 = vcombine.low %v7929, %v7933
    %v9252 = vcombine.low %v7937, %v7941
    %v9254 = vunpack.c.l.s4 1983009808
    %v9255 = vunpack.c.0.s8 %v9254
    %v9256 = vlaneseq
    %v9257 = vshrl.u32 %v9256, 7
    %v9258 = vsub.s32 %v9255, %v9257
    %v9259 = vrot.slane %v9251, %v9258
    %v9261 = vunpack.c.l.s4 1983009808
    %v9262 = vunpack.c.0.s8 %v9261
    %v9263 = vlaneseq
    %v9264 = vshrl.u32 %v9263, 7
    %v9265 = vsub.s32 %v9262, %v9264
    %v9266 = vrot.slane %v9252, %v9265
    %v9267 = vcombine.low %v9259, %v9266
    %v9268 = vcombine.low %v7945, %v7949
    %v9269 = vcombine.low %v7953, %v7957
    %v9271 = vunpack.c.l.s4 1983009808
    %v9272 = vunpack.c.0.s8 %v9271
    %v9273 = vlaneseq
    %v9274 = vshrl.u32 %v9273, 7
    %v9275 = vsub.s32 %v9272, %v9274
    %v9276 = vrot.slane %v9268, %v9275
    %v9278 = vunpack.c.l.s4 1983009808
    %v9279 = vunpack.c.0.s8 %v9278
    %v9280 = vlaneseq
    %v9281 = vshrl.u32 %v9280, 7
    %v9282 = vsub.s32 %v9279, %v9281
    %v9283 = vrot.slane %v9269, %v9282
    %v9284 = vcombine.low %v9276, %v9283
    %v9285 = vcombine.low %v7961, %v7965
    %v9286 = vcombine.low %v7969, %v7973
    %v9288 = vunpack.c.l.s4 1983009808
    %v9289 = vunpack.c.0.s8 %v9288
    %v9290 = vlaneseq
    %v9291 = vshrl.u32 %v9290, 7
    %v9292 = vsub.s32 %v9289, %v9291
    %v9293 = vrot.slane %v9285, %v9292
    %v9295 = vunpack.c.l.s4 1983009808
    %v9296 = vunpack.c.0.s8 %v9295
    %v9297 = vlaneseq
    %v9298 = vshrl.u32 %v9297, 7
    %v9299 = vsub.s32 %v9296, %v9298
    %v9300 = vrot.slane %v9286, %v9299
    %v9301 = vcombine.low %v9293, %v9300
    %v9302 = vcombine.low %v7977, %v7981
    %v9303 = vcombine.low %v7985, %v7989
    %v9305 = vunpack.c.l.s4 1983009808
    %v9306 = vunpack.c.0.s8 %v9305
    %v9307 = vlaneseq
    %v9308 = vshrl.u32 %v9307, 7
    %v9309 = vsub.s32 %v9306, %v9308
    %v9310 = vrot.slane %v9302, %v9309
    %v9312 = vunpack.c.l.s4 1983009808
    %v9313 = vunpack.c.0.s8 %v9312
    %v9314 = vlaneseq
    %v9315 = vshrl.u32 %v9314, 7
    %v9316 = vsub.s32 %v9313, %v9315
    %v9317 = vrot.slane %v9303, %v9316
    %v9318 = vcombine.low %v9310, %v9317
    %v9319 = vcombine.low %v7993, %v7997
    %v9320 = vcombine.low %v8001, %v8005
    %v9322 = vunpack.c.l.s4 1983009808
    %v9323 = vunpack.c.0.s8 %v9322
    %v9324 = vlaneseq
    %v9325 = vshrl.u32 %v9324, 7
    %v9326 = vsub.s32 %v9323, %v9325
    %v9327 = vrot.slane %v9319, %v9326
    %v9329 = vunpack.c.l.s4 1983009808
    %v9330 = vunpack.c.0.s8 %v9329
    %v9331 = vlaneseq
    %v9332 = vshrl.u32 %v9331, 7
    %v9333 = vsub.s32 %v9330, %v9332
    %v9334 = vrot.slane %v9320, %v9333
    %v9335 = vcombine.low %v9327, %v9334
    %v9336 = vcombine.low %v8009, %v8013
    %v9337 = vcombine.low %v8017, %v8021
    %v9339 = vunpack.c.l.s4 1983009808
    %v9340 = vunpack.c.0.s8 %v9339
    %v9341 = vlaneseq
    %v9342 = vshrl.u32 %v9341, 7
    %v9343 = vsub.s32 %v9340, %v9342
    %v9344 = vrot.slane %v9336, %v9343
    %v9346 = vunpack.c.l.s4 1983009808
    %v9347 = vunpack.c.0.s8 %v9346
    %v9348 = vlaneseq
    %v9349 = vshrl.u32 %v9348, 7
    %v9350 = vsub.s32 %v9347, %v9349
    %v9351 = vrot.slane %v9337, %v9350
    %v9352 = vcombine.low %v9344, %v9351
    %v9353 = vcombine.low %v8025, %v8029
    %v9354 = vcombine.low %v8033, %v8037
    %v9356 = vunpack.c.l.s4 1983009808
    %v9357 = vunpack.c.0.s8 %v9356
    %v9358 = vlaneseq
    %v9359 = vshrl.u32 %v9358, 7
    %v9360 = vsub.s32 %v9357, %v9359
    %v9361 = vrot.slane %v9353, %v9360
    %v9363 = vunpack.c.l.s4 1983009808
    %v9364 = vunpack.c.0.s8 %v9363
    %v9365 = vlaneseq
    %v9366 = vshrl.u32 %v9365, 7
    %v9367 = vsub.s32 %v9364, %v9366
    %v9368 = vrot.slane %v9354, %v9367
    %v9369 = vcombine.low %v9361, %v9368
    %v9370 = vcombine.low %v8041, %v8045
    %v9371 = vcombine.low %v8049, %v8053
    %v9373 = vunpack.c.l.s4 1983009808
    %v9374 = vunpack.c.0.s8 %v9373
    %v9375 = vlaneseq
    %v9376 = vshrl.u32 %v9375, 7
    %v9377 = vsub.s32 %v9374, %v9376
    %v9378 = vrot.slane %v9370, %v9377
    %v9380 = vunpack.c.l.s4 1983009808
    %v9381 = vunpack.c.0.s8 %v9380
    %v9382 = vlaneseq
    %v9383 = vshrl.u32 %v9382, 7
    %v9384 = vsub.s32 %v9381, %v9383
    %v9385 = vrot.slane %v9371, %v9384
    %v9386 = vcombine.low %v9378, %v9385
    %v9387 = vcombine.low %v8057, %v8061
    %v9388 = vcombine.low %v8065, %v8069
    %v9390 = vunpack.c.l.s4 1983009808
    %v9391 = vunpack.c.0.s8 %v9390
    %v9392 = vlaneseq
    %v9393 = vshrl.u32 %v9392, 7
    %v9394 = vsub.s32 %v9391, %v9393
    %v9395 = vrot.slane %v9387, %v9394
    %v9397 = vunpack.c.l.s4 1983009808
    %v9398 = vunpack.c.0.s8 %v9397
    %v9399 = vlaneseq
    %v9400 = vshrl.u32 %v9399, 7
    %v9401 = vsub.s32 %v9398, %v9400
    %v9402 = vrot.slane %v9388, %v9401
    %v9403 = vcombine.low %v9395, %v9402
    %v9404 = vcombine.low %v8073, %v8077
    %v9405 = vcombine.low %v8081, %v8085
    %v9407 = vunpack.c.l.s4 1983009808
    %v9408 = vunpack.c.0.s8 %v9407
    %v9409 = vlaneseq
    %v9410 = vshrl.u32 %v9409, 7
    %v9411 = vsub.s32 %v9408, %v9410
    %v9412 = vrot.slane %v9404, %v9411
    %v9414 = vunpack.c.l.s4 1983009808
    %v9415 = vunpack.c.0.s8 %v9414
    %v9416 = vlaneseq
    %v9417 = vshrl.u32 %v9416, 7
    %v9418 = vsub.s32 %v9415, %v9417
    %v9419 = vrot.slane %v9405, %v9418
    %v9420 = vcombine.low %v9412, %v9419
    %v9421 = vcombine.low %v8089, %v8093
    %v9422 = vcombine.low %v8097, %v8101
    %v9424 = vunpack.c.l.s4 1983009808
    %v9425 = vunpack.c.0.s8 %v9424
    %v9426 = vlaneseq
    %v9427 = vshrl.u32 %v9426, 7
    %v9428 = vsub.s32 %v9425, %v9427
    %v9429 = vrot.slane %v9421, %v9428
    %v9431 = vunpack.c.l.s4 1983009808
    %v9432 = vunpack.c.0.s8 %v9431
    %v9433 = vlaneseq
    %v9434 = vshrl.u32 %v9433, 7
    %v9435 = vsub.s32 %v9432, %v9434
    %v9436 = vrot.slane %v9422, %v9435
    %v9437 = vcombine.low %v9429, %v9436
    %v9438 = vcombine.low %v8105, %v8109
    %v9439 = vcombine.low %v8113, %v8117
    %v9441 = vunpack.c.l.s4 1983009808
    %v9442 = vunpack.c.0.s8 %v9441
    %v9443 = vlaneseq
    %v9444 = vshrl.u32 %v9443, 7
    %v9445 = vsub.s32 %v9442, %v9444
    %v9446 = vrot.slane %v9438, %v9445
    %v9448 = vunpack.c.l.s4 1983009808
    %v9449 = vunpack.c.0.s8 %v9448
    %v9450 = vlaneseq
    %v9451 = vshrl.u32 %v9450, 7
    %v9452 = vsub.s32 %v9449, %v9451
    %v9453 = vrot.slane %v9439, %v9452
    %v9454 = vcombine.low %v9446, %v9453
    %v9455 = vcombine.low %v8121, %v8125
    %v9456 = vcombine.low %v8129, %v8133
    %v9458 = vunpack.c.l.s4 1983009808
    %v9459 = vunpack.c.0.s8 %v9458
    %v9460 = vlaneseq
    %v9461 = vshrl.u32 %v9460, 7
    %v9462 = vsub.s32 %v9459, %v9461
    %v9463 = vrot.slane %v9455, %v9462
    %v9465 = vunpack.c.l.s4 1983009808
    %v9466 = vunpack.c.0.s8 %v9465
    %v9467 = vlaneseq
    %v9468 = vshrl.u32 %v9467, 7
    %v9469 = vsub.s32 %v9466, %v9468
    %v9470 = vrot.slane %v9456, %v9469
    %v9471 = vcombine.low %v9463, %v9470
    %v9472 = vcombine.low %v8137, %v8141
    %v9473 = vcombine.low %v8145, %v8149
    %v9475 = vunpack.c.l.s4 1983009808
    %v9476 = vunpack.c.0.s8 %v9475
    %v9477 = vlaneseq
    %v9478 = vshrl.u32 %v9477, 7
    %v9479 = vsub.s32 %v9476, %v9478
    %v9480 = vrot.slane %v9472, %v9479
    %v9482 = vunpack.c.l.s4 1983009808
    %v9483 = vunpack.c.0.s8 %v9482
    %v9484 = vlaneseq
    %v9485 = vshrl.u32 %v9484, 7
    %v9486 = vsub.s32 %v9483, %v9485
    %v9487 = vrot.slane %v9473, %v9486
    %v9488 = vcombine.low %v9480, %v9487
    %v9489 = vcombine.low %v8153, %v8157
    %v9490 = vcombine.low %v8161, %v8165
    %v9492 = vunpack.c.l.s4 1983009808
    %v9493 = vunpack.c.0.s8 %v9492
    %v9494 = vlaneseq
    %v9495 = vshrl.u32 %v9494, 7
    %v9496 = vsub.s32 %v9493, %v9495
    %v9497 = vrot.slane %v9489, %v9496
    %v9499 = vunpack.c.l.s4 1983009808
    %v9500 = vunpack.c.0.s8 %v9499
    %v9501 = vlaneseq
    %v9502 = vshrl.u32 %v9501, 7
    %v9503 = vsub.s32 %v9500, %v9502
    %v9504 = vrot.slane %v9490, %v9503
    %v9505 = vcombine.low %v9497, %v9504
    %v9506 = vcombine.low %v8169, %v8173
    %v9507 = vcombine.low %v8177, %v8181
    %v9509 = vunpack.c.l.s4 1983009808
    %v9510 = vunpack.c.0.s8 %v9509
    %v9511 = vlaneseq
    %v9512 = vshrl.u32 %v9511, 7
    %v9513 = vsub.s32 %v9510, %v9512
    %v9514 = vrot.slane %v9506, %v9513
    %v9516 = vunpack.c.l.s4 1983009808
    %v9517 = vunpack.c.0.s8 %v9516
    %v9518 = vlaneseq
    %v9519 = vshrl.u32 %v9518, 7
    %v9520 = vsub.s32 %v9517, %v9519
    %v9521 = vrot.slane %v9507, %v9520
    %v9522 = vcombine.low %v9514, %v9521
    %v9523 = vcombine.low %v8185, %v8189
    %v9524 = vcombine.low %v8193, %v8197
    %v9526 = vunpack.c.l.s4 1983009808
    %v9527 = vunpack.c.0.s8 %v9526
    %v9528 = vlaneseq
    %v9529 = vshrl.u32 %v9528, 7
    %v9530 = vsub.s32 %v9527, %v9529
    %v9531 = vrot.slane %v9523, %v9530
    %v9533 = vunpack.c.l.s4 1983009808
    %v9534 = vunpack.c.0.s8 %v9533
    %v9535 = vlaneseq
    %v9536 = vshrl.u32 %v9535, 7
    %v9537 = vsub.s32 %v9534, %v9536
    %v9538 = vrot.slane %v9524, %v9537
    %v9539 = vcombine.low %v9531, %v9538
    %v9540 = vcombine.low %v8201, %v8205
    %v9541 = vcombine.low %v8209, %v8213
    %v9543 = vunpack.c.l.s4 1983009808
    %v9544 = vunpack.c.0.s8 %v9543
    %v9545 = vlaneseq
    %v9546 = vshrl.u32 %v9545, 7
    %v9547 = vsub.s32 %v9544, %v9546
    %v9548 = vrot.slane %v9540, %v9547
    %v9550 = vunpack.c.l.s4 1983009808
    %v9551 = vunpack.c.0.s8 %v9550
    %v9552 = vlaneseq
    %v9553 = vshrl.u32 %v9552, 7
    %v9554 = vsub.s32 %v9551, %v9553
    %v9555 = vrot.slane %v9541, %v9554
    %v9556 = vcombine.low %v9548, %v9555
    %v9557 = vcombine.low %v8217, %v8221
    %v9558 = vcombine.low %v8225, %v8229
    %v9560 = vunpack.c.l.s4 1983009808
    %v9561 = vunpack.c.0.s8 %v9560
    %v9562 = vlaneseq
    %v9563 = vshrl.u32 %v9562, 7
    %v9564 = vsub.s32 %v9561, %v9563
    %v9565 = vrot.slane %v9557, %v9564
    %v9567 = vunpack.c.l.s4 1983009808
    %v9568 = vunpack.c.0.s8 %v9567
    %v9569 = vlaneseq
    %v9570 = vshrl.u32 %v9569, 7
    %v9571 = vsub.s32 %v9568, %v9570
    %v9572 = vrot.slane %v9558, %v9571
    %v9573 = vcombine.low %v9565, %v9572
    %v9638 = vmul.f32 %v36, %v8502
    %v9639 = vmul.f32 %v37, %v8519
    %v9640 = vmul.f32 %v38, %v8536
    %v9641 = vmul.f32 %v39, %v8553
    %v9642 = vmul.f32 %v40, %v8570
    %v9643 = vmul.f32 %v41, %v8587
    %v9644 = vmul.f32 %v42, %v8604
    %v9645 = vmul.f32 %v43, %v8621
    %v9646 = vmul.f32 %v44, %v8638
    %v9647 = vmul.f32 %v45, %v8655
    %v9648 = vmul.f32 %v46, %v8672
    %v9649 = vmul.f32 %v47, %v8689
    %v9650 = vmul.f32 %v48, %v8706
    %v9651 = vmul.f32 %v49, %v8723
    %v9652 = vmul.f32 %v50, %v8740
    %v9653 = vmul.f32 %v51, %v8757
    %v9654 = vmul.f32 %v52, %v8774
    %v9655 = vmul.f32 %v53, %v8791
    %v9656 = vmul.f32 %v54, %v8808
    %v9657 = vmul.f32 %v55, %v8825
    %v9658 = vmul.f32 %v56, %v8842
    %v9659 = vmul.f32 %v57, %v8859
    %v9660 = vmul.f32 %v58, %v8876
    %v9661 = vmul.f32 %v59, %v8893
    %v9662 = vmul.f32 %v60, %v8910
    %v9663 = vmul.f32 %v61, %v8927
    %v9664 = vmul.f32 %v62, %v8944
    %v9665 = vmul.f32 %v63, %v8961
    %v9666 = vmul.f32 %v64, %v8978
    %v9667 = vmul.f32 %v65, %v8995
    %v9668 = vmul.f32 %v66, %v9012
    %v9669 = vmul.f32 %v67, %v9029
    %v9670 = vmul.f32 %v68, %v9046
    %v9671 = vmul.f32 %v69, %v9063
    %v9672 = vmul.f32 %v70, %v9080
    %v9673 = vmul.f32 %v71, %v9097
    %v9674 = vmul.f32 %v72, %v9114
    %v9675 = vmul.f32 %v73, %v9131
    %v9676 = vmul.f32 %v74, %v9148
    %v9677 = vmul.f32 %v75, %v9165
    %v9678 = vmul.f32 %v76, %v9182
    %v9679 = vmul.f32 %v77, %v9199
    %v9680 = vmul.f32 %v78, %v9216
    %v9681 = vmul.f32 %v79, %v9233
    %v9682 = vmul.f32 %v80, %v9250
    %v9683 = vmul.f32 %v81, %v9267
    %v9684 = vmul.f32 %v82, %v9284
    %v9685 = vmul.f32 %v83, %v9301
    %v9686 = vmul.f32 %v84, %v9318
    %v9687 = vmul.f32 %v85, %v9335
    %v9688 = vmul.f32 %v86, %v9352
    %v9689 = vmul.f32 %v87, %v9369
    %v9690 = vmul.f32 %v88, %v9386
    %v9691 = vmul.f32 %v89, %v9403
    %v9692 = vmul.f32 %v90, %v9420
    %v9693 = vmul.f32 %v91, %v9437
    %v9694 = vmul.f32 %v92, %v9454
    %v9695 = vmul.f32 %v93, %v9471
    %v9696 = vmul.f32 %v94, %v9488
    %v9697 = vmul.f32 %v95, %v9505
    %v9698 = vmul.f32 %v96, %v9522
    %v9699 = vmul.f32 %v97, %v9539
    %v9700 = vmul.f32 %v98, %v9556
    %v9701 = vmul.f32 %v99, %v9573
    %v9766 = vcombine.high %v9638, %v9638
    %v9768 = vunpack.c.l.s4 1983009808
    %v9769 = vunpack.c.0.s8 %v9768
    %v9770 = vlaneseq
    %v9771 = vshrl.u32 %v9770, 7
    %v9772 = vsub.s32 %v9769, %v9771
    %v9773 = vrot.slane %v9638, %v9772
    %v9775 = vunpack.c.l.s4 1983009808
    %v9776 = vunpack.c.0.s8 %v9775
    %v9777 = vlaneseq
    %v9778 = vshrl.u32 %v9777, 7
    %v9779 = vsub.s32 %v9776, %v9778
    %v9780 = vrot.slane %v9766, %v9779
    %v9781 = vcombine.high %v9773, %v9773
    %v9782 = vcombine.high %v9780, %v9780
    %v9783 = vcombine.high %v9639, %v9639
    %v9785 = vunpack.c.l.s4 1983009808
    %v9786 = vunpack.c.0.s8 %v9785
    %v9787 = vlaneseq
    %v9788 = vshrl.u32 %v9787, 7
    %v9789 = vsub.s32 %v9786, %v9788
    %v9790 = vrot.slane %v9639, %v9789
    %v9792 = vunpack.c.l.s4 1983009808
    %v9793 = vunpack.c.0.s8 %v9792
    %v9794 = vlaneseq
    %v9795 = vshrl.u32 %v9794, 7
    %v9796 = vsub.s32 %v9793, %v9795
    %v9797 = vrot.slane %v9783, %v9796
    %v9798 = vcombine.high %v9790, %v9790
    %v9799 = vcombine.high %v9797, %v9797
    %v9800 = vcombine.high %v9640, %v9640
    %v9802 = vunpack.c.l.s4 1983009808
    %v9803 = vunpack.c.0.s8 %v9802
    %v9804 = vlaneseq
    %v9805 = vshrl.u32 %v9804, 7
    %v9806 = vsub.s32 %v9803, %v9805
    %v9807 = vrot.slane %v9640, %v9806
    %v9809 = vunpack.c.l.s4 1983009808
    %v9810 = vunpack.c.0.s8 %v9809
    %v9811 = vlaneseq
    %v9812 = vshrl.u32 %v9811, 7
    %v9813 = vsub.s32 %v9810, %v9812
    %v9814 = vrot.slane %v9800, %v9813
    %v9815 = vcombine.high %v9807, %v9807
    %v9816 = vcombine.high %v9814, %v9814
    %v9817 = vcombine.high %v9641, %v9641
    %v9819 = vunpack.c.l.s4 1983009808
    %v9820 = vunpack.c.0.s8 %v9819
    %v9821 = vlaneseq
    %v9822 = vshrl.u32 %v9821, 7
    %v9823 = vsub.s32 %v9820, %v9822
    %v9824 = vrot.slane %v9641, %v9823
    %v9826 = vunpack.c.l.s4 1983009808
    %v9827 = vunpack.c.0.s8 %v9826
    %v9828 = vlaneseq
    %v9829 = vshrl.u32 %v9828, 7
    %v9830 = vsub.s32 %v9827, %v9829
    %v9831 = vrot.slane %v9817, %v9830
    %v9832 = vcombine.high %v9824, %v9824
    %v9833 = vcombine.high %v9831, %v9831
    %v9834 = vcombine.high %v9642, %v9642
    %v9836 = vunpack.c.l.s4 1983009808
    %v9837 = vunpack.c.0.s8 %v9836
    %v9838 = vlaneseq
    %v9839 = vshrl.u32 %v9838, 7
    %v9840 = vsub.s32 %v9837, %v9839
    %v9841 = vrot.slane %v9642, %v9840
    %v9843 = vunpack.c.l.s4 1983009808
    %v9844 = vunpack.c.0.s8 %v9843
    %v9845 = vlaneseq
    %v9846 = vshrl.u32 %v9845, 7
    %v9847 = vsub.s32 %v9844, %v9846
    %v9848 = vrot.slane %v9834, %v9847
    %v9849 = vcombine.high %v9841, %v9841
    %v9850 = vcombine.high %v9848, %v9848
    %v9851 = vcombine.high %v9643, %v9643
    %v9853 = vunpack.c.l.s4 1983009808
    %v9854 = vunpack.c.0.s8 %v9853
    %v9855 = vlaneseq
    %v9856 = vshrl.u32 %v9855, 7
    %v9857 = vsub.s32 %v9854, %v9856
    %v9858 = vrot.slane %v9643, %v9857
    %v9860 = vunpack.c.l.s4 1983009808
    %v9861 = vunpack.c.0.s8 %v9860
    %v9862 = vlaneseq
    %v9863 = vshrl.u32 %v9862, 7
    %v9864 = vsub.s32 %v9861, %v9863
    %v9865 = vrot.slane %v9851, %v9864
    %v9866 = vcombine.high %v9858, %v9858
    %v9867 = vcombine.high %v9865, %v9865
    %v9868 = vcombine.high %v9644, %v9644
    %v9870 = vunpack.c.l.s4 1983009808
    %v9871 = vunpack.c.0.s8 %v9870
    %v9872 = vlaneseq
    %v9873 = vshrl.u32 %v9872, 7
    %v9874 = vsub.s32 %v9871, %v9873
    %v9875 = vrot.slane %v9644, %v9874
    %v9877 = vunpack.c.l.s4 1983009808
    %v9878 = vunpack.c.0.s8 %v9877
    %v9879 = vlaneseq
    %v9880 = vshrl.u32 %v9879, 7
    %v9881 = vsub.s32 %v9878, %v9880
    %v9882 = vrot.slane %v9868, %v9881
    %v9883 = vcombine.high %v9875, %v9875
    %v9884 = vcombine.high %v9882, %v9882
    %v9885 = vcombine.high %v9645, %v9645
    %v9887 = vunpack.c.l.s4 1983009808
    %v9888 = vunpack.c.0.s8 %v9887
    %v9889 = vlaneseq
    %v9890 = vshrl.u32 %v9889, 7
    %v9891 = vsub.s32 %v9888, %v9890
    %v9892 = vrot.slane %v9645, %v9891
    %v9894 = vunpack.c.l.s4 1983009808
    %v9895 = vunpack.c.0.s8 %v9894
    %v9896 = vlaneseq
    %v9897 = vshrl.u32 %v9896, 7
    %v9898 = vsub.s32 %v9895, %v9897
    %v9899 = vrot.slane %v9885, %v9898
    %v9900 = vcombine.high %v9892, %v9892
    %v9901 = vcombine.high %v9899, %v9899
    %v9902 = vcombine.high %v9646, %v9646
    %v9904 = vunpack.c.l.s4 1983009808
    %v9905 = vunpack.c.0.s8 %v9904
    %v9906 = vlaneseq
    %v9907 = vshrl.u32 %v9906, 7
    %v9908 = vsub.s32 %v9905, %v9907
    %v9909 = vrot.slane %v9646, %v9908
    %v9911 = vunpack.c.l.s4 1983009808
    %v9912 = vunpack.c.0.s8 %v9911
    %v9913 = vlaneseq
    %v9914 = vshrl.u32 %v9913, 7
    %v9915 = vsub.s32 %v9912, %v9914
    %v9916 = vrot.slane %v9902, %v9915
    %v9917 = vcombine.high %v9909, %v9909
    %v9918 = vcombine.high %v9916, %v9916
    %v9919 = vcombine.high %v9647, %v9647
    %v9921 = vunpack.c.l.s4 1983009808
    %v9922 = vunpack.c.0.s8 %v9921
    %v9923 = vlaneseq
    %v9924 = vshrl.u32 %v9923, 7
    %v9925 = vsub.s32 %v9922, %v9924
    %v9926 = vrot.slane %v9647, %v9925
    %v9928 = vunpack.c.l.s4 1983009808
    %v9929 = vunpack.c.0.s8 %v9928
    %v9930 = vlaneseq
    %v9931 = vshrl.u32 %v9930, 7
    %v9932 = vsub.s32 %v9929, %v9931
    %v9933 = vrot.slane %v9919, %v9932
    %v9934 = vcombine.high %v9926, %v9926
    %v9935 = vcombine.high %v9933, %v9933
    %v9936 = vcombine.high %v9648, %v9648
    %v9938 = vunpack.c.l.s4 1983009808
    %v9939 = vunpack.c.0.s8 %v9938
    %v9940 = vlaneseq
    %v9941 = vshrl.u32 %v9940, 7
    %v9942 = vsub.s32 %v9939, %v9941
    %v9943 = vrot.slane %v9648, %v9942
    %v9945 = vunpack.c.l.s4 1983009808
    %v9946 = vunpack.c.0.s8 %v9945
    %v9947 = vlaneseq
    %v9948 = vshrl.u32 %v9947, 7
    %v9949 = vsub.s32 %v9946, %v9948
    %v9950 = vrot.slane %v9936, %v9949
    %v9951 = vcombine.high %v9943, %v9943
    %v9952 = vcombine.high %v9950, %v9950
    %v9953 = vcombine.high %v9649, %v9649
    %v9955 = vunpack.c.l.s4 1983009808
    %v9956 = vunpack.c.0.s8 %v9955
    %v9957 = vlaneseq
    %v9958 = vshrl.u32 %v9957, 7
    %v9959 = vsub.s32 %v9956, %v9958
    %v9960 = vrot.slane %v9649, %v9959
    %v9962 = vunpack.c.l.s4 1983009808
    %v9963 = vunpack.c.0.s8 %v9962
    %v9964 = vlaneseq
    %v9965 = vshrl.u32 %v9964, 7
    %v9966 = vsub.s32 %v9963, %v9965
    %v9967 = vrot.slane %v9953, %v9966
    %v9968 = vcombine.high %v9960, %v9960
    %v9969 = vcombine.high %v9967, %v9967
    %v9970 = vcombine.high %v9650, %v9650
    %v9972 = vunpack.c.l.s4 1983009808
    %v9973 = vunpack.c.0.s8 %v9972
    %v9974 = vlaneseq
    %v9975 = vshrl.u32 %v9974, 7
    %v9976 = vsub.s32 %v9973, %v9975
    %v9977 = vrot.slane %v9650, %v9976
    %v9979 = vunpack.c.l.s4 1983009808
    %v9980 = vunpack.c.0.s8 %v9979
    %v9981 = vlaneseq
    %v9982 = vshrl.u32 %v9981, 7
    %v9983 = vsub.s32 %v9980, %v9982
    %v9984 = vrot.slane %v9970, %v9983
    %v9985 = vcombine.high %v9977, %v9977
    %v9986 = vcombine.high %v9984, %v9984
    %v9987 = vcombine.high %v9651, %v9651
    %v9989 = vunpack.c.l.s4 1983009808
    %v9990 = vunpack.c.0.s8 %v9989
    %v9991 = vlaneseq
    %v9992 = vshrl.u32 %v9991, 7
    %v9993 = vsub.s32 %v9990, %v9992
    %v9994 = vrot.slane %v9651, %v9993
    %v9996 = vunpack.c.l.s4 1983009808
    %v9997 = vunpack.c.0.s8 %v9996
    %v9998 = vlaneseq
    %v9999 = vshrl.u32 %v9998, 7
    %v10000 = vsub.s32 %v9997, %v9999
    %v10001 = vrot.slane %v9987, %v10000
    %v10002 = vcombine.high %v9994, %v9994
    %v10003 = vcombine.high %v10001, %v10001
    %v10004 = vcombine.high %v9652, %v9652
    %v10006 = vunpack.c.l.s4 1983009808
    %v10007 = vunpack.c.0.s8 %v10006
    %v10008 = vlaneseq
    %v10009 = vshrl.u32 %v10008, 7
    %v10010 = vsub.s32 %v10007, %v10009
    %v10011 = vrot.slane %v9652, %v10010
    %v10013 = vunpack.c.l.s4 1983009808
    %v10014 = vunpack.c.0.s8 %v10013
    %v10015 = vlaneseq
    %v10016 = vshrl.u32 %v10015, 7
    %v10017 = vsub.s32 %v10014, %v10016
    %v10018 = vrot.slane %v10004, %v10017
    %v10019 = vcombine.high %v10011, %v10011
    %v10020 = vcombine.high %v10018, %v10018
    %v10021 = vcombine.high %v9653, %v9653
    %v10023 = vunpack.c.l.s4 1983009808
    %v10024 = vunpack.c.0.s8 %v10023
    %v10025 = vlaneseq
    %v10026 = vshrl.u32 %v10025, 7
    %v10027 = vsub.s32 %v10024, %v10026
    %v10028 = vrot.slane %v9653, %v10027
    %v10030 = vunpack.c.l.s4 1983009808
    %v10031 = vunpack.c.0.s8 %v10030
    %v10032 = vlaneseq
    %v10033 = vshrl.u32 %v10032, 7
    %v10034 = vsub.s32 %v10031, %v10033
    %v10035 = vrot.slane %v10021, %v10034
    %v10036 = vcombine.high %v10028, %v10028
    %v10037 = vcombine.high %v10035, %v10035
    %v10038 = vcombine.high %v9654, %v9654
    %v10040 = vunpack.c.l.s4 1983009808
    %v10041 = vunpack.c.0.s8 %v10040
    %v10042 = vlaneseq
    %v10043 = vshrl.u32 %v10042, 7
    %v10044 = vsub.s32 %v10041, %v10043
    %v10045 = vrot.slane %v9654, %v10044
    %v10047 = vunpack.c.l.s4 1983009808
    %v10048 = vunpack.c.0.s8 %v10047
    %v10049 = vlaneseq
    %v10050 = vshrl.u32 %v10049, 7
    %v10051 = vsub.s32 %v10048, %v10050
    %v10052 = vrot.slane %v10038, %v10051
    %v10053 = vcombine.high %v10045, %v10045
    %v10054 = vcombine.high %v10052, %v10052
    %v10055 = vcombine.high %v9655, %v9655
    %v10057 = vunpack.c.l.s4 1983009808
    %v10058 = vunpack.c.0.s8 %v10057
    %v10059 = vlaneseq
    %v10060 = vshrl.u32 %v10059, 7
    %v10061 = vsub.s32 %v10058, %v10060
    %v10062 = vrot.slane %v9655, %v10061
    %v10064 = vunpack.c.l.s4 1983009808
    %v10065 = vunpack.c.0.s8 %v10064
    %v10066 = vlaneseq
    %v10067 = vshrl.u32 %v10066, 7
    %v10068 = vsub.s32 %v10065, %v10067
    %v10069 = vrot.slane %v10055, %v10068
    %v10070 = vcombine.high %v10062, %v10062
    %v10071 = vcombine.high %v10069, %v10069
    %v10072 = vcombine.high %v9656, %v9656
    %v10074 = vunpack.c.l.s4 1983009808
    %v10075 = vunpack.c.0.s8 %v10074
    %v10076 = vlaneseq
    %v10077 = vshrl.u32 %v10076, 7
    %v10078 = vsub.s32 %v10075, %v10077
    %v10079 = vrot.slane %v9656, %v10078
    %v10081 = vunpack.c.l.s4 1983009808
    %v10082 = vunpack.c.0.s8 %v10081
    %v10083 = vlaneseq
    %v10084 = vshrl.u32 %v10083, 7
    %v10085 = vsub.s32 %v10082, %v10084
    %v10086 = vrot.slane %v10072, %v10085
    %v10087 = vcombine.high %v10079, %v10079
    %v10088 = vcombine.high %v10086, %v10086
    %v10089 = vcombine.high %v9657, %v9657
    %v10091 = vunpack.c.l.s4 1983009808
    %v10092 = vunpack.c.0.s8 %v10091
    %v10093 = vlaneseq
    %v10094 = vshrl.u32 %v10093, 7
    %v10095 = vsub.s32 %v10092, %v10094
    %v10096 = vrot.slane %v9657, %v10095
    %v10098 = vunpack.c.l.s4 1983009808
    %v10099 = vunpack.c.0.s8 %v10098
    %v10100 = vlaneseq
    %v10101 = vshrl.u32 %v10100, 7
    %v10102 = vsub.s32 %v10099, %v10101
    %v10103 = vrot.slane %v10089, %v10102
    %v10104 = vcombine.high %v10096, %v10096
    %v10105 = vcombine.high %v10103, %v10103
    %v10106 = vcombine.high %v9658, %v9658
    %v10108 = vunpack.c.l.s4 1983009808
    %v10109 = vunpack.c.0.s8 %v10108
    %v10110 = vlaneseq
    %v10111 = vshrl.u32 %v10110, 7
    %v10112 = vsub.s32 %v10109, %v10111
    %v10113 = vrot.slane %v9658, %v10112
    %v10115 = vunpack.c.l.s4 1983009808
    %v10116 = vunpack.c.0.s8 %v10115
    %v10117 = vlaneseq
    %v10118 = vshrl.u32 %v10117, 7
    %v10119 = vsub.s32 %v10116, %v10118
    %v10120 = vrot.slane %v10106, %v10119
    %v10121 = vcombine.high %v10113, %v10113
    %v10122 = vcombine.high %v10120, %v10120
    %v10123 = vcombine.high %v9659, %v9659
    %v10125 = vunpack.c.l.s4 1983009808
    %v10126 = vunpack.c.0.s8 %v10125
    %v10127 = vlaneseq
    %v10128 = vshrl.u32 %v10127, 7
    %v10129 = vsub.s32 %v10126, %v10128
    %v10130 = vrot.slane %v9659, %v10129
    %v10132 = vunpack.c.l.s4 1983009808
    %v10133 = vunpack.c.0.s8 %v10132
    %v10134 = vlaneseq
    %v10135 = vshrl.u32 %v10134, 7
    %v10136 = vsub.s32 %v10133, %v10135
    %v10137 = vrot.slane %v10123, %v10136
    %v10138 = vcombine.high %v10130, %v10130
    %v10139 = vcombine.high %v10137, %v10137
    %v10140 = vcombine.high %v9660, %v9660
    %v10142 = vunpack.c.l.s4 1983009808
    %v10143 = vunpack.c.0.s8 %v10142
    %v10144 = vlaneseq
    %v10145 = vshrl.u32 %v10144, 7
    %v10146 = vsub.s32 %v10143, %v10145
    %v10147 = vrot.slane %v9660, %v10146
    %v10149 = vunpack.c.l.s4 1983009808
    %v10150 = vunpack.c.0.s8 %v10149
    %v10151 = vlaneseq
    %v10152 = vshrl.u32 %v10151, 7
    %v10153 = vsub.s32 %v10150, %v10152
    %v10154 = vrot.slane %v10140, %v10153
    %v10155 = vcombine.high %v10147, %v10147
    %v10156 = vcombine.high %v10154, %v10154
    %v10157 = vcombine.high %v9661, %v9661
    %v10159 = vunpack.c.l.s4 1983009808
    %v10160 = vunpack.c.0.s8 %v10159
    %v10161 = vlaneseq
    %v10162 = vshrl.u32 %v10161, 7
    %v10163 = vsub.s32 %v10160, %v10162
    %v10164 = vrot.slane %v9661, %v10163
    %v10166 = vunpack.c.l.s4 1983009808
    %v10167 = vunpack.c.0.s8 %v10166
    %v10168 = vlaneseq
    %v10169 = vshrl.u32 %v10168, 7
    %v10170 = vsub.s32 %v10167, %v10169
    %v10171 = vrot.slane %v10157, %v10170
    %v10172 = vcombine.high %v10164, %v10164
    %v10173 = vcombine.high %v10171, %v10171
    %v10174 = vcombine.high %v9662, %v9662
    %v10176 = vunpack.c.l.s4 1983009808
    %v10177 = vunpack.c.0.s8 %v10176
    %v10178 = vlaneseq
    %v10179 = vshrl.u32 %v10178, 7
    %v10180 = vsub.s32 %v10177, %v10179
    %v10181 = vrot.slane %v9662, %v10180
    %v10183 = vunpack.c.l.s4 1983009808
    %v10184 = vunpack.c.0.s8 %v10183
    %v10185 = vlaneseq
    %v10186 = vshrl.u32 %v10185, 7
    %v10187 = vsub.s32 %v10184, %v10186
    %v10188 = vrot.slane %v10174, %v10187
    %v10189 = vcombine.high %v10181, %v10181
    %v10190 = vcombine.high %v10188, %v10188
    %v10191 = vcombine.high %v9663, %v9663
    %v10193 = vunpack.c.l.s4 1983009808
    %v10194 = vunpack.c.0.s8 %v10193
    %v10195 = vlaneseq
    %v10196 = vshrl.u32 %v10195, 7
    %v10197 = vsub.s32 %v10194, %v10196
    %v10198 = vrot.slane %v9663, %v10197
    %v10200 = vunpack.c.l.s4 1983009808
    %v10201 = vunpack.c.0.s8 %v10200
    %v10202 = vlaneseq
    %v10203 = vshrl.u32 %v10202, 7
    %v10204 = vsub.s32 %v10201, %v10203
    %v10205 = vrot.slane %v10191, %v10204
    %v10206 = vcombine.high %v10198, %v10198
    %v10207 = vcombine.high %v10205, %v10205
    %v10208 = vcombine.high %v9664, %v9664
    %v10210 = vunpack.c.l.s4 1983009808
    %v10211 = vunpack.c.0.s8 %v10210
    %v10212 = vlaneseq
    %v10213 = vshrl.u32 %v10212, 7
    %v10214 = vsub.s32 %v10211, %v10213
    %v10215 = vrot.slane %v9664, %v10214
    %v10217 = vunpack.c.l.s4 1983009808
    %v10218 = vunpack.c.0.s8 %v10217
    %v10219 = vlaneseq
    %v10220 = vshrl.u32 %v10219, 7
    %v10221 = vsub.s32 %v10218, %v10220
    %v10222 = vrot.slane %v10208, %v10221
    %v10223 = vcombine.high %v10215, %v10215
    %v10224 = vcombine.high %v10222, %v10222
    %v10225 = vcombine.high %v9665, %v9665
    %v10227 = vunpack.c.l.s4 1983009808
    %v10228 = vunpack.c.0.s8 %v10227
    %v10229 = vlaneseq
    %v10230 = vshrl.u32 %v10229, 7
    %v10231 = vsub.s32 %v10228, %v10230
    %v10232 = vrot.slane %v9665, %v10231
    %v10234 = vunpack.c.l.s4 1983009808
    %v10235 = vunpack.c.0.s8 %v10234
    %v10236 = vlaneseq
    %v10237 = vshrl.u32 %v10236, 7
    %v10238 = vsub.s32 %v10235, %v10237
    %v10239 = vrot.slane %v10225, %v10238
    %v10240 = vcombine.high %v10232, %v10232
    %v10241 = vcombine.high %v10239, %v10239
    %v10242 = vcombine.high %v9666, %v9666
    %v10244 = vunpack.c.l.s4 1983009808
    %v10245 = vunpack.c.0.s8 %v10244
    %v10246 = vlaneseq
    %v10247 = vshrl.u32 %v10246, 7
    %v10248 = vsub.s32 %v10245, %v10247
    %v10249 = vrot.slane %v9666, %v10248
    %v10251 = vunpack.c.l.s4 1983009808
    %v10252 = vunpack.c.0.s8 %v10251
    %v10253 = vlaneseq
    %v10254 = vshrl.u32 %v10253, 7
    %v10255 = vsub.s32 %v10252, %v10254
    %v10256 = vrot.slane %v10242, %v10255
    %v10257 = vcombine.high %v10249, %v10249
    %v10258 = vcombine.high %v10256, %v10256
    %v10259 = vcombine.high %v9667, %v9667
    %v10261 = vunpack.c.l.s4 1983009808
    %v10262 = vunpack.c.0.s8 %v10261
    %v10263 = vlaneseq
    %v10264 = vshrl.u32 %v10263, 7
    %v10265 = vsub.s32 %v10262, %v10264
    %v10266 = vrot.slane %v9667, %v10265
    %v10268 = vunpack.c.l.s4 1983009808
    %v10269 = vunpack.c.0.s8 %v10268
    %v10270 = vlaneseq
    %v10271 = vshrl.u32 %v10270, 7
    %v10272 = vsub.s32 %v10269, %v10271
    %v10273 = vrot.slane %v10259, %v10272
    %v10274 = vcombine.high %v10266, %v10266
    %v10275 = vcombine.high %v10273, %v10273
    %v10276 = vcombine.high %v9668, %v9668
    %v10278 = vunpack.c.l.s4 1983009808
    %v10279 = vunpack.c.0.s8 %v10278
    %v10280 = vlaneseq
    %v10281 = vshrl.u32 %v10280, 7
    %v10282 = vsub.s32 %v10279, %v10281
    %v10283 = vrot.slane %v9668, %v10282
    %v10285 = vunpack.c.l.s4 1983009808
    %v10286 = vunpack.c.0.s8 %v10285
    %v10287 = vlaneseq
    %v10288 = vshrl.u32 %v10287, 7
    %v10289 = vsub.s32 %v10286, %v10288
    %v10290 = vrot.slane %v10276, %v10289
    %v10291 = vcombine.high %v10283, %v10283
    %v10292 = vcombine.high %v10290, %v10290
    %v10293 = vcombine.high %v9669, %v9669
    %v10295 = vunpack.c.l.s4 1983009808
    %v10296 = vunpack.c.0.s8 %v10295
    %v10297 = vlaneseq
    %v10298 = vshrl.u32 %v10297, 7
    %v10299 = vsub.s32 %v10296, %v10298
    %v10300 = vrot.slane %v9669, %v10299
    %v10302 = vunpack.c.l.s4 1983009808
    %v10303 = vunpack.c.0.s8 %v10302
    %v10304 = vlaneseq
    %v10305 = vshrl.u32 %v10304, 7
    %v10306 = vsub.s32 %v10303, %v10305
    %v10307 = vrot.slane %v10293, %v10306
    %v10308 = vcombine.high %v10300, %v10300
    %v10309 = vcombine.high %v10307, %v10307
    %v10310 = vcombine.high %v9670, %v9670
    %v10312 = vunpack.c.l.s4 1983009808
    %v10313 = vunpack.c.0.s8 %v10312
    %v10314 = vlaneseq
    %v10315 = vshrl.u32 %v10314, 7
    %v10316 = vsub.s32 %v10313, %v10315
    %v10317 = vrot.slane %v9670, %v10316
    %v10319 = vunpack.c.l.s4 1983009808
    %v10320 = vunpack.c.0.s8 %v10319
    %v10321 = vlaneseq
    %v10322 = vshrl.u32 %v10321, 7
    %v10323 = vsub.s32 %v10320, %v10322
    %v10324 = vrot.slane %v10310, %v10323
    %v10325 = vcombine.high %v10317, %v10317
    %v10326 = vcombine.high %v10324, %v10324
    %v10327 = vcombine.high %v9671, %v9671
    %v10329 = vunpack.c.l.s4 1983009808
    %v10330 = vunpack.c.0.s8 %v10329
    %v10331 = vlaneseq
    %v10332 = vshrl.u32 %v10331, 7
    %v10333 = vsub.s32 %v10330, %v10332
    %v10334 = vrot.slane %v9671, %v10333
    %v10336 = vunpack.c.l.s4 1983009808
    %v10337 = vunpack.c.0.s8 %v10336
    %v10338 = vlaneseq
    %v10339 = vshrl.u32 %v10338, 7
    %v10340 = vsub.s32 %v10337, %v10339
    %v10341 = vrot.slane %v10327, %v10340
    %v10342 = vcombine.high %v10334, %v10334
    %v10343 = vcombine.high %v10341, %v10341
    %v10344 = vcombine.high %v9672, %v9672
    %v10346 = vunpack.c.l.s4 1983009808
    %v10347 = vunpack.c.0.s8 %v10346
    %v10348 = vlaneseq
    %v10349 = vshrl.u32 %v10348, 7
    %v10350 = vsub.s32 %v10347, %v10349
    %v10351 = vrot.slane %v9672, %v10350
    %v10353 = vunpack.c.l.s4 1983009808
    %v10354 = vunpack.c.0.s8 %v10353
    %v10355 = vlaneseq
    %v10356 = vshrl.u32 %v10355, 7
    %v10357 = vsub.s32 %v10354, %v10356
    %v10358 = vrot.slane %v10344, %v10357
    %v10359 = vcombine.high %v10351, %v10351
    %v10360 = vcombine.high %v10358, %v10358
    %v10361 = vcombine.high %v9673, %v9673
    %v10363 = vunpack.c.l.s4 1983009808
    %v10364 = vunpack.c.0.s8 %v10363
    %v10365 = vlaneseq
    %v10366 = vshrl.u32 %v10365, 7
    %v10367 = vsub.s32 %v10364, %v10366
    %v10368 = vrot.slane %v9673, %v10367
    %v10370 = vunpack.c.l.s4 1983009808
    %v10371 = vunpack.c.0.s8 %v10370
    %v10372 = vlaneseq
    %v10373 = vshrl.u32 %v10372, 7
    %v10374 = vsub.s32 %v10371, %v10373
    %v10375 = vrot.slane %v10361, %v10374
    %v10376 = vcombine.high %v10368, %v10368
    %v10377 = vcombine.high %v10375, %v10375
    %v10378 = vcombine.high %v9674, %v9674
    %v10380 = vunpack.c.l.s4 1983009808
    %v10381 = vunpack.c.0.s8 %v10380
    %v10382 = vlaneseq
    %v10383 = vshrl.u32 %v10382, 7
    %v10384 = vsub.s32 %v10381, %v10383
    %v10385 = vrot.slane %v9674, %v10384
    %v10387 = vunpack.c.l.s4 1983009808
    %v10388 = vunpack.c.0.s8 %v10387
    %v10389 = vlaneseq
    %v10390 = vshrl.u32 %v10389, 7
    %v10391 = vsub.s32 %v10388, %v10390
    %v10392 = vrot.slane %v10378, %v10391
    %v10393 = vcombine.high %v10385, %v10385
    %v10394 = vcombine.high %v10392, %v10392
    %v10395 = vcombine.high %v9675, %v9675
    %v10397 = vunpack.c.l.s4 1983009808
    %v10398 = vunpack.c.0.s8 %v10397
    %v10399 = vlaneseq
    %v10400 = vshrl.u32 %v10399, 7
    %v10401 = vsub.s32 %v10398, %v10400
    %v10402 = vrot.slane %v9675, %v10401
    %v10404 = vunpack.c.l.s4 1983009808
    %v10405 = vunpack.c.0.s8 %v10404
    %v10406 = vlaneseq
    %v10407 = vshrl.u32 %v10406, 7
    %v10408 = vsub.s32 %v10405, %v10407
    %v10409 = vrot.slane %v10395, %v10408
    %v10410 = vcombine.high %v10402, %v10402
    %v10411 = vcombine.high %v10409, %v10409
    %v10412 = vcombine.high %v9676, %v9676
    %v10414 = vunpack.c.l.s4 1983009808
    %v10415 = vunpack.c.0.s8 %v10414
    %v10416 = vlaneseq
    %v10417 = vshrl.u32 %v10416, 7
    %v10418 = vsub.s32 %v10415, %v10417
    %v10419 = vrot.slane %v9676, %v10418
    %v10421 = vunpack.c.l.s4 1983009808
    %v10422 = vunpack.c.0.s8 %v10421
    %v10423 = vlaneseq
    %v10424 = vshrl.u32 %v10423, 7
    %v10425 = vsub.s32 %v10422, %v10424
    %v10426 = vrot.slane %v10412, %v10425
    %v10427 = vcombine.high %v10419, %v10419
    %v10428 = vcombine.high %v10426, %v10426
    %v10429 = vcombine.high %v9677, %v9677
    %v10431 = vunpack.c.l.s4 1983009808
    %v10432 = vunpack.c.0.s8 %v10431
    %v10433 = vlaneseq
    %v10434 = vshrl.u32 %v10433, 7
    %v10435 = vsub.s32 %v10432, %v10434
    %v10436 = vrot.slane %v9677, %v10435
    %v10438 = vunpack.c.l.s4 1983009808
    %v10439 = vunpack.c.0.s8 %v10438
    %v10440 = vlaneseq
    %v10441 = vshrl.u32 %v10440, 7
    %v10442 = vsub.s32 %v10439, %v10441
    %v10443 = vrot.slane %v10429, %v10442
    %v10444 = vcombine.high %v10436, %v10436
    %v10445 = vcombine.high %v10443, %v10443
    %v10446 = vcombine.high %v9678, %v9678
    %v10448 = vunpack.c.l.s4 1983009808
    %v10449 = vunpack.c.0.s8 %v10448
    %v10450 = vlaneseq
    %v10451 = vshrl.u32 %v10450, 7
    %v10452 = vsub.s32 %v10449, %v10451
    %v10453 = vrot.slane %v9678, %v10452
    %v10455 = vunpack.c.l.s4 1983009808
    %v10456 = vunpack.c.0.s8 %v10455
    %v10457 = vlaneseq
    %v10458 = vshrl.u32 %v10457, 7
    %v10459 = vsub.s32 %v10456, %v10458
    %v10460 = vrot.slane %v10446, %v10459
    %v10461 = vcombine.high %v10453, %v10453
    %v10462 = vcombine.high %v10460, %v10460
    %v10463 = vcombine.high %v9679, %v9679
    %v10465 = vunpack.c.l.s4 1983009808
    %v10466 = vunpack.c.0.s8 %v10465
    %v10467 = vlaneseq
    %v10468 = vshrl.u32 %v10467, 7
    %v10469 = vsub.s32 %v10466, %v10468
    %v10470 = vrot.slane %v9679, %v10469
    %v10472 = vunpack.c.l.s4 1983009808
    %v10473 = vunpack.c.0.s8 %v10472
    %v10474 = vlaneseq
    %v10475 = vshrl.u32 %v10474, 7
    %v10476 = vsub.s32 %v10473, %v10475
    %v10477 = vrot.slane %v10463, %v10476
    %v10478 = vcombine.high %v10470, %v10470
    %v10479 = vcombine.high %v10477, %v10477
    %v10480 = vcombine.high %v9680, %v9680
    %v10482 = vunpack.c.l.s4 1983009808
    %v10483 = vunpack.c.0.s8 %v10482
    %v10484 = vlaneseq
    %v10485 = vshrl.u32 %v10484, 7
    %v10486 = vsub.s32 %v10483, %v10485
    %v10487 = vrot.slane %v9680, %v10486
    %v10489 = vunpack.c.l.s4 1983009808
    %v10490 = vunpack.c.0.s8 %v10489
    %v10491 = vlaneseq
    %v10492 = vshrl.u32 %v10491, 7
    %v10493 = vsub.s32 %v10490, %v10492
    %v10494 = vrot.slane %v10480, %v10493
    %v10495 = vcombine.high %v10487, %v10487
    %v10496 = vcombine.high %v10494, %v10494
    %v10497 = vcombine.high %v9681, %v9681
    %v10499 = vunpack.c.l.s4 1983009808
    %v10500 = vunpack.c.0.s8 %v10499
    %v10501 = vlaneseq
    %v10502 = vshrl.u32 %v10501, 7
    %v10503 = vsub.s32 %v10500, %v10502
    %v10504 = vrot.slane %v9681, %v10503
    %v10506 = vunpack.c.l.s4 1983009808
    %v10507 = vunpack.c.0.s8 %v10506
    %v10508 = vlaneseq
    %v10509 = vshrl.u32 %v10508, 7
    %v10510 = vsub.s32 %v10507, %v10509
    %v10511 = vrot.slane %v10497, %v10510
    %v10512 = vcombine.high %v10504, %v10504
    %v10513 = vcombine.high %v10511, %v10511
    %v10514 = vcombine.high %v9682, %v9682
    %v10516 = vunpack.c.l.s4 1983009808
    %v10517 = vunpack.c.0.s8 %v10516
    %v10518 = vlaneseq
    %v10519 = vshrl.u32 %v10518, 7
    %v10520 = vsub.s32 %v10517, %v10519
    %v10521 = vrot.slane %v9682, %v10520
    %v10523 = vunpack.c.l.s4 1983009808
    %v10524 = vunpack.c.0.s8 %v10523
    %v10525 = vlaneseq
    %v10526 = vshrl.u32 %v10525, 7
    %v10527 = vsub.s32 %v10524, %v10526
    %v10528 = vrot.slane %v10514, %v10527
    %v10529 = vcombine.high %v10521, %v10521
    %v10530 = vcombine.high %v10528, %v10528
    %v10531 = vcombine.high %v9683, %v9683
    %v10533 = vunpack.c.l.s4 1983009808
    %v10534 = vunpack.c.0.s8 %v10533
    %v10535 = vlaneseq
    %v10536 = vshrl.u32 %v10535, 7
    %v10537 = vsub.s32 %v10534, %v10536
    %v10538 = vrot.slane %v9683, %v10537
    %v10540 = vunpack.c.l.s4 1983009808
    %v10541 = vunpack.c.0.s8 %v10540
    %v10542 = vlaneseq
    %v10543 = vshrl.u32 %v10542, 7
    %v10544 = vsub.s32 %v10541, %v10543
    %v10545 = vrot.slane %v10531, %v10544
    %v10546 = vcombine.high %v10538, %v10538
    %v10547 = vcombine.high %v10545, %v10545
    %v10548 = vcombine.high %v9684, %v9684
    %v10550 = vunpack.c.l.s4 1983009808
    %v10551 = vunpack.c.0.s8 %v10550
    %v10552 = vlaneseq
    %v10553 = vshrl.u32 %v10552, 7
    %v10554 = vsub.s32 %v10551, %v10553
    %v10555 = vrot.slane %v9684, %v10554
    %v10557 = vunpack.c.l.s4 1983009808
    %v10558 = vunpack.c.0.s8 %v10557
    %v10559 = vlaneseq
    %v10560 = vshrl.u32 %v10559, 7
    %v10561 = vsub.s32 %v10558, %v10560
    %v10562 = vrot.slane %v10548, %v10561
    %v10563 = vcombine.high %v10555, %v10555
    %v10564 = vcombine.high %v10562, %v10562
    %v10565 = vcombine.high %v9685, %v9685
    %v10567 = vunpack.c.l.s4 1983009808
    %v10568 = vunpack.c.0.s8 %v10567
    %v10569 = vlaneseq
    %v10570 = vshrl.u32 %v10569, 7
    %v10571 = vsub.s32 %v10568, %v10570
    %v10572 = vrot.slane %v9685, %v10571
    %v10574 = vunpack.c.l.s4 1983009808
    %v10575 = vunpack.c.0.s8 %v10574
    %v10576 = vlaneseq
    %v10577 = vshrl.u32 %v10576, 7
    %v10578 = vsub.s32 %v10575, %v10577
    %v10579 = vrot.slane %v10565, %v10578
    %v10580 = vcombine.high %v10572, %v10572
    %v10581 = vcombine.high %v10579, %v10579
    %v10582 = vcombine.high %v9686, %v9686
    %v10584 = vunpack.c.l.s4 1983009808
    %v10585 = vunpack.c.0.s8 %v10584
    %v10586 = vlaneseq
    %v10587 = vshrl.u32 %v10586, 7
    %v10588 = vsub.s32 %v10585, %v10587
    %v10589 = vrot.slane %v9686, %v10588
    %v10591 = vunpack.c.l.s4 1983009808
    %v10592 = vunpack.c.0.s8 %v10591
    %v10593 = vlaneseq
    %v10594 = vshrl.u32 %v10593, 7
    %v10595 = vsub.s32 %v10592, %v10594
    %v10596 = vrot.slane %v10582, %v10595
    %v10597 = vcombine.high %v10589, %v10589
    %v10598 = vcombine.high %v10596, %v10596
    %v10599 = vcombine.high %v9687, %v9687
    %v10601 = vunpack.c.l.s4 1983009808
    %v10602 = vunpack.c.0.s8 %v10601
    %v10603 = vlaneseq
    %v10604 = vshrl.u32 %v10603, 7
    %v10605 = vsub.s32 %v10602, %v10604
    %v10606 = vrot.slane %v9687, %v10605
    %v10608 = vunpack.c.l.s4 1983009808
    %v10609 = vunpack.c.0.s8 %v10608
    %v10610 = vlaneseq
    %v10611 = vshrl.u32 %v10610, 7
    %v10612 = vsub.s32 %v10609, %v10611
    %v10613 = vrot.slane %v10599, %v10612
    %v10614 = vcombine.high %v10606, %v10606
    %v10615 = vcombine.high %v10613, %v10613
    %v10616 = vcombine.high %v9688, %v9688
    %v10618 = vunpack.c.l.s4 1983009808
    %v10619 = vunpack.c.0.s8 %v10618
    %v10620 = vlaneseq
    %v10621 = vshrl.u32 %v10620, 7
    %v10622 = vsub.s32 %v10619, %v10621
    %v10623 = vrot.slane %v9688, %v10622
    %v10625 = vunpack.c.l.s4 1983009808
    %v10626 = vunpack.c.0.s8 %v10625
    %v10627 = vlaneseq
    %v10628 = vshrl.u32 %v10627, 7
    %v10629 = vsub.s32 %v10626, %v10628
    %v10630 = vrot.slane %v10616, %v10629
    %v10631 = vcombine.high %v10623, %v10623
    %v10632 = vcombine.high %v10630, %v10630
    %v10633 = vcombine.high %v9689, %v9689
    %v10635 = vunpack.c.l.s4 1983009808
    %v10636 = vunpack.c.0.s8 %v10635
    %v10637 = vlaneseq
    %v10638 = vshrl.u32 %v10637, 7
    %v10639 = vsub.s32 %v10636, %v10638
    %v10640 = vrot.slane %v9689, %v10639
    %v10642 = vunpack.c.l.s4 1983009808
    %v10643 = vunpack.c.0.s8 %v10642
    %v10644 = vlaneseq
    %v10645 = vshrl.u32 %v10644, 7
    %v10646 = vsub.s32 %v10643, %v10645
    %v10647 = vrot.slane %v10633, %v10646
    %v10648 = vcombine.high %v10640, %v10640
    %v10649 = vcombine.high %v10647, %v10647
    %v10650 = vcombine.high %v9690, %v9690
    %v10652 = vunpack.c.l.s4 1983009808
    %v10653 = vunpack.c.0.s8 %v10652
    %v10654 = vlaneseq
    %v10655 = vshrl.u32 %v10654, 7
    %v10656 = vsub.s32 %v10653, %v10655
    %v10657 = vrot.slane %v9690, %v10656
    %v10659 = vunpack.c.l.s4 1983009808
    %v10660 = vunpack.c.0.s8 %v10659
    %v10661 = vlaneseq
    %v10662 = vshrl.u32 %v10661, 7
    %v10663 = vsub.s32 %v10660, %v10662
    %v10664 = vrot.slane %v10650, %v10663
    %v10665 = vcombine.high %v10657, %v10657
    %v10666 = vcombine.high %v10664, %v10664
    %v10667 = vcombine.high %v9691, %v9691
    %v10669 = vunpack.c.l.s4 1983009808
    %v10670 = vunpack.c.0.s8 %v10669
    %v10671 = vlaneseq
    %v10672 = vshrl.u32 %v10671, 7
    %v10673 = vsub.s32 %v10670, %v10672
    %v10674 = vrot.slane %v9691, %v10673
    %v10676 = vunpack.c.l.s4 1983009808
    %v10677 = vunpack.c.0.s8 %v10676
    %v10678 = vlaneseq
    %v10679 = vshrl.u32 %v10678, 7
    %v10680 = vsub.s32 %v10677, %v10679
    %v10681 = vrot.slane %v10667, %v10680
    %v10682 = vcombine.high %v10674, %v10674
    %v10683 = vcombine.high %v10681, %v10681
    %v10684 = vcombine.high %v9692, %v9692
    %v10686 = vunpack.c.l.s4 1983009808
    %v10687 = vunpack.c.0.s8 %v10686
    %v10688 = vlaneseq
    %v10689 = vshrl.u32 %v10688, 7
    %v10690 = vsub.s32 %v10687, %v10689
    %v10691 = vrot.slane %v9692, %v10690
    %v10693 = vunpack.c.l.s4 1983009808
    %v10694 = vunpack.c.0.s8 %v10693
    %v10695 = vlaneseq
    %v10696 = vshrl.u32 %v10695, 7
    %v10697 = vsub.s32 %v10694, %v10696
    %v10698 = vrot.slane %v10684, %v10697
    %v10699 = vcombine.high %v10691, %v10691
    %v10700 = vcombine.high %v10698, %v10698
    %v10701 = vcombine.high %v9693, %v9693
    %v10703 = vunpack.c.l.s4 1983009808
    %v10704 = vunpack.c.0.s8 %v10703
    %v10705 = vlaneseq
    %v10706 = vshrl.u32 %v10705, 7
    %v10707 = vsub.s32 %v10704, %v10706
    %v10708 = vrot.slane %v9693, %v10707
    %v10710 = vunpack.c.l.s4 1983009808
    %v10711 = vunpack.c.0.s8 %v10710
    %v10712 = vlaneseq
    %v10713 = vshrl.u32 %v10712, 7
    %v10714 = vsub.s32 %v10711, %v10713
    %v10715 = vrot.slane %v10701, %v10714
    %v10716 = vcombine.high %v10708, %v10708
    %v10717 = vcombine.high %v10715, %v10715
    %v10718 = vcombine.high %v9694, %v9694
    %v10720 = vunpack.c.l.s4 1983009808
    %v10721 = vunpack.c.0.s8 %v10720
    %v10722 = vlaneseq
    %v10723 = vshrl.u32 %v10722, 7
    %v10724 = vsub.s32 %v10721, %v10723
    %v10725 = vrot.slane %v9694, %v10724
    %v10727 = vunpack.c.l.s4 1983009808
    %v10728 = vunpack.c.0.s8 %v10727
    %v10729 = vlaneseq
    %v10730 = vshrl.u32 %v10729, 7
    %v10731 = vsub.s32 %v10728, %v10730
    %v10732 = vrot.slane %v10718, %v10731
    %v10733 = vcombine.high %v10725, %v10725
    %v10734 = vcombine.high %v10732, %v10732
    %v10735 = vcombine.high %v9695, %v9695
    %v10737 = vunpack.c.l.s4 1983009808
    %v10738 = vunpack.c.0.s8 %v10737
    %v10739 = vlaneseq
    %v10740 = vshrl.u32 %v10739, 7
    %v10741 = vsub.s32 %v10738, %v10740
    %v10742 = vrot.slane %v9695, %v10741
    %v10744 = vunpack.c.l.s4 1983009808
    %v10745 = vunpack.c.0.s8 %v10744
    %v10746 = vlaneseq
    %v10747 = vshrl.u32 %v10746, 7
    %v10748 = vsub.s32 %v10745, %v10747
    %v10749 = vrot.slane %v10735, %v10748
    %v10750 = vcombine.high %v10742, %v10742
    %v10751 = vcombine.high %v10749, %v10749
    %v10752 = vcombine.high %v9696, %v9696
    %v10754 = vunpack.c.l.s4 1983009808
    %v10755 = vunpack.c.0.s8 %v10754
    %v10756 = vlaneseq
    %v10757 = vshrl.u32 %v10756, 7
    %v10758 = vsub.s32 %v10755, %v10757
    %v10759 = vrot.slane %v9696, %v10758
    %v10761 = vunpack.c.l.s4 1983009808
    %v10762 = vunpack.c.0.s8 %v10761
    %v10763 = vlaneseq
    %v10764 = vshrl.u32 %v10763, 7
    %v10765 = vsub.s32 %v10762, %v10764
    %v10766 = vrot.slane %v10752, %v10765
    %v10767 = vcombine.high %v10759, %v10759
    %v10768 = vcombine.high %v10766, %v10766
    %v10769 = vcombine.high %v9697, %v9697
    %v10771 = vunpack.c.l.s4 1983009808
    %v10772 = vunpack.c.0.s8 %v10771
    %v10773 = vlaneseq
    %v10774 = vshrl.u32 %v10773, 7
    %v10775 = vsub.s32 %v10772, %v10774
    %v10776 = vrot.slane %v9697, %v10775
    %v10778 = vunpack.c.l.s4 1983009808
    %v10779 = vunpack.c.0.s8 %v10778
    %v10780 = vlaneseq
    %v10781 = vshrl.u32 %v10780, 7
    %v10782 = vsub.s32 %v10779, %v10781
    %v10783 = vrot.slane %v10769, %v10782
    %v10784 = vcombine.high %v10776, %v10776
    %v10785 = vcombine.high %v10783, %v10783
    %v10786 = vcombine.high %v9698, %v9698
    %v10788 = vunpack.c.l.s4 1983009808
    %v10789 = vunpack.c.0.s8 %v10788
    %v10790 = vlaneseq
    %v10791 = vshrl.u32 %v10790, 7
    %v10792 = vsub.s32 %v10789, %v10791
    %v10793 = vrot.slane %v9698, %v10792
    %v10795 = vunpack.c.l.s4 1983009808
    %v10796 = vunpack.c.0.s8 %v10795
    %v10797 = vlaneseq
    %v10798 = vshrl.u32 %v10797, 7
    %v10799 = vsub.s32 %v10796, %v10798
    %v10800 = vrot.slane %v10786, %v10799
    %v10801 = vcombine.high %v10793, %v10793
    %v10802 = vcombine.high %v10800, %v10800
    %v10803 = vcombine.high %v9699, %v9699
    %v10805 = vunpack.c.l.s4 1983009808
    %v10806 = vunpack.c.0.s8 %v10805
    %v10807 = vlaneseq
    %v10808 = vshrl.u32 %v10807, 7
    %v10809 = vsub.s32 %v10806, %v10808
    %v10810 = vrot.slane %v9699, %v10809
    %v10812 = vunpack.c.l.s4 1983009808
    %v10813 = vunpack.c.0.s8 %v10812
    %v10814 = vlaneseq
    %v10815 = vshrl.u32 %v10814, 7
    %v10816 = vsub.s32 %v10813, %v10815
    %v10817 = vrot.slane %v10803, %v10816
    %v10818 = vcombine.high %v10810, %v10810
    %v10819 = vcombine.high %v10817, %v10817
    %v10820 = vcombine.high %v9700, %v9700
    %v10822 = vunpack.c.l.s4 1983009808
    %v10823 = vunpack.c.0.s8 %v10822
    %v10824 = vlaneseq
    %v10825 = vshrl.u32 %v10824, 7
    %v10826 = vsub.s32 %v10823, %v10825
    %v10827 = vrot.slane %v9700, %v10826
    %v10829 = vunpack.c.l.s4 1983009808
    %v10830 = vunpack.c.0.s8 %v10829
    %v10831 = vlaneseq
    %v10832 = vshrl.u32 %v10831, 7
    %v10833 = vsub.s32 %v10830, %v10832
    %v10834 = vrot.slane %v10820, %v10833
    %v10835 = vcombine.high %v10827, %v10827
    %v10836 = vcombine.high %v10834, %v10834
    %v10837 = vcombine.high %v9701, %v9701
    %v10839 = vunpack.c.l.s4 1983009808
    %v10840 = vunpack.c.0.s8 %v10839
    %v10841 = vlaneseq
    %v10842 = vshrl.u32 %v10841, 7
    %v10843 = vsub.s32 %v10840, %v10842
    %v10844 = vrot.slane %v9701, %v10843
    %v10846 = vunpack.c.l.s4 1983009808
    %v10847 = vunpack.c.0.s8 %v10846
    %v10848 = vlaneseq
    %v10849 = vshrl.u32 %v10848, 7
    %v10850 = vsub.s32 %v10847, %v10849
    %v10851 = vrot.slane %v10837, %v10850
    %v10852 = vcombine.high %v10844, %v10844
    %v10853 = vcombine.high %v10851, %v10851
    %v11110 = vsel %vm5412, %v9773, 0.0
    %v11111 = vsel %vm5412, %v9781, 0.0
    %v11112 = vadd.f32 %v11110, %v11111
    %v11113 = vsel %vm5412, %v9780, 0.0
    %v11114 = vadd.f32 %v11112, %v11113
    %v11115 = vsel %vm5412, %v9782, 0.0
    %v11116 = vadd.f32 %v11114, %v11115
    %v11117 = vsel %vm5412, %v9790, 0.0
    %v11118 = vadd.f32 %v11116, %v11117
    %v11119 = vsel %vm5412, %v9798, 0.0
    %v11120 = vadd.f32 %v11118, %v11119
    %v11121 = vsel %vm5412, %v9797, 0.0
    %v11122 = vadd.f32 %v11120, %v11121
    %v11123 = vsel %vm5412, %v9799, 0.0
    %v11124 = vadd.f32 %v11122, %v11123
    %v11125 = vsel %vm5412, %v9807, 0.0
    %v11126 = vadd.f32 %v11124, %v11125
    %v11127 = vsel %vm5412, %v9815, 0.0
    %v11128 = vadd.f32 %v11126, %v11127
    %v11129 = vsel %vm5412, %v9814, 0.0
    %v11130 = vadd.f32 %v11128, %v11129
    %v11131 = vsel %vm5412, %v9816, 0.0
    %v11132 = vadd.f32 %v11130, %v11131
    %v11133 = vsel %vm5412, %v9824, 0.0
    %v11134 = vadd.f32 %v11132, %v11133
    %v11135 = vsel %vm5412, %v9832, 0.0
    %v11136 = vadd.f32 %v11134, %v11135
    %v11137 = vsel %vm5412, %v9831, 0.0
    %v11138 = vadd.f32 %v11136, %v11137
    %v11139 = vsel %vm5412, %v9833, 0.0
    %v11140 = vadd.f32 %v11138, %v11139
    %v11141 = vsel %vm5412, %v9841, 0.0
    %v11142 = vadd.f32 %v11140, %v11141
    %v11143 = vsel %vm5412, %v9849, 0.0
    %v11144 = vadd.f32 %v11142, %v11143
    %v11145 = vsel %vm5412, %v9848, 0.0
    %v11146 = vadd.f32 %v11144, %v11145
    %v11147 = vsel %vm5412, %v9850, 0.0
    %v11148 = vadd.f32 %v11146, %v11147
    %v11149 = vsel %vm5412, %v9858, 0.0
    %v11150 = vadd.f32 %v11148, %v11149
    %v11151 = vsel %vm5412, %v9866, 0.0
    %v11152 = vadd.f32 %v11150, %v11151
    %v11153 = vsel %vm5412, %v9865, 0.0
    %v11154 = vadd.f32 %v11152, %v11153
    %v11155 = vsel %vm5412, %v9867, 0.0
    %v11156 = vadd.f32 %v11154, %v11155
    %v11157 = vsel %vm5412, %v9875, 0.0
    %v11158 = vadd.f32 %v11156, %v11157
    %v11159 = vsel %vm5412, %v9883, 0.0
    %v11160 = vadd.f32 %v11158, %v11159
    %v11161 = vsel %vm5412, %v9882, 0.0
    %v11162 = vadd.f32 %v11160, %v11161
    %v11163 = vsel %vm5412, %v9884, 0.0
    %v11164 = vadd.f32 %v11162, %v11163
    %v11165 = vsel %vm5412, %v9892, 0.0
    %v11166 = vadd.f32 %v11164, %v11165
    %v11167 = vsel %vm5412, %v9900, 0.0
    %v11168 = vadd.f32 %v11166, %v11167
    %v11169 = vsel %vm5412, %v9899, 0.0
    %v11170 = vadd.f32 %v11168, %v11169
    %v11171 = vsel %vm5412, %v9901, 0.0
    %v11172 = vadd.f32 %v11170, %v11171
    %v11173 = vsel %vm5412, %v9909, 0.0
    %v11174 = vadd.f32 %v11172, %v11173
    %v11175 = vsel %vm5412, %v9917, 0.0
    %v11176 = vadd.f32 %v11174, %v11175
    %v11177 = vsel %vm5412, %v9916, 0.0
    %v11178 = vadd.f32 %v11176, %v11177
    %v11179 = vsel %vm5412, %v9918, 0.0
    %v11180 = vadd.f32 %v11178, %v11179
    %v11181 = vsel %vm5412, %v9926, 0.0
    %v11182 = vadd.f32 %v11180, %v11181
    %v11183 = vsel %vm5412, %v9934, 0.0
    %v11184 = vadd.f32 %v11182, %v11183
    %v11185 = vsel %vm5412, %v9933, 0.0
    %v11186 = vadd.f32 %v11184, %v11185
    %v11187 = vsel %vm5412, %v9935, 0.0
    %v11188 = vadd.f32 %v11186, %v11187
    %v11189 = vsel %vm5412, %v9943, 0.0
    %v11190 = vadd.f32 %v11188, %v11189
    %v11191 = vsel %vm5412, %v9951, 0.0
    %v11192 = vadd.f32 %v11190, %v11191
    %v11193 = vsel %vm5412, %v9950, 0.0
    %v11194 = vadd.f32 %v11192, %v11193
    %v11195 = vsel %vm5412, %v9952, 0.0
    %v11196 = vadd.f32 %v11194, %v11195
    %v11197 = vsel %vm5412, %v9960, 0.0
    %v11198 = vadd.f32 %v11196, %v11197
    %v11199 = vsel %vm5412, %v9968, 0.0
    %v11200 = vadd.f32 %v11198, %v11199
    %v11201 = vsel %vm5412, %v9967, 0.0
    %v11202 = vadd.f32 %v11200, %v11201
    %v11203 = vsel %vm5412, %v9969, 0.0
    %v11204 = vadd.f32 %v11202, %v11203
    %v11205 = vsel %vm5412, %v9977, 0.0
    %v11206 = vadd.f32 %v11204, %v11205
    %v11207 = vsel %vm5412, %v9985, 0.0
    %v11208 = vadd.f32 %v11206, %v11207
    %v11209 = vsel %vm5412, %v9984, 0.0
    %v11210 = vadd.f32 %v11208, %v11209
    %v11211 = vsel %vm5412, %v9986, 0.0
    %v11212 = vadd.f32 %v11210, %v11211
    %v11213 = vsel %vm5412, %v9994, 0.0
    %v11214 = vadd.f32 %v11212, %v11213
    %v11215 = vsel %vm5412, %v10002, 0.0
    %v11216 = vadd.f32 %v11214, %v11215
    %v11217 = vsel %vm5412, %v10001, 0.0
    %v11218 = vadd.f32 %v11216, %v11217
    %v11219 = vsel %vm5412, %v10003, 0.0
    %v11220 = vadd.f32 %v11218, %v11219
    %v11221 = vsel %vm5412, %v10011, 0.0
    %v11222 = vadd.f32 %v11220, %v11221
    %v11223 = vsel %vm5412, %v10019, 0.0
    %v11224 = vadd.f32 %v11222, %v11223
    %v11225 = vsel %vm5412, %v10018, 0.0
    %v11226 = vadd.f32 %v11224, %v11225
    %v11227 = vsel %vm5412, %v10020, 0.0
    %v11228 = vadd.f32 %v11226, %v11227
    %v11229 = vsel %vm5412, %v10028, 0.0
    %v11230 = vadd.f32 %v11228, %v11229
    %v11231 = vsel %vm5412, %v10036, 0.0
    %v11232 = vadd.f32 %v11230, %v11231
    %v11233 = vsel %vm5412, %v10035, 0.0
    %v11234 = vadd.f32 %v11232, %v11233
    %v11235 = vsel %vm5412, %v10037, 0.0
    %v11236 = vadd.f32 %v11234, %v11235
    %v11237 = vsel %vm5412, %v10045, 0.0
    %v11238 = vadd.f32 %v11236, %v11237
    %v11239 = vsel %vm5412, %v10053, 0.0
    %v11240 = vadd.f32 %v11238, %v11239
    %v11241 = vsel %vm5412, %v10052, 0.0
    %v11242 = vadd.f32 %v11240, %v11241
    %v11243 = vsel %vm5412, %v10054, 0.0
    %v11244 = vadd.f32 %v11242, %v11243
    %v11245 = vsel %vm5412, %v10062, 0.0
    %v11246 = vadd.f32 %v11244, %v11245
    %v11247 = vsel %vm5412, %v10070, 0.0
    %v11248 = vadd.f32 %v11246, %v11247
    %v11249 = vsel %vm5412, %v10069, 0.0
    %v11250 = vadd.f32 %v11248, %v11249
    %v11251 = vsel %vm5412, %v10071, 0.0
    %v11252 = vadd.f32 %v11250, %v11251
    %v11253 = vsel %vm5412, %v10079, 0.0
    %v11254 = vadd.f32 %v11252, %v11253
    %v11255 = vsel %vm5412, %v10087, 0.0
    %v11256 = vadd.f32 %v11254, %v11255
    %v11257 = vsel %vm5412, %v10086, 0.0
    %v11258 = vadd.f32 %v11256, %v11257
    %v11259 = vsel %vm5412, %v10088, 0.0
    %v11260 = vadd.f32 %v11258, %v11259
    %v11261 = vsel %vm5412, %v10096, 0.0
    %v11262 = vadd.f32 %v11260, %v11261
    %v11263 = vsel %vm5412, %v10104, 0.0
    %v11264 = vadd.f32 %v11262, %v11263
    %v11265 = vsel %vm5412, %v10103, 0.0
    %v11266 = vadd.f32 %v11264, %v11265
    %v11267 = vsel %vm5412, %v10105, 0.0
    %v11268 = vadd.f32 %v11266, %v11267
    %v11269 = vsel %vm5412, %v10113, 0.0
    %v11270 = vadd.f32 %v11268, %v11269
    %v11271 = vsel %vm5412, %v10121, 0.0
    %v11272 = vadd.f32 %v11270, %v11271
    %v11273 = vsel %vm5412, %v10120, 0.0
    %v11274 = vadd.f32 %v11272, %v11273
    %v11275 = vsel %vm5412, %v10122, 0.0
    %v11276 = vadd.f32 %v11274, %v11275
    %v11277 = vsel %vm5412, %v10130, 0.0
    %v11278 = vadd.f32 %v11276, %v11277
    %v11279 = vsel %vm5412, %v10138, 0.0
    %v11280 = vadd.f32 %v11278, %v11279
    %v11281 = vsel %vm5412, %v10137, 0.0
    %v11282 = vadd.f32 %v11280, %v11281
    %v11283 = vsel %vm5412, %v10139, 0.0
    %v11284 = vadd.f32 %v11282, %v11283
    %v11285 = vsel %vm5412, %v10147, 0.0
    %v11286 = vadd.f32 %v11284, %v11285
    %v11287 = vsel %vm5412, %v10155, 0.0
    %v11288 = vadd.f32 %v11286, %v11287
    %v11289 = vsel %vm5412, %v10154, 0.0
    %v11290 = vadd.f32 %v11288, %v11289
    %v11291 = vsel %vm5412, %v10156, 0.0
    %v11292 = vadd.f32 %v11290, %v11291
    %v11293 = vsel %vm5412, %v10164, 0.0
    %v11294 = vadd.f32 %v11292, %v11293
    %v11295 = vsel %vm5412, %v10172, 0.0
    %v11296 = vadd.f32 %v11294, %v11295
    %v11297 = vsel %vm5412, %v10171, 0.0
    %v11298 = vadd.f32 %v11296, %v11297
    %v11299 = vsel %vm5412, %v10173, 0.0
    %v11300 = vadd.f32 %v11298, %v11299
    %v11301 = vsel %vm5412, %v10181, 0.0
    %v11302 = vadd.f32 %v11300, %v11301
    %v11303 = vsel %vm5412, %v10189, 0.0
    %v11304 = vadd.f32 %v11302, %v11303
    %v11305 = vsel %vm5412, %v10188, 0.0
    %v11306 = vadd.f32 %v11304, %v11305
    %v11307 = vsel %vm5412, %v10190, 0.0
    %v11308 = vadd.f32 %v11306, %v11307
    %v11309 = vsel %vm5412, %v10198, 0.0
    %v11310 = vadd.f32 %v11308, %v11309
    %v11311 = vsel %vm5412, %v10206, 0.0
    %v11312 = vadd.f32 %v11310, %v11311
    %v11313 = vsel %vm5412, %v10205, 0.0
    %v11314 = vadd.f32 %v11312, %v11313
    %v11315 = vsel %vm5412, %v10207, 0.0
    %v11316 = vadd.f32 %v11314, %v11315
    %v11317 = vsel %vm5412, %v10215, 0.0
    %v11318 = vadd.f32 %v11316, %v11317
    %v11319 = vsel %vm5412, %v10223, 0.0
    %v11320 = vadd.f32 %v11318, %v11319
    %v11321 = vsel %vm5412, %v10222, 0.0
    %v11322 = vadd.f32 %v11320, %v11321
    %v11323 = vsel %vm5412, %v10224, 0.0
    %v11324 = vadd.f32 %v11322, %v11323
    %v11325 = vsel %vm5412, %v10232, 0.0
    %v11326 = vadd.f32 %v11324, %v11325
    %v11327 = vsel %vm5412, %v10240, 0.0
    %v11328 = vadd.f32 %v11326, %v11327
    %v11329 = vsel %vm5412, %v10239, 0.0
    %v11330 = vadd.f32 %v11328, %v11329
    %v11331 = vsel %vm5412, %v10241, 0.0
    %v11332 = vadd.f32 %v11330, %v11331
    %v11333 = vsel %vm5412, %v10249, 0.0
    %v11334 = vadd.f32 %v11332, %v11333
    %v11335 = vsel %vm5412, %v10257, 0.0
    %v11336 = vadd.f32 %v11334, %v11335
    %v11337 = vsel %vm5412, %v10256, 0.0
    %v11338 = vadd.f32 %v11336, %v11337
    %v11339 = vsel %vm5412, %v10258, 0.0
    %v11340 = vadd.f32 %v11338, %v11339
    %v11341 = vsel %vm5412, %v10266, 0.0
    %v11342 = vadd.f32 %v11340, %v11341
    %v11343 = vsel %vm5412, %v10274, 0.0
    %v11344 = vadd.f32 %v11342, %v11343
    %v11345 = vsel %vm5412, %v10273, 0.0
    %v11346 = vadd.f32 %v11344, %v11345
    %v11347 = vsel %vm5412, %v10275, 0.0
    %v11348 = vadd.f32 %v11346, %v11347
    %v11349 = vsel %vm5412, %v10283, 0.0
    %v11350 = vadd.f32 %v11348, %v11349
    %v11351 = vsel %vm5412, %v10291, 0.0
    %v11352 = vadd.f32 %v11350, %v11351
    %v11353 = vsel %vm5412, %v10290, 0.0
    %v11354 = vadd.f32 %v11352, %v11353
    %v11355 = vsel %vm5412, %v10292, 0.0
    %v11356 = vadd.f32 %v11354, %v11355
    %v11357 = vsel %vm5412, %v10300, 0.0
    %v11358 = vadd.f32 %v11356, %v11357
    %v11359 = vsel %vm5412, %v10308, 0.0
    %v11360 = vadd.f32 %v11358, %v11359
    %v11361 = vsel %vm5412, %v10307, 0.0
    %v11362 = vadd.f32 %v11360, %v11361
    %v11363 = vsel %vm5412, %v10309, 0.0
    %v11364 = vadd.f32 %v11362, %v11363
    %v11365 = vsel %vm5412, %v10317, 0.0
    %v11366 = vadd.f32 %v11364, %v11365
    %v11367 = vsel %vm5412, %v10325, 0.0
    %v11368 = vadd.f32 %v11366, %v11367
    %v11369 = vsel %vm5412, %v10324, 0.0
    %v11370 = vadd.f32 %v11368, %v11369
    %v11371 = vsel %vm5412, %v10326, 0.0
    %v11372 = vadd.f32 %v11370, %v11371
    %v11373 = vsel %vm5412, %v10334, 0.0
    %v11374 = vadd.f32 %v11372, %v11373
    %v11375 = vsel %vm5412, %v10342, 0.0
    %v11376 = vadd.f32 %v11374, %v11375
    %v11377 = vsel %vm5412, %v10341, 0.0
    %v11378 = vadd.f32 %v11376, %v11377
    %v11379 = vsel %vm5412, %v10343, 0.0
    %v11380 = vadd.f32 %v11378, %v11379
    %v11381 = vsel %vm5412, %v10351, 0.0
    %v11382 = vadd.f32 %v11380, %v11381
    %v11383 = vsel %vm5412, %v10359, 0.0
    %v11384 = vadd.f32 %v11382, %v11383
    %v11385 = vsel %vm5412, %v10358, 0.0
    %v11386 = vadd.f32 %v11384, %v11385
    %v11387 = vsel %vm5412, %v10360, 0.0
    %v11388 = vadd.f32 %v11386, %v11387
    %v11389 = vsel %vm5412, %v10368, 0.0
    %v11390 = vadd.f32 %v11388, %v11389
    %v11391 = vsel %vm5412, %v10376, 0.0
    %v11392 = vadd.f32 %v11390, %v11391
    %v11393 = vsel %vm5412, %v10375, 0.0
    %v11394 = vadd.f32 %v11392, %v11393
    %v11395 = vsel %vm5412, %v10377, 0.0
    %v11396 = vadd.f32 %v11394, %v11395
    %v11397 = vsel %vm5412, %v10385, 0.0
    %v11398 = vadd.f32 %v11396, %v11397
    %v11399 = vsel %vm5412, %v10393, 0.0
    %v11400 = vadd.f32 %v11398, %v11399
    %v11401 = vsel %vm5412, %v10392, 0.0
    %v11402 = vadd.f32 %v11400, %v11401
    %v11403 = vsel %vm5412, %v10394, 0.0
    %v11404 = vadd.f32 %v11402, %v11403
    %v11405 = vsel %vm5412, %v10402, 0.0
    %v11406 = vadd.f32 %v11404, %v11405
    %v11407 = vsel %vm5412, %v10410, 0.0
    %v11408 = vadd.f32 %v11406, %v11407
    %v11409 = vsel %vm5412, %v10409, 0.0
    %v11410 = vadd.f32 %v11408, %v11409
    %v11411 = vsel %vm5412, %v10411, 0.0
    %v11412 = vadd.f32 %v11410, %v11411
    %v11413 = vsel %vm5412, %v10419, 0.0
    %v11414 = vadd.f32 %v11412, %v11413
    %v11415 = vsel %vm5412, %v10427, 0.0
    %v11416 = vadd.f32 %v11414, %v11415
    %v11417 = vsel %vm5412, %v10426, 0.0
    %v11418 = vadd.f32 %v11416, %v11417
    %v11419 = vsel %vm5412, %v10428, 0.0
    %v11420 = vadd.f32 %v11418, %v11419
    %v11421 = vsel %vm5412, %v10436, 0.0
    %v11422 = vadd.f32 %v11420, %v11421
    %v11423 = vsel %vm5412, %v10444, 0.0
    %v11424 = vadd.f32 %v11422, %v11423
    %v11425 = vsel %vm5412, %v10443, 0.0
    %v11426 = vadd.f32 %v11424, %v11425
    %v11427 = vsel %vm5412, %v10445, 0.0
    %v11428 = vadd.f32 %v11426, %v11427
    %v11429 = vsel %vm5412, %v10453, 0.0
    %v11430 = vadd.f32 %v11428, %v11429
    %v11431 = vsel %vm5412, %v10461, 0.0
    %v11432 = vadd.f32 %v11430, %v11431
    %v11433 = vsel %vm5412, %v10460, 0.0
    %v11434 = vadd.f32 %v11432, %v11433
    %v11435 = vsel %vm5412, %v10462, 0.0
    %v11436 = vadd.f32 %v11434, %v11435
    %v11437 = vsel %vm5412, %v10470, 0.0
    %v11438 = vadd.f32 %v11436, %v11437
    %v11439 = vsel %vm5412, %v10478, 0.0
    %v11440 = vadd.f32 %v11438, %v11439
    %v11441 = vsel %vm5412, %v10477, 0.0
    %v11442 = vadd.f32 %v11440, %v11441
    %v11443 = vsel %vm5412, %v10479, 0.0
    %v11444 = vadd.f32 %v11442, %v11443
    %v11445 = vsel %vm5412, %v10487, 0.0
    %v11446 = vadd.f32 %v11444, %v11445
    %v11447 = vsel %vm5412, %v10495, 0.0
    %v11448 = vadd.f32 %v11446, %v11447
    %v11449 = vsel %vm5412, %v10494, 0.0
    %v11450 = vadd.f32 %v11448, %v11449
    %v11451 = vsel %vm5412, %v10496, 0.0
    %v11452 = vadd.f32 %v11450, %v11451
    %v11453 = vsel %vm5412, %v10504, 0.0
    %v11454 = vadd.f32 %v11452, %v11453
    %v11455 = vsel %vm5412, %v10512, 0.0
    %v11456 = vadd.f32 %v11454, %v11455
    %v11457 = vsel %vm5412, %v10511, 0.0
    %v11458 = vadd.f32 %v11456, %v11457
    %v11459 = vsel %vm5412, %v10513, 0.0
    %v11460 = vadd.f32 %v11458, %v11459
    %v11461 = vsel %vm5412, %v10521, 0.0
    %v11462 = vadd.f32 %v11460, %v11461
    %v11463 = vsel %vm5412, %v10529, 0.0
    %v11464 = vadd.f32 %v11462, %v11463
    %v11465 = vsel %vm5412, %v10528, 0.0
    %v11466 = vadd.f32 %v11464, %v11465
    %v11467 = vsel %vm5412, %v10530, 0.0
    %v11468 = vadd.f32 %v11466, %v11467
    %v11469 = vsel %vm5412, %v10538, 0.0
    %v11470 = vadd.f32 %v11468, %v11469
    %v11471 = vsel %vm5412, %v10546, 0.0
    %v11472 = vadd.f32 %v11470, %v11471
    %v11473 = vsel %vm5412, %v10545, 0.0
    %v11474 = vadd.f32 %v11472, %v11473
    %v11475 = vsel %vm5412, %v10547, 0.0
    %v11476 = vadd.f32 %v11474, %v11475
    %v11477 = vsel %vm5412, %v10555, 0.0
    %v11478 = vadd.f32 %v11476, %v11477
    %v11479 = vsel %vm5412, %v10563, 0.0
    %v11480 = vadd.f32 %v11478, %v11479
    %v11481 = vsel %vm5412, %v10562, 0.0
    %v11482 = vadd.f32 %v11480, %v11481
    %v11483 = vsel %vm5412, %v10564, 0.0
    %v11484 = vadd.f32 %v11482, %v11483
    %v11485 = vsel %vm5412, %v10572, 0.0
    %v11486 = vadd.f32 %v11484, %v11485
    %v11487 = vsel %vm5412, %v10580, 0.0
    %v11488 = vadd.f32 %v11486, %v11487
    %v11489 = vsel %vm5412, %v10579, 0.0
    %v11490 = vadd.f32 %v11488, %v11489
    %v11491 = vsel %vm5412, %v10581, 0.0
    %v11492 = vadd.f32 %v11490, %v11491
    %v11493 = vsel %vm5412, %v10589, 0.0
    %v11494 = vadd.f32 %v11492, %v11493
    %v11495 = vsel %vm5412, %v10597, 0.0
    %v11496 = vadd.f32 %v11494, %v11495
    %v11497 = vsel %vm5412, %v10596, 0.0
    %v11498 = vadd.f32 %v11496, %v11497
    %v11499 = vsel %vm5412, %v10598, 0.0
    %v11500 = vadd.f32 %v11498, %v11499
    %v11501 = vsel %vm5412, %v10606, 0.0
    %v11502 = vadd.f32 %v11500, %v11501
    %v11503 = vsel %vm5412, %v10614, 0.0
    %v11504 = vadd.f32 %v11502, %v11503
    %v11505 = vsel %vm5412, %v10613, 0.0
    %v11506 = vadd.f32 %v11504, %v11505
    %v11507 = vsel %vm5412, %v10615, 0.0
    %v11508 = vadd.f32 %v11506, %v11507
    %v11509 = vsel %vm5412, %v10623, 0.0
    %v11510 = vadd.f32 %v11508, %v11509
    %v11511 = vsel %vm5412, %v10631, 0.0
    %v11512 = vadd.f32 %v11510, %v11511
    %v11513 = vsel %vm5412, %v10630, 0.0
    %v11514 = vadd.f32 %v11512, %v11513
    %v11515 = vsel %vm5412, %v10632, 0.0
    %v11516 = vadd.f32 %v11514, %v11515
    %v11517 = vsel %vm5412, %v10640, 0.0
    %v11518 = vadd.f32 %v11516, %v11517
    %v11519 = vsel %vm5412, %v10648, 0.0
    %v11520 = vadd.f32 %v11518, %v11519
    %v11521 = vsel %vm5412, %v10647, 0.0
    %v11522 = vadd.f32 %v11520, %v11521
    %v11523 = vsel %vm5412, %v10649, 0.0
    %v11524 = vadd.f32 %v11522, %v11523
    %v11525 = vsel %vm5412, %v10657, 0.0
    %v11526 = vadd.f32 %v11524, %v11525
    %v11527 = vsel %vm5412, %v10665, 0.0
    %v11528 = vadd.f32 %v11526, %v11527
    %v11529 = vsel %vm5412, %v10664, 0.0
    %v11530 = vadd.f32 %v11528, %v11529
    %v11531 = vsel %vm5412, %v10666, 0.0
    %v11532 = vadd.f32 %v11530, %v11531
    %v11533 = vsel %vm5412, %v10674, 0.0
    %v11534 = vadd.f32 %v11532, %v11533
    %v11535 = vsel %vm5412, %v10682, 0.0
    %v11536 = vadd.f32 %v11534, %v11535
    %v11537 = vsel %vm5412, %v10681, 0.0
    %v11538 = vadd.f32 %v11536, %v11537
    %v11539 = vsel %vm5412, %v10683, 0.0
    %v11540 = vadd.f32 %v11538, %v11539
    %v11541 = vsel %vm5412, %v10691, 0.0
    %v11542 = vadd.f32 %v11540, %v11541
    %v11543 = vsel %vm5412, %v10699, 0.0
    %v11544 = vadd.f32 %v11542, %v11543
    %v11545 = vsel %vm5412, %v10698, 0.0
    %v11546 = vadd.f32 %v11544, %v11545
    %v11547 = vsel %vm5412, %v10700, 0.0
    %v11548 = vadd.f32 %v11546, %v11547
    %v11549 = vsel %vm5412, %v10708, 0.0
    %v11550 = vadd.f32 %v11548, %v11549
    %v11551 = vsel %vm5412, %v10716, 0.0
    %v11552 = vadd.f32 %v11550, %v11551
    %v11553 = vsel %vm5412, %v10715, 0.0
    %v11554 = vadd.f32 %v11552, %v11553
    %v11555 = vsel %vm5412, %v10717, 0.0
    %v11556 = vadd.f32 %v11554, %v11555
    %v11557 = vsel %vm5412, %v10725, 0.0
    %v11558 = vadd.f32 %v11556, %v11557
    %v11559 = vsel %vm5412, %v10733, 0.0
    %v11560 = vadd.f32 %v11558, %v11559
    %v11561 = vsel %vm5412, %v10732, 0.0
    %v11562 = vadd.f32 %v11560, %v11561
    %v11563 = vsel %vm5412, %v10734, 0.0
    %v11564 = vadd.f32 %v11562, %v11563
    %v11565 = vsel %vm5412, %v10742, 0.0
    %v11566 = vadd.f32 %v11564, %v11565
    %v11567 = vsel %vm5412, %v10750, 0.0
    %v11568 = vadd.f32 %v11566, %v11567
    %v11569 = vsel %vm5412, %v10749, 0.0
    %v11570 = vadd.f32 %v11568, %v11569
    %v11571 = vsel %vm5412, %v10751, 0.0
    %v11572 = vadd.f32 %v11570, %v11571
    %v11573 = vsel %vm5412, %v10759, 0.0
    %v11574 = vadd.f32 %v11572, %v11573
    %v11575 = vsel %vm5412, %v10767, 0.0
    %v11576 = vadd.f32 %v11574, %v11575
    %v11577 = vsel %vm5412, %v10766, 0.0
    %v11578 = vadd.f32 %v11576, %v11577
    %v11579 = vsel %vm5412, %v10768, 0.0
    %v11580 = vadd.f32 %v11578, %v11579
    %v11581 = vsel %vm5412, %v10776, 0.0
    %v11582 = vadd.f32 %v11580, %v11581
    %v11583 = vsel %vm5412, %v10784, 0.0
    %v11584 = vadd.f32 %v11582, %v11583
    %v11585 = vsel %vm5412, %v10783, 0.0
    %v11586 = vadd.f32 %v11584, %v11585
    %v11587 = vsel %vm5412, %v10785, 0.0
    %v11588 = vadd.f32 %v11586, %v11587
    %v11589 = vsel %vm5412, %v10793, 0.0
    %v11590 = vadd.f32 %v11588, %v11589
    %v11591 = vsel %vm5412, %v10801, 0.0
    %v11592 = vadd.f32 %v11590, %v11591
    %v11593 = vsel %vm5412, %v10800, 0.0
    %v11594 = vadd.f32 %v11592, %v11593
    %v11595 = vsel %vm5412, %v10802, 0.0
    %v11596 = vadd.f32 %v11594, %v11595
    %v11597 = vsel %vm5412, %v10810, 0.0
    %v11598 = vadd.f32 %v11596, %v11597
    %v11599 = vsel %vm5412, %v10818, 0.0
    %v11600 = vadd.f32 %v11598, %v11599
    %v11601 = vsel %vm5412, %v10817, 0.0
    %v11602 = vadd.f32 %v11600, %v11601
    %v11603 = vsel %vm5412, %v10819, 0.0
    %v11604 = vadd.f32 %v11602, %v11603
    %v11605 = vsel %vm5412, %v10827, 0.0
    %v11606 = vadd.f32 %v11604, %v11605
    %v11607 = vsel %vm5412, %v10835, 0.0
    %v11608 = vadd.f32 %v11606, %v11607
    %v11609 = vsel %vm5412, %v10834, 0.0
    %v11610 = vadd.f32 %v11608, %v11609
    %v11611 = vsel %vm5412, %v10836, 0.0
    %v11612 = vadd.f32 %v11610, %v11611
    %v11613 = vsel %vm5412, %v10844, 0.0
    %v11614 = vadd.f32 %v11612, %v11613
    %v11615 = vsel %vm5412, %v10852, 0.0
    %v11616 = vadd.f32 %v11614, %v11615
    %v11617 = vsel %vm5412, %v10851, 0.0
    %v11618 = vadd.f32 %v11616, %v11617
    %v11619 = vsel %vm5412, %v10853, 0.0
    %v11620 = vadd.f32 %v11618, %v11619
    %11621 = vadd.xlane.f32.xlu0 %v11620
    %v11622 = vpop.xlane.xlu0 %11621
    %vm11623 = vcmask 7168
    %v11624 = vsel %vm11623, %v5925, %v11622
    %vm11625 = vcmask 9216
    %11626 = vst.msk [vmem:[#allocation7] sm:$0x3] %vm11625, %v11624
    // Predicated region
    $region18: #{tpu_custom_call.1} parent=1 // pred_check
      _
    $region19: #{tpu_custom_call.1} parent=1 // pred_check_branch
      %11628 = sbr.rel (0) target = $region21
    $region20: #{tpu_custom_call.1} parent=1 // pred_region
      %s11630 = ssub.s32 32, 32
      %11631 = vsyncadd [#allocation4], %s11630
      %s11633 = sshll.u32 [#allocation7], 4
      %s11634 = int_to_ptr.vmem [resolvable:$true] %s11633
      %11636 = dma.vmem_to_hbm [thread:$0]  %s11634, 32, %s2, [#allocation4]
    $region21: #{tpu_custom_call.1} parent=1 // pred_fallthru
      _
    // Predicated region
    $region22: #{tpu_custom_call.1} parent=1 // pred_check
      _
    $region23: #{tpu_custom_call.1} parent=1 // pred_check_branch
      %11638 = sbr.rel (0) target = $region25
    $region24: #{tpu_custom_call.1} parent=1 // pred_region
      %11639 = dma.done [#allocation4], 32
    $region25: #{tpu_custom_call.1} parent=1 // pred_fallthru
      _
    %11640 = vsyncpa [#allocation3], 1
    %11641 = vsyncpa [#allocation6], 1
    %11642 = vsyncpa [#allocation4], 1

</llo_original>
